<compile_context>
chip_gen: v7x
topology: tpu7x:2x2x1
jax: 0.10.0
libtpu: 0.0.40
codegen_flags: <defaults>
</compile_context>

<pallas_src>
import functools

import jax
import jax.numpy as jnp
import numpy as np
from jax.experimental import pallas as pl
from jax.experimental.pallas import tpu as pltpu

EPS = 1e-5  # nn.BatchNorm2d default eps


# ---------------------------------------------------------------- kernel ----
def _repvgg5x5_kernel(x_ref, w_ref, b_ref, o_ref, slab_ref, acc_ref, *, kh_per_mm):
    # x_ref:    (1, TH+4, W+4, Cin)       bf16  halo row-band of zero-padded input
    # w_ref:    (25*Cin, TCO)             bf16  reparam 5x5 taps, K order (kh,kw,cin)
    # b_ref:    (1, TCO)                  f32   fused bias
    # o_ref:    (1, TH, W, TCO)           bf16
    # slab_ref: (TH*W, kh_per_mm*5*Cin)   bf16  im2col slab (VMEM scratch)
    # acc_ref:  (TH*W, TCO)               f32   accumulator (VMEM scratch)
    _, th, w, tco = o_ref.shape
    cin = x_ref.shape[-1]
    kslab = kh_per_mm * 5 * cin
    n_mm = 5 // kh_per_mm

    for m in range(n_mm):                       # 1 (fused) or 5 (per-kh) matmuls
        # Stage kh_per_mm*5 shifted (th, w, cin) windows side by side along K.
        for r, kh in enumerate(range(m * kh_per_mm, (m + 1) * kh_per_mm)):
            for kw in range(5):
                piece = x_ref[0, pl.ds(kh, th), pl.ds(kw, w), :]       # (th, w, cin)
                col = (r * 5 + kw) * cin
                slab_ref[:, pl.ds(col, cin)] = piece.reshape(th * w, cin)
        prod = jnp.dot(slab_ref[...], w_ref[pl.ds(m * kslab, kslab), :],
                       preferred_element_type=jnp.float32)             # (th*w, tco)
        if m == 0:
            acc_ref[...] = prod
        else:
            acc_ref[...] += prod

    out = jnp.maximum(acc_ref[...] + b_ref[...], 0.0)                  # bias + ReLU
    o_ref[...] = out.reshape(o_ref.shape).astype(o_ref.dtype)


# ------------------------------------------------------------------ glue ----
def _bn_fold(gamma, beta, mean, var):
    s = gamma / jnp.sqrt(var + EPS)
    return s, beta - mean * s


def _rup(a, b):
    return -(-a // b) * b


def repvgg_block_5x5(x_nchw, params, *, band_h=None, cout_tile=None,
                     vmem_budget=10 * 1024 * 1024):
    N, Cin, H, W = x_nchw.shape
    Cout = params["w5"].shape[0]
    assert Cin == Cout, "identity branch requires in_channels == out_channels"

    # ---- exact branch fusion (classic RepVGG reparam, eval-mode BN) --------
    s5, b5 = _bn_fold(*params["bn5"])
    s3, b3 = _bn_fold(*params["bn3"])
    si, bi = _bn_fold(*params["bnid"])
    w_eq = params["w5"] * s5[:, None, None, None]                      # (O,I,5,5)
    w_eq = w_eq.at[:, :, 1:4, 1:4].add(params["w3"] * s3[:, None, None, None])
    w_eq = w_eq.at[:, :, 2, 2].add(si[:, None] * jnp.eye(Cout, Cin, dtype=w_eq.dtype))
    bias = (b5 + b3 + bi).astype(jnp.float32)                          # (O,)

    # (O,I,5,5) -> (kh,kw,I,O) -> (25*I, O); pad O to lane-dense multiple of 128.
    cout_p = 128 * pl.cdiv(Cout, 128)
    w_tap = jnp.transpose(w_eq, (2, 3, 1, 0)).reshape(25 * Cin, Cout)
    w_tap = jnp.pad(w_tap, ((0, 0), (0, cout_p - Cout))).astype(jnp.bfloat16)
    bias_p = jnp.pad(bias, (0, cout_p - Cout)).reshape(1, cout_p)

    # ---- static tiling decisions --------------------------------------------
    if cout_tile is None:                 # N multiples of 256 help v6e/v7x MXU
        cout_tile = 256 if cout_p % 256 == 0 else 128
    tco = min(cout_tile, cout_p)
    nco = cout_p // tco
    kh_per_mm = 5 if Cin <= 32 else 1     # taps fused per matmul (K = taps*5*Cin)
    kslab = kh_per_mm * 5 * Cin

    def footprint(th):                    # layout-padded per-step VMEM bytes
        return (2 * (th + 4) * _rup(W + 4, 16) * _rup(Cin, 128) * 2    # x band x2
                + 2 * _rup(25 * Cin, 16) * _rup(tco, 128) * 2          # weights x2
                + 2 * th * _rup(W, 16) * _rup(tco, 128) * 2            # out tile x2
                + _rup(th * W, 16) * _rup(kslab, 128) * 2              # im2col slab
                + _rup(th * W, 8) * _rup(tco, 128) * 4)                # f32 acc

    if band_h is None:                    # largest divisor of H that fits budget
        band_h = 1
        for d in sorted((d for d in range(1, H + 1) if H % d == 0), reverse=True):
            if footprint(d) <= vmem_budget:
                band_h = d
                break
    th = band_h if H % band_h == 0 else H
    nhb = H // th
    nb = N * nhb

    # ---- NHWC, zero halo, bf16; avoid band materialization when possible ----
    x = jnp.transpose(x_nchw, (0, 2, 3, 1)).astype(jnp.bfloat16)       # (N,H,W,I)
    xp = jnp.pad(x, ((0, 0), (2, 2), (2, 2), (0, 0)))                  # (N,H+4,W+4,I)
    if nhb == 1:
        xb = xp                                                        # no extra copy
    else:
        # TODO(synk): multi-band halo still materialized; a pl.ANY +
        # make_async_copy path would remove this extra HBM pass.
        xb = jnp.stack([xp[:, i * th: i * th + th + 4] for i in range(nhb)],
                       axis=1).reshape(N * nhb, th + 4, W + 4, Cin)

    # ---- grid order: keep the larger re-streamed operand resident ----------
    band_bytes = nb * (th + 4) * (W + 4) * Cin * 2
    w_bytes = 25 * Cin * cout_p * 2
    c_outer = nco > 1 and nb > 1 and (nb - 1) * w_bytes > (nco - 1) * band_bytes
    if c_outer:        # weight tile DMA'd once, bands re-streamed per cout tile
        grid = (nco, nb)
        x_map = lambda c, b: (b, 0, 0, 0)
        w_map = lambda c, b: (0, c)
        bias_map = lambda c, b: (0, c)
        o_map = lambda c, b: (b, 0, 0, c)
    else:              # band DMA'd once, weights re-streamed per band
        grid = (nb, nco)
        x_map = lambda b, c: (b, 0, 0, 0)
        w_map = lambda b, c: (0, c)
        bias_map = lambda b, c: (0, c)
        o_map = lambda b, c: (b, 0, 0, c)

    out = pl.pallas_call(
        functools.partial(_repvgg5x5_kernel, kh_per_mm=kh_per_mm),
        out_shape=jax.ShapeDtypeStruct((nb, th, W, cout_p), jnp.bfloat16),
        grid=grid,
        in_specs=[
            pl.BlockSpec((1, th + 4, W + 4, Cin), x_map),
            pl.BlockSpec((25 * Cin, tco), w_map),
            pl.BlockSpec((1, tco), bias_map),
        ],
        out_specs=pl.BlockSpec((1, th, W, tco), o_map),
        scratch_shapes=[
            pltpu.VMEM((th * W, kslab), jnp.bfloat16),   # im2col slab
            pltpu.VMEM((th * W, tco), jnp.float32),      # accumulator
        ],
        compiler_params=pltpu.CompilerParams(
            dimension_semantics=("parallel", "parallel")),
    )(xb, w_tap, bias_p)

    out = out.reshape(N, H, W, cout_p)[..., :Cout]
    return jnp.transpose(out, (0, 3, 1, 2))                            # NCHW, bf16


# ------------------------------------------------------------- reference ----
def _reference(x_nchw, params):
    dn = ("NCHW", "OIHW", "NCHW")

    def conv(x, w, pad):
        return jax.lax.conv_general_dilated(
            x, w, (1, 1), [(pad, pad), (pad, pad)], dimension_numbers=dn)

    def bn(y, g, b, m, v):
        s = g / jnp.sqrt(v + EPS)
        return y * s[None, :, None, None] + (b - m * s)[None, :, None, None]

    y5 = bn(conv(x_nchw, params["w5"], 2), *params["bn5"])
    y3 = bn(conv(x_nchw, params["w3"], 1), *params["bn3"])
    yi = bn(x_nchw, *params["bnid"])
    return jnp.maximum(y5 + y3 + yi, 0.0)


# ------------------------------------------------------------------ init ----
def init_params(key, cin, cout):
    ks = jax.random.split(key, 5)

    def bn_params(k, c):
        k1, k2, k3, k4 = jax.random.split(k, 4)
        gamma = jax.random.uniform(k1, (c,), jnp.float32, 0.5, 1.5)
        beta = 0.1 * jax.random.normal(k2, (c,), jnp.float32)
        mean = 0.1 * jax.random.normal(k3, (c,), jnp.float32)
        var = jax.random.uniform(k4, (c,), jnp.float32, 0.5, 1.5)
        return (gamma, beta, mean, var)

    w5 = 0.1 * jax.random.normal(ks[0], (cout, cin, 5, 5), jnp.float32)
    w3 = 0.1 * jax.random.normal(ks[1], (cout, cin, 3, 3), jnp.float32)
    return {
        "w5": w5, "bn5": bn_params(ks[2], cout),
        "w3": w3, "bn3": bn_params(ks[3], cout),
        "bnid": bn_params(ks[4], cin),
    }


if __name__ == "__main__":
    key = jax.random.PRNGKey(0)
    kx, kp = jax.random.split(key)
    N, C, H, W = 2, 4, 16, 16
    x = jax.random.normal(kx, (N, C, H, W), jnp.float32)
    params = init_params(kp, C, C)

    out = jax.jit(repvgg_block_5x5)(x, params)
    out = jax.block_until_ready(out)

    ref = _reference(x, params)
    # bf16 operands + bf16 output (f32 accumulate) -> loosened tolerance
    np.testing.assert_allclose(np.asarray(out).astype(np.float32),
                               np.asarray(ref), rtol=2e-2, atol=3e-2)
    print("KERNEL_OK")
</pallas_src>

<mosaic_0001>
module attributes {stable_mosaic.version = 11 : i64} {
  func.func @_repvgg5x5_kernel(%arg0: i32, %arg1: i32, %arg2: memref<1x20x20x4xbf16, #tpu.memory_space<vmem>>, %arg3: memref<100x128xbf16, #tpu.memory_space<vmem>>, %arg4: memref<1x128xf32, #tpu.memory_space<vmem>>, %arg5: memref<1x16x16x128xbf16, #tpu.memory_space<vmem>>, %arg6: memref<256x100xbf16, #tpu.memory_space<vmem>>, %arg7: memref<256x128xf32, #tpu.memory_space<vmem>>) attributes {dimension_semantics = [#tpu.dimension_semantics<parallel>, #tpu.dimension_semantics<parallel>], iteration_bounds = array<i64: 2, 1>, scalar_prefetch = 0 : i64, scratch_operands = 2 : i64, tpu.core_type = #tpu.core_type<tc>, window_params = [{transform_indices = @transform_0, window_bounds = array<i64: 1, 20, 20, 4>}, {transform_indices = @transform_1, window_bounds = array<i64: 100, 128>}, {transform_indices = @transform_2, window_bounds = array<i64: 1, 128>}, {transform_indices = @transform_3, window_bounds = array<i64: 1, 16, 16, 128>}]} {
    %c0 = arith.constant 0 : index
    %c0_0 = arith.constant 0 : index
    %c0_1 = arith.constant 0 : index
    %c0_2 = arith.constant 0 : index
    %0 = vector.load %arg2[%c0, %c0_0, %c0_1, %c0_2] : memref<1x20x20x4xbf16, #tpu.memory_space<vmem>>, vector<1x16x16x4xbf16>
    %1 = vector.shape_cast %0 : vector<1x16x16x4xbf16> to vector<16x16x4xbf16>
    %2 = vector.shape_cast %1 : vector<16x16x4xbf16> to vector<256x4xbf16>
    %c0_3 = arith.constant 0 : index
    %c0_4 = arith.constant 0 : index
    %3 = vector.load %arg6[%c0_3, %c0_4] : memref<256x100xbf16, #tpu.memory_space<vmem>>, vector<256x4xbf16>
    tpu.vector_store %arg6[%c0_3, %c0_4], %2 {strides = array<i32>} : memref<256x100xbf16, #tpu.memory_space<vmem>>, vector<256x4xbf16>,
    %c0_5 = arith.constant 0 : index
    %c0_6 = arith.constant 0 : index
    %c1 = arith.constant 1 : index
    %c0_7 = arith.constant 0 : index
    %4 = vector.load %arg2[%c0_5, %c0_6, %c1, %c0_7] : memref<1x20x20x4xbf16, #tpu.memory_space<vmem>>, vector<1x16x16x4xbf16>
    %5 = vector.shape_cast %4 : vector<1x16x16x4xbf16> to vector<16x16x4xbf16>
    %6 = vector.shape_cast %5 : vector<16x16x4xbf16> to vector<256x4xbf16>
    %c0_8 = arith.constant 0 : index
    %c4 = arith.constant 4 : index
    %7 = vector.load %arg6[%c0_8, %c4] : memref<256x100xbf16, #tpu.memory_space<vmem>>, vector<256x4xbf16>
    tpu.vector_store %arg6[%c0_8, %c4], %6 {strides = array<i32>} : memref<256x100xbf16, #tpu.memory_space<vmem>>, vector<256x4xbf16>,
    %c0_9 = arith.constant 0 : index
    %c0_10 = arith.constant 0 : index
    %c2 = arith.constant 2 : index
    %c0_11 = arith.constant 0 : index
    %8 = vector.load %arg2[%c0_9, %c0_10, %c2, %c0_11] : memref<1x20x20x4xbf16, #tpu.memory_space<vmem>>, vector<1x16x16x4xbf16>
    %9 = vector.shape_cast %8 : vector<1x16x16x4xbf16> to vector<16x16x4xbf16>
    %10 = vector.shape_cast %9 : vector<16x16x4xbf16> to vector<256x4xbf16>
    %c0_12 = arith.constant 0 : index
    %c8 = arith.constant 8 : index
    %11 = vector.load %arg6[%c0_12, %c8] : memref<256x100xbf16, #tpu.memory_space<vmem>>, vector<256x4xbf16>
    tpu.vector_store %arg6[%c0_12, %c8], %10 {strides = array<i32>} : memref<256x100xbf16, #tpu.memory_space<vmem>>, vector<256x4xbf16>,
    %c0_13 = arith.constant 0 : index
    %c0_14 = arith.constant 0 : index
    %c3 = arith.constant 3 : index
    %c0_15 = arith.constant 0 : index
    %12 = vector.load %arg2[%c0_13, %c0_14, %c3, %c0_15] : memref<1x20x20x4xbf16, #tpu.memory_space<vmem>>, vector<1x16x16x4xbf16>
    %13 = vector.shape_cast %12 : vector<1x16x16x4xbf16> to vector<16x16x4xbf16>
    %14 = vector.shape_cast %13 : vector<16x16x4xbf16> to vector<256x4xbf16>
    %c0_16 = arith.constant 0 : index
    %c12 = arith.constant 12 : index
    %15 = vector.load %arg6[%c0_16, %c12] : memref<256x100xbf16, #tpu.memory_space<vmem>>, vector<256x4xbf16>
    tpu.vector_store %arg6[%c0_16, %c12], %14 {strides = array<i32>} : memref<256x100xbf16, #tpu.memory_space<vmem>>, vector<256x4xbf16>,
    %c0_17 = arith.constant 0 : index
    %c0_18 = arith.constant 0 : index
    %c4_19 = arith.constant 4 : index
    %c0_20 = arith.constant 0 : index
    %16 = vector.load %arg2[%c0_17, %c0_18, %c4_19, %c0_20] : memref<1x20x20x4xbf16, #tpu.memory_space<vmem>>, vector<1x16x16x4xbf16>
    %17 = vector.shape_cast %16 : vector<1x16x16x4xbf16> to vector<16x16x4xbf16>
    %18 = vector.shape_cast %17 : vector<16x16x4xbf16> to vector<256x4xbf16>
    %c0_21 = arith.constant 0 : index
    %c16 = arith.constant 16 : index
    %19 = vector.load %arg6[%c0_21, %c16] : memref<256x100xbf16, #tpu.memory_space<vmem>>, vector<256x4xbf16>
    tpu.vector_store %arg6[%c0_21, %c16], %18 {strides = array<i32>} : memref<256x100xbf16, #tpu.memory_space<vmem>>, vector<256x4xbf16>,
    %c0_22 = arith.constant 0 : index
    %c1_23 = arith.constant 1 : index
    %c0_24 = arith.constant 0 : index
    %c0_25 = arith.constant 0 : index
    %20 = vector.load %arg2[%c0_22, %c1_23, %c0_24, %c0_25] : memref<1x20x20x4xbf16, #tpu.memory_space<vmem>>, vector<1x16x16x4xbf16>
    %21 = vector.shape_cast %20 : vector<1x16x16x4xbf16> to vector<16x16x4xbf16>
    %22 = vector.shape_cast %21 : vector<16x16x4xbf16> to vector<256x4xbf16>
    %c0_26 = arith.constant 0 : index
    %c20 = arith.constant 20 : index
    %23 = vector.load %arg6[%c0_26, %c20] : memref<256x100xbf16, #tpu.memory_space<vmem>>, vector<256x4xbf16>
    tpu.vector_store %arg6[%c0_26, %c20], %22 {strides = array<i32>} : memref<256x100xbf16, #tpu.memory_space<vmem>>, vector<256x4xbf16>,
    %c0_27 = arith.constant 0 : index
    %c1_28 = arith.constant 1 : index
    %c1_29 = arith.constant 1 : index
    %c0_30 = arith.constant 0 : index
    %24 = vector.load %arg2[%c0_27, %c1_28, %c1_29, %c0_30] : memref<1x20x20x4xbf16, #tpu.memory_space<vmem>>, vector<1x16x16x4xbf16>
    %25 = vector.shape_cast %24 : vector<1x16x16x4xbf16> to vector<16x16x4xbf16>
    %26 = vector.shape_cast %25 : vector<16x16x4xbf16> to vector<256x4xbf16>
    %c0_31 = arith.constant 0 : index
    %c24 = arith.constant 24 : index
    %27 = vector.load %arg6[%c0_31, %c24] : memref<256x100xbf16, #tpu.memory_space<vmem>>, vector<256x4xbf16>
    tpu.vector_store %arg6[%c0_31, %c24], %26 {strides = array<i32>} : memref<256x100xbf16, #tpu.memory_space<vmem>>, vector<256x4xbf16>,
    %c0_32 = arith.constant 0 : index
    %c1_33 = arith.constant 1 : index
    %c2_34 = arith.constant 2 : index
    %c0_35 = arith.constant 0 : index
    %28 = vector.load %arg2[%c0_32, %c1_33, %c2_34, %c0_35] : memref<1x20x20x4xbf16, #tpu.memory_space<vmem>>, vector<1x16x16x4xbf16>
    %29 = vector.shape_cast %28 : vector<1x16x16x4xbf16> to vector<16x16x4xbf16>
    %30 = vector.shape_cast %29 : vector<16x16x4xbf16> to vector<256x4xbf16>
    %c0_36 = arith.constant 0 : index
    %c28 = arith.constant 28 : index
    %31 = vector.load %arg6[%c0_36, %c28] : memref<256x100xbf16, #tpu.memory_space<vmem>>, vector<256x4xbf16>
    tpu.vector_store %arg6[%c0_36, %c28], %30 {strides = array<i32>} : memref<256x100xbf16, #tpu.memory_space<vmem>>, vector<256x4xbf16>,
    %c0_37 = arith.constant 0 : index
    %c1_38 = arith.constant 1 : index
    %c3_39 = arith.constant 3 : index
    %c0_40 = arith.constant 0 : index
    %32 = vector.load %arg2[%c0_37, %c1_38, %c3_39, %c0_40] : memref<1x20x20x4xbf16, #tpu.memory_space<vmem>>, vector<1x16x16x4xbf16>
    %33 = vector.shape_cast %32 : vector<1x16x16x4xbf16> to vector<16x16x4xbf16>
    %34 = vector.shape_cast %33 : vector<16x16x4xbf16> to vector<256x4xbf16>
    %c0_41 = arith.constant 0 : index
    %c32 = arith.constant 32 : index
    %35 = vector.load %arg6[%c0_41, %c32] : memref<256x100xbf16, #tpu.memory_space<vmem>>, vector<256x4xbf16>
    tpu.vector_store %arg6[%c0_41, %c32], %34 {strides = array<i32>} : memref<256x100xbf16, #tpu.memory_space<vmem>>, vector<256x4xbf16>,
    %c0_42 = arith.constant 0 : index
    %c1_43 = arith.constant 1 : index
    %c4_44 = arith.constant 4 : index
    %c0_45 = arith.constant 0 : index
    %36 = vector.load %arg2[%c0_42, %c1_43, %c4_44, %c0_45] : memref<1x20x20x4xbf16, #tpu.memory_space<vmem>>, vector<1x16x16x4xbf16>
    %37 = vector.shape_cast %36 : vector<1x16x16x4xbf16> to vector<16x16x4xbf16>
    %38 = vector.shape_cast %37 : vector<16x16x4xbf16> to vector<256x4xbf16>
    %c0_46 = arith.constant 0 : index
    %c36 = arith.constant 36 : index
    %39 = vector.load %arg6[%c0_46, %c36] : memref<256x100xbf16, #tpu.memory_space<vmem>>, vector<256x4xbf16>
    tpu.vector_store %arg6[%c0_46, %c36], %38 {strides = array<i32>} : memref<256x100xbf16, #tpu.memory_space<vmem>>, vector<256x4xbf16>,
    %c0_47 = arith.constant 0 : index
    %c2_48 = arith.constant 2 : index
    %c0_49 = arith.constant 0 : index
    %c0_50 = arith.constant 0 : index
    %40 = vector.load %arg2[%c0_47, %c2_48, %c0_49, %c0_50] : memref<1x20x20x4xbf16, #tpu.memory_space<vmem>>, vector<1x16x16x4xbf16>
    %41 = vector.shape_cast %40 : vector<1x16x16x4xbf16> to vector<16x16x4xbf16>
    %42 = vector.shape_cast %41 : vector<16x16x4xbf16> to vector<256x4xbf16>
    %c0_51 = arith.constant 0 : index
    %c40 = arith.constant 40 : index
    %43 = vector.load %arg6[%c0_51, %c40] : memref<256x100xbf16, #tpu.memory_space<vmem>>, vector<256x4xbf16>
    tpu.vector_store %arg6[%c0_51, %c40], %42 {strides = array<i32>} : memref<256x100xbf16, #tpu.memory_space<vmem>>, vector<256x4xbf16>,
    %c0_52 = arith.constant 0 : index
    %c2_53 = arith.constant 2 : index
    %c1_54 = arith.constant 1 : index
    %c0_55 = arith.constant 0 : index
    %44 = vector.load %arg2[%c0_52, %c2_53, %c1_54, %c0_55] : memref<1x20x20x4xbf16, #tpu.memory_space<vmem>>, vector<1x16x16x4xbf16>
    %45 = vector.shape_cast %44 : vector<1x16x16x4xbf16> to vector<16x16x4xbf16>
    %46 = vector.shape_cast %45 : vector<16x16x4xbf16> to vector<256x4xbf16>
    %c0_56 = arith.constant 0 : index
    %c44 = arith.constant 44 : index
    %47 = vector.load %arg6[%c0_56, %c44] : memref<256x100xbf16, #tpu.memory_space<vmem>>, vector<256x4xbf16>
    tpu.vector_store %arg6[%c0_56, %c44], %46 {strides = array<i32>} : memref<256x100xbf16, #tpu.memory_space<vmem>>, vector<256x4xbf16>,
    %c0_57 = arith.constant 0 : index
    %c2_58 = arith.constant 2 : index
    %c2_59 = arith.constant 2 : index
    %c0_60 = arith.constant 0 : index
    %48 = vector.load %arg2[%c0_57, %c2_58, %c2_59, %c0_60] : memref<1x20x20x4xbf16, #tpu.memory_space<vmem>>, vector<1x16x16x4xbf16>
    %49 = vector.shape_cast %48 : vector<1x16x16x4xbf16> to vector<16x16x4xbf16>
    %50 = vector.shape_cast %49 : vector<16x16x4xbf16> to vector<256x4xbf16>
    %c0_61 = arith.constant 0 : index
    %c48 = arith.constant 48 : index
    %51 = vector.load %arg6[%c0_61, %c48] : memref<256x100xbf16, #tpu.memory_space<vmem>>, vector<256x4xbf16>
    tpu.vector_store %arg6[%c0_61, %c48], %50 {strides = array<i32>} : memref<256x100xbf16, #tpu.memory_space<vmem>>, vector<256x4xbf16>,
    %c0_62 = arith.constant 0 : index
    %c2_63 = arith.constant 2 : index
    %c3_64 = arith.constant 3 : index
    %c0_65 = arith.constant 0 : index
    %52 = vector.load %arg2[%c0_62, %c2_63, %c3_64, %c0_65] : memref<1x20x20x4xbf16, #tpu.memory_space<vmem>>, vector<1x16x16x4xbf16>
    %53 = vector.shape_cast %52 : vector<1x16x16x4xbf16> to vector<16x16x4xbf16>
    %54 = vector.shape_cast %53 : vector<16x16x4xbf16> to vector<256x4xbf16>
    %c0_66 = arith.constant 0 : index
    %c52 = arith.constant 52 : index
    %55 = vector.load %arg6[%c0_66, %c52] : memref<256x100xbf16, #tpu.memory_space<vmem>>, vector<256x4xbf16>
    tpu.vector_store %arg6[%c0_66, %c52], %54 {strides = array<i32>} : memref<256x100xbf16, #tpu.memory_space<vmem>>, vector<256x4xbf16>,
    %c0_67 = arith.constant 0 : index
    %c2_68 = arith.constant 2 : index
    %c4_69 = arith.constant 4 : index
    %c0_70 = arith.constant 0 : index
    %56 = vector.load %arg2[%c0_67, %c2_68, %c4_69, %c0_70] : memref<1x20x20x4xbf16, #tpu.memory_space<vmem>>, vector<1x16x16x4xbf16>
    %57 = vector.shape_cast %56 : vector<1x16x16x4xbf16> to vector<16x16x4xbf16>
    %58 = vector.shape_cast %57 : vector<16x16x4xbf16> to vector<256x4xbf16>
    %c0_71 = arith.constant 0 : index
    %c56 = arith.constant 56 : index
    %59 = vector.load %arg6[%c0_71, %c56] : memref<256x100xbf16, #tpu.memory_space<vmem>>, vector<256x4xbf16>
    tpu.vector_store %arg6[%c0_71, %c56], %58 {strides = array<i32>} : memref<256x100xbf16, #tpu.memory_space<vmem>>, vector<256x4xbf16>,
    %c0_72 = arith.constant 0 : index
    %c3_73 = arith.constant 3 : index
    %c0_74 = arith.constant 0 : index
    %c0_75 = arith.constant 0 : index
    %60 = vector.load %arg2[%c0_72, %c3_73, %c0_74, %c0_75] : memref<1x20x20x4xbf16, #tpu.memory_space<vmem>>, vector<1x16x16x4xbf16>
    %61 = vector.shape_cast %60 : vector<1x16x16x4xbf16> to vector<16x16x4xbf16>
    %62 = vector.shape_cast %61 : vector<16x16x4xbf16> to vector<256x4xbf16>
    %c0_76 = arith.constant 0 : index
    %c60 = arith.constant 60 : index
    %63 = vector.load %arg6[%c0_76, %c60] : memref<256x100xbf16, #tpu.memory_space<vmem>>, vector<256x4xbf16>
    tpu.vector_store %arg6[%c0_76, %c60], %62 {strides = array<i32>} : memref<256x100xbf16, #tpu.memory_space<vmem>>, vector<256x4xbf16>,
    %c0_77 = arith.constant 0 : index
    %c3_78 = arith.constant 3 : index
    %c1_79 = arith.constant 1 : index
    %c0_80 = arith.constant 0 : index
    %64 = vector.load %arg2[%c0_77, %c3_78, %c1_79, %c0_80] : memref<1x20x20x4xbf16, #tpu.memory_space<vmem>>, vector<1x16x16x4xbf16>
    %65 = vector.shape_cast %64 : vector<1x16x16x4xbf16> to vector<16x16x4xbf16>
    %66 = vector.shape_cast %65 : vector<16x16x4xbf16> to vector<256x4xbf16>
    %c0_81 = arith.constant 0 : index
    %c64 = arith.constant 64 : index
    %67 = vector.load %arg6[%c0_81, %c64] : memref<256x100xbf16, #tpu.memory_space<vmem>>, vector<256x4xbf16>
    tpu.vector_store %arg6[%c0_81, %c64], %66 {strides = array<i32>} : memref<256x100xbf16, #tpu.memory_space<vmem>>, vector<256x4xbf16>,
    %c0_82 = arith.constant 0 : index
    %c3_83 = arith.constant 3 : index
    %c2_84 = arith.constant 2 : index
    %c0_85 = arith.constant 0 : index
    %68 = vector.load %arg2[%c0_82, %c3_83, %c2_84, %c0_85] : memref<1x20x20x4xbf16, #tpu.memory_space<vmem>>, vector<1x16x16x4xbf16>
    %69 = vector.shape_cast %68 : vector<1x16x16x4xbf16> to vector<16x16x4xbf16>
    %70 = vector.shape_cast %69 : vector<16x16x4xbf16> to vector<256x4xbf16>
    %c0_86 = arith.constant 0 : index
    %c68 = arith.constant 68 : index
    %71 = vector.load %arg6[%c0_86, %c68] : memref<256x100xbf16, #tpu.memory_space<vmem>>, vector<256x4xbf16>
    tpu.vector_store %arg6[%c0_86, %c68], %70 {strides = array<i32>} : memref<256x100xbf16, #tpu.memory_space<vmem>>, vector<256x4xbf16>,
    %c0_87 = arith.constant 0 : index
    %c3_88 = arith.constant 3 : index
    %c3_89 = arith.constant 3 : index
    %c0_90 = arith.constant 0 : index
    %72 = vector.load %arg2[%c0_87, %c3_88, %c3_89, %c0_90] : memref<1x20x20x4xbf16, #tpu.memory_space<vmem>>, vector<1x16x16x4xbf16>
    %73 = vector.shape_cast %72 : vector<1x16x16x4xbf16> to vector<16x16x4xbf16>
    %74 = vector.shape_cast %73 : vector<16x16x4xbf16> to vector<256x4xbf16>
    %c0_91 = arith.constant 0 : index
    %c72 = arith.constant 72 : index
    %75 = vector.load %arg6[%c0_91, %c72] : memref<256x100xbf16, #tpu.memory_space<vmem>>, vector<256x4xbf16>
    tpu.vector_store %arg6[%c0_91, %c72], %74 {strides = array<i32>} : memref<256x100xbf16, #tpu.memory_space<vmem>>, vector<256x4xbf16>,
    %c0_92 = arith.constant 0 : index
    %c3_93 = arith.constant 3 : index
    %c4_94 = arith.constant 4 : index
    %c0_95 = arith.constant 0 : index
    %76 = vector.load %arg2[%c0_92, %c3_93, %c4_94, %c0_95] : memref<1x20x20x4xbf16, #tpu.memory_space<vmem>>, vector<1x16x16x4xbf16>
    %77 = vector.shape_cast %76 : vector<1x16x16x4xbf16> to vector<16x16x4xbf16>
    %78 = vector.shape_cast %77 : vector<16x16x4xbf16> to vector<256x4xbf16>
    %c0_96 = arith.constant 0 : index
    %c76 = arith.constant 76 : index
    %79 = vector.load %arg6[%c0_96, %c76] : memref<256x100xbf16, #tpu.memory_space<vmem>>, vector<256x4xbf16>
    tpu.vector_store %arg6[%c0_96, %c76], %78 {strides = array<i32>} : memref<256x100xbf16, #tpu.memory_space<vmem>>, vector<256x4xbf16>,
    %c0_97 = arith.constant 0 : index
    %c4_98 = arith.constant 4 : index
    %c0_99 = arith.constant 0 : index
    %c0_100 = arith.constant 0 : index
    %80 = vector.load %arg2[%c0_97, %c4_98, %c0_99, %c0_100] : memref<1x20x20x4xbf16, #tpu.memory_space<vmem>>, vector<1x16x16x4xbf16>
    %81 = vector.shape_cast %80 : vector<1x16x16x4xbf16> to vector<16x16x4xbf16>
    %82 = vector.shape_cast %81 : vector<16x16x4xbf16> to vector<256x4xbf16>
    %c0_101 = arith.constant 0 : index
    %c80 = arith.constant 80 : index
    %83 = vector.load %arg6[%c0_101, %c80] : memref<256x100xbf16, #tpu.memory_space<vmem>>, vector<256x4xbf16>
    tpu.vector_store %arg6[%c0_101, %c80], %82 {strides = array<i32>} : memref<256x100xbf16, #tpu.memory_space<vmem>>, vector<256x4xbf16>,
    %c0_102 = arith.constant 0 : index
    %c4_103 = arith.constant 4 : index
    %c1_104 = arith.constant 1 : index
    %c0_105 = arith.constant 0 : index
    %84 = vector.load %arg2[%c0_102, %c4_103, %c1_104, %c0_105] : memref<1x20x20x4xbf16, #tpu.memory_space<vmem>>, vector<1x16x16x4xbf16>
    %85 = vector.shape_cast %84 : vector<1x16x16x4xbf16> to vector<16x16x4xbf16>
    %86 = vector.shape_cast %85 : vector<16x16x4xbf16> to vector<256x4xbf16>
    %c0_106 = arith.constant 0 : index
    %c84 = arith.constant 84 : index
    %87 = vector.load %arg6[%c0_106, %c84] : memref<256x100xbf16, #tpu.memory_space<vmem>>, vector<256x4xbf16>
    tpu.vector_store %arg6[%c0_106, %c84], %86 {strides = array<i32>} : memref<256x100xbf16, #tpu.memory_space<vmem>>, vector<256x4xbf16>,
    %c0_107 = arith.constant 0 : index
    %c4_108 = arith.constant 4 : index
    %c2_109 = arith.constant 2 : index
    %c0_110 = arith.constant 0 : index
    %88 = vector.load %arg2[%c0_107, %c4_108, %c2_109, %c0_110] : memref<1x20x20x4xbf16, #tpu.memory_space<vmem>>, vector<1x16x16x4xbf16>
    %89 = vector.shape_cast %88 : vector<1x16x16x4xbf16> to vector<16x16x4xbf16>
    %90 = vector.shape_cast %89 : vector<16x16x4xbf16> to vector<256x4xbf16>
    %c0_111 = arith.constant 0 : index
    %c88 = arith.constant 88 : index
    %91 = vector.load %arg6[%c0_111, %c88] : memref<256x100xbf16, #tpu.memory_space<vmem>>, vector<256x4xbf16>
    tpu.vector_store %arg6[%c0_111, %c88], %90 {strides = array<i32>} : memref<256x100xbf16, #tpu.memory_space<vmem>>, vector<256x4xbf16>,
    %c0_112 = arith.constant 0 : index
    %c4_113 = arith.constant 4 : index
    %c3_114 = arith.constant 3 : index
    %c0_115 = arith.constant 0 : index
    %92 = vector.load %arg2[%c0_112, %c4_113, %c3_114, %c0_115] : memref<1x20x20x4xbf16, #tpu.memory_space<vmem>>, vector<1x16x16x4xbf16>
    %93 = vector.shape_cast %92 : vector<1x16x16x4xbf16> to vector<16x16x4xbf16>
    %94 = vector.shape_cast %93 : vector<16x16x4xbf16> to vector<256x4xbf16>
    %c0_116 = arith.constant 0 : index
    %c92 = arith.constant 92 : index
    %95 = vector.load %arg6[%c0_116, %c92] : memref<256x100xbf16, #tpu.memory_space<vmem>>, vector<256x4xbf16>
    tpu.vector_store %arg6[%c0_116, %c92], %94 {strides = array<i32>} : memref<256x100xbf16, #tpu.memory_space<vmem>>, vector<256x4xbf16>,
    %c0_117 = arith.constant 0 : index
    %c4_118 = arith.constant 4 : index
    %c4_119 = arith.constant 4 : index
    %c0_120 = arith.constant 0 : index
    %96 = vector.load %arg2[%c0_117, %c4_118, %c4_119, %c0_120] : memref<1x20x20x4xbf16, #tpu.memory_space<vmem>>, vector<1x16x16x4xbf16>
    %97 = vector.shape_cast %96 : vector<1x16x16x4xbf16> to vector<16x16x4xbf16>
    %98 = vector.shape_cast %97 : vector<16x16x4xbf16> to vector<256x4xbf16>
    %c0_121 = arith.constant 0 : index
    %c96 = arith.constant 96 : index
    %99 = vector.load %arg6[%c0_121, %c96] : memref<256x100xbf16, #tpu.memory_space<vmem>>, vector<256x4xbf16>
    tpu.vector_store %arg6[%c0_121, %c96], %98 {strides = array<i32>} : memref<256x100xbf16, #tpu.memory_space<vmem>>, vector<256x4xbf16>,
    %c0_122 = arith.constant 0 : index
    %c0_123 = arith.constant 0 : index
    %100 = vector.load %arg6[%c0_122, %c0_123] : memref<256x100xbf16, #tpu.memory_space<vmem>>, vector<256x100xbf16>
    %c0_124 = arith.constant 0 : index
    %c0_125 = arith.constant 0 : index
    %101 = vector.load %arg3[%c0_124, %c0_125] : memref<100x128xbf16, #tpu.memory_space<vmem>>, vector<100x128xbf16>
    %cst = arith.constant dense<0.000000e+00> : vector<256x128xf32>
    %102 = tpu.matmul %100, %101, %cst {dimension_numbers = #tpu.dot_dimension_numbers<[1], [0], [0], [1], [0, 0, 1, 1], [], []>} : vector<256x100xbf16>, vector<100x128xbf16>, vector<256x128xf32> -> vector<256x128xf32>
    %c0_126 = arith.constant 0 : index
    %c0_127 = arith.constant 0 : index
    %103 = vector.load %arg7[%c0_126, %c0_127] : memref<256x128xf32, #tpu.memory_space<vmem>>, vector<256x128xf32>
    tpu.vector_store %arg7[%c0_126, %c0_127], %102 {strides = array<i32>} : memref<256x128xf32, #tpu.memory_space<vmem>>, vector<256x128xf32>,
    %c0_128 = arith.constant 0 : index
    %c0_129 = arith.constant 0 : index
    %104 = vector.load %arg7[%c0_128, %c0_129] : memref<256x128xf32, #tpu.memory_space<vmem>>, vector<256x128xf32>
    %c0_130 = arith.constant 0 : index
    %c0_131 = arith.constant 0 : index
    %105 = vector.load %arg4[%c0_130, %c0_131] : memref<1x128xf32, #tpu.memory_space<vmem>>, vector<1x128xf32>
    %106 = vector.broadcast %105 : vector<1x128xf32> to vector<256x128xf32>
    %107 = arith.addf %104, %106 : vector<256x128xf32>
    %cst_132 = arith.constant 0.000000e+00 : f32
    %108 = vector.broadcast %cst_132 : f32 to vector<256x128xf32>
    %109 = arith.maximumf %107, %108 : vector<256x128xf32>
    %110 = vector.shape_cast %109 : vector<256x128xf32> to vector<1x16x16x128xf32>
    %111 = arith.truncf %110 : vector<1x16x16x128xf32> to vector<1x16x16x128xbf16>
    %c0_133 = arith.constant 0 : index
    %c0_134 = arith.constant 0 : index
    %c0_135 = arith.constant 0 : index
    %c0_136 = arith.constant 0 : index
    %112 = vector.load %arg5[%c0_133, %c0_134, %c0_135, %c0_136] : memref<1x16x16x128xbf16, #tpu.memory_space<vmem>>, vector<1x16x16x128xbf16>
    tpu.vector_store %arg5[%c0_133, %c0_134, %c0_135, %c0_136], %111 {strides = array<i32>} : memref<1x16x16x128xbf16, #tpu.memory_space<vmem>>, vector<1x16x16x128xbf16>,
    return
  }
  func.func @transform_0(%arg0: i32, %arg1: i32) -> (i32, i32, i32, i32) {
    %c0_i32 = arith.constant 0 : i32
    %c0_i32_0 = arith.constant 0 : i32
    %c0_i32_1 = arith.constant 0 : i32
    %c0_i32_2 = arith.constant 0 : i32
    return %arg0, %c0_i32, %c0_i32_0, %c0_i32_1 : i32, i32, i32, i32
  }
  func.func @transform_1(%arg0: i32, %arg1: i32) -> (i32, i32) {
    %c0_i32 = arith.constant 0 : i32
    %c0_i32_0 = arith.constant 0 : i32
    return %c0_i32, %arg1 : i32, i32
  }
  func.func @transform_2(%arg0: i32, %arg1: i32) -> (i32, i32) {
    %c0_i32 = arith.constant 0 : i32
    %c0_i32_0 = arith.constant 0 : i32
    return %c0_i32, %arg1 : i32, i32
  }
  func.func @transform_3(%arg0: i32, %arg1: i32) -> (i32, i32, i32, i32) {
    %c0_i32 = arith.constant 0 : i32
    %c0_i32_0 = arith.constant 0 : i32
    %c0_i32_1 = arith.constant 0 : i32
    return %arg0, %c0_i32, %c0_i32_0, %arg1 : i32, i32, i32, i32
  }
}

</mosaic_0001>

<llo_original>
// kernel: repvgg_block_5x5.1
$region0: #{repvgg_block_5x5.1}
  #allocation0 [shape = 'u32[]', space=smem, size = 0x4, offset = 0x4, fixed_abs, tag = 'smem constant byte address 0x4 - core index']
  #allocation1 [shape = 'u32[144,128]{1,0:T(1,128)}', space=vmem, size = 0x12000, scoped, tag = 'internal scratch']
  #allocation2 [shape = 'bf16[256,100]{1,0:T(16,128)(2,1)}', space=vmem, size = 0x10000, scoped, tag = 'scratch operand']
  #allocation3 [shape = 'f32[256,128]{1,0:T(8,128)}', space=vmem, size = 0x20000, scoped, tag = 'scratch operand']
  %s0 = inlined_call_operand.vmem [shape: bf16[2,20,20,4], index: 0, kind: input, shape index: {}]
  %s1 = inlined_call_operand.vmem [shape: bf16[100,128], index: 1, kind: input, shape index: {}]
  %s2 = inlined_call_operand.vmem [shape: f32[1,128], index: 2, kind: input, shape index: {}]
  %s3 = inlined_call_operand.vmem [shape: bf16[2,16,16,128], index: 3, kind: output, shape index: {}]
  %s4 = sld [smem:[#allocation0]]
  $region45: #{repvgg_block_5x5.1} parent=0
    _
  %s6 = ssub.s32 1, %s4
  %s7 = scalar_select 0, %s6, %s4
  loop: start=0, step=1, limit=4
  $region2: #{repvgg_block_5x5.1} parent=0 // loop_pre_header
    _
  $region3: #{repvgg_block_5x5.1} parent=0 // loop_header
    %s9 = sphi 0, %s13
    %p10 = scmp.ge.s32.totalorder %s9, 4
    %s16 = sphi 0, %s28
    %s17 = sphi 0, %s24
    %s18 = sphi 0, %s16
    %s19 = sphi 0, %s17
    %s20 = sphi 0, %s18
    %s21 = sphi 0, %s19
    %s31 = sphi 0, %s33
    %s34 = sphi 0, %s31
    %s35 = sphi 0, %s34
    %s51 = sphi 0, %s35
    %s57 = sphi 0, %s59
    %s60 = sphi 0, %s57
    %s61 = sphi 0, %s60
    %s77 = sphi 0, %s61
    %s83 = sphi 0, %s85
    %s86 = sphi 0, %s83
    %s87 = sphi 0, %s86
    %s103 = sphi 0, %s87
    %s111 = sphi 0, %s113
    %s114 = sphi 0, %s111
    %s115 = sphi 0, %s114
    %s131 = sphi 0, %s115
  $region4: #{repvgg_block_5x5.1} parent=0 // loop_header_branch
    %12 = sbr.rel (%p10) target = $region8
  $region5: #{repvgg_block_5x5.1} parent=0 // loop_body
    %s14 = ssub.s32 %s9, 1
    %s15 = ssub.s32 %s9, 2
    %s22 = sadd.s32 1, %s17
    %p23 = scmp.ge.s32.totalorder %s22, 1
    %s24 = scalar_select %p23, 0, %s22
    %s25 = sadd.s32 1, %s16
    %s26 = scalar_select %p23, %s25, %s16
    %p27 = scmp.ge.s32.totalorder %s26, 2
    %s28 = scalar_select %p27, 0, %s26
    %s29 = ssub.s32 %s16, %s28
    %p30 = scmp.eq.s32.totalorder %s29, 0
    %s32 = sadd.s32 %s31, 1
    %s33 = scalar_select %p30, %s31, %s32
    %p36 = pneg %p30
    %p37 = scmp.eq.s32.totalorder %s9, 1
    %p38 = por %p36, %p37
    %p39 = scmp.ne.s32.totalorder %s31, %s34
    %p40 = scmp.eq.s32.totalorder %s9, 0
    %p41 = por %p39, %p40
    %p42 = scmp.ne.s32.totalorder %s31, %s34
    %p43 = scmp.eq.s32.totalorder %s14, 1
    %p44 = por %p42, %p43
    %p45 = scmp.ne.s32.totalorder %s34, %s35
    %p46 = scmp.eq.s32.totalorder %s14, 0
    %p47 = por %p45, %p46
    %p48 = scmp.ne.s32.totalorder %s34, %s35
    %p49 = scmp.eq.s32.totalorder %s15, 1
    %p50 = por %p48, %p49
    %p52 = scmp.ne.s32.totalorder %s35, %s51
    %p53 = scmp.eq.s32.totalorder %s15, 0
    %p54 = por %p52, %p53
    %s55 = ssub.s32 %s17, %s24
    %p56 = scmp.eq.s32.totalorder %s55, 0
    %s58 = sadd.s32 %s57, 1
    %s59 = scalar_select %p56, %s57, %s58
    %p62 = pneg %p56
    %p63 = scmp.eq.s32.totalorder %s9, 1
    %p64 = por %p62, %p63
    %p65 = scmp.ne.s32.totalorder %s57, %s60
    %p66 = scmp.eq.s32.totalorder %s9, 0
    %p67 = por %p65, %p66
    %p68 = scmp.ne.s32.totalorder %s57, %s60
    %p69 = scmp.eq.s32.totalorder %s14, 1
    %p70 = por %p68, %p69
    %p71 = scmp.ne.s32.totalorder %s60, %s61
    %p72 = scmp.eq.s32.totalorder %s14, 0
    %p73 = por %p71, %p72
    %p74 = scmp.ne.s32.totalorder %s60, %s61
    %p75 = scmp.eq.s32.totalorder %s15, 1
    %p76 = por %p74, %p75
    %p78 = scmp.ne.s32.totalorder %s61, %s77
    %p79 = scmp.eq.s32.totalorder %s15, 0
    %p80 = por %p78, %p79
    %s81 = ssub.s32 %s17, %s24
    %p82 = scmp.eq.s32.totalorder %s81, 0
    %s84 = sadd.s32 %s83, 1
    %s85 = scalar_select %p82, %s83, %s84
    %p88 = pneg %p82
    %p89 = scmp.eq.s32.totalorder %s9, 1
    %p90 = por %p88, %p89
    %p91 = scmp.ne.s32.totalorder %s83, %s86
    %p92 = scmp.eq.s32.totalorder %s9, 0
    %p93 = por %p91, %p92
    %p94 = scmp.ne.s32.totalorder %s83, %s86
    %p95 = scmp.eq.s32.totalorder %s14, 1
    %p96 = por %p94, %p95
    %p97 = scmp.ne.s32.totalorder %s86, %s87
    %p98 = scmp.eq.s32.totalorder %s14, 0
    %p99 = por %p97, %p98
    %p100 = scmp.ne.s32.totalorder %s86, %s87
    %p101 = scmp.eq.s32.totalorder %s15, 1
    %p102 = por %p100, %p101
    %p104 = scmp.ne.s32.totalorder %s87, %s103
    %p105 = scmp.eq.s32.totalorder %s15, 0
    %p106 = por %p104, %p105
    %s107 = ssub.s32 %s16, %s28
    %s108 = ssub.s32 %s17, %s24
    %s109 = sor.u32 %s107, %s108
    %p110 = scmp.eq.s32.totalorder %s109, 0
    %s112 = sadd.s32 %s111, 1
    %s113 = scalar_select %p110, %s111, %s112
    %p116 = pneg %p110
    %p117 = scmp.eq.s32.totalorder %s9, 1
    %p118 = por %p116, %p117
    %p119 = scmp.ne.s32.totalorder %s111, %s114
    %p120 = scmp.eq.s32.totalorder %s9, 0
    %p121 = por %p119, %p120
    %p122 = scmp.ne.s32.totalorder %s111, %s114
    %p123 = scmp.eq.s32.totalorder %s14, 1
    %p124 = por %p122, %p123
    %p125 = scmp.ne.s32.totalorder %s114, %s115
    %p126 = scmp.eq.s32.totalorder %s14, 0
    %p127 = por %p125, %p126
    %p128 = scmp.ne.s32.totalorder %s114, %s115
    %p129 = scmp.eq.s32.totalorder %s15, 1
    %p130 = por %p128, %p129
    %p132 = scmp.ne.s32.totalorder %s115, %s131
    %p133 = scmp.eq.s32.totalorder %s15, 0
    %p134 = por %p132, %p133
    %p135 = scmp.le.s32.totalorder 1, %s9
    %p136 = scmp.lt.s32.totalorder %s9, 3
    %p137 = pnand %p135, %p136
    %p138 = pneg %p137
    // Predicated region
    $region9: #{repvgg_block_5x5.1} parent=5 // pred_check
      _
    $region10: #{repvgg_block_5x5.1} parent=5 // pred_check_branch
      %140 = sbr.rel (%p137) target = $region12
    $region11: #{repvgg_block_5x5.1} parent=5 // pred_region
      %s141 = ssub.s32 %s9, 1
      // Predicated region
      $region13: #{repvgg_block_5x5.1} parent=11 // pred_check
        %p142 = pneg %p73
      $region14: #{repvgg_block_5x5.1} parent=11 // pred_check_branch
        %144 = sbr.rel (%p142) target = $region16
      $region15: #{repvgg_block_5x5.1} parent=11 // pred_region
        %p145 = scmp.lt.s32.totalorder %s19, 0
        %s146 = scalar_select %p145, %s19, 0
        %s147 = smul.addr %s146, 4
        %s148 = scalar_lea.vmem %s1, %s147
      $region16: #{repvgg_block_5x5.1} parent=11 // pred_fallthru
        _
      // Predicated region
      $region17: #{repvgg_block_5x5.1} parent=11 // pred_check
        %p149 = pneg %p99
      $region18: #{repvgg_block_5x5.1} parent=11 // pred_check_branch
        %151 = sbr.rel (%p149) target = $region20
      $region19: #{repvgg_block_5x5.1} parent=11 // pred_region
        %p152 = scmp.lt.s32.totalorder %s19, 0
        %s153 = scalar_select %p152, %s19, 0
        %s154 = scalar_lea.vmem %s2, %s153
      $region20: #{repvgg_block_5x5.1} parent=11 // pred_fallthru
        _
    $region12: #{repvgg_block_5x5.1} parent=5 // pred_fallthru
      _
    %p155 = scmp.lt.s32.totalorder %s9, 2
    // Predicated region
    $region21: #{repvgg_block_5x5.1} parent=5 // pred_check
      %p156 = pneg %p155
    $region22: #{repvgg_block_5x5.1} parent=5 // pred_check_branch
      %158 = sbr.rel (%p156) target = $region24
    $region23: #{repvgg_block_5x5.1} parent=5 // pred_region
      // Predicated region
      $region25: #{repvgg_block_5x5.1} parent=23 // pred_check
        %p159 = pneg %p41
      $region26: #{repvgg_block_5x5.1} parent=23 // pred_check_branch
        %161 = sbr.rel (%p159) target = $region28
      $region27: #{repvgg_block_5x5.1} parent=23 // pred_region
        %p162 = scmp.lt.s32.totalorder %s16, 1
        %s163 = scalar_select %p162, %s16, 1
        %s164 = smul.addr %s163, 60
        %s165 = smul.addr %s164, 4
        %s166 = scalar_lea.vmem %s0, %s165
      $region28: #{repvgg_block_5x5.1} parent=23 // pred_fallthru
        _
    $region24: #{repvgg_block_5x5.1} parent=5 // pred_fallthru
      _
    %p167 = scmp.le.s32.totalorder 1, %s9
    %p168 = scmp.lt.s32.totalorder %s9, 3
    %p169 = pnand %p167, %p168
    %p170 = pneg %p169
    // Predicated region
    $region29: #{repvgg_block_5x5.1} parent=5 // pred_check
      _
    $region30: #{repvgg_block_5x5.1} parent=5 // pred_check_branch
      %172 = sbr.rel (%p169) target = $region32
    $region31: #{repvgg_block_5x5.1} parent=5 // pred_region
      %s173 = ssub.s32 %s9, 1
      %p174 = scmp.lt.s32.totalorder %s18, 1
      %s175 = scalar_select %p174, %s18, 1
      %s176 = smul.addr %s175, 60
      %s177 = smul.addr %s176, 4
      %s178 = scalar_lea.vmem %s0, %s177
      %p179 = pneg %p47
      %p180 = pneg %p44
      %p181 = scmp.lt.s32.totalorder %s19, 0
      %s182 = scalar_select %p181, %s19, 0
      %s183 = smul.addr %s182, 4
      %s184 = scalar_lea.vmem %s1, %s183
      %p185 = pneg %p73
      %p186 = pneg %p70
      %p187 = scmp.lt.s32.totalorder %s19, 0
      %s188 = scalar_select %p187, %s19, 0
      %s189 = scalar_lea.vmem %s2, %s188
      %p190 = pneg %p99
      %p191 = pneg %p96
      %p192 = pneg %p127
      %p193 = pneg %p124
      %p194 = scmp.lt.s32.totalorder %s18, 1
      %s195 = scalar_select %p194, %s18, 1
      %p196 = scmp.lt.s32.totalorder %s19, 0
      %s197 = scalar_select %p196, %s19, 0
      %s198 = smul.addr %s195, 32
      %s199 = sadd.s32 %s197, %s198
      %s200 = smul.addr %s199, 4
      %s201 = scalar_lea.vmem %s3, %s200
      %p202 = scmp.lt.s32.totalorder %s18, 1
      %s203 = scalar_select %p202, %s18, 1
      %s204 = smul.addr %s203, 60
      %s205 = smul.addr %s204, 4
      %s206 = scalar_lea.vmem %s0, %s205
      %p207 = scmp.lt.s32.totalorder %s19, 0
      %s208 = scalar_select %p207, %s19, 0
      %s209 = smul.addr %s208, 4
      %s210 = scalar_lea.vmem %s1, %s209
      %p211 = scmp.lt.s32.totalorder %s19, 0
      %s212 = scalar_select %p211, %s19, 0
      %s213 = scalar_lea.vmem %s2, %s212
      %p214 = scmp.lt.s32.totalorder %s18, 1
      %s215 = scalar_select %p214, %s18, 1
      %p216 = scmp.lt.s32.totalorder %s19, 0
      %s217 = scalar_select %p216, %s19, 0
      %s218 = smul.addr %s215, 32
      %s219 = sadd.s32 %s217, %s218
      %s220 = smul.addr %s219, 4
      %s221 = scalar_lea.vmem %s3, %s220
      %v223 = vld [vmem:[%s206] sm:$0xf]
      %v224 = vld [vmem:[%s206 + $0x4] sm:$0xf]
      %v225 = vld [vmem:[%s206 + $0xc] sm:$0xf]
      %v226 = vld [vmem:[%s206 + $0x10] sm:$0xf]
      %v227 = vld [vmem:[%s206 + $0x18] sm:$0xf]
      %v228 = vld [vmem:[%s206 + $0x1c] sm:$0xf]
      %v229 = vld [vmem:[%s206 + $0x24] sm:$0xf]
      %v230 = vld [vmem:[%s206 + $0x28] sm:$0xf]
      %v231 = vld [vmem:[%s206 + $0x30] sm:$0xf]
      %v232 = vld [vmem:[%s206 + $0x34] sm:$0xf]
      %v233 = vld [vmem:[%s206 + $0x3c] sm:$0xf]
      %v234 = vld [vmem:[%s206 + $0x40] sm:$0xf]
      %v235 = vld [vmem:[%s206 + $0x48] sm:$0xf]
      %v236 = vld [vmem:[%s206 + $0x4c] sm:$0xf]
      %v237 = vld [vmem:[%s206 + $0x54] sm:$0xf]
      %v238 = vld [vmem:[%s206 + $0x58] sm:$0xf]
      %v239 = vld [vmem:[%s206 + $0x60] sm:$0xf]
      %v240 = vld [vmem:[%s206 + $0x64] sm:$0xf]
      %v241 = vld [vmem:[%s206 + $0x6c] sm:$0xf]
      %v242 = vld [vmem:[%s206 + $0x70] sm:$0xf]
      %v243 = vld [vmem:[%s206 + $0x78] sm:$0xf]
      %v244 = vld [vmem:[%s206 + $0x7c] sm:$0xf]
      %v245 = vld [vmem:[%s206 + $0x84] sm:$0xf]
      %v246 = vld [vmem:[%s206 + $0x88] sm:$0xf]
      %v247 = vld [vmem:[%s206 + $0x90] sm:$0xf]
      %v248 = vld [vmem:[%s206 + $0x94] sm:$0xf]
      %v249 = vld [vmem:[%s206 + $0x9c] sm:$0xf]
      %v250 = vld [vmem:[%s206 + $0xa0] sm:$0xf]
      %v251 = vld [vmem:[%s206 + $0xa8] sm:$0xf]
      %v252 = vld [vmem:[%s206 + $0xac] sm:$0xf]
      %v253 = vld [vmem:[%s206 + $0xb4] sm:$0xf]
      %v254 = vld [vmem:[%s206 + $0xb8] sm:$0xf]
      %v287 = vunpack.c.l.b16 %v223
      %v288 = vunpack.c.l.b16 %v224
      %v289 = vunpack.c.l.b16 %v225
      %v290 = vunpack.c.l.b16 %v226
      %v291 = vunpack.c.l.b16 %v227
      %v292 = vunpack.c.l.b16 %v228
      %v293 = vunpack.c.l.b16 %v229
      %v294 = vunpack.c.l.b16 %v230
      %v295 = vunpack.c.l.b16 %v231
      %v296 = vunpack.c.l.b16 %v232
      %v297 = vunpack.c.l.b16 %v233
      %v298 = vunpack.c.l.b16 %v234
      %v299 = vunpack.c.l.b16 %v235
      %v300 = vunpack.c.l.b16 %v236
      %v301 = vunpack.c.l.b16 %v237
      %v302 = vunpack.c.l.b16 %v238
      %v303 = vunpack.c.l.b16 %v239
      %v304 = vunpack.c.l.b16 %v240
      %v305 = vunpack.c.l.b16 %v241
      %v306 = vunpack.c.l.b16 %v242
      %v307 = vunpack.c.l.b16 %v243
      %v308 = vunpack.c.l.b16 %v244
      %v309 = vunpack.c.l.b16 %v245
      %v310 = vunpack.c.l.b16 %v246
      %v311 = vunpack.c.l.b16 %v247
      %v312 = vunpack.c.l.b16 %v248
      %v313 = vunpack.c.l.b16 %v249
      %v314 = vunpack.c.l.b16 %v250
      %v315 = vunpack.c.l.b16 %v251
      %v316 = vunpack.c.l.b16 %v252
      %v317 = vunpack.c.l.b16 %v253
      %v318 = vunpack.c.l.b16 %v254
      %v319 = vpack.c.b16 %v288, %v287
      %v320 = vpack.c.b16 %v290, %v289
      %v321 = vpack.c.b16 %v292, %v291
      %v322 = vpack.c.b16 %v294, %v293
      %v323 = vpack.c.b16 %v296, %v295
      %v324 = vpack.c.b16 %v298, %v297
      %v325 = vpack.c.b16 %v300, %v299
      %v326 = vpack.c.b16 %v302, %v301
      %v327 = vpack.c.b16 %v304, %v303
      %v328 = vpack.c.b16 %v306, %v305
      %v329 = vpack.c.b16 %v308, %v307
      %v330 = vpack.c.b16 %v310, %v309
      %v331 = vpack.c.b16 %v312, %v311
      %v332 = vpack.c.b16 %v314, %v313
      %v333 = vpack.c.b16 %v316, %v315
      %v334 = vpack.c.b16 %v318, %v317
      %vm351 = vcmask 31744
      %352 = vst.msk [vmem:[#allocation2] sm:$0xff] %vm351, %v319
      %353 = vst.msk [vmem:[#allocation2 + $0x8] sm:$0xff] %vm351, %v320
      %354 = vst.msk [vmem:[#allocation2 + $0x10] sm:$0xff] %vm351, %v321
      %355 = vst.msk [vmem:[#allocation2 + $0x18] sm:$0xff] %vm351, %v322
      %356 = vst.msk [vmem:[#allocation2 + $0x20] sm:$0xff] %vm351, %v323
      %357 = vst.msk [vmem:[#allocation2 + $0x28] sm:$0xff] %vm351, %v324
      %358 = vst.msk [vmem:[#allocation2 + $0x30] sm:$0xff] %vm351, %v325
      %359 = vst.msk [vmem:[#allocation2 + $0x38] sm:$0xff] %vm351, %v326
      %360 = vst.msk [vmem:[#allocation2 + $0x40] sm:$0xff] %vm351, %v327
      %361 = vst.msk [vmem:[#allocation2 + $0x48] sm:$0xff] %vm351, %v328
      %362 = vst.msk [vmem:[#allocation2 + $0x50] sm:$0xff] %vm351, %v329
      %363 = vst.msk [vmem:[#allocation2 + $0x58] sm:$0xff] %vm351, %v330
      %364 = vst.msk [vmem:[#allocation2 + $0x60] sm:$0xff] %vm351, %v331
      %365 = vst.msk [vmem:[#allocation2 + $0x68] sm:$0xff] %vm351, %v332
      %366 = vst.msk [vmem:[#allocation2 + $0x70] sm:$0xff] %vm351, %v333
      %367 = vst.msk [vmem:[#allocation2 + $0x78] sm:$0xff] %vm351, %v334
      %v368 = vld [vmem:[%s206] sm:$0xf]
      %v369 = vld [vmem:[%s206 + $0x4] sm:$0xf]
      %v370 = vld [vmem:[%s206 + $0x8] sm:$0x1]
      %v371 = vld [vmem:[%s206 + $0xc] sm:$0xf]
      %v372 = vld [vmem:[%s206 + $0x10] sm:$0xf]
      %v373 = vld [vmem:[%s206 + $0x14] sm:$0x1]
      %v374 = vld [vmem:[%s206 + $0x18] sm:$0xf]
      %v375 = vld [vmem:[%s206 + $0x1c] sm:$0xf]
      %v376 = vld [vmem:[%s206 + $0x20] sm:$0x1]
      %v377 = vld [vmem:[%s206 + $0x24] sm:$0xf]
      %v378 = vld [vmem:[%s206 + $0x28] sm:$0xf]
      %v379 = vld [vmem:[%s206 + $0x2c] sm:$0x1]
      %v380 = vld [vmem:[%s206 + $0x30] sm:$0xf]
      %v381 = vld [vmem:[%s206 + $0x34] sm:$0xf]
      %v382 = vld [vmem:[%s206 + $0x38] sm:$0x1]
      %v383 = vld [vmem:[%s206 + $0x3c] sm:$0xf]
      %v384 = vld [vmem:[%s206 + $0x40] sm:$0xf]
      %v385 = vld [vmem:[%s206 + $0x44] sm:$0x1]
      %v386 = vld [vmem:[%s206 + $0x48] sm:$0xf]
      %v387 = vld [vmem:[%s206 + $0x4c] sm:$0xf]
      %v388 = vld [vmem:[%s206 + $0x50] sm:$0x1]
      %v389 = vld [vmem:[%s206 + $0x54] sm:$0xf]
      %v390 = vld [vmem:[%s206 + $0x58] sm:$0xf]
      %v391 = vld [vmem:[%s206 + $0x5c] sm:$0x1]
      %v392 = vld [vmem:[%s206 + $0x60] sm:$0xf]
      %v393 = vld [vmem:[%s206 + $0x64] sm:$0xf]
      %v394 = vld [vmem:[%s206 + $0x68] sm:$0x1]
      %v395 = vld [vmem:[%s206 + $0x6c] sm:$0xf]
      %v396 = vld [vmem:[%s206 + $0x70] sm:$0xf]
      %v397 = vld [vmem:[%s206 + $0x74] sm:$0x1]
      %v398 = vld [vmem:[%s206 + $0x78] sm:$0xf]
      %v399 = vld [vmem:[%s206 + $0x7c] sm:$0xf]
      %v400 = vld [vmem:[%s206 + $0x80] sm:$0x1]
      %v401 = vld [vmem:[%s206 + $0x84] sm:$0xf]
      %v402 = vld [vmem:[%s206 + $0x88] sm:$0xf]
      %v403 = vld [vmem:[%s206 + $0x8c] sm:$0x1]
      %v404 = vld [vmem:[%s206 + $0x90] sm:$0xf]
      %v405 = vld [vmem:[%s206 + $0x94] sm:$0xf]
      %v406 = vld [vmem:[%s206 + $0x98] sm:$0x1]
      %v407 = vld [vmem:[%s206 + $0x9c] sm:$0xf]
      %v408 = vld [vmem:[%s206 + $0xa0] sm:$0xf]
      %v409 = vld [vmem:[%s206 + $0xa4] sm:$0x1]
      %v410 = vld [vmem:[%s206 + $0xa8] sm:$0xf]
      %v411 = vld [vmem:[%s206 + $0xac] sm:$0xf]
      %v412 = vld [vmem:[%s206 + $0xb0] sm:$0x1]
      %v413 = vld [vmem:[%s206 + $0xb4] sm:$0xf]
      %v414 = vld [vmem:[%s206 + $0xb8] sm:$0xf]
      %v415 = vld [vmem:[%s206 + $0xbc] sm:$0x1]
      %vm416 = vsmask.f32 3328
      %vm417 = vsmask.f32 7440
      %vm418 = vmor %vm416, %vm417
      %v420 = vshrl.u32 %v368, 16
      %v422 = vrot.slane %v420, 4
      %v423 = vshll.u32 %v368, 16
      %v425 = vrot.slane %v423, 5
      %v426 = vor.u32 %v422, %v425
      %v427 = vrot.slane %v426, 4
      %v429 = vshll.u32 %v369, 16
      %v431 = vrot.slane %v429, 5
      %v432 = vsel %vm418, %v427, %v431
      %v433 = vshrl.u32 %v369, 16
      %v435 = vrot.slane %v433, 4
      %v436 = vor.u32 %v435, %v431
      %v437 = vrot.slane %v436, 4
      %v439 = vshll.u32 %v370, 16
      %v441 = vrot.slane %v439, 5
      %v442 = vsel %vm418, %v437, %v441
      %v444 = vshrl.u32 %v371, 16
      %v446 = vrot.slane %v444, 4
      %v447 = vshll.u32 %v371, 16
      %v449 = vrot.slane %v447, 5
      %v450 = vor.u32 %v446, %v449
      %v451 = vrot.slane %v450, 4
      %v453 = vshll.u32 %v372, 16
      %v455 = vrot.slane %v453, 5
      %v456 = vsel %vm418, %v451, %v455
      %v457 = vshrl.u32 %v372, 16
      %v459 = vrot.slane %v457, 4
      %v460 = vor.u32 %v459, %v455
      %v461 = vrot.slane %v460, 4
      %v463 = vshll.u32 %v373, 16
      %v465 = vrot.slane %v463, 5
      %v466 = vsel %vm418, %v461, %v465
      %v468 = vshrl.u32 %v374, 16
      %v470 = vrot.slane %v468, 4
      %v471 = vshll.u32 %v374, 16
      %v473 = vrot.slane %v471, 5
      %v474 = vor.u32 %v470, %v473
      %v475 = vrot.slane %v474, 4
      %v477 = vshll.u32 %v375, 16
      %v479 = vrot.slane %v477, 5
      %v480 = vsel %vm418, %v475, %v479
      %v481 = vshrl.u32 %v375, 16
      %v483 = vrot.slane %v481, 4
      %v484 = vor.u32 %v483, %v479
      %v485 = vrot.slane %v484, 4
      %v487 = vshll.u32 %v376, 16
      %v489 = vrot.slane %v487, 5
      %v490 = vsel %vm418, %v485, %v489
      %v492 = vshrl.u32 %v377, 16
      %v494 = vrot.slane %v492, 4
      %v495 = vshll.u32 %v377, 16
      %v497 = vrot.slane %v495, 5
      %v498 = vor.u32 %v494, %v497
      %v499 = vrot.slane %v498, 4
      %v501 = vshll.u32 %v378, 16
      %v503 = vrot.slane %v501, 5
      %v504 = vsel %vm418, %v499, %v503
      %v505 = vshrl.u32 %v378, 16
      %v507 = vrot.slane %v505, 4
      %v508 = vor.u32 %v507, %v503
      %v509 = vrot.slane %v508, 4
      %v511 = vshll.u32 %v379, 16
      %v513 = vrot.slane %v511, 5
      %v514 = vsel %vm418, %v509, %v513
      %v516 = vshrl.u32 %v380, 16
      %v518 = vrot.slane %v516, 4
      %v519 = vshll.u32 %v380, 16
      %v521 = vrot.slane %v519, 5
      %v522 = vor.u32 %v518, %v521
      %v523 = vrot.slane %v522, 4
      %v525 = vshll.u32 %v381, 16
      %v527 = vrot.slane %v525, 5
      %v528 = vsel %vm418, %v523, %v527
      %v529 = vshrl.u32 %v381, 16
      %v531 = vrot.slane %v529, 4
      %v532 = vor.u32 %v531, %v527
      %v533 = vrot.slane %v532, 4
      %v535 = vshll.u32 %v382, 16
      %v537 = vrot.slane %v535, 5
      %v538 = vsel %vm418, %v533, %v537
      %v540 = vshrl.u32 %v383, 16
      %v542 = vrot.slane %v540, 4
      %v543 = vshll.u32 %v383, 16
      %v545 = vrot.slane %v543, 5
      %v546 = vor.u32 %v542, %v545
      %v547 = vrot.slane %v546, 4
      %v549 = vshll.u32 %v384, 16
      %v551 = vrot.slane %v549, 5
      %v552 = vsel %vm418, %v547, %v551
      %v553 = vshrl.u32 %v384, 16
      %v555 = vrot.slane %v553, 4
      %v556 = vor.u32 %v555, %v551
      %v557 = vrot.slane %v556, 4
      %v559 = vshll.u32 %v385, 16
      %v561 = vrot.slane %v559, 5
      %v562 = vsel %vm418, %v557, %v561
      %v564 = vshrl.u32 %v386, 16
      %v566 = vrot.slane %v564, 4
      %v567 = vshll.u32 %v386, 16
      %v569 = vrot.slane %v567, 5
      %v570 = vor.u32 %v566, %v569
      %v571 = vrot.slane %v570, 4
      %v573 = vshll.u32 %v387, 16
      %v575 = vrot.slane %v573, 5
      %v576 = vsel %vm418, %v571, %v575
      %v577 = vshrl.u32 %v387, 16
      %v579 = vrot.slane %v577, 4
      %v580 = vor.u32 %v579, %v575
      %v581 = vrot.slane %v580, 4
      %v583 = vshll.u32 %v388, 16
      %v585 = vrot.slane %v583, 5
      %v586 = vsel %vm418, %v581, %v585
      %v588 = vshrl.u32 %v389, 16
      %v590 = vrot.slane %v588, 4
      %v591 = vshll.u32 %v389, 16
      %v593 = vrot.slane %v591, 5
      %v594 = vor.u32 %v590, %v593
      %v595 = vrot.slane %v594, 4
      %v597 = vshll.u32 %v390, 16
      %v599 = vrot.slane %v597, 5
      %v600 = vsel %vm418, %v595, %v599
      %v601 = vshrl.u32 %v390, 16
      %v603 = vrot.slane %v601, 4
      %v604 = vor.u32 %v603, %v599
      %v605 = vrot.slane %v604, 4
      %v607 = vshll.u32 %v391, 16
      %v609 = vrot.slane %v607, 5
      %v610 = vsel %vm418, %v605, %v609
      %v612 = vshrl.u32 %v392, 16
      %v614 = vrot.slane %v612, 4
      %v615 = vshll.u32 %v392, 16
      %v617 = vrot.slane %v615, 5
      %v618 = vor.u32 %v614, %v617
      %v619 = vrot.slane %v618, 4
      %v621 = vshll.u32 %v393, 16
      %v623 = vrot.slane %v621, 5
      %v624 = vsel %vm418, %v619, %v623
      %v625 = vshrl.u32 %v393, 16
      %v627 = vrot.slane %v625, 4
      %v628 = vor.u32 %v627, %v623
      %v629 = vrot.slane %v628, 4
      %v631 = vshll.u32 %v394, 16
      %v633 = vrot.slane %v631, 5
      %v634 = vsel %vm418, %v629, %v633
      %v636 = vshrl.u32 %v395, 16
      %v638 = vrot.slane %v636, 4
      %v639 = vshll.u32 %v395, 16
      %v641 = vrot.slane %v639, 5
      %v642 = vor.u32 %v638, %v641
      %v643 = vrot.slane %v642, 4
      %v645 = vshll.u32 %v396, 16
      %v647 = vrot.slane %v645, 5
      %v648 = vsel %vm418, %v643, %v647
      %v649 = vshrl.u32 %v396, 16
      %v651 = vrot.slane %v649, 4
      %v652 = vor.u32 %v651, %v647
      %v653 = vrot.slane %v652, 4
      %v655 = vshll.u32 %v397, 16
      %v657 = vrot.slane %v655, 5
      %v658 = vsel %vm418, %v653, %v657
      %v660 = vshrl.u32 %v398, 16
      %v662 = vrot.slane %v660, 4
      %v663 = vshll.u32 %v398, 16
      %v665 = vrot.slane %v663, 5
      %v666 = vor.u32 %v662, %v665
      %v667 = vrot.slane %v666, 4
      %v669 = vshll.u32 %v399, 16
      %v671 = vrot.slane %v669, 5
      %v672 = vsel %vm418, %v667, %v671
      %v673 = vshrl.u32 %v399, 16
      %v675 = vrot.slane %v673, 4
      %v676 = vor.u32 %v675, %v671
      %v677 = vrot.slane %v676, 4
      %v679 = vshll.u32 %v400, 16
      %v681 = vrot.slane %v679, 5
      %v682 = vsel %vm418, %v677, %v681
      %v684 = vshrl.u32 %v401, 16
      %v686 = vrot.slane %v684, 4
      %v687 = vshll.u32 %v401, 16
      %v689 = vrot.slane %v687, 5
      %v690 = vor.u32 %v686, %v689
      %v691 = vrot.slane %v690, 4
      %v693 = vshll.u32 %v402, 16
      %v695 = vrot.slane %v693, 5
      %v696 = vsel %vm418, %v691, %v695
      %v697 = vshrl.u32 %v402, 16
      %v699 = vrot.slane %v697, 4
      %v700 = vor.u32 %v699, %v695
      %v701 = vrot.slane %v700, 4
      %v703 = vshll.u32 %v403, 16
      %v705 = vrot.slane %v703, 5
      %v706 = vsel %vm418, %v701, %v705
      %v708 = vshrl.u32 %v404, 16
      %v710 = vrot.slane %v708, 4
      %v711 = vshll.u32 %v404, 16
      %v713 = vrot.slane %v711, 5
      %v714 = vor.u32 %v710, %v713
      %v715 = vrot.slane %v714, 4
      %v717 = vshll.u32 %v405, 16
      %v719 = vrot.slane %v717, 5
      %v720 = vsel %vm418, %v715, %v719
      %v721 = vshrl.u32 %v405, 16
      %v723 = vrot.slane %v721, 4
      %v724 = vor.u32 %v723, %v719
      %v725 = vrot.slane %v724, 4
      %v727 = vshll.u32 %v406, 16
      %v729 = vrot.slane %v727, 5
      %v730 = vsel %vm418, %v725, %v729
      %v732 = vshrl.u32 %v407, 16
      %v734 = vrot.slane %v732, 4
      %v735 = vshll.u32 %v407, 16
      %v737 = vrot.slane %v735, 5
      %v738 = vor.u32 %v734, %v737
      %v739 = vrot.slane %v738, 4
      %v741 = vshll.u32 %v408, 16
      %v743 = vrot.slane %v741, 5
      %v744 = vsel %vm418, %v739, %v743
      %v745 = vshrl.u32 %v408, 16
      %v747 = vrot.slane %v745, 4
      %v748 = vor.u32 %v747, %v743
      %v749 = vrot.slane %v748, 4
      %v751 = vshll.u32 %v409, 16
      %v753 = vrot.slane %v751, 5
      %v754 = vsel %vm418, %v749, %v753
      %v756 = vshrl.u32 %v410, 16
      %v758 = vrot.slane %v756, 4
      %v759 = vshll.u32 %v410, 16
      %v761 = vrot.slane %v759, 5
      %v762 = vor.u32 %v758, %v761
      %v763 = vrot.slane %v762, 4
      %v765 = vshll.u32 %v411, 16
      %v767 = vrot.slane %v765, 5
      %v768 = vsel %vm418, %v763, %v767
      %v769 = vshrl.u32 %v411, 16
      %v771 = vrot.slane %v769, 4
      %v772 = vor.u32 %v771, %v767
      %v773 = vrot.slane %v772, 4
      %v775 = vshll.u32 %v412, 16
      %v777 = vrot.slane %v775, 5
      %v778 = vsel %vm418, %v773, %v777
      %v780 = vshrl.u32 %v413, 16
      %v782 = vrot.slane %v780, 4
      %v783 = vshll.u32 %v413, 16
      %v785 = vrot.slane %v783, 5
      %v786 = vor.u32 %v782, %v785
      %v787 = vrot.slane %v786, 4
      %v789 = vshll.u32 %v414, 16
      %v791 = vrot.slane %v789, 5
      %v792 = vsel %vm418, %v787, %v791
      %v793 = vshrl.u32 %v414, 16
      %v795 = vrot.slane %v793, 4
      %v796 = vor.u32 %v795, %v791
      %v797 = vrot.slane %v796, 4
      %v799 = vshll.u32 %v415, 16
      %v801 = vrot.slane %v799, 5
      %v802 = vsel %vm418, %v797, %v801
      %v803 = vunpack.c.l.b16 %v432
      %v804 = vunpack.c.l.b16 %v442
      %v805 = vunpack.c.l.b16 %v456
      %v806 = vunpack.c.l.b16 %v466
      %v807 = vunpack.c.l.b16 %v480
      %v808 = vunpack.c.l.b16 %v490
      %v809 = vunpack.c.l.b16 %v504
      %v810 = vunpack.c.l.b16 %v514
      %v811 = vunpack.c.l.b16 %v528
      %v812 = vunpack.c.l.b16 %v538
      %v813 = vunpack.c.l.b16 %v552
      %v814 = vunpack.c.l.b16 %v562
      %v815 = vunpack.c.l.b16 %v576
      %v816 = vunpack.c.l.b16 %v586
      %v817 = vunpack.c.l.b16 %v600
      %v818 = vunpack.c.l.b16 %v610
      %v819 = vunpack.c.l.b16 %v624
      %v820 = vunpack.c.l.b16 %v634
      %v821 = vunpack.c.l.b16 %v648
      %v822 = vunpack.c.l.b16 %v658
      %v823 = vunpack.c.l.b16 %v672
      %v824 = vunpack.c.l.b16 %v682
      %v825 = vunpack.c.l.b16 %v696
      %v826 = vunpack.c.l.b16 %v706
      %v827 = vunpack.c.l.b16 %v720
      %v828 = vunpack.c.l.b16 %v730
      %v829 = vunpack.c.l.b16 %v744
      %v830 = vunpack.c.l.b16 %v754
      %v831 = vunpack.c.l.b16 %v768
      %v832 = vunpack.c.l.b16 %v778
      %v833 = vunpack.c.l.b16 %v792
      %v834 = vunpack.c.l.b16 %v802
      %v835 = vpack.c.b16 %v804, %v803
      %v836 = vpack.c.b16 %v806, %v805
      %v837 = vpack.c.b16 %v808, %v807
      %v838 = vpack.c.b16 %v810, %v809
      %v839 = vpack.c.b16 %v812, %v811
      %v840 = vpack.c.b16 %v814, %v813
      %v841 = vpack.c.b16 %v816, %v815
      %v842 = vpack.c.b16 %v818, %v817
      %v843 = vpack.c.b16 %v820, %v819
      %v844 = vpack.c.b16 %v822, %v821
      %v845 = vpack.c.b16 %v824, %v823
      %v846 = vpack.c.b16 %v826, %v825
      %v847 = vpack.c.b16 %v828, %v827
      %v848 = vpack.c.b16 %v830, %v829
      %v849 = vpack.c.b16 %v832, %v831
      %v850 = vpack.c.b16 %v834, %v833
      %851 = vrot.lane.b32.xlu0 %v835, 4
      %v852 = vpop.permute.xlu0 %851
      %853 = vrot.lane.b32.xlu0 %v836, 4
      %v854 = vpop.permute.xlu0 %853
      %855 = vrot.lane.b32.xlu0 %v837, 4
      %v856 = vpop.permute.xlu0 %855
      %857 = vrot.lane.b32.xlu0 %v838, 4
      %v858 = vpop.permute.xlu0 %857
      %859 = vrot.lane.b32.xlu0 %v839, 4
      %v860 = vpop.permute.xlu0 %859
      %861 = vrot.lane.b32.xlu0 %v840, 4
      %v862 = vpop.permute.xlu0 %861
      %863 = vrot.lane.b32.xlu0 %v841, 4
      %v864 = vpop.permute.xlu0 %863
      %865 = vrot.lane.b32.xlu0 %v842, 4
      %v866 = vpop.permute.xlu0 %865
      %867 = vrot.lane.b32.xlu0 %v843, 4
      %v868 = vpop.permute.xlu0 %867
      %869 = vrot.lane.b32.xlu0 %v844, 4
      %v870 = vpop.permute.xlu0 %869
      %871 = vrot.lane.b32.xlu0 %v845, 4
      %v872 = vpop.permute.xlu0 %871
      %873 = vrot.lane.b32.xlu0 %v846, 4
      %v874 = vpop.permute.xlu0 %873
      %875 = vrot.lane.b32.xlu0 %v847, 4
      %v876 = vpop.permute.xlu0 %875
      %877 = vrot.lane.b32.xlu0 %v848, 4
      %v878 = vpop.permute.xlu0 %877
      %879 = vrot.lane.b32.xlu0 %v849, 4
      %v880 = vpop.permute.xlu0 %879
      %881 = vrot.lane.b32.xlu0 %v850, 4
      %v882 = vpop.permute.xlu0 %881
      %vm899 = vcmask 64544
      %900 = vst.msk [vmem:[#allocation2] sm:$0xff] %vm899, %v852
      %901 = vst.msk [vmem:[#allocation2 + $0x8] sm:$0xff] %vm899, %v854
      %902 = vst.msk [vmem:[#allocation2 + $0x10] sm:$0xff] %vm899, %v856
      %903 = vst.msk [vmem:[#allocation2 + $0x18] sm:$0xff] %vm899, %v858
      %904 = vst.msk [vmem:[#allocation2 + $0x20] sm:$0xff] %vm899, %v860
      %905 = vst.msk [vmem:[#allocation2 + $0x28] sm:$0xff] %vm899, %v862
      %906 = vst.msk [vmem:[#allocation2 + $0x30] sm:$0xff] %vm899, %v864
      %907 = vst.msk [vmem:[#allocation2 + $0x38] sm:$0xff] %vm899, %v866
      %908 = vst.msk [vmem:[#allocation2 + $0x40] sm:$0xff] %vm899, %v868
      %909 = vst.msk [vmem:[#allocation2 + $0x48] sm:$0xff] %vm899, %v870
      %910 = vst.msk [vmem:[#allocation2 + $0x50] sm:$0xff] %vm899, %v872
      %911 = vst.msk [vmem:[#allocation2 + $0x58] sm:$0xff] %vm899, %v874
      %912 = vst.msk [vmem:[#allocation2 + $0x60] sm:$0xff] %vm899, %v876
      %913 = vst.msk [vmem:[#allocation2 + $0x68] sm:$0xff] %vm899, %v878
      %914 = vst.msk [vmem:[#allocation2 + $0x70] sm:$0xff] %vm899, %v880
      %915 = vst.msk [vmem:[#allocation2 + $0x78] sm:$0xff] %vm899, %v882
      %v916 = vld [vmem:[%s206] sm:$0xe]
      %v917 = vld [vmem:[%s206 + $0x4] sm:$0xf]
      %v918 = vld [vmem:[%s206 + $0x8] sm:$0x1]
      %v919 = vld [vmem:[%s206 + $0xc] sm:$0xe]
      %v920 = vld [vmem:[%s206 + $0x10] sm:$0xf]
      %v921 = vld [vmem:[%s206 + $0x14] sm:$0x1]
      %v922 = vld [vmem:[%s206 + $0x18] sm:$0xe]
      %v923 = vld [vmem:[%s206 + $0x1c] sm:$0xf]
      %v924 = vld [vmem:[%s206 + $0x20] sm:$0x1]
      %v925 = vld [vmem:[%s206 + $0x24] sm:$0xe]
      %v926 = vld [vmem:[%s206 + $0x28] sm:$0xf]
      %v927 = vld [vmem:[%s206 + $0x2c] sm:$0x1]
      %v928 = vld [vmem:[%s206 + $0x30] sm:$0xe]
      %v929 = vld [vmem:[%s206 + $0x34] sm:$0xf]
      %v930 = vld [vmem:[%s206 + $0x38] sm:$0x1]
      %v931 = vld [vmem:[%s206 + $0x3c] sm:$0xe]
      %v932 = vld [vmem:[%s206 + $0x40] sm:$0xf]
      %v933 = vld [vmem:[%s206 + $0x44] sm:$0x1]
      %v934 = vld [vmem:[%s206 + $0x48] sm:$0xe]
      %v935 = vld [vmem:[%s206 + $0x4c] sm:$0xf]
      %v936 = vld [vmem:[%s206 + $0x50] sm:$0x1]
      %v937 = vld [vmem:[%s206 + $0x54] sm:$0xe]
      %v938 = vld [vmem:[%s206 + $0x58] sm:$0xf]
      %v939 = vld [vmem:[%s206 + $0x5c] sm:$0x1]
      %v940 = vld [vmem:[%s206 + $0x60] sm:$0xe]
      %v941 = vld [vmem:[%s206 + $0x64] sm:$0xf]
      %v942 = vld [vmem:[%s206 + $0x68] sm:$0x1]
      %v943 = vld [vmem:[%s206 + $0x6c] sm:$0xe]
      %v944 = vld [vmem:[%s206 + $0x70] sm:$0xf]
      %v945 = vld [vmem:[%s206 + $0x74] sm:$0x1]
      %v946 = vld [vmem:[%s206 + $0x78] sm:$0xe]
      %v947 = vld [vmem:[%s206 + $0x7c] sm:$0xf]
      %v948 = vld [vmem:[%s206 + $0x80] sm:$0x1]
      %v949 = vld [vmem:[%s206 + $0x84] sm:$0xe]
      %v950 = vld [vmem:[%s206 + $0x88] sm:$0xf]
      %v951 = vld [vmem:[%s206 + $0x8c] sm:$0x1]
      %v952 = vld [vmem:[%s206 + $0x90] sm:$0xe]
      %v953 = vld [vmem:[%s206 + $0x94] sm:$0xf]
      %v954 = vld [vmem:[%s206 + $0x98] sm:$0x1]
      %v955 = vld [vmem:[%s206 + $0x9c] sm:$0xe]
      %v956 = vld [vmem:[%s206 + $0xa0] sm:$0xf]
      %v957 = vld [vmem:[%s206 + $0xa4] sm:$0x1]
      %v958 = vld [vmem:[%s206 + $0xa8] sm:$0xe]
      %v959 = vld [vmem:[%s206 + $0xac] sm:$0xf]
      %v960 = vld [vmem:[%s206 + $0xb0] sm:$0x1]
      %v961 = vld [vmem:[%s206 + $0xb4] sm:$0xe]
      %v962 = vld [vmem:[%s206 + $0xb8] sm:$0xf]
      %v963 = vld [vmem:[%s206 + $0xbc] sm:$0x1]
      %vm1012 = vcmask 1042432
      %vm1013 = vcmask 1046532
      %vm1014 = vmor %vm1012, %vm1013
      %v1015 = vrot.slane %v916, 5
      %v1016 = vrot.slane %v1015, 4
      %v1017 = vrot.slane %v917, 5
      %v1018 = vsel %vm1014, %v1016, %v1017
      %v1019 = vrot.slane %v1017, 4
      %v1020 = vrot.slane %v918, 5
      %v1021 = vsel %vm1014, %v1019, %v1020
      %v1022 = vrot.slane %v919, 5
      %v1023 = vrot.slane %v1022, 4
      %v1024 = vrot.slane %v920, 5
      %v1025 = vsel %vm1014, %v1023, %v1024
      %v1026 = vrot.slane %v1024, 4
      %v1027 = vrot.slane %v921, 5
      %v1028 = vsel %vm1014, %v1026, %v1027
      %v1029 = vrot.slane %v922, 5
      %v1030 = vrot.slane %v1029, 4
      %v1031 = vrot.slane %v923, 5
      %v1032 = vsel %vm1014, %v1030, %v1031
      %v1033 = vrot.slane %v1031, 4
      %v1034 = vrot.slane %v924, 5
      %v1035 = vsel %vm1014, %v1033, %v1034
      %v1036 = vrot.slane %v925, 5
      %v1037 = vrot.slane %v1036, 4
      %v1038 = vrot.slane %v926, 5
      %v1039 = vsel %vm1014, %v1037, %v1038
      %v1040 = vrot.slane %v1038, 4
      %v1041 = vrot.slane %v927, 5
      %v1042 = vsel %vm1014, %v1040, %v1041
      %v1043 = vrot.slane %v928, 5
      %v1044 = vrot.slane %v1043, 4
      %v1045 = vrot.slane %v929, 5
      %v1046 = vsel %vm1014, %v1044, %v1045
      %v1047 = vrot.slane %v1045, 4
      %v1048 = vrot.slane %v930, 5
      %v1049 = vsel %vm1014, %v1047, %v1048
      %v1050 = vrot.slane %v931, 5
      %v1051 = vrot.slane %v1050, 4
      %v1052 = vrot.slane %v932, 5
      %v1053 = vsel %vm1014, %v1051, %v1052
      %v1054 = vrot.slane %v1052, 4
      %v1055 = vrot.slane %v933, 5
      %v1056 = vsel %vm1014, %v1054, %v1055
      %v1057 = vrot.slane %v934, 5
      %v1058 = vrot.slane %v1057, 4
      %v1059 = vrot.slane %v935, 5
      %v1060 = vsel %vm1014, %v1058, %v1059
      %v1061 = vrot.slane %v1059, 4
      %v1062 = vrot.slane %v936, 5
      %v1063 = vsel %vm1014, %v1061, %v1062
      %v1064 = vrot.slane %v937, 5
      %v1065 = vrot.slane %v1064, 4
      %v1066 = vrot.slane %v938, 5
      %v1067 = vsel %vm1014, %v1065, %v1066
      %v1068 = vrot.slane %v1066, 4
      %v1069 = vrot.slane %v939, 5
      %v1070 = vsel %vm1014, %v1068, %v1069
      %v1071 = vrot.slane %v940, 5
      %v1072 = vrot.slane %v1071, 4
      %v1073 = vrot.slane %v941, 5
      %v1074 = vsel %vm1014, %v1072, %v1073
      %v1075 = vrot.slane %v1073, 4
      %v1076 = vrot.slane %v942, 5
      %v1077 = vsel %vm1014, %v1075, %v1076
      %v1078 = vrot.slane %v943, 5
      %v1079 = vrot.slane %v1078, 4
      %v1080 = vrot.slane %v944, 5
      %v1081 = vsel %vm1014, %v1079, %v1080
      %v1082 = vrot.slane %v1080, 4
      %v1083 = vrot.slane %v945, 5
      %v1084 = vsel %vm1014, %v1082, %v1083
      %v1085 = vrot.slane %v946, 5
      %v1086 = vrot.slane %v1085, 4
      %v1087 = vrot.slane %v947, 5
      %v1088 = vsel %vm1014, %v1086, %v1087
      %v1089 = vrot.slane %v1087, 4
      %v1090 = vrot.slane %v948, 5
      %v1091 = vsel %vm1014, %v1089, %v1090
      %v1092 = vrot.slane %v949, 5
      %v1093 = vrot.slane %v1092, 4
      %v1094 = vrot.slane %v950, 5
      %v1095 = vsel %vm1014, %v1093, %v1094
      %v1096 = vrot.slane %v1094, 4
      %v1097 = vrot.slane %v951, 5
      %v1098 = vsel %vm1014, %v1096, %v1097
      %v1099 = vrot.slane %v952, 5
      %v1100 = vrot.slane %v1099, 4
      %v1101 = vrot.slane %v953, 5
      %v1102 = vsel %vm1014, %v1100, %v1101
      %v1103 = vrot.slane %v1101, 4
      %v1104 = vrot.slane %v954, 5
      %v1105 = vsel %vm1014, %v1103, %v1104
      %v1106 = vrot.slane %v955, 5
      %v1107 = vrot.slane %v1106, 4
      %v1108 = vrot.slane %v956, 5
      %v1109 = vsel %vm1014, %v1107, %v1108
      %v1110 = vrot.slane %v1108, 4
      %v1111 = vrot.slane %v957, 5
      %v1112 = vsel %vm1014, %v1110, %v1111
      %v1113 = vrot.slane %v958, 5
      %v1114 = vrot.slane %v1113, 4
      %v1115 = vrot.slane %v959, 5
      %v1116 = vsel %vm1014, %v1114, %v1115
      %v1117 = vrot.slane %v1115, 4
      %v1118 = vrot.slane %v960, 5
      %v1119 = vsel %vm1014, %v1117, %v1118
      %v1120 = vrot.slane %v961, 5
      %v1121 = vrot.slane %v1120, 4
      %v1122 = vrot.slane %v962, 5
      %v1123 = vsel %vm1014, %v1121, %v1122
      %v1124 = vrot.slane %v1122, 4
      %v1125 = vrot.slane %v963, 5
      %v1126 = vsel %vm1014, %v1124, %v1125
      %v1127 = vunpack.c.l.b16 %v1018
      %v1128 = vunpack.c.l.b16 %v1021
      %v1129 = vunpack.c.l.b16 %v1025
      %v1130 = vunpack.c.l.b16 %v1028
      %v1131 = vunpack.c.l.b16 %v1032
      %v1132 = vunpack.c.l.b16 %v1035
      %v1133 = vunpack.c.l.b16 %v1039
      %v1134 = vunpack.c.l.b16 %v1042
      %v1135 = vunpack.c.l.b16 %v1046
      %v1136 = vunpack.c.l.b16 %v1049
      %v1137 = vunpack.c.l.b16 %v1053
      %v1138 = vunpack.c.l.b16 %v1056
      %v1139 = vunpack.c.l.b16 %v1060
      %v1140 = vunpack.c.l.b16 %v1063
      %v1141 = vunpack.c.l.b16 %v1067
      %v1142 = vunpack.c.l.b16 %v1070
      %v1143 = vunpack.c.l.b16 %v1074
      %v1144 = vunpack.c.l.b16 %v1077
      %v1145 = vunpack.c.l.b16 %v1081
      %v1146 = vunpack.c.l.b16 %v1084
      %v1147 = vunpack.c.l.b16 %v1088
      %v1148 = vunpack.c.l.b16 %v1091
      %v1149 = vunpack.c.l.b16 %v1095
      %v1150 = vunpack.c.l.b16 %v1098
      %v1151 = vunpack.c.l.b16 %v1102
      %v1152 = vunpack.c.l.b16 %v1105
      %v1153 = vunpack.c.l.b16 %v1109
      %v1154 = vunpack.c.l.b16 %v1112
      %v1155 = vunpack.c.l.b16 %v1116
      %v1156 = vunpack.c.l.b16 %v1119
      %v1157 = vunpack.c.l.b16 %v1123
      %v1158 = vunpack.c.l.b16 %v1126
      %v1159 = vpack.c.b16 %v1128, %v1127
      %v1160 = vpack.c.b16 %v1130, %v1129
      %v1161 = vpack.c.b16 %v1132, %v1131
      %v1162 = vpack.c.b16 %v1134, %v1133
      %v1163 = vpack.c.b16 %v1136, %v1135
      %v1164 = vpack.c.b16 %v1138, %v1137
      %v1165 = vpack.c.b16 %v1140, %v1139
      %v1166 = vpack.c.b16 %v1142, %v1141
      %v1167 = vpack.c.b16 %v1144, %v1143
      %v1168 = vpack.c.b16 %v1146, %v1145
      %v1169 = vpack.c.b16 %v1148, %v1147
      %v1170 = vpack.c.b16 %v1150, %v1149
      %v1171 = vpack.c.b16 %v1152, %v1151
      %v1172 = vpack.c.b16 %v1154, %v1153
      %v1173 = vpack.c.b16 %v1156, %v1155
      %v1174 = vpack.c.b16 %v1158, %v1157
      %1175 = vrot.lane.b32.xlu0 %v1159, 8
      %v1176 = vpop.permute.xlu0 %1175
      %1177 = vrot.lane.b32.xlu0 %v1160, 8
      %v1178 = vpop.permute.xlu0 %1177
      %1179 = vrot.lane.b32.xlu0 %v1161, 8
      %v1180 = vpop.permute.xlu0 %1179
      %1181 = vrot.lane.b32.xlu0 %v1162, 8
      %v1182 = vpop.permute.xlu0 %1181
      %1183 = vrot.lane.b32.xlu0 %v1163, 8
      %v1184 = vpop.permute.xlu0 %1183
      %1185 = vrot.lane.b32.xlu0 %v1164, 8
      %v1186 = vpop.permute.xlu0 %1185
      %1187 = vrot.lane.b32.xlu0 %v1165, 8
      %v1188 = vpop.permute.xlu0 %1187
      %1189 = vrot.lane.b32.xlu0 %v1166, 8
      %v1190 = vpop.permute.xlu0 %1189
      %1191 = vrot.lane.b32.xlu0 %v1167, 8
      %v1192 = vpop.permute.xlu0 %1191
      %1193 = vrot.lane.b32.xlu0 %v1168, 8
      %v1194 = vpop.permute.xlu0 %1193
      %1195 = vrot.lane.b32.xlu0 %v1169, 8
      %v1196 = vpop.permute.xlu0 %1195
      %1197 = vrot.lane.b32.xlu0 %v1170, 8
      %v1198 = vpop.permute.xlu0 %1197
      %1199 = vrot.lane.b32.xlu0 %v1171, 8
      %v1200 = vpop.permute.xlu0 %1199
      %1201 = vrot.lane.b32.xlu0 %v1172, 8
      %v1202 = vpop.permute.xlu0 %1201
      %1203 = vrot.lane.b32.xlu0 %v1173, 8
      %v1204 = vpop.permute.xlu0 %1203
      %1205 = vrot.lane.b32.xlu0 %v1174, 8
      %v1206 = vpop.permute.xlu0 %1205
      %vm1223 = vcmask 97344
      %1224 = vst.msk [vmem:[#allocation2] sm:$0xff] %vm1223, %v1176
      %1225 = vst.msk [vmem:[#allocation2 + $0x8] sm:$0xff] %vm1223, %v1178
      %1226 = vst.msk [vmem:[#allocation2 + $0x10] sm:$0xff] %vm1223, %v1180
      %1227 = vst.msk [vmem:[#allocation2 + $0x18] sm:$0xff] %vm1223, %v1182
      %1228 = vst.msk [vmem:[#allocation2 + $0x20] sm:$0xff] %vm1223, %v1184
      %1229 = vst.msk [vmem:[#allocation2 + $0x28] sm:$0xff] %vm1223, %v1186
      %1230 = vst.msk [vmem:[#allocation2 + $0x30] sm:$0xff] %vm1223, %v1188
      %1231 = vst.msk [vmem:[#allocation2 + $0x38] sm:$0xff] %vm1223, %v1190
      %1232 = vst.msk [vmem:[#allocation2 + $0x40] sm:$0xff] %vm1223, %v1192
      %1233 = vst.msk [vmem:[#allocation2 + $0x48] sm:$0xff] %vm1223, %v1194
      %1234 = vst.msk [vmem:[#allocation2 + $0x50] sm:$0xff] %vm1223, %v1196
      %1235 = vst.msk [vmem:[#allocation2 + $0x58] sm:$0xff] %vm1223, %v1198
      %1236 = vst.msk [vmem:[#allocation2 + $0x60] sm:$0xff] %vm1223, %v1200
      %1237 = vst.msk [vmem:[#allocation2 + $0x68] sm:$0xff] %vm1223, %v1202
      %1238 = vst.msk [vmem:[#allocation2 + $0x70] sm:$0xff] %vm1223, %v1204
      %1239 = vst.msk [vmem:[#allocation2 + $0x78] sm:$0xff] %vm1223, %v1206
      %v1240 = vld [vmem:[%s206] sm:$0xe]
      %v1241 = vld [vmem:[%s206 + $0x4] sm:$0xf]
      %v1242 = vld [vmem:[%s206 + $0x8] sm:$0x3]
      %v1243 = vld [vmem:[%s206 + $0xc] sm:$0xe]
      %v1244 = vld [vmem:[%s206 + $0x10] sm:$0xf]
      %v1245 = vld [vmem:[%s206 + $0x14] sm:$0x3]
      %v1246 = vld [vmem:[%s206 + $0x18] sm:$0xe]
      %v1247 = vld [vmem:[%s206 + $0x1c] sm:$0xf]
      %v1248 = vld [vmem:[%s206 + $0x20] sm:$0x3]
      %v1249 = vld [vmem:[%s206 + $0x24] sm:$0xe]
      %v1250 = vld [vmem:[%s206 + $0x28] sm:$0xf]
      %v1251 = vld [vmem:[%s206 + $0x2c] sm:$0x3]
      %v1252 = vld [vmem:[%s206 + $0x30] sm:$0xe]
      %v1253 = vld [vmem:[%s206 + $0x34] sm:$0xf]
      %v1254 = vld [vmem:[%s206 + $0x38] sm:$0x3]
      %v1255 = vld [vmem:[%s206 + $0x3c] sm:$0xe]
      %v1256 = vld [vmem:[%s206 + $0x40] sm:$0xf]
      %v1257 = vld [vmem:[%s206 + $0x44] sm:$0x3]
      %v1258 = vld [vmem:[%s206 + $0x48] sm:$0xe]
      %v1259 = vld [vmem:[%s206 + $0x4c] sm:$0xf]
      %v1260 = vld [vmem:[%s206 + $0x50] sm:$0x3]
      %v1261 = vld [vmem:[%s206 + $0x54] sm:$0xe]
      %v1262 = vld [vmem:[%s206 + $0x58] sm:$0xf]
      %v1263 = vld [vmem:[%s206 + $0x5c] sm:$0x3]
      %v1264 = vld [vmem:[%s206 + $0x60] sm:$0xe]
      %v1265 = vld [vmem:[%s206 + $0x64] sm:$0xf]
      %v1266 = vld [vmem:[%s206 + $0x68] sm:$0x3]
      %v1267 = vld [vmem:[%s206 + $0x6c] sm:$0xe]
      %v1268 = vld [vmem:[%s206 + $0x70] sm:$0xf]
      %v1269 = vld [vmem:[%s206 + $0x74] sm:$0x3]
      %v1270 = vld [vmem:[%s206 + $0x78] sm:$0xe]
      %v1271 = vld [vmem:[%s206 + $0x7c] sm:$0xf]
      %v1272 = vld [vmem:[%s206 + $0x80] sm:$0x3]
      %v1273 = vld [vmem:[%s206 + $0x84] sm:$0xe]
      %v1274 = vld [vmem:[%s206 + $0x88] sm:$0xf]
      %v1275 = vld [vmem:[%s206 + $0x8c] sm:$0x3]
      %v1276 = vld [vmem:[%s206 + $0x90] sm:$0xe]
      %v1277 = vld [vmem:[%s206 + $0x94] sm:$0xf]
      %v1278 = vld [vmem:[%s206 + $0x98] sm:$0x3]
      %v1279 = vld [vmem:[%s206 + $0x9c] sm:$0xe]
      %v1280 = vld [vmem:[%s206 + $0xa0] sm:$0xf]
      %v1281 = vld [vmem:[%s206 + $0xa4] sm:$0x3]
      %v1282 = vld [vmem:[%s206 + $0xa8] sm:$0xe]
      %v1283 = vld [vmem:[%s206 + $0xac] sm:$0xf]
      %v1284 = vld [vmem:[%s206 + $0xb0] sm:$0x3]
      %v1285 = vld [vmem:[%s206 + $0xb4] sm:$0xe]
      %v1286 = vld [vmem:[%s206 + $0xb8] sm:$0xf]
      %v1287 = vld [vmem:[%s206 + $0xbc] sm:$0x3]
      %vm1288 = vsmask.f32 2304
      %vm1289 = vsmask.f32 6416
      %vm1290 = vmor %vm1288, %vm1289
      %v1292 = vshrl.u32 %v1240, 16
      %v1294 = vrot.slane %v1292, 5
      %v1295 = vshll.u32 %v1240, 16
      %v1297 = vrot.slane %v1295, 6
      %v1298 = vor.u32 %v1294, %v1297
      %v1299 = vrot.slane %v1298, 4
      %v1301 = vshrl.u32 %v1241, 16
      %v1303 = vrot.slane %v1301, 5
      %v1304 = vshll.u32 %v1241, 16
      %v1306 = vrot.slane %v1304, 6
      %v1307 = vor.u32 %v1303, %v1306
      %v1308 = vsel %vm1290, %v1299, %v1307
      %v1309 = vrot.slane %v1307, 4
      %v1311 = vshrl.u32 %v1242, 16
      %v1313 = vrot.slane %v1311, 5
      %v1314 = vshll.u32 %v1242, 16
      %v1316 = vrot.slane %v1314, 6
      %v1317 = vor.u32 %v1313, %v1316
      %v1318 = vsel %vm1290, %v1309, %v1317
      %v1320 = vshrl.u32 %v1243, 16
      %v1322 = vrot.slane %v1320, 5
      %v1323 = vshll.u32 %v1243, 16
      %v1325 = vrot.slane %v1323, 6
      %v1326 = vor.u32 %v1322, %v1325
      %v1327 = vrot.slane %v1326, 4
      %v1329 = vshrl.u32 %v1244, 16
      %v1331 = vrot.slane %v1329, 5
      %v1332 = vshll.u32 %v1244, 16
      %v1334 = vrot.slane %v1332, 6
      %v1335 = vor.u32 %v1331, %v1334
      %v1336 = vsel %vm1290, %v1327, %v1335
      %v1337 = vrot.slane %v1335, 4
      %v1339 = vshrl.u32 %v1245, 16
      %v1341 = vrot.slane %v1339, 5
      %v1342 = vshll.u32 %v1245, 16
      %v1344 = vrot.slane %v1342, 6
      %v1345 = vor.u32 %v1341, %v1344
      %v1346 = vsel %vm1290, %v1337, %v1345
      %v1348 = vshrl.u32 %v1246, 16
      %v1350 = vrot.slane %v1348, 5
      %v1351 = vshll.u32 %v1246, 16
      %v1353 = vrot.slane %v1351, 6
      %v1354 = vor.u32 %v1350, %v1353
      %v1355 = vrot.slane %v1354, 4
      %v1357 = vshrl.u32 %v1247, 16
      %v1359 = vrot.slane %v1357, 5
      %v1360 = vshll.u32 %v1247, 16
      %v1362 = vrot.slane %v1360, 6
      %v1363 = vor.u32 %v1359, %v1362
      %v1364 = vsel %vm1290, %v1355, %v1363
      %v1365 = vrot.slane %v1363, 4
      %v1367 = vshrl.u32 %v1248, 16
      %v1369 = vrot.slane %v1367, 5
      %v1370 = vshll.u32 %v1248, 16
      %v1372 = vrot.slane %v1370, 6
      %v1373 = vor.u32 %v1369, %v1372
      %v1374 = vsel %vm1290, %v1365, %v1373
      %v1376 = vshrl.u32 %v1249, 16
      %v1378 = vrot.slane %v1376, 5
      %v1379 = vshll.u32 %v1249, 16
      %v1381 = vrot.slane %v1379, 6
      %v1382 = vor.u32 %v1378, %v1381
      %v1383 = vrot.slane %v1382, 4
      %v1385 = vshrl.u32 %v1250, 16
      %v1387 = vrot.slane %v1385, 5
      %v1388 = vshll.u32 %v1250, 16
      %v1390 = vrot.slane %v1388, 6
      %v1391 = vor.u32 %v1387, %v1390
      %v1392 = vsel %vm1290, %v1383, %v1391
      %v1393 = vrot.slane %v1391, 4
      %v1395 = vshrl.u32 %v1251, 16
      %v1397 = vrot.slane %v1395, 5
      %v1398 = vshll.u32 %v1251, 16
      %v1400 = vrot.slane %v1398, 6
      %v1401 = vor.u32 %v1397, %v1400
      %v1402 = vsel %vm1290, %v1393, %v1401
      %v1404 = vshrl.u32 %v1252, 16
      %v1406 = vrot.slane %v1404, 5
      %v1407 = vshll.u32 %v1252, 16
      %v1409 = vrot.slane %v1407, 6
      %v1410 = vor.u32 %v1406, %v1409
      %v1411 = vrot.slane %v1410, 4
      %v1413 = vshrl.u32 %v1253, 16
      %v1415 = vrot.slane %v1413, 5
      %v1416 = vshll.u32 %v1253, 16
      %v1418 = vrot.slane %v1416, 6
      %v1419 = vor.u32 %v1415, %v1418
      %v1420 = vsel %vm1290, %v1411, %v1419
      %v1421 = vrot.slane %v1419, 4
      %v1423 = vshrl.u32 %v1254, 16
      %v1425 = vrot.slane %v1423, 5
      %v1426 = vshll.u32 %v1254, 16
      %v1428 = vrot.slane %v1426, 6
      %v1429 = vor.u32 %v1425, %v1428
      %v1430 = vsel %vm1290, %v1421, %v1429
      %v1432 = vshrl.u32 %v1255, 16
      %v1434 = vrot.slane %v1432, 5
      %v1435 = vshll.u32 %v1255, 16
      %v1437 = vrot.slane %v1435, 6
      %v1438 = vor.u32 %v1434, %v1437
      %v1439 = vrot.slane %v1438, 4
      %v1441 = vshrl.u32 %v1256, 16
      %v1443 = vrot.slane %v1441, 5
      %v1444 = vshll.u32 %v1256, 16
      %v1446 = vrot.slane %v1444, 6
      %v1447 = vor.u32 %v1443, %v1446
      %v1448 = vsel %vm1290, %v1439, %v1447
      %v1449 = vrot.slane %v1447, 4
      %v1451 = vshrl.u32 %v1257, 16
      %v1453 = vrot.slane %v1451, 5
      %v1454 = vshll.u32 %v1257, 16
      %v1456 = vrot.slane %v1454, 6
      %v1457 = vor.u32 %v1453, %v1456
      %v1458 = vsel %vm1290, %v1449, %v1457
      %v1460 = vshrl.u32 %v1258, 16
      %v1462 = vrot.slane %v1460, 5
      %v1463 = vshll.u32 %v1258, 16
      %v1465 = vrot.slane %v1463, 6
      %v1466 = vor.u32 %v1462, %v1465
      %v1467 = vrot.slane %v1466, 4
      %v1469 = vshrl.u32 %v1259, 16
      %v1471 = vrot.slane %v1469, 5
      %v1472 = vshll.u32 %v1259, 16
      %v1474 = vrot.slane %v1472, 6
      %v1475 = vor.u32 %v1471, %v1474
      %v1476 = vsel %vm1290, %v1467, %v1475
      %v1477 = vrot.slane %v1475, 4
      %v1479 = vshrl.u32 %v1260, 16
      %v1481 = vrot.slane %v1479, 5
      %v1482 = vshll.u32 %v1260, 16
      %v1484 = vrot.slane %v1482, 6
      %v1485 = vor.u32 %v1481, %v1484
      %v1486 = vsel %vm1290, %v1477, %v1485
      %v1488 = vshrl.u32 %v1261, 16
      %v1490 = vrot.slane %v1488, 5
      %v1491 = vshll.u32 %v1261, 16
      %v1493 = vrot.slane %v1491, 6
      %v1494 = vor.u32 %v1490, %v1493
      %v1495 = vrot.slane %v1494, 4
      %v1497 = vshrl.u32 %v1262, 16
      %v1499 = vrot.slane %v1497, 5
      %v1500 = vshll.u32 %v1262, 16
      %v1502 = vrot.slane %v1500, 6
      %v1503 = vor.u32 %v1499, %v1502
      %v1504 = vsel %vm1290, %v1495, %v1503
      %v1505 = vrot.slane %v1503, 4
      %v1507 = vshrl.u32 %v1263, 16
      %v1509 = vrot.slane %v1507, 5
      %v1510 = vshll.u32 %v1263, 16
      %v1512 = vrot.slane %v1510, 6
      %v1513 = vor.u32 %v1509, %v1512
      %v1514 = vsel %vm1290, %v1505, %v1513
      %v1516 = vshrl.u32 %v1264, 16
      %v1518 = vrot.slane %v1516, 5
      %v1519 = vshll.u32 %v1264, 16
      %v1521 = vrot.slane %v1519, 6
      %v1522 = vor.u32 %v1518, %v1521
      %v1523 = vrot.slane %v1522, 4
      %v1525 = vshrl.u32 %v1265, 16
      %v1527 = vrot.slane %v1525, 5
      %v1528 = vshll.u32 %v1265, 16
      %v1530 = vrot.slane %v1528, 6
      %v1531 = vor.u32 %v1527, %v1530
      %v1532 = vsel %vm1290, %v1523, %v1531
      %v1533 = vrot.slane %v1531, 4
      %v1535 = vshrl.u32 %v1266, 16
      %v1537 = vrot.slane %v1535, 5
      %v1538 = vshll.u32 %v1266, 16
      %v1540 = vrot.slane %v1538, 6
      %v1541 = vor.u32 %v1537, %v1540
      %v1542 = vsel %vm1290, %v1533, %v1541
      %v1544 = vshrl.u32 %v1267, 16
      %v1546 = vrot.slane %v1544, 5
      %v1547 = vshll.u32 %v1267, 16
      %v1549 = vrot.slane %v1547, 6
      %v1550 = vor.u32 %v1546, %v1549
      %v1551 = vrot.slane %v1550, 4
      %v1553 = vshrl.u32 %v1268, 16
      %v1555 = vrot.slane %v1553, 5
      %v1556 = vshll.u32 %v1268, 16
      %v1558 = vrot.slane %v1556, 6
      %v1559 = vor.u32 %v1555, %v1558
      %v1560 = vsel %vm1290, %v1551, %v1559
      %v1561 = vrot.slane %v1559, 4
      %v1563 = vshrl.u32 %v1269, 16
      %v1565 = vrot.slane %v1563, 5
      %v1566 = vshll.u32 %v1269, 16
      %v1568 = vrot.slane %v1566, 6
      %v1569 = vor.u32 %v1565, %v1568
      %v1570 = vsel %vm1290, %v1561, %v1569
      %v1572 = vshrl.u32 %v1270, 16
      %v1574 = vrot.slane %v1572, 5
      %v1575 = vshll.u32 %v1270, 16
      %v1577 = vrot.slane %v1575, 6
      %v1578 = vor.u32 %v1574, %v1577
      %v1579 = vrot.slane %v1578, 4
      %v1581 = vshrl.u32 %v1271, 16
      %v1583 = vrot.slane %v1581, 5
      %v1584 = vshll.u32 %v1271, 16
      %v1586 = vrot.slane %v1584, 6
      %v1587 = vor.u32 %v1583, %v1586
      %v1588 = vsel %vm1290, %v1579, %v1587
      %v1589 = vrot.slane %v1587, 4
      %v1591 = vshrl.u32 %v1272, 16
      %v1593 = vrot.slane %v1591, 5
      %v1594 = vshll.u32 %v1272, 16
      %v1596 = vrot.slane %v1594, 6
      %v1597 = vor.u32 %v1593, %v1596
      %v1598 = vsel %vm1290, %v1589, %v1597
      %v1600 = vshrl.u32 %v1273, 16
      %v1602 = vrot.slane %v1600, 5
      %v1603 = vshll.u32 %v1273, 16
      %v1605 = vrot.slane %v1603, 6
      %v1606 = vor.u32 %v1602, %v1605
      %v1607 = vrot.slane %v1606, 4
      %v1609 = vshrl.u32 %v1274, 16
      %v1611 = vrot.slane %v1609, 5
      %v1612 = vshll.u32 %v1274, 16
      %v1614 = vrot.slane %v1612, 6
      %v1615 = vor.u32 %v1611, %v1614
      %v1616 = vsel %vm1290, %v1607, %v1615
      %v1617 = vrot.slane %v1615, 4
      %v1619 = vshrl.u32 %v1275, 16
      %v1621 = vrot.slane %v1619, 5
      %v1622 = vshll.u32 %v1275, 16
      %v1624 = vrot.slane %v1622, 6
      %v1625 = vor.u32 %v1621, %v1624
      %v1626 = vsel %vm1290, %v1617, %v1625
      %v1628 = vshrl.u32 %v1276, 16
      %v1630 = vrot.slane %v1628, 5
      %v1631 = vshll.u32 %v1276, 16
      %v1633 = vrot.slane %v1631, 6
      %v1634 = vor.u32 %v1630, %v1633
      %v1635 = vrot.slane %v1634, 4
      %v1637 = vshrl.u32 %v1277, 16
      %v1639 = vrot.slane %v1637, 5
      %v1640 = vshll.u32 %v1277, 16
      %v1642 = vrot.slane %v1640, 6
      %v1643 = vor.u32 %v1639, %v1642
      %v1644 = vsel %vm1290, %v1635, %v1643
      %v1645 = vrot.slane %v1643, 4
      %v1647 = vshrl.u32 %v1278, 16
      %v1649 = vrot.slane %v1647, 5
      %v1650 = vshll.u32 %v1278, 16
      %v1652 = vrot.slane %v1650, 6
      %v1653 = vor.u32 %v1649, %v1652
      %v1654 = vsel %vm1290, %v1645, %v1653
      %v1656 = vshrl.u32 %v1279, 16
      %v1658 = vrot.slane %v1656, 5
      %v1659 = vshll.u32 %v1279, 16
      %v1661 = vrot.slane %v1659, 6
      %v1662 = vor.u32 %v1658, %v1661
      %v1663 = vrot.slane %v1662, 4
      %v1665 = vshrl.u32 %v1280, 16
      %v1667 = vrot.slane %v1665, 5
      %v1668 = vshll.u32 %v1280, 16
      %v1670 = vrot.slane %v1668, 6
      %v1671 = vor.u32 %v1667, %v1670
      %v1672 = vsel %vm1290, %v1663, %v1671
      %v1673 = vrot.slane %v1671, 4
      %v1675 = vshrl.u32 %v1281, 16
      %v1677 = vrot.slane %v1675, 5
      %v1678 = vshll.u32 %v1281, 16
      %v1680 = vrot.slane %v1678, 6
      %v1681 = vor.u32 %v1677, %v1680
      %v1682 = vsel %vm1290, %v1673, %v1681
      %v1684 = vshrl.u32 %v1282, 16
      %v1686 = vrot.slane %v1684, 5
      %v1687 = vshll.u32 %v1282, 16
      %v1689 = vrot.slane %v1687, 6
      %v1690 = vor.u32 %v1686, %v1689
      %v1691 = vrot.slane %v1690, 4
      %v1693 = vshrl.u32 %v1283, 16
      %v1695 = vrot.slane %v1693, 5
      %v1696 = vshll.u32 %v1283, 16
      %v1698 = vrot.slane %v1696, 6
      %v1699 = vor.u32 %v1695, %v1698
      %v1700 = vsel %vm1290, %v1691, %v1699
      %v1701 = vrot.slane %v1699, 4
      %v1703 = vshrl.u32 %v1284, 16
      %v1705 = vrot.slane %v1703, 5
      %v1706 = vshll.u32 %v1284, 16
      %v1708 = vrot.slane %v1706, 6
      %v1709 = vor.u32 %v1705, %v1708
      %v1710 = vsel %vm1290, %v1701, %v1709
      %v1712 = vshrl.u32 %v1285, 16
      %v1714 = vrot.slane %v1712, 5
      %v1715 = vshll.u32 %v1285, 16
      %v1717 = vrot.slane %v1715, 6
      %v1718 = vor.u32 %v1714, %v1717
      %v1719 = vrot.slane %v1718, 4
      %v1721 = vshrl.u32 %v1286, 16
      %v1723 = vrot.slane %v1721, 5
      %v1724 = vshll.u32 %v1286, 16
      %v1726 = vrot.slane %v1724, 6
      %v1727 = vor.u32 %v1723, %v1726
      %v1728 = vsel %vm1290, %v1719, %v1727
      %v1729 = vrot.slane %v1727, 4
      %v1731 = vshrl.u32 %v1287, 16
      %v1733 = vrot.slane %v1731, 5
      %v1734 = vshll.u32 %v1287, 16
      %v1736 = vrot.slane %v1734, 6
      %v1737 = vor.u32 %v1733, %v1736
      %v1738 = vsel %vm1290, %v1729, %v1737
      %v1739 = vunpack.c.l.b16 %v1308
      %v1740 = vunpack.c.l.b16 %v1318
      %v1741 = vunpack.c.l.b16 %v1336
      %v1742 = vunpack.c.l.b16 %v1346
      %v1743 = vunpack.c.l.b16 %v1364
      %v1744 = vunpack.c.l.b16 %v1374
      %v1745 = vunpack.c.l.b16 %v1392
      %v1746 = vunpack.c.l.b16 %v1402
      %v1747 = vunpack.c.l.b16 %v1420
      %v1748 = vunpack.c.l.b16 %v1430
      %v1749 = vunpack.c.l.b16 %v1448
      %v1750 = vunpack.c.l.b16 %v1458
      %v1751 = vunpack.c.l.b16 %v1476
      %v1752 = vunpack.c.l.b16 %v1486
      %v1753 = vunpack.c.l.b16 %v1504
      %v1754 = vunpack.c.l.b16 %v1514
      %v1755 = vunpack.c.l.b16 %v1532
      %v1756 = vunpack.c.l.b16 %v1542
      %v1757 = vunpack.c.l.b16 %v1560
      %v1758 = vunpack.c.l.b16 %v1570
      %v1759 = vunpack.c.l.b16 %v1588
      %v1760 = vunpack.c.l.b16 %v1598
      %v1761 = vunpack.c.l.b16 %v1616
      %v1762 = vunpack.c.l.b16 %v1626
      %v1763 = vunpack.c.l.b16 %v1644
      %v1764 = vunpack.c.l.b16 %v1654
      %v1765 = vunpack.c.l.b16 %v1672
      %v1766 = vunpack.c.l.b16 %v1682
      %v1767 = vunpack.c.l.b16 %v1700
      %v1768 = vunpack.c.l.b16 %v1710
      %v1769 = vunpack.c.l.b16 %v1728
      %v1770 = vunpack.c.l.b16 %v1738
      %v1771 = vpack.c.b16 %v1740, %v1739
      %v1772 = vpack.c.b16 %v1742, %v1741
      %v1773 = vpack.c.b16 %v1744, %v1743
      %v1774 = vpack.c.b16 %v1746, %v1745
      %v1775 = vpack.c.b16 %v1748, %v1747
      %v1776 = vpack.c.b16 %v1750, %v1749
      %v1777 = vpack.c.b16 %v1752, %v1751
      %v1778 = vpack.c.b16 %v1754, %v1753
      %v1779 = vpack.c.b16 %v1756, %v1755
      %v1780 = vpack.c.b16 %v1758, %v1757
      %v1781 = vpack.c.b16 %v1760, %v1759
      %v1782 = vpack.c.b16 %v1762, %v1761
      %v1783 = vpack.c.b16 %v1764, %v1763
      %v1784 = vpack.c.b16 %v1766, %v1765
      %v1785 = vpack.c.b16 %v1768, %v1767
      %v1786 = vpack.c.b16 %v1770, %v1769
      %1787 = vrot.lane.b32.xlu0 %v1771, 12
      %v1788 = vpop.permute.xlu0 %1787
      %1789 = vrot.lane.b32.xlu0 %v1772, 12
      %v1790 = vpop.permute.xlu0 %1789
      %1791 = vrot.lane.b32.xlu0 %v1773, 12
      %v1792 = vpop.permute.xlu0 %1791
      %1793 = vrot.lane.b32.xlu0 %v1774, 12
      %v1794 = vpop.permute.xlu0 %1793
      %1795 = vrot.lane.b32.xlu0 %v1775, 12
      %v1796 = vpop.permute.xlu0 %1795
      %1797 = vrot.lane.b32.xlu0 %v1776, 12
      %v1798 = vpop.permute.xlu0 %1797
      %1799 = vrot.lane.b32.xlu0 %v1777, 12
      %v1800 = vpop.permute.xlu0 %1799
      %1801 = vrot.lane.b32.xlu0 %v1778, 12
      %v1802 = vpop.permute.xlu0 %1801
      %1803 = vrot.lane.b32.xlu0 %v1779, 12
      %v1804 = vpop.permute.xlu0 %1803
      %1805 = vrot.lane.b32.xlu0 %v1780, 12
      %v1806 = vpop.permute.xlu0 %1805
      %1807 = vrot.lane.b32.xlu0 %v1781, 12
      %v1808 = vpop.permute.xlu0 %1807
      %1809 = vrot.lane.b32.xlu0 %v1782, 12
      %v1810 = vpop.permute.xlu0 %1809
      %1811 = vrot.lane.b32.xlu0 %v1783, 12
      %v1812 = vpop.permute.xlu0 %1811
      %1813 = vrot.lane.b32.xlu0 %v1784, 12
      %v1814 = vpop.permute.xlu0 %1813
      %1815 = vrot.lane.b32.xlu0 %v1785, 12
      %v1816 = vpop.permute.xlu0 %1815
      %1817 = vrot.lane.b32.xlu0 %v1786, 12
      %v1818 = vpop.permute.xlu0 %1817
      %vm1835 = vcmask 130144
      %1836 = vst.msk [vmem:[#allocation2] sm:$0xff] %vm1835, %v1788
      %1837 = vst.msk [vmem:[#allocation2 + $0x8] sm:$0xff] %vm1835, %v1790
      %1838 = vst.msk [vmem:[#allocation2 + $0x10] sm:$0xff] %vm1835, %v1792
      %1839 = vst.msk [vmem:[#allocation2 + $0x18] sm:$0xff] %vm1835, %v1794
      %1840 = vst.msk [vmem:[#allocation2 + $0x20] sm:$0xff] %vm1835, %v1796
      %1841 = vst.msk [vmem:[#allocation2 + $0x28] sm:$0xff] %vm1835, %v1798
      %1842 = vst.msk [vmem:[#allocation2 + $0x30] sm:$0xff] %vm1835, %v1800
      %1843 = vst.msk [vmem:[#allocation2 + $0x38] sm:$0xff] %vm1835, %v1802
      %1844 = vst.msk [vmem:[#allocation2 + $0x40] sm:$0xff] %vm1835, %v1804
      %1845 = vst.msk [vmem:[#allocation2 + $0x48] sm:$0xff] %vm1835, %v1806
      %1846 = vst.msk [vmem:[#allocation2 + $0x50] sm:$0xff] %vm1835, %v1808
      %1847 = vst.msk [vmem:[#allocation2 + $0x58] sm:$0xff] %vm1835, %v1810
      %1848 = vst.msk [vmem:[#allocation2 + $0x60] sm:$0xff] %vm1835, %v1812
      %1849 = vst.msk [vmem:[#allocation2 + $0x68] sm:$0xff] %vm1835, %v1814
      %1850 = vst.msk [vmem:[#allocation2 + $0x70] sm:$0xff] %vm1835, %v1816
      %1851 = vst.msk [vmem:[#allocation2 + $0x78] sm:$0xff] %vm1835, %v1818
      %v1852 = vld [vmem:[%s206] sm:$0xc]
      %v1853 = vld [vmem:[%s206 + $0x4] sm:$0xf]
      %v1854 = vld [vmem:[%s206 + $0x8] sm:$0x3]
      %v1855 = vld [vmem:[%s206 + $0xc] sm:$0xc]
      %v1856 = vld [vmem:[%s206 + $0x10] sm:$0xf]
      %v1857 = vld [vmem:[%s206 + $0x14] sm:$0x3]
      %v1858 = vld [vmem:[%s206 + $0x18] sm:$0xc]
      %v1859 = vld [vmem:[%s206 + $0x1c] sm:$0xf]
      %v1860 = vld [vmem:[%s206 + $0x20] sm:$0x3]
      %v1861 = vld [vmem:[%s206 + $0x24] sm:$0xc]
      %v1862 = vld [vmem:[%s206 + $0x28] sm:$0xf]
      %v1863 = vld [vmem:[%s206 + $0x2c] sm:$0x3]
      %v1864 = vld [vmem:[%s206 + $0x30] sm:$0xc]
      %v1865 = vld [vmem:[%s206 + $0x34] sm:$0xf]
      %v1866 = vld [vmem:[%s206 + $0x38] sm:$0x3]
      %v1867 = vld [vmem:[%s206 + $0x3c] sm:$0xc]
      %v1868 = vld [vmem:[%s206 + $0x40] sm:$0xf]
      %v1869 = vld [vmem:[%s206 + $0x44] sm:$0x3]
      %v1870 = vld [vmem:[%s206 + $0x48] sm:$0xc]
      %v1871 = vld [vmem:[%s206 + $0x4c] sm:$0xf]
      %v1872 = vld [vmem:[%s206 + $0x50] sm:$0x3]
      %v1873 = vld [vmem:[%s206 + $0x54] sm:$0xc]
      %v1874 = vld [vmem:[%s206 + $0x58] sm:$0xf]
      %v1875 = vld [vmem:[%s206 + $0x5c] sm:$0x3]
      %v1876 = vld [vmem:[%s206 + $0x60] sm:$0xc]
      %v1877 = vld [vmem:[%s206 + $0x64] sm:$0xf]
      %v1878 = vld [vmem:[%s206 + $0x68] sm:$0x3]
      %v1879 = vld [vmem:[%s206 + $0x6c] sm:$0xc]
      %v1880 = vld [vmem:[%s206 + $0x70] sm:$0xf]
      %v1881 = vld [vmem:[%s206 + $0x74] sm:$0x3]
      %v1882 = vld [vmem:[%s206 + $0x78] sm:$0xc]
      %v1883 = vld [vmem:[%s206 + $0x7c] sm:$0xf]
      %v1884 = vld [vmem:[%s206 + $0x80] sm:$0x3]
      %v1885 = vld [vmem:[%s206 + $0x84] sm:$0xc]
      %v1886 = vld [vmem:[%s206 + $0x88] sm:$0xf]
      %v1887 = vld [vmem:[%s206 + $0x8c] sm:$0x3]
      %v1888 = vld [vmem:[%s206 + $0x90] sm:$0xc]
      %v1889 = vld [vmem:[%s206 + $0x94] sm:$0xf]
      %v1890 = vld [vmem:[%s206 + $0x98] sm:$0x3]
      %v1891 = vld [vmem:[%s206 + $0x9c] sm:$0xc]
      %v1892 = vld [vmem:[%s206 + $0xa0] sm:$0xf]
      %v1893 = vld [vmem:[%s206 + $0xa4] sm:$0x3]
      %v1894 = vld [vmem:[%s206 + $0xa8] sm:$0xc]
      %v1895 = vld [vmem:[%s206 + $0xac] sm:$0xf]
      %v1896 = vld [vmem:[%s206 + $0xb0] sm:$0x3]
      %v1897 = vld [vmem:[%s206 + $0xb4] sm:$0xc]
      %v1898 = vld [vmem:[%s206 + $0xb8] sm:$0xf]
      %v1899 = vld [vmem:[%s206 + $0xbc] sm:$0x3]
      %vm1948 = vcmask 1041408
      %vm1949 = vcmask 1045508
      %vm1950 = vmor %vm1948, %vm1949
      %v1951 = vrot.slane %v1852, 6
      %v1952 = vrot.slane %v1951, 4
      %v1953 = vrot.slane %v1853, 6
      %v1954 = vsel %vm1950, %v1952, %v1953
      %v1955 = vrot.slane %v1953, 4
      %v1956 = vrot.slane %v1854, 6
      %v1957 = vsel %vm1950, %v1955, %v1956
      %v1958 = vrot.slane %v1855, 6
      %v1959 = vrot.slane %v1958, 4
      %v1960 = vrot.slane %v1856, 6
      %v1961 = vsel %vm1950, %v1959, %v1960
      %v1962 = vrot.slane %v1960, 4
      %v1963 = vrot.slane %v1857, 6
      %v1964 = vsel %vm1950, %v1962, %v1963
      %v1965 = vrot.slane %v1858, 6
      %v1966 = vrot.slane %v1965, 4
      %v1967 = vrot.slane %v1859, 6
      %v1968 = vsel %vm1950, %v1966, %v1967
      %v1969 = vrot.slane %v1967, 4
      %v1970 = vrot.slane %v1860, 6
      %v1971 = vsel %vm1950, %v1969, %v1970
      %v1972 = vrot.slane %v1861, 6
      %v1973 = vrot.slane %v1972, 4
      %v1974 = vrot.slane %v1862, 6
      %v1975 = vsel %vm1950, %v1973, %v1974
      %v1976 = vrot.slane %v1974, 4
      %v1977 = vrot.slane %v1863, 6
      %v1978 = vsel %vm1950, %v1976, %v1977
      %v1979 = vrot.slane %v1864, 6
      %v1980 = vrot.slane %v1979, 4
      %v1981 = vrot.slane %v1865, 6
      %v1982 = vsel %vm1950, %v1980, %v1981
      %v1983 = vrot.slane %v1981, 4
      %v1984 = vrot.slane %v1866, 6
      %v1985 = vsel %vm1950, %v1983, %v1984
      %v1986 = vrot.slane %v1867, 6
      %v1987 = vrot.slane %v1986, 4
      %v1988 = vrot.slane %v1868, 6
      %v1989 = vsel %vm1950, %v1987, %v1988
      %v1990 = vrot.slane %v1988, 4
      %v1991 = vrot.slane %v1869, 6
      %v1992 = vsel %vm1950, %v1990, %v1991
      %v1993 = vrot.slane %v1870, 6
      %v1994 = vrot.slane %v1993, 4
      %v1995 = vrot.slane %v1871, 6
      %v1996 = vsel %vm1950, %v1994, %v1995
      %v1997 = vrot.slane %v1995, 4
      %v1998 = vrot.slane %v1872, 6
      %v1999 = vsel %vm1950, %v1997, %v1998
      %v2000 = vrot.slane %v1873, 6
      %v2001 = vrot.slane %v2000, 4
      %v2002 = vrot.slane %v1874, 6
      %v2003 = vsel %vm1950, %v2001, %v2002
      %v2004 = vrot.slane %v2002, 4
      %v2005 = vrot.slane %v1875, 6
      %v2006 = vsel %vm1950, %v2004, %v2005
      %v2007 = vrot.slane %v1876, 6
      %v2008 = vrot.slane %v2007, 4
      %v2009 = vrot.slane %v1877, 6
      %v2010 = vsel %vm1950, %v2008, %v2009
      %v2011 = vrot.slane %v2009, 4
      %v2012 = vrot.slane %v1878, 6
      %v2013 = vsel %vm1950, %v2011, %v2012
      %v2014 = vrot.slane %v1879, 6
      %v2015 = vrot.slane %v2014, 4
      %v2016 = vrot.slane %v1880, 6
      %v2017 = vsel %vm1950, %v2015, %v2016
      %v2018 = vrot.slane %v2016, 4
      %v2019 = vrot.slane %v1881, 6
      %v2020 = vsel %vm1950, %v2018, %v2019
      %v2021 = vrot.slane %v1882, 6
      %v2022 = vrot.slane %v2021, 4
      %v2023 = vrot.slane %v1883, 6
      %v2024 = vsel %vm1950, %v2022, %v2023
      %v2025 = vrot.slane %v2023, 4
      %v2026 = vrot.slane %v1884, 6
      %v2027 = vsel %vm1950, %v2025, %v2026
      %v2028 = vrot.slane %v1885, 6
      %v2029 = vrot.slane %v2028, 4
      %v2030 = vrot.slane %v1886, 6
      %v2031 = vsel %vm1950, %v2029, %v2030
      %v2032 = vrot.slane %v2030, 4
      %v2033 = vrot.slane %v1887, 6
      %v2034 = vsel %vm1950, %v2032, %v2033
      %v2035 = vrot.slane %v1888, 6
      %v2036 = vrot.slane %v2035, 4
      %v2037 = vrot.slane %v1889, 6
      %v2038 = vsel %vm1950, %v2036, %v2037
      %v2039 = vrot.slane %v2037, 4
      %v2040 = vrot.slane %v1890, 6
      %v2041 = vsel %vm1950, %v2039, %v2040
      %v2042 = vrot.slane %v1891, 6
      %v2043 = vrot.slane %v2042, 4
      %v2044 = vrot.slane %v1892, 6
      %v2045 = vsel %vm1950, %v2043, %v2044
      %v2046 = vrot.slane %v2044, 4
      %v2047 = vrot.slane %v1893, 6
      %v2048 = vsel %vm1950, %v2046, %v2047
      %v2049 = vrot.slane %v1894, 6
      %v2050 = vrot.slane %v2049, 4
      %v2051 = vrot.slane %v1895, 6
      %v2052 = vsel %vm1950, %v2050, %v2051
      %v2053 = vrot.slane %v2051, 4
      %v2054 = vrot.slane %v1896, 6
      %v2055 = vsel %vm1950, %v2053, %v2054
      %v2056 = vrot.slane %v1897, 6
      %v2057 = vrot.slane %v2056, 4
      %v2058 = vrot.slane %v1898, 6
      %v2059 = vsel %vm1950, %v2057, %v2058
      %v2060 = vrot.slane %v2058, 4
      %v2061 = vrot.slane %v1899, 6
      %v2062 = vsel %vm1950, %v2060, %v2061
      %v2063 = vunpack.c.l.b16 %v1954
      %v2064 = vunpack.c.l.b16 %v1957
      %v2065 = vunpack.c.l.b16 %v1961
      %v2066 = vunpack.c.l.b16 %v1964
      %v2067 = vunpack.c.l.b16 %v1968
      %v2068 = vunpack.c.l.b16 %v1971
      %v2069 = vunpack.c.l.b16 %v1975
      %v2070 = vunpack.c.l.b16 %v1978
      %v2071 = vunpack.c.l.b16 %v1982
      %v2072 = vunpack.c.l.b16 %v1985
      %v2073 = vunpack.c.l.b16 %v1989
      %v2074 = vunpack.c.l.b16 %v1992
      %v2075 = vunpack.c.l.b16 %v1996
      %v2076 = vunpack.c.l.b16 %v1999
      %v2077 = vunpack.c.l.b16 %v2003
      %v2078 = vunpack.c.l.b16 %v2006
      %v2079 = vunpack.c.l.b16 %v2010
      %v2080 = vunpack.c.l.b16 %v2013
      %v2081 = vunpack.c.l.b16 %v2017
      %v2082 = vunpack.c.l.b16 %v2020
      %v2083 = vunpack.c.l.b16 %v2024
      %v2084 = vunpack.c.l.b16 %v2027
      %v2085 = vunpack.c.l.b16 %v2031
      %v2086 = vunpack.c.l.b16 %v2034
      %v2087 = vunpack.c.l.b16 %v2038
      %v2088 = vunpack.c.l.b16 %v2041
      %v2089 = vunpack.c.l.b16 %v2045
      %v2090 = vunpack.c.l.b16 %v2048
      %v2091 = vunpack.c.l.b16 %v2052
      %v2092 = vunpack.c.l.b16 %v2055
      %v2093 = vunpack.c.l.b16 %v2059
      %v2094 = vunpack.c.l.b16 %v2062
      %v2095 = vpack.c.b16 %v2064, %v2063
      %v2096 = vpack.c.b16 %v2066, %v2065
      %v2097 = vpack.c.b16 %v2068, %v2067
      %v2098 = vpack.c.b16 %v2070, %v2069
      %v2099 = vpack.c.b16 %v2072, %v2071
      %v2100 = vpack.c.b16 %v2074, %v2073
      %v2101 = vpack.c.b16 %v2076, %v2075
      %v2102 = vpack.c.b16 %v2078, %v2077
      %v2103 = vpack.c.b16 %v2080, %v2079
      %v2104 = vpack.c.b16 %v2082, %v2081
      %v2105 = vpack.c.b16 %v2084, %v2083
      %v2106 = vpack.c.b16 %v2086, %v2085
      %v2107 = vpack.c.b16 %v2088, %v2087
      %v2108 = vpack.c.b16 %v2090, %v2089
      %v2109 = vpack.c.b16 %v2092, %v2091
      %v2110 = vpack.c.b16 %v2094, %v2093
      %2111 = vrot.lane.b32.xlu0 %v2095, 16
      %v2112 = vpop.permute.xlu0 %2111
      %2113 = vrot.lane.b32.xlu0 %v2096, 16
      %v2114 = vpop.permute.xlu0 %2113
      %2115 = vrot.lane.b32.xlu0 %v2097, 16
      %v2116 = vpop.permute.xlu0 %2115
      %2117 = vrot.lane.b32.xlu0 %v2098, 16
      %v2118 = vpop.permute.xlu0 %2117
      %2119 = vrot.lane.b32.xlu0 %v2099, 16
      %v2120 = vpop.permute.xlu0 %2119
      %2121 = vrot.lane.b32.xlu0 %v2100, 16
      %v2122 = vpop.permute.xlu0 %2121
      %2123 = vrot.lane.b32.xlu0 %v2101, 16
      %v2124 = vpop.permute.xlu0 %2123
      %2125 = vrot.lane.b32.xlu0 %v2102, 16
      %v2126 = vpop.permute.xlu0 %2125
      %2127 = vrot.lane.b32.xlu0 %v2103, 16
      %v2128 = vpop.permute.xlu0 %2127
      %2129 = vrot.lane.b32.xlu0 %v2104, 16
      %v2130 = vpop.permute.xlu0 %2129
      %2131 = vrot.lane.b32.xlu0 %v2105, 16
      %v2132 = vpop.permute.xlu0 %2131
      %2133 = vrot.lane.b32.xlu0 %v2106, 16
      %v2134 = vpop.permute.xlu0 %2133
      %2135 = vrot.lane.b32.xlu0 %v2107, 16
      %v2136 = vpop.permute.xlu0 %2135
      %2137 = vrot.lane.b32.xlu0 %v2108, 16
      %v2138 = vpop.permute.xlu0 %2137
      %2139 = vrot.lane.b32.xlu0 %v2109, 16
      %v2140 = vpop.permute.xlu0 %2139
      %2141 = vrot.lane.b32.xlu0 %v2110, 16
      %v2142 = vpop.permute.xlu0 %2141
      %vm2159 = vcmask 162944
      %2160 = vst.msk [vmem:[#allocation2] sm:$0xff] %vm2159, %v2112
      %2161 = vst.msk [vmem:[#allocation2 + $0x8] sm:$0xff] %vm2159, %v2114
      %2162 = vst.msk [vmem:[#allocation2 + $0x10] sm:$0xff] %vm2159, %v2116
      %2163 = vst.msk [vmem:[#allocation2 + $0x18] sm:$0xff] %vm2159, %v2118
      %2164 = vst.msk [vmem:[#allocation2 + $0x20] sm:$0xff] %vm2159, %v2120
      %2165 = vst.msk [vmem:[#allocation2 + $0x28] sm:$0xff] %vm2159, %v2122
      %2166 = vst.msk [vmem:[#allocation2 + $0x30] sm:$0xff] %vm2159, %v2124
      %2167 = vst.msk [vmem:[#allocation2 + $0x38] sm:$0xff] %vm2159, %v2126
      %2168 = vst.msk [vmem:[#allocation2 + $0x40] sm:$0xff] %vm2159, %v2128
      %2169 = vst.msk [vmem:[#allocation2 + $0x48] sm:$0xff] %vm2159, %v2130
      %2170 = vst.msk [vmem:[#allocation2 + $0x50] sm:$0xff] %vm2159, %v2132
      %2171 = vst.msk [vmem:[#allocation2 + $0x58] sm:$0xff] %vm2159, %v2134
      %2172 = vst.msk [vmem:[#allocation2 + $0x60] sm:$0xff] %vm2159, %v2136
      %2173 = vst.msk [vmem:[#allocation2 + $0x68] sm:$0xff] %vm2159, %v2138
      %2174 = vst.msk [vmem:[#allocation2 + $0x70] sm:$0xff] %vm2159, %v2140
      %2175 = vst.msk [vmem:[#allocation2 + $0x78] sm:$0xff] %vm2159, %v2142
      %s2176 = scalar_lea.vmem %s206, 12
      %v2177 = vld [vmem:[%s2176] sm:$0xf]
      %v2178 = vld [vmem:[%s2176 + $0x4] sm:$0xf]
      %v2179 = vld [vmem:[%s2176 + $0xc] sm:$0xf]
      %v2180 = vld [vmem:[%s2176 + $0x10] sm:$0xf]
      %v2181 = vld [vmem:[%s2176 + $0x18] sm:$0xf]
      %v2182 = vld [vmem:[%s2176 + $0x1c] sm:$0xf]
      %v2183 = vld [vmem:[%s2176 + $0x24] sm:$0xf]
      %v2184 = vld [vmem:[%s2176 + $0x28] sm:$0xf]
      %v2185 = vld [vmem:[%s2176 + $0x30] sm:$0xf]
      %v2186 = vld [vmem:[%s2176 + $0x34] sm:$0xf]
      %v2187 = vld [vmem:[%s2176 + $0x3c] sm:$0xf]
      %v2188 = vld [vmem:[%s2176 + $0x40] sm:$0xf]
      %v2189 = vld [vmem:[%s2176 + $0x48] sm:$0xf]
      %v2190 = vld [vmem:[%s2176 + $0x4c] sm:$0xf]
      %v2191 = vld [vmem:[%s2176 + $0x54] sm:$0xf]
      %v2192 = vld [vmem:[%s2176 + $0x58] sm:$0xf]
      %v2193 = vld [vmem:[%s2176 + $0x60] sm:$0xf]
      %v2194 = vld [vmem:[%s2176 + $0x64] sm:$0xf]
      %v2195 = vld [vmem:[%s2176 + $0x6c] sm:$0xf]
      %v2196 = vld [vmem:[%s2176 + $0x70] sm:$0xf]
      %v2197 = vld [vmem:[%s2176 + $0x78] sm:$0xf]
      %v2198 = vld [vmem:[%s2176 + $0x7c] sm:$0xf]
      %v2199 = vld [vmem:[%s2176 + $0x84] sm:$0xf]
      %v2200 = vld [vmem:[%s2176 + $0x88] sm:$0xf]
      %v2201 = vld [vmem:[%s2176 + $0x90] sm:$0xf]
      %v2202 = vld [vmem:[%s2176 + $0x94] sm:$0xf]
      %v2203 = vld [vmem:[%s2176 + $0x9c] sm:$0xf]
      %v2204 = vld [vmem:[%s2176 + $0xa0] sm:$0xf]
      %v2205 = vld [vmem:[%s2176 + $0xa8] sm:$0xf]
      %v2206 = vld [vmem:[%s2176 + $0xac] sm:$0xf]
      %v2207 = vld [vmem:[%s2176 + $0xb4] sm:$0xf]
      %v2208 = vld [vmem:[%s2176 + $0xb8] sm:$0xf]
      %v2241 = vunpack.c.l.b16 %v2177
      %v2242 = vunpack.c.l.b16 %v2178
      %v2243 = vunpack.c.l.b16 %v2179
      %v2244 = vunpack.c.l.b16 %v2180
      %v2245 = vunpack.c.l.b16 %v2181
      %v2246 = vunpack.c.l.b16 %v2182
      %v2247 = vunpack.c.l.b16 %v2183
      %v2248 = vunpack.c.l.b16 %v2184
      %v2249 = vunpack.c.l.b16 %v2185
      %v2250 = vunpack.c.l.b16 %v2186
      %v2251 = vunpack.c.l.b16 %v2187
      %v2252 = vunpack.c.l.b16 %v2188
      %v2253 = vunpack.c.l.b16 %v2189
      %v2254 = vunpack.c.l.b16 %v2190
      %v2255 = vunpack.c.l.b16 %v2191
      %v2256 = vunpack.c.l.b16 %v2192
      %v2257 = vunpack.c.l.b16 %v2193
      %v2258 = vunpack.c.l.b16 %v2194
      %v2259 = vunpack.c.l.b16 %v2195
      %v2260 = vunpack.c.l.b16 %v2196
      %v2261 = vunpack.c.l.b16 %v2197
      %v2262 = vunpack.c.l.b16 %v2198
      %v2263 = vunpack.c.l.b16 %v2199
      %v2264 = vunpack.c.l.b16 %v2200
      %v2265 = vunpack.c.l.b16 %v2201
      %v2266 = vunpack.c.l.b16 %v2202
      %v2267 = vunpack.c.l.b16 %v2203
      %v2268 = vunpack.c.l.b16 %v2204
      %v2269 = vunpack.c.l.b16 %v2205
      %v2270 = vunpack.c.l.b16 %v2206
      %v2271 = vunpack.c.l.b16 %v2207
      %v2272 = vunpack.c.l.b16 %v2208
      %v2273 = vpack.c.b16 %v2242, %v2241
      %v2274 = vpack.c.b16 %v2244, %v2243
      %v2275 = vpack.c.b16 %v2246, %v2245
      %v2276 = vpack.c.b16 %v2248, %v2247
      %v2277 = vpack.c.b16 %v2250, %v2249
      %v2278 = vpack.c.b16 %v2252, %v2251
      %v2279 = vpack.c.b16 %v2254, %v2253
      %v2280 = vpack.c.b16 %v2256, %v2255
      %v2281 = vpack.c.b16 %v2258, %v2257
      %v2282 = vpack.c.b16 %v2260, %v2259
      %v2283 = vpack.c.b16 %v2262, %v2261
      %v2284 = vpack.c.b16 %v2264, %v2263
      %v2285 = vpack.c.b16 %v2266, %v2265
      %v2286 = vpack.c.b16 %v2268, %v2267
      %v2287 = vpack.c.b16 %v2270, %v2269
      %v2288 = vpack.c.b16 %v2272, %v2271
      %2289 = vrot.lane.b32.xlu0 %v2273, 20
      %v2290 = vpop.permute.xlu0 %2289
      %2291 = vrot.lane.b32.xlu0 %v2274, 20
      %v2292 = vpop.permute.xlu0 %2291
      %2293 = vrot.lane.b32.xlu0 %v2275, 20
      %v2294 = vpop.permute.xlu0 %2293
      %2295 = vrot.lane.b32.xlu0 %v2276, 20
      %v2296 = vpop.permute.xlu0 %2295
      %2297 = vrot.lane.b32.xlu0 %v2277, 20
      %v2298 = vpop.permute.xlu0 %2297
      %2299 = vrot.lane.b32.xlu0 %v2278, 20
      %v2300 = vpop.permute.xlu0 %2299
      %2301 = vrot.lane.b32.xlu0 %v2279, 20
      %v2302 = vpop.permute.xlu0 %2301
      %2303 = vrot.lane.b32.xlu0 %v2280, 20
      %v2304 = vpop.permute.xlu0 %2303
      %2305 = vrot.lane.b32.xlu0 %v2281, 20
      %v2306 = vpop.permute.xlu0 %2305
      %2307 = vrot.lane.b32.xlu0 %v2282, 20
      %v2308 = vpop.permute.xlu0 %2307
      %2309 = vrot.lane.b32.xlu0 %v2283, 20
      %v2310 = vpop.permute.xlu0 %2309
      %2311 = vrot.lane.b32.xlu0 %v2284, 20
      %v2312 = vpop.permute.xlu0 %2311
      %2313 = vrot.lane.b32.xlu0 %v2285, 20
      %v2314 = vpop.permute.xlu0 %2313
      %2315 = vrot.lane.b32.xlu0 %v2286, 20
      %v2316 = vpop.permute.xlu0 %2315
      %2317 = vrot.lane.b32.xlu0 %v2287, 20
      %v2318 = vpop.permute.xlu0 %2317
      %2319 = vrot.lane.b32.xlu0 %v2288, 20
      %v2320 = vpop.permute.xlu0 %2319
      %vm2337 = vcmask 195744
      %2338 = vst.msk [vmem:[#allocation2] sm:$0xff] %vm2337, %v2290
      %2339 = vst.msk [vmem:[#allocation2 + $0x8] sm:$0xff] %vm2337, %v2292
      %2340 = vst.msk [vmem:[#allocation2 + $0x10] sm:$0xff] %vm2337, %v2294
      %2341 = vst.msk [vmem:[#allocation2 + $0x18] sm:$0xff] %vm2337, %v2296
      %2342 = vst.msk [vmem:[#allocation2 + $0x20] sm:$0xff] %vm2337, %v2298
      %2343 = vst.msk [vmem:[#allocation2 + $0x28] sm:$0xff] %vm2337, %v2300
      %2344 = vst.msk [vmem:[#allocation2 + $0x30] sm:$0xff] %vm2337, %v2302
      %2345 = vst.msk [vmem:[#allocation2 + $0x38] sm:$0xff] %vm2337, %v2304
      %2346 = vst.msk [vmem:[#allocation2 + $0x40] sm:$0xff] %vm2337, %v2306
      %2347 = vst.msk [vmem:[#allocation2 + $0x48] sm:$0xff] %vm2337, %v2308
      %2348 = vst.msk [vmem:[#allocation2 + $0x50] sm:$0xff] %vm2337, %v2310
      %2349 = vst.msk [vmem:[#allocation2 + $0x58] sm:$0xff] %vm2337, %v2312
      %2350 = vst.msk [vmem:[#allocation2 + $0x60] sm:$0xff] %vm2337, %v2314
      %2351 = vst.msk [vmem:[#allocation2 + $0x68] sm:$0xff] %vm2337, %v2316
      %2352 = vst.msk [vmem:[#allocation2 + $0x70] sm:$0xff] %vm2337, %v2318
      %2353 = vst.msk [vmem:[#allocation2 + $0x78] sm:$0xff] %vm2337, %v2320
      %v2354 = vld [vmem:[%s2176] sm:$0xf]
      %v2355 = vld [vmem:[%s2176 + $0x4] sm:$0xf]
      %v2356 = vld [vmem:[%s2176 + $0x8] sm:$0x1]
      %v2357 = vld [vmem:[%s2176 + $0xc] sm:$0xf]
      %v2358 = vld [vmem:[%s2176 + $0x10] sm:$0xf]
      %v2359 = vld [vmem:[%s2176 + $0x14] sm:$0x1]
      %v2360 = vld [vmem:[%s2176 + $0x18] sm:$0xf]
      %v2361 = vld [vmem:[%s2176 + $0x1c] sm:$0xf]
      %v2362 = vld [vmem:[%s2176 + $0x20] sm:$0x1]
      %v2363 = vld [vmem:[%s2176 + $0x24] sm:$0xf]
      %v2364 = vld [vmem:[%s2176 + $0x28] sm:$0xf]
      %v2365 = vld [vmem:[%s2176 + $0x2c] sm:$0x1]
      %v2366 = vld [vmem:[%s2176 + $0x30] sm:$0xf]
      %v2367 = vld [vmem:[%s2176 + $0x34] sm:$0xf]
      %v2368 = vld [vmem:[%s2176 + $0x38] sm:$0x1]
      %v2369 = vld [vmem:[%s2176 + $0x3c] sm:$0xf]
      %v2370 = vld [vmem:[%s2176 + $0x40] sm:$0xf]
      %v2371 = vld [vmem:[%s2176 + $0x44] sm:$0x1]
      %v2372 = vld [vmem:[%s2176 + $0x48] sm:$0xf]
      %v2373 = vld [vmem:[%s2176 + $0x4c] sm:$0xf]
      %v2374 = vld [vmem:[%s2176 + $0x50] sm:$0x1]
      %v2375 = vld [vmem:[%s2176 + $0x54] sm:$0xf]
      %v2376 = vld [vmem:[%s2176 + $0x58] sm:$0xf]
      %v2377 = vld [vmem:[%s2176 + $0x5c] sm:$0x1]
      %v2378 = vld [vmem:[%s2176 + $0x60] sm:$0xf]
      %v2379 = vld [vmem:[%s2176 + $0x64] sm:$0xf]
      %v2380 = vld [vmem:[%s2176 + $0x68] sm:$0x1]
      %v2381 = vld [vmem:[%s2176 + $0x6c] sm:$0xf]
      %v2382 = vld [vmem:[%s2176 + $0x70] sm:$0xf]
      %v2383 = vld [vmem:[%s2176 + $0x74] sm:$0x1]
      %v2384 = vld [vmem:[%s2176 + $0x78] sm:$0xf]
      %v2385 = vld [vmem:[%s2176 + $0x7c] sm:$0xf]
      %v2386 = vld [vmem:[%s2176 + $0x80] sm:$0x1]
      %v2387 = vld [vmem:[%s2176 + $0x84] sm:$0xf]
      %v2388 = vld [vmem:[%s2176 + $0x88] sm:$0xf]
      %v2389 = vld [vmem:[%s2176 + $0x8c] sm:$0x1]
      %v2390 = vld [vmem:[%s2176 + $0x90] sm:$0xf]
      %v2391 = vld [vmem:[%s2176 + $0x94] sm:$0xf]
      %v2392 = vld [vmem:[%s2176 + $0x98] sm:$0x1]
      %v2393 = vld [vmem:[%s2176 + $0x9c] sm:$0xf]
      %v2394 = vld [vmem:[%s2176 + $0xa0] sm:$0xf]
      %v2395 = vld [vmem:[%s2176 + $0xa4] sm:$0x1]
      %v2396 = vld [vmem:[%s2176 + $0xa8] sm:$0xf]
      %v2397 = vld [vmem:[%s2176 + $0xac] sm:$0xf]
      %v2398 = vld [vmem:[%s2176 + $0xb0] sm:$0x1]
      %v2399 = vld [vmem:[%s2176 + $0xb4] sm:$0xf]
      %v2400 = vld [vmem:[%s2176 + $0xb8] sm:$0xf]
      %v2401 = vld [vmem:[%s2176 + $0xbc] sm:$0x1]
      %v2403 = vshrl.u32 %v2354, 16
      %v2405 = vrot.slane %v2403, 4
      %v2406 = vshll.u32 %v2354, 16
      %v2408 = vrot.slane %v2406, 5
      %v2409 = vor.u32 %v2405, %v2408
      %v2410 = vrot.slane %v2409, 4
      %v2412 = vshll.u32 %v2355, 16
      %v2414 = vrot.slane %v2412, 5
      %v2415 = vsel %vm418, %v2410, %v2414
      %v2416 = vshrl.u32 %v2355, 16
      %v2418 = vrot.slane %v2416, 4
      %v2419 = vor.u32 %v2418, %v2414
      %v2420 = vrot.slane %v2419, 4
      %v2422 = vshll.u32 %v2356, 16
      %v2424 = vrot.slane %v2422, 5
      %v2425 = vsel %vm418, %v2420, %v2424
      %v2427 = vshrl.u32 %v2357, 16
      %v2429 = vrot.slane %v2427, 4
      %v2430 = vshll.u32 %v2357, 16
      %v2432 = vrot.slane %v2430, 5
      %v2433 = vor.u32 %v2429, %v2432
      %v2434 = vrot.slane %v2433, 4
      %v2436 = vshll.u32 %v2358, 16
      %v2438 = vrot.slane %v2436, 5
      %v2439 = vsel %vm418, %v2434, %v2438
      %v2440 = vshrl.u32 %v2358, 16
      %v2442 = vrot.slane %v2440, 4
      %v2443 = vor.u32 %v2442, %v2438
      %v2444 = vrot.slane %v2443, 4
      %v2446 = vshll.u32 %v2359, 16
      %v2448 = vrot.slane %v2446, 5
      %v2449 = vsel %vm418, %v2444, %v2448
      %v2451 = vshrl.u32 %v2360, 16
      %v2453 = vrot.slane %v2451, 4
      %v2454 = vshll.u32 %v2360, 16
      %v2456 = vrot.slane %v2454, 5
      %v2457 = vor.u32 %v2453, %v2456
      %v2458 = vrot.slane %v2457, 4
      %v2460 = vshll.u32 %v2361, 16
      %v2462 = vrot.slane %v2460, 5
      %v2463 = vsel %vm418, %v2458, %v2462
      %v2464 = vshrl.u32 %v2361, 16
      %v2466 = vrot.slane %v2464, 4
      %v2467 = vor.u32 %v2466, %v2462
      %v2468 = vrot.slane %v2467, 4
      %v2470 = vshll.u32 %v2362, 16
      %v2472 = vrot.slane %v2470, 5
      %v2473 = vsel %vm418, %v2468, %v2472
      %v2475 = vshrl.u32 %v2363, 16
      %v2477 = vrot.slane %v2475, 4
      %v2478 = vshll.u32 %v2363, 16
      %v2480 = vrot.slane %v2478, 5
      %v2481 = vor.u32 %v2477, %v2480
      %v2482 = vrot.slane %v2481, 4
      %v2484 = vshll.u32 %v2364, 16
      %v2486 = vrot.slane %v2484, 5
      %v2487 = vsel %vm418, %v2482, %v2486
      %v2488 = vshrl.u32 %v2364, 16
      %v2490 = vrot.slane %v2488, 4
      %v2491 = vor.u32 %v2490, %v2486
      %v2492 = vrot.slane %v2491, 4
      %v2494 = vshll.u32 %v2365, 16
      %v2496 = vrot.slane %v2494, 5
      %v2497 = vsel %vm418, %v2492, %v2496
      %v2499 = vshrl.u32 %v2366, 16
      %v2501 = vrot.slane %v2499, 4
      %v2502 = vshll.u32 %v2366, 16
      %v2504 = vrot.slane %v2502, 5
      %v2505 = vor.u32 %v2501, %v2504
      %v2506 = vrot.slane %v2505, 4
      %v2508 = vshll.u32 %v2367, 16
      %v2510 = vrot.slane %v2508, 5
      %v2511 = vsel %vm418, %v2506, %v2510
      %v2512 = vshrl.u32 %v2367, 16
      %v2514 = vrot.slane %v2512, 4
      %v2515 = vor.u32 %v2514, %v2510
      %v2516 = vrot.slane %v2515, 4
      %v2518 = vshll.u32 %v2368, 16
      %v2520 = vrot.slane %v2518, 5
      %v2521 = vsel %vm418, %v2516, %v2520
      %v2523 = vshrl.u32 %v2369, 16
      %v2525 = vrot.slane %v2523, 4
      %v2526 = vshll.u32 %v2369, 16
      %v2528 = vrot.slane %v2526, 5
      %v2529 = vor.u32 %v2525, %v2528
      %v2530 = vrot.slane %v2529, 4
      %v2532 = vshll.u32 %v2370, 16
      %v2534 = vrot.slane %v2532, 5
      %v2535 = vsel %vm418, %v2530, %v2534
      %v2536 = vshrl.u32 %v2370, 16
      %v2538 = vrot.slane %v2536, 4
      %v2539 = vor.u32 %v2538, %v2534
      %v2540 = vrot.slane %v2539, 4
      %v2542 = vshll.u32 %v2371, 16
      %v2544 = vrot.slane %v2542, 5
      %v2545 = vsel %vm418, %v2540, %v2544
      %v2547 = vshrl.u32 %v2372, 16
      %v2549 = vrot.slane %v2547, 4
      %v2550 = vshll.u32 %v2372, 16
      %v2552 = vrot.slane %v2550, 5
      %v2553 = vor.u32 %v2549, %v2552
      %v2554 = vrot.slane %v2553, 4
      %v2556 = vshll.u32 %v2373, 16
      %v2558 = vrot.slane %v2556, 5
      %v2559 = vsel %vm418, %v2554, %v2558
      %v2560 = vshrl.u32 %v2373, 16
      %v2562 = vrot.slane %v2560, 4
      %v2563 = vor.u32 %v2562, %v2558
      %v2564 = vrot.slane %v2563, 4
      %v2566 = vshll.u32 %v2374, 16
      %v2568 = vrot.slane %v2566, 5
      %v2569 = vsel %vm418, %v2564, %v2568
      %v2571 = vshrl.u32 %v2375, 16
      %v2573 = vrot.slane %v2571, 4
      %v2574 = vshll.u32 %v2375, 16
      %v2576 = vrot.slane %v2574, 5
      %v2577 = vor.u32 %v2573, %v2576
      %v2578 = vrot.slane %v2577, 4
      %v2580 = vshll.u32 %v2376, 16
      %v2582 = vrot.slane %v2580, 5
      %v2583 = vsel %vm418, %v2578, %v2582
      %v2584 = vshrl.u32 %v2376, 16
      %v2586 = vrot.slane %v2584, 4
      %v2587 = vor.u32 %v2586, %v2582
      %v2588 = vrot.slane %v2587, 4
      %v2590 = vshll.u32 %v2377, 16
      %v2592 = vrot.slane %v2590, 5
      %v2593 = vsel %vm418, %v2588, %v2592
      %v2595 = vshrl.u32 %v2378, 16
      %v2597 = vrot.slane %v2595, 4
      %v2598 = vshll.u32 %v2378, 16
      %v2600 = vrot.slane %v2598, 5
      %v2601 = vor.u32 %v2597, %v2600
      %v2602 = vrot.slane %v2601, 4
      %v2604 = vshll.u32 %v2379, 16
      %v2606 = vrot.slane %v2604, 5
      %v2607 = vsel %vm418, %v2602, %v2606
      %v2608 = vshrl.u32 %v2379, 16
      %v2610 = vrot.slane %v2608, 4
      %v2611 = vor.u32 %v2610, %v2606
      %v2612 = vrot.slane %v2611, 4
      %v2614 = vshll.u32 %v2380, 16
      %v2616 = vrot.slane %v2614, 5
      %v2617 = vsel %vm418, %v2612, %v2616
      %v2619 = vshrl.u32 %v2381, 16
      %v2621 = vrot.slane %v2619, 4
      %v2622 = vshll.u32 %v2381, 16
      %v2624 = vrot.slane %v2622, 5
      %v2625 = vor.u32 %v2621, %v2624
      %v2626 = vrot.slane %v2625, 4
      %v2628 = vshll.u32 %v2382, 16
      %v2630 = vrot.slane %v2628, 5
      %v2631 = vsel %vm418, %v2626, %v2630
      %v2632 = vshrl.u32 %v2382, 16
      %v2634 = vrot.slane %v2632, 4
      %v2635 = vor.u32 %v2634, %v2630
      %v2636 = vrot.slane %v2635, 4
      %v2638 = vshll.u32 %v2383, 16
      %v2640 = vrot.slane %v2638, 5
      %v2641 = vsel %vm418, %v2636, %v2640
      %v2643 = vshrl.u32 %v2384, 16
      %v2645 = vrot.slane %v2643, 4
      %v2646 = vshll.u32 %v2384, 16
      %v2648 = vrot.slane %v2646, 5
      %v2649 = vor.u32 %v2645, %v2648
      %v2650 = vrot.slane %v2649, 4
      %v2652 = vshll.u32 %v2385, 16
      %v2654 = vrot.slane %v2652, 5
      %v2655 = vsel %vm418, %v2650, %v2654
      %v2656 = vshrl.u32 %v2385, 16
      %v2658 = vrot.slane %v2656, 4
      %v2659 = vor.u32 %v2658, %v2654
      %v2660 = vrot.slane %v2659, 4
      %v2662 = vshll.u32 %v2386, 16
      %v2664 = vrot.slane %v2662, 5
      %v2665 = vsel %vm418, %v2660, %v2664
      %v2667 = vshrl.u32 %v2387, 16
      %v2669 = vrot.slane %v2667, 4
      %v2670 = vshll.u32 %v2387, 16
      %v2672 = vrot.slane %v2670, 5
      %v2673 = vor.u32 %v2669, %v2672
      %v2674 = vrot.slane %v2673, 4
      %v2676 = vshll.u32 %v2388, 16
      %v2678 = vrot.slane %v2676, 5
      %v2679 = vsel %vm418, %v2674, %v2678
      %v2680 = vshrl.u32 %v2388, 16
      %v2682 = vrot.slane %v2680, 4
      %v2683 = vor.u32 %v2682, %v2678
      %v2684 = vrot.slane %v2683, 4
      %v2686 = vshll.u32 %v2389, 16
      %v2688 = vrot.slane %v2686, 5
      %v2689 = vsel %vm418, %v2684, %v2688
      %v2691 = vshrl.u32 %v2390, 16
      %v2693 = vrot.slane %v2691, 4
      %v2694 = vshll.u32 %v2390, 16
      %v2696 = vrot.slane %v2694, 5
      %v2697 = vor.u32 %v2693, %v2696
      %v2698 = vrot.slane %v2697, 4
      %v2700 = vshll.u32 %v2391, 16
      %v2702 = vrot.slane %v2700, 5
      %v2703 = vsel %vm418, %v2698, %v2702
      %v2704 = vshrl.u32 %v2391, 16
      %v2706 = vrot.slane %v2704, 4
      %v2707 = vor.u32 %v2706, %v2702
      %v2708 = vrot.slane %v2707, 4
      %v2710 = vshll.u32 %v2392, 16
      %v2712 = vrot.slane %v2710, 5
      %v2713 = vsel %vm418, %v2708, %v2712
      %v2715 = vshrl.u32 %v2393, 16
      %v2717 = vrot.slane %v2715, 4
      %v2718 = vshll.u32 %v2393, 16
      %v2720 = vrot.slane %v2718, 5
      %v2721 = vor.u32 %v2717, %v2720
      %v2722 = vrot.slane %v2721, 4
      %v2724 = vshll.u32 %v2394, 16
      %v2726 = vrot.slane %v2724, 5
      %v2727 = vsel %vm418, %v2722, %v2726
      %v2728 = vshrl.u32 %v2394, 16
      %v2730 = vrot.slane %v2728, 4
      %v2731 = vor.u32 %v2730, %v2726
      %v2732 = vrot.slane %v2731, 4
      %v2734 = vshll.u32 %v2395, 16
      %v2736 = vrot.slane %v2734, 5
      %v2737 = vsel %vm418, %v2732, %v2736
      %v2739 = vshrl.u32 %v2396, 16
      %v2741 = vrot.slane %v2739, 4
      %v2742 = vshll.u32 %v2396, 16
      %v2744 = vrot.slane %v2742, 5
      %v2745 = vor.u32 %v2741, %v2744
      %v2746 = vrot.slane %v2745, 4
      %v2748 = vshll.u32 %v2397, 16
      %v2750 = vrot.slane %v2748, 5
      %v2751 = vsel %vm418, %v2746, %v2750
      %v2752 = vshrl.u32 %v2397, 16
      %v2754 = vrot.slane %v2752, 4
      %v2755 = vor.u32 %v2754, %v2750
      %v2756 = vrot.slane %v2755, 4
      %v2758 = vshll.u32 %v2398, 16
      %v2760 = vrot.slane %v2758, 5
      %v2761 = vsel %vm418, %v2756, %v2760
      %v2763 = vshrl.u32 %v2399, 16
      %v2765 = vrot.slane %v2763, 4
      %v2766 = vshll.u32 %v2399, 16
      %v2768 = vrot.slane %v2766, 5
      %v2769 = vor.u32 %v2765, %v2768
      %v2770 = vrot.slane %v2769, 4
      %v2772 = vshll.u32 %v2400, 16
      %v2774 = vrot.slane %v2772, 5
      %v2775 = vsel %vm418, %v2770, %v2774
      %v2776 = vshrl.u32 %v2400, 16
      %v2778 = vrot.slane %v2776, 4
      %v2779 = vor.u32 %v2778, %v2774
      %v2780 = vrot.slane %v2779, 4
      %v2782 = vshll.u32 %v2401, 16
      %v2784 = vrot.slane %v2782, 5
      %v2785 = vsel %vm418, %v2780, %v2784
      %v2786 = vunpack.c.l.b16 %v2415
      %v2787 = vunpack.c.l.b16 %v2425
      %v2788 = vunpack.c.l.b16 %v2439
      %v2789 = vunpack.c.l.b16 %v2449
      %v2790 = vunpack.c.l.b16 %v2463
      %v2791 = vunpack.c.l.b16 %v2473
      %v2792 = vunpack.c.l.b16 %v2487
      %v2793 = vunpack.c.l.b16 %v2497
      %v2794 = vunpack.c.l.b16 %v2511
      %v2795 = vunpack.c.l.b16 %v2521
      %v2796 = vunpack.c.l.b16 %v2535
      %v2797 = vunpack.c.l.b16 %v2545
      %v2798 = vunpack.c.l.b16 %v2559
      %v2799 = vunpack.c.l.b16 %v2569
      %v2800 = vunpack.c.l.b16 %v2583
      %v2801 = vunpack.c.l.b16 %v2593
      %v2802 = vunpack.c.l.b16 %v2607
      %v2803 = vunpack.c.l.b16 %v2617
      %v2804 = vunpack.c.l.b16 %v2631
      %v2805 = vunpack.c.l.b16 %v2641
      %v2806 = vunpack.c.l.b16 %v2655
      %v2807 = vunpack.c.l.b16 %v2665
      %v2808 = vunpack.c.l.b16 %v2679
      %v2809 = vunpack.c.l.b16 %v2689
      %v2810 = vunpack.c.l.b16 %v2703
      %v2811 = vunpack.c.l.b16 %v2713
      %v2812 = vunpack.c.l.b16 %v2727
      %v2813 = vunpack.c.l.b16 %v2737
      %v2814 = vunpack.c.l.b16 %v2751
      %v2815 = vunpack.c.l.b16 %v2761
      %v2816 = vunpack.c.l.b16 %v2775
      %v2817 = vunpack.c.l.b16 %v2785
      %v2818 = vpack.c.b16 %v2787, %v2786
      %v2819 = vpack.c.b16 %v2789, %v2788
      %v2820 = vpack.c.b16 %v2791, %v2790
      %v2821 = vpack.c.b16 %v2793, %v2792
      %v2822 = vpack.c.b16 %v2795, %v2794
      %v2823 = vpack.c.b16 %v2797, %v2796
      %v2824 = vpack.c.b16 %v2799, %v2798
      %v2825 = vpack.c.b16 %v2801, %v2800
      %v2826 = vpack.c.b16 %v2803, %v2802
      %v2827 = vpack.c.b16 %v2805, %v2804
      %v2828 = vpack.c.b16 %v2807, %v2806
      %v2829 = vpack.c.b16 %v2809, %v2808
      %v2830 = vpack.c.b16 %v2811, %v2810
      %v2831 = vpack.c.b16 %v2813, %v2812
      %v2832 = vpack.c.b16 %v2815, %v2814
      %v2833 = vpack.c.b16 %v2817, %v2816
      %2834 = vrot.lane.b32.xlu0 %v2818, 24
      %v2835 = vpop.permute.xlu0 %2834
      %2836 = vrot.lane.b32.xlu0 %v2819, 24
      %v2837 = vpop.permute.xlu0 %2836
      %2838 = vrot.lane.b32.xlu0 %v2820, 24
      %v2839 = vpop.permute.xlu0 %2838
      %2840 = vrot.lane.b32.xlu0 %v2821, 24
      %v2841 = vpop.permute.xlu0 %2840
      %2842 = vrot.lane.b32.xlu0 %v2822, 24
      %v2843 = vpop.permute.xlu0 %2842
      %2844 = vrot.lane.b32.xlu0 %v2823, 24
      %v2845 = vpop.permute.xlu0 %2844
      %2846 = vrot.lane.b32.xlu0 %v2824, 24
      %v2847 = vpop.permute.xlu0 %2846
      %2848 = vrot.lane.b32.xlu0 %v2825, 24
      %v2849 = vpop.permute.xlu0 %2848
      %2850 = vrot.lane.b32.xlu0 %v2826, 24
      %v2851 = vpop.permute.xlu0 %2850
      %2852 = vrot.lane.b32.xlu0 %v2827, 24
      %v2853 = vpop.permute.xlu0 %2852
      %2854 = vrot.lane.b32.xlu0 %v2828, 24
      %v2855 = vpop.permute.xlu0 %2854
      %2856 = vrot.lane.b32.xlu0 %v2829, 24
      %v2857 = vpop.permute.xlu0 %2856
      %2858 = vrot.lane.b32.xlu0 %v2830, 24
      %v2859 = vpop.permute.xlu0 %2858
      %2860 = vrot.lane.b32.xlu0 %v2831, 24
      %v2861 = vpop.permute.xlu0 %2860
      %2862 = vrot.lane.b32.xlu0 %v2832, 24
      %v2863 = vpop.permute.xlu0 %2862
      %2864 = vrot.lane.b32.xlu0 %v2833, 24
      %v2865 = vpop.permute.xlu0 %2864
      %vm2882 = vcmask 228544
      %2883 = vst.msk [vmem:[#allocation2] sm:$0xff] %vm2882, %v2835
      %2884 = vst.msk [vmem:[#allocation2 + $0x8] sm:$0xff] %vm2882, %v2837
      %2885 = vst.msk [vmem:[#allocation2 + $0x10] sm:$0xff] %vm2882, %v2839
      %2886 = vst.msk [vmem:[#allocation2 + $0x18] sm:$0xff] %vm2882, %v2841
      %2887 = vst.msk [vmem:[#allocation2 + $0x20] sm:$0xff] %vm2882, %v2843
      %2888 = vst.msk [vmem:[#allocation2 + $0x28] sm:$0xff] %vm2882, %v2845
      %2889 = vst.msk [vmem:[#allocation2 + $0x30] sm:$0xff] %vm2882, %v2847
      %2890 = vst.msk [vmem:[#allocation2 + $0x38] sm:$0xff] %vm2882, %v2849
      %2891 = vst.msk [vmem:[#allocation2 + $0x40] sm:$0xff] %vm2882, %v2851
      %2892 = vst.msk [vmem:[#allocation2 + $0x48] sm:$0xff] %vm2882, %v2853
      %2893 = vst.msk [vmem:[#allocation2 + $0x50] sm:$0xff] %vm2882, %v2855
      %2894 = vst.msk [vmem:[#allocation2 + $0x58] sm:$0xff] %vm2882, %v2857
      %2895 = vst.msk [vmem:[#allocation2 + $0x60] sm:$0xff] %vm2882, %v2859
      %2896 = vst.msk [vmem:[#allocation2 + $0x68] sm:$0xff] %vm2882, %v2861
      %2897 = vst.msk [vmem:[#allocation2 + $0x70] sm:$0xff] %vm2882, %v2863
      %2898 = vst.msk [vmem:[#allocation2 + $0x78] sm:$0xff] %vm2882, %v2865
      %v2899 = vld [vmem:[%s2176] sm:$0xe]
      %v2900 = vld [vmem:[%s2176 + $0x4] sm:$0xf]
      %v2901 = vld [vmem:[%s2176 + $0x8] sm:$0x1]
      %v2902 = vld [vmem:[%s2176 + $0xc] sm:$0xe]
      %v2903 = vld [vmem:[%s2176 + $0x10] sm:$0xf]
      %v2904 = vld [vmem:[%s2176 + $0x14] sm:$0x1]
      %v2905 = vld [vmem:[%s2176 + $0x18] sm:$0xe]
      %v2906 = vld [vmem:[%s2176 + $0x1c] sm:$0xf]
      %v2907 = vld [vmem:[%s2176 + $0x20] sm:$0x1]
      %v2908 = vld [vmem:[%s2176 + $0x24] sm:$0xe]
      %v2909 = vld [vmem:[%s2176 + $0x28] sm:$0xf]
      %v2910 = vld [vmem:[%s2176 + $0x2c] sm:$0x1]
      %v2911 = vld [vmem:[%s2176 + $0x30] sm:$0xe]
      %v2912 = vld [vmem:[%s2176 + $0x34] sm:$0xf]
      %v2913 = vld [vmem:[%s2176 + $0x38] sm:$0x1]
      %v2914 = vld [vmem:[%s2176 + $0x3c] sm:$0xe]
      %v2915 = vld [vmem:[%s2176 + $0x40] sm:$0xf]
      %v2916 = vld [vmem:[%s2176 + $0x44] sm:$0x1]
      %v2917 = vld [vmem:[%s2176 + $0x48] sm:$0xe]
      %v2918 = vld [vmem:[%s2176 + $0x4c] sm:$0xf]
      %v2919 = vld [vmem:[%s2176 + $0x50] sm:$0x1]
      %v2920 = vld [vmem:[%s2176 + $0x54] sm:$0xe]
      %v2921 = vld [vmem:[%s2176 + $0x58] sm:$0xf]
      %v2922 = vld [vmem:[%s2176 + $0x5c] sm:$0x1]
      %v2923 = vld [vmem:[%s2176 + $0x60] sm:$0xe]
      %v2924 = vld [vmem:[%s2176 + $0x64] sm:$0xf]
      %v2925 = vld [vmem:[%s2176 + $0x68] sm:$0x1]
      %v2926 = vld [vmem:[%s2176 + $0x6c] sm:$0xe]
      %v2927 = vld [vmem:[%s2176 + $0x70] sm:$0xf]
      %v2928 = vld [vmem:[%s2176 + $0x74] sm:$0x1]
      %v2929 = vld [vmem:[%s2176 + $0x78] sm:$0xe]
      %v2930 = vld [vmem:[%s2176 + $0x7c] sm:$0xf]
      %v2931 = vld [vmem:[%s2176 + $0x80] sm:$0x1]
      %v2932 = vld [vmem:[%s2176 + $0x84] sm:$0xe]
      %v2933 = vld [vmem:[%s2176 + $0x88] sm:$0xf]
      %v2934 = vld [vmem:[%s2176 + $0x8c] sm:$0x1]
      %v2935 = vld [vmem:[%s2176 + $0x90] sm:$0xe]
      %v2936 = vld [vmem:[%s2176 + $0x94] sm:$0xf]
      %v2937 = vld [vmem:[%s2176 + $0x98] sm:$0x1]
      %v2938 = vld [vmem:[%s2176 + $0x9c] sm:$0xe]
      %v2939 = vld [vmem:[%s2176 + $0xa0] sm:$0xf]
      %v2940 = vld [vmem:[%s2176 + $0xa4] sm:$0x1]
      %v2941 = vld [vmem:[%s2176 + $0xa8] sm:$0xe]
      %v2942 = vld [vmem:[%s2176 + $0xac] sm:$0xf]
      %v2943 = vld [vmem:[%s2176 + $0xb0] sm:$0x1]
      %v2944 = vld [vmem:[%s2176 + $0xb4] sm:$0xe]
      %v2945 = vld [vmem:[%s2176 + $0xb8] sm:$0xf]
      %v2946 = vld [vmem:[%s2176 + $0xbc] sm:$0x1]
      %v2995 = vrot.slane %v2899, 5
      %v2996 = vrot.slane %v2995, 4
      %v2997 = vrot.slane %v2900, 5
      %v2998 = vsel %vm1014, %v2996, %v2997
      %v2999 = vrot.slane %v2997, 4
      %v3000 = vrot.slane %v2901, 5
      %v3001 = vsel %vm1014, %v2999, %v3000
      %v3002 = vrot.slane %v2902, 5
      %v3003 = vrot.slane %v3002, 4
      %v3004 = vrot.slane %v2903, 5
      %v3005 = vsel %vm1014, %v3003, %v3004
      %v3006 = vrot.slane %v3004, 4
      %v3007 = vrot.slane %v2904, 5
      %v3008 = vsel %vm1014, %v3006, %v3007
      %v3009 = vrot.slane %v2905, 5
      %v3010 = vrot.slane %v3009, 4
      %v3011 = vrot.slane %v2906, 5
      %v3012 = vsel %vm1014, %v3010, %v3011
      %v3013 = vrot.slane %v3011, 4
      %v3014 = vrot.slane %v2907, 5
      %v3015 = vsel %vm1014, %v3013, %v3014
      %v3016 = vrot.slane %v2908, 5
      %v3017 = vrot.slane %v3016, 4
      %v3018 = vrot.slane %v2909, 5
      %v3019 = vsel %vm1014, %v3017, %v3018
      %v3020 = vrot.slane %v3018, 4
      %v3021 = vrot.slane %v2910, 5
      %v3022 = vsel %vm1014, %v3020, %v3021
      %v3023 = vrot.slane %v2911, 5
      %v3024 = vrot.slane %v3023, 4
      %v3025 = vrot.slane %v2912, 5
      %v3026 = vsel %vm1014, %v3024, %v3025
      %v3027 = vrot.slane %v3025, 4
      %v3028 = vrot.slane %v2913, 5
      %v3029 = vsel %vm1014, %v3027, %v3028
      %v3030 = vrot.slane %v2914, 5
      %v3031 = vrot.slane %v3030, 4
      %v3032 = vrot.slane %v2915, 5
      %v3033 = vsel %vm1014, %v3031, %v3032
      %v3034 = vrot.slane %v3032, 4
      %v3035 = vrot.slane %v2916, 5
      %v3036 = vsel %vm1014, %v3034, %v3035
      %v3037 = vrot.slane %v2917, 5
      %v3038 = vrot.slane %v3037, 4
      %v3039 = vrot.slane %v2918, 5
      %v3040 = vsel %vm1014, %v3038, %v3039
      %v3041 = vrot.slane %v3039, 4
      %v3042 = vrot.slane %v2919, 5
      %v3043 = vsel %vm1014, %v3041, %v3042
      %v3044 = vrot.slane %v2920, 5
      %v3045 = vrot.slane %v3044, 4
      %v3046 = vrot.slane %v2921, 5
      %v3047 = vsel %vm1014, %v3045, %v3046
      %v3048 = vrot.slane %v3046, 4
      %v3049 = vrot.slane %v2922, 5
      %v3050 = vsel %vm1014, %v3048, %v3049
      %v3051 = vrot.slane %v2923, 5
      %v3052 = vrot.slane %v3051, 4
      %v3053 = vrot.slane %v2924, 5
      %v3054 = vsel %vm1014, %v3052, %v3053
      %v3055 = vrot.slane %v3053, 4
      %v3056 = vrot.slane %v2925, 5
      %v3057 = vsel %vm1014, %v3055, %v3056
      %v3058 = vrot.slane %v2926, 5
      %v3059 = vrot.slane %v3058, 4
      %v3060 = vrot.slane %v2927, 5
      %v3061 = vsel %vm1014, %v3059, %v3060
      %v3062 = vrot.slane %v3060, 4
      %v3063 = vrot.slane %v2928, 5
      %v3064 = vsel %vm1014, %v3062, %v3063
      %v3065 = vrot.slane %v2929, 5
      %v3066 = vrot.slane %v3065, 4
      %v3067 = vrot.slane %v2930, 5
      %v3068 = vsel %vm1014, %v3066, %v3067
      %v3069 = vrot.slane %v3067, 4
      %v3070 = vrot.slane %v2931, 5
      %v3071 = vsel %vm1014, %v3069, %v3070
      %v3072 = vrot.slane %v2932, 5
      %v3073 = vrot.slane %v3072, 4
      %v3074 = vrot.slane %v2933, 5
      %v3075 = vsel %vm1014, %v3073, %v3074
      %v3076 = vrot.slane %v3074, 4
      %v3077 = vrot.slane %v2934, 5
      %v3078 = vsel %vm1014, %v3076, %v3077
      %v3079 = vrot.slane %v2935, 5
      %v3080 = vrot.slane %v3079, 4
      %v3081 = vrot.slane %v2936, 5
      %v3082 = vsel %vm1014, %v3080, %v3081
      %v3083 = vrot.slane %v3081, 4
      %v3084 = vrot.slane %v2937, 5
      %v3085 = vsel %vm1014, %v3083, %v3084
      %v3086 = vrot.slane %v2938, 5
      %v3087 = vrot.slane %v3086, 4
      %v3088 = vrot.slane %v2939, 5
      %v3089 = vsel %vm1014, %v3087, %v3088
      %v3090 = vrot.slane %v3088, 4
      %v3091 = vrot.slane %v2940, 5
      %v3092 = vsel %vm1014, %v3090, %v3091
      %v3093 = vrot.slane %v2941, 5
      %v3094 = vrot.slane %v3093, 4
      %v3095 = vrot.slane %v2942, 5
      %v3096 = vsel %vm1014, %v3094, %v3095
      %v3097 = vrot.slane %v3095, 4
      %v3098 = vrot.slane %v2943, 5
      %v3099 = vsel %vm1014, %v3097, %v3098
      %v3100 = vrot.slane %v2944, 5
      %v3101 = vrot.slane %v3100, 4
      %v3102 = vrot.slane %v2945, 5
      %v3103 = vsel %vm1014, %v3101, %v3102
      %v3104 = vrot.slane %v3102, 4
      %v3105 = vrot.slane %v2946, 5
      %v3106 = vsel %vm1014, %v3104, %v3105
      %v3107 = vunpack.c.l.b16 %v2998
      %v3108 = vunpack.c.l.b16 %v3001
      %v3109 = vunpack.c.l.b16 %v3005
      %v3110 = vunpack.c.l.b16 %v3008
      %v3111 = vunpack.c.l.b16 %v3012
      %v3112 = vunpack.c.l.b16 %v3015
      %v3113 = vunpack.c.l.b16 %v3019
      %v3114 = vunpack.c.l.b16 %v3022
      %v3115 = vunpack.c.l.b16 %v3026
      %v3116 = vunpack.c.l.b16 %v3029
      %v3117 = vunpack.c.l.b16 %v3033
      %v3118 = vunpack.c.l.b16 %v3036
      %v3119 = vunpack.c.l.b16 %v3040
      %v3120 = vunpack.c.l.b16 %v3043
      %v3121 = vunpack.c.l.b16 %v3047
      %v3122 = vunpack.c.l.b16 %v3050
      %v3123 = vunpack.c.l.b16 %v3054
      %v3124 = vunpack.c.l.b16 %v3057
      %v3125 = vunpack.c.l.b16 %v3061
      %v3126 = vunpack.c.l.b16 %v3064
      %v3127 = vunpack.c.l.b16 %v3068
      %v3128 = vunpack.c.l.b16 %v3071
      %v3129 = vunpack.c.l.b16 %v3075
      %v3130 = vunpack.c.l.b16 %v3078
      %v3131 = vunpack.c.l.b16 %v3082
      %v3132 = vunpack.c.l.b16 %v3085
      %v3133 = vunpack.c.l.b16 %v3089
      %v3134 = vunpack.c.l.b16 %v3092
      %v3135 = vunpack.c.l.b16 %v3096
      %v3136 = vunpack.c.l.b16 %v3099
      %v3137 = vunpack.c.l.b16 %v3103
      %v3138 = vunpack.c.l.b16 %v3106
      %v3139 = vpack.c.b16 %v3108, %v3107
      %v3140 = vpack.c.b16 %v3110, %v3109
      %v3141 = vpack.c.b16 %v3112, %v3111
      %v3142 = vpack.c.b16 %v3114, %v3113
      %v3143 = vpack.c.b16 %v3116, %v3115
      %v3144 = vpack.c.b16 %v3118, %v3117
      %v3145 = vpack.c.b16 %v3120, %v3119
      %v3146 = vpack.c.b16 %v3122, %v3121
      %v3147 = vpack.c.b16 %v3124, %v3123
      %v3148 = vpack.c.b16 %v3126, %v3125
      %v3149 = vpack.c.b16 %v3128, %v3127
      %v3150 = vpack.c.b16 %v3130, %v3129
      %v3151 = vpack.c.b16 %v3132, %v3131
      %v3152 = vpack.c.b16 %v3134, %v3133
      %v3153 = vpack.c.b16 %v3136, %v3135
      %v3154 = vpack.c.b16 %v3138, %v3137
      %3155 = vrot.lane.b32.xlu0 %v3139, 28
      %v3156 = vpop.permute.xlu0 %3155
      %3157 = vrot.lane.b32.xlu0 %v3140, 28
      %v3158 = vpop.permute.xlu0 %3157
      %3159 = vrot.lane.b32.xlu0 %v3141, 28
      %v3160 = vpop.permute.xlu0 %3159
      %3161 = vrot.lane.b32.xlu0 %v3142, 28
      %v3162 = vpop.permute.xlu0 %3161
      %3163 = vrot.lane.b32.xlu0 %v3143, 28
      %v3164 = vpop.permute.xlu0 %3163
      %3165 = vrot.lane.b32.xlu0 %v3144, 28
      %v3166 = vpop.permute.xlu0 %3165
      %3167 = vrot.lane.b32.xlu0 %v3145, 28
      %v3168 = vpop.permute.xlu0 %3167
      %3169 = vrot.lane.b32.xlu0 %v3146, 28
      %v3170 = vpop.permute.xlu0 %3169
      %3171 = vrot.lane.b32.xlu0 %v3147, 28
      %v3172 = vpop.permute.xlu0 %3171
      %3173 = vrot.lane.b32.xlu0 %v3148, 28
      %v3174 = vpop.permute.xlu0 %3173
      %3175 = vrot.lane.b32.xlu0 %v3149, 28
      %v3176 = vpop.permute.xlu0 %3175
      %3177 = vrot.lane.b32.xlu0 %v3150, 28
      %v3178 = vpop.permute.xlu0 %3177
      %3179 = vrot.lane.b32.xlu0 %v3151, 28
      %v3180 = vpop.permute.xlu0 %3179
      %3181 = vrot.lane.b32.xlu0 %v3152, 28
      %v3182 = vpop.permute.xlu0 %3181
      %3183 = vrot.lane.b32.xlu0 %v3153, 28
      %v3184 = vpop.permute.xlu0 %3183
      %3185 = vrot.lane.b32.xlu0 %v3154, 28
      %v3186 = vpop.permute.xlu0 %3185
      %vm3203 = vcmask 261344
      %3204 = vst.msk [vmem:[#allocation2] sm:$0xff] %vm3203, %v3156
      %3205 = vst.msk [vmem:[#allocation2 + $0x8] sm:$0xff] %vm3203, %v3158
      %3206 = vst.msk [vmem:[#allocation2 + $0x10] sm:$0xff] %vm3203, %v3160
      %3207 = vst.msk [vmem:[#allocation2 + $0x18] sm:$0xff] %vm3203, %v3162
      %3208 = vst.msk [vmem:[#allocation2 + $0x20] sm:$0xff] %vm3203, %v3164
      %3209 = vst.msk [vmem:[#allocation2 + $0x28] sm:$0xff] %vm3203, %v3166
      %3210 = vst.msk [vmem:[#allocation2 + $0x30] sm:$0xff] %vm3203, %v3168
      %3211 = vst.msk [vmem:[#allocation2 + $0x38] sm:$0xff] %vm3203, %v3170
      %3212 = vst.msk [vmem:[#allocation2 + $0x40] sm:$0xff] %vm3203, %v3172
      %3213 = vst.msk [vmem:[#allocation2 + $0x48] sm:$0xff] %vm3203, %v3174
      %3214 = vst.msk [vmem:[#allocation2 + $0x50] sm:$0xff] %vm3203, %v3176
      %3215 = vst.msk [vmem:[#allocation2 + $0x58] sm:$0xff] %vm3203, %v3178
      %3216 = vst.msk [vmem:[#allocation2 + $0x60] sm:$0xff] %vm3203, %v3180
      %3217 = vst.msk [vmem:[#allocation2 + $0x68] sm:$0xff] %vm3203, %v3182
      %3218 = vst.msk [vmem:[#allocation2 + $0x70] sm:$0xff] %vm3203, %v3184
      %3219 = vst.msk [vmem:[#allocation2 + $0x78] sm:$0xff] %vm3203, %v3186
      %v3220 = vld [vmem:[%s2176] sm:$0xe]
      %v3221 = vld [vmem:[%s2176 + $0x4] sm:$0xf]
      %v3222 = vld [vmem:[%s2176 + $0x8] sm:$0x3]
      %v3223 = vld [vmem:[%s2176 + $0xc] sm:$0xe]
      %v3224 = vld [vmem:[%s2176 + $0x10] sm:$0xf]
      %v3225 = vld [vmem:[%s2176 + $0x14] sm:$0x3]
      %v3226 = vld [vmem:[%s2176 + $0x18] sm:$0xe]
      %v3227 = vld [vmem:[%s2176 + $0x1c] sm:$0xf]
      %v3228 = vld [vmem:[%s2176 + $0x20] sm:$0x3]
      %v3229 = vld [vmem:[%s2176 + $0x24] sm:$0xe]
      %v3230 = vld [vmem:[%s2176 + $0x28] sm:$0xf]
      %v3231 = vld [vmem:[%s2176 + $0x2c] sm:$0x3]
      %v3232 = vld [vmem:[%s2176 + $0x30] sm:$0xe]
      %v3233 = vld [vmem:[%s2176 + $0x34] sm:$0xf]
      %v3234 = vld [vmem:[%s2176 + $0x38] sm:$0x3]
      %v3235 = vld [vmem:[%s2176 + $0x3c] sm:$0xe]
      %v3236 = vld [vmem:[%s2176 + $0x40] sm:$0xf]
      %v3237 = vld [vmem:[%s2176 + $0x44] sm:$0x3]
      %v3238 = vld [vmem:[%s2176 + $0x48] sm:$0xe]
      %v3239 = vld [vmem:[%s2176 + $0x4c] sm:$0xf]
      %v3240 = vld [vmem:[%s2176 + $0x50] sm:$0x3]
      %v3241 = vld [vmem:[%s2176 + $0x54] sm:$0xe]
      %v3242 = vld [vmem:[%s2176 + $0x58] sm:$0xf]
      %v3243 = vld [vmem:[%s2176 + $0x5c] sm:$0x3]
      %v3244 = vld [vmem:[%s2176 + $0x60] sm:$0xe]
      %v3245 = vld [vmem:[%s2176 + $0x64] sm:$0xf]
      %v3246 = vld [vmem:[%s2176 + $0x68] sm:$0x3]
      %v3247 = vld [vmem:[%s2176 + $0x6c] sm:$0xe]
      %v3248 = vld [vmem:[%s2176 + $0x70] sm:$0xf]
      %v3249 = vld [vmem:[%s2176 + $0x74] sm:$0x3]
      %v3250 = vld [vmem:[%s2176 + $0x78] sm:$0xe]
      %v3251 = vld [vmem:[%s2176 + $0x7c] sm:$0xf]
      %v3252 = vld [vmem:[%s2176 + $0x80] sm:$0x3]
      %v3253 = vld [vmem:[%s2176 + $0x84] sm:$0xe]
      %v3254 = vld [vmem:[%s2176 + $0x88] sm:$0xf]
      %v3255 = vld [vmem:[%s2176 + $0x8c] sm:$0x3]
      %v3256 = vld [vmem:[%s2176 + $0x90] sm:$0xe]
      %v3257 = vld [vmem:[%s2176 + $0x94] sm:$0xf]
      %v3258 = vld [vmem:[%s2176 + $0x98] sm:$0x3]
      %v3259 = vld [vmem:[%s2176 + $0x9c] sm:$0xe]
      %v3260 = vld [vmem:[%s2176 + $0xa0] sm:$0xf]
      %v3261 = vld [vmem:[%s2176 + $0xa4] sm:$0x3]
      %v3262 = vld [vmem:[%s2176 + $0xa8] sm:$0xe]
      %v3263 = vld [vmem:[%s2176 + $0xac] sm:$0xf]
      %v3264 = vld [vmem:[%s2176 + $0xb0] sm:$0x3]
      %v3265 = vld [vmem:[%s2176 + $0xb4] sm:$0xe]
      %v3266 = vld [vmem:[%s2176 + $0xb8] sm:$0xf]
      %v3267 = vld [vmem:[%s2176 + $0xbc] sm:$0x3]
      %v3269 = vshrl.u32 %v3220, 16
      %v3271 = vrot.slane %v3269, 5
      %v3272 = vshll.u32 %v3220, 16
      %v3274 = vrot.slane %v3272, 6
      %v3275 = vor.u32 %v3271, %v3274
      %v3276 = vrot.slane %v3275, 4
      %v3278 = vshrl.u32 %v3221, 16
      %v3280 = vrot.slane %v3278, 5
      %v3281 = vshll.u32 %v3221, 16
      %v3283 = vrot.slane %v3281, 6
      %v3284 = vor.u32 %v3280, %v3283
      %v3285 = vsel %vm1290, %v3276, %v3284
      %v3286 = vrot.slane %v3284, 4
      %v3288 = vshrl.u32 %v3222, 16
      %v3290 = vrot.slane %v3288, 5
      %v3291 = vshll.u32 %v3222, 16
      %v3293 = vrot.slane %v3291, 6
      %v3294 = vor.u32 %v3290, %v3293
      %v3295 = vsel %vm1290, %v3286, %v3294
      %v3297 = vshrl.u32 %v3223, 16
      %v3299 = vrot.slane %v3297, 5
      %v3300 = vshll.u32 %v3223, 16
      %v3302 = vrot.slane %v3300, 6
      %v3303 = vor.u32 %v3299, %v3302
      %v3304 = vrot.slane %v3303, 4
      %v3306 = vshrl.u32 %v3224, 16
      %v3308 = vrot.slane %v3306, 5
      %v3309 = vshll.u32 %v3224, 16
      %v3311 = vrot.slane %v3309, 6
      %v3312 = vor.u32 %v3308, %v3311
      %v3313 = vsel %vm1290, %v3304, %v3312
      %v3314 = vrot.slane %v3312, 4
      %v3316 = vshrl.u32 %v3225, 16
      %v3318 = vrot.slane %v3316, 5
      %v3319 = vshll.u32 %v3225, 16
      %v3321 = vrot.slane %v3319, 6
      %v3322 = vor.u32 %v3318, %v3321
      %v3323 = vsel %vm1290, %v3314, %v3322
      %v3325 = vshrl.u32 %v3226, 16
      %v3327 = vrot.slane %v3325, 5
      %v3328 = vshll.u32 %v3226, 16
      %v3330 = vrot.slane %v3328, 6
      %v3331 = vor.u32 %v3327, %v3330
      %v3332 = vrot.slane %v3331, 4
      %v3334 = vshrl.u32 %v3227, 16
      %v3336 = vrot.slane %v3334, 5
      %v3337 = vshll.u32 %v3227, 16
      %v3339 = vrot.slane %v3337, 6
      %v3340 = vor.u32 %v3336, %v3339
      %v3341 = vsel %vm1290, %v3332, %v3340
      %v3342 = vrot.slane %v3340, 4
      %v3344 = vshrl.u32 %v3228, 16
      %v3346 = vrot.slane %v3344, 5
      %v3347 = vshll.u32 %v3228, 16
      %v3349 = vrot.slane %v3347, 6
      %v3350 = vor.u32 %v3346, %v3349
      %v3351 = vsel %vm1290, %v3342, %v3350
      %v3353 = vshrl.u32 %v3229, 16
      %v3355 = vrot.slane %v3353, 5
      %v3356 = vshll.u32 %v3229, 16
      %v3358 = vrot.slane %v3356, 6
      %v3359 = vor.u32 %v3355, %v3358
      %v3360 = vrot.slane %v3359, 4
      %v3362 = vshrl.u32 %v3230, 16
      %v3364 = vrot.slane %v3362, 5
      %v3365 = vshll.u32 %v3230, 16
      %v3367 = vrot.slane %v3365, 6
      %v3368 = vor.u32 %v3364, %v3367
      %v3369 = vsel %vm1290, %v3360, %v3368
      %v3370 = vrot.slane %v3368, 4
      %v3372 = vshrl.u32 %v3231, 16
      %v3374 = vrot.slane %v3372, 5
      %v3375 = vshll.u32 %v3231, 16
      %v3377 = vrot.slane %v3375, 6
      %v3378 = vor.u32 %v3374, %v3377
      %v3379 = vsel %vm1290, %v3370, %v3378
      %v3381 = vshrl.u32 %v3232, 16
      %v3383 = vrot.slane %v3381, 5
      %v3384 = vshll.u32 %v3232, 16
      %v3386 = vrot.slane %v3384, 6
      %v3387 = vor.u32 %v3383, %v3386
      %v3388 = vrot.slane %v3387, 4
      %v3390 = vshrl.u32 %v3233, 16
      %v3392 = vrot.slane %v3390, 5
      %v3393 = vshll.u32 %v3233, 16
      %v3395 = vrot.slane %v3393, 6
      %v3396 = vor.u32 %v3392, %v3395
      %v3397 = vsel %vm1290, %v3388, %v3396
      %v3398 = vrot.slane %v3396, 4
      %v3400 = vshrl.u32 %v3234, 16
      %v3402 = vrot.slane %v3400, 5
      %v3403 = vshll.u32 %v3234, 16
      %v3405 = vrot.slane %v3403, 6
      %v3406 = vor.u32 %v3402, %v3405
      %v3407 = vsel %vm1290, %v3398, %v3406
      %v3409 = vshrl.u32 %v3235, 16
      %v3411 = vrot.slane %v3409, 5
      %v3412 = vshll.u32 %v3235, 16
      %v3414 = vrot.slane %v3412, 6
      %v3415 = vor.u32 %v3411, %v3414
      %v3416 = vrot.slane %v3415, 4
      %v3418 = vshrl.u32 %v3236, 16
      %v3420 = vrot.slane %v3418, 5
      %v3421 = vshll.u32 %v3236, 16
      %v3423 = vrot.slane %v3421, 6
      %v3424 = vor.u32 %v3420, %v3423
      %v3425 = vsel %vm1290, %v3416, %v3424
      %v3426 = vrot.slane %v3424, 4
      %v3428 = vshrl.u32 %v3237, 16
      %v3430 = vrot.slane %v3428, 5
      %v3431 = vshll.u32 %v3237, 16
      %v3433 = vrot.slane %v3431, 6
      %v3434 = vor.u32 %v3430, %v3433
      %v3435 = vsel %vm1290, %v3426, %v3434
      %v3437 = vshrl.u32 %v3238, 16
      %v3439 = vrot.slane %v3437, 5
      %v3440 = vshll.u32 %v3238, 16
      %v3442 = vrot.slane %v3440, 6
      %v3443 = vor.u32 %v3439, %v3442
      %v3444 = vrot.slane %v3443, 4
      %v3446 = vshrl.u32 %v3239, 16
      %v3448 = vrot.slane %v3446, 5
      %v3449 = vshll.u32 %v3239, 16
      %v3451 = vrot.slane %v3449, 6
      %v3452 = vor.u32 %v3448, %v3451
      %v3453 = vsel %vm1290, %v3444, %v3452
      %v3454 = vrot.slane %v3452, 4
      %v3456 = vshrl.u32 %v3240, 16
      %v3458 = vrot.slane %v3456, 5
      %v3459 = vshll.u32 %v3240, 16
      %v3461 = vrot.slane %v3459, 6
      %v3462 = vor.u32 %v3458, %v3461
      %v3463 = vsel %vm1290, %v3454, %v3462
      %v3465 = vshrl.u32 %v3241, 16
      %v3467 = vrot.slane %v3465, 5
      %v3468 = vshll.u32 %v3241, 16
      %v3470 = vrot.slane %v3468, 6
      %v3471 = vor.u32 %v3467, %v3470
      %v3472 = vrot.slane %v3471, 4
      %v3474 = vshrl.u32 %v3242, 16
      %v3476 = vrot.slane %v3474, 5
      %v3477 = vshll.u32 %v3242, 16
      %v3479 = vrot.slane %v3477, 6
      %v3480 = vor.u32 %v3476, %v3479
      %v3481 = vsel %vm1290, %v3472, %v3480
      %v3482 = vrot.slane %v3480, 4
      %v3484 = vshrl.u32 %v3243, 16
      %v3486 = vrot.slane %v3484, 5
      %v3487 = vshll.u32 %v3243, 16
      %v3489 = vrot.slane %v3487, 6
      %v3490 = vor.u32 %v3486, %v3489
      %v3491 = vsel %vm1290, %v3482, %v3490
      %v3493 = vshrl.u32 %v3244, 16
      %v3495 = vrot.slane %v3493, 5
      %v3496 = vshll.u32 %v3244, 16
      %v3498 = vrot.slane %v3496, 6
      %v3499 = vor.u32 %v3495, %v3498
      %v3500 = vrot.slane %v3499, 4
      %v3502 = vshrl.u32 %v3245, 16
      %v3504 = vrot.slane %v3502, 5
      %v3505 = vshll.u32 %v3245, 16
      %v3507 = vrot.slane %v3505, 6
      %v3508 = vor.u32 %v3504, %v3507
      %v3509 = vsel %vm1290, %v3500, %v3508
      %v3510 = vrot.slane %v3508, 4
      %v3512 = vshrl.u32 %v3246, 16
      %v3514 = vrot.slane %v3512, 5
      %v3515 = vshll.u32 %v3246, 16
      %v3517 = vrot.slane %v3515, 6
      %v3518 = vor.u32 %v3514, %v3517
      %v3519 = vsel %vm1290, %v3510, %v3518
      %v3521 = vshrl.u32 %v3247, 16
      %v3523 = vrot.slane %v3521, 5
      %v3524 = vshll.u32 %v3247, 16
      %v3526 = vrot.slane %v3524, 6
      %v3527 = vor.u32 %v3523, %v3526
      %v3528 = vrot.slane %v3527, 4
      %v3530 = vshrl.u32 %v3248, 16
      %v3532 = vrot.slane %v3530, 5
      %v3533 = vshll.u32 %v3248, 16
      %v3535 = vrot.slane %v3533, 6
      %v3536 = vor.u32 %v3532, %v3535
      %v3537 = vsel %vm1290, %v3528, %v3536
      %v3538 = vrot.slane %v3536, 4
      %v3540 = vshrl.u32 %v3249, 16
      %v3542 = vrot.slane %v3540, 5
      %v3543 = vshll.u32 %v3249, 16
      %v3545 = vrot.slane %v3543, 6
      %v3546 = vor.u32 %v3542, %v3545
      %v3547 = vsel %vm1290, %v3538, %v3546
      %v3549 = vshrl.u32 %v3250, 16
      %v3551 = vrot.slane %v3549, 5
      %v3552 = vshll.u32 %v3250, 16
      %v3554 = vrot.slane %v3552, 6
      %v3555 = vor.u32 %v3551, %v3554
      %v3556 = vrot.slane %v3555, 4
      %v3558 = vshrl.u32 %v3251, 16
      %v3560 = vrot.slane %v3558, 5
      %v3561 = vshll.u32 %v3251, 16
      %v3563 = vrot.slane %v3561, 6
      %v3564 = vor.u32 %v3560, %v3563
      %v3565 = vsel %vm1290, %v3556, %v3564
      %v3566 = vrot.slane %v3564, 4
      %v3568 = vshrl.u32 %v3252, 16
      %v3570 = vrot.slane %v3568, 5
      %v3571 = vshll.u32 %v3252, 16
      %v3573 = vrot.slane %v3571, 6
      %v3574 = vor.u32 %v3570, %v3573
      %v3575 = vsel %vm1290, %v3566, %v3574
      %v3577 = vshrl.u32 %v3253, 16
      %v3579 = vrot.slane %v3577, 5
      %v3580 = vshll.u32 %v3253, 16
      %v3582 = vrot.slane %v3580, 6
      %v3583 = vor.u32 %v3579, %v3582
      %v3584 = vrot.slane %v3583, 4
      %v3586 = vshrl.u32 %v3254, 16
      %v3588 = vrot.slane %v3586, 5
      %v3589 = vshll.u32 %v3254, 16
      %v3591 = vrot.slane %v3589, 6
      %v3592 = vor.u32 %v3588, %v3591
      %v3593 = vsel %vm1290, %v3584, %v3592
      %v3594 = vrot.slane %v3592, 4
      %v3596 = vshrl.u32 %v3255, 16
      %v3598 = vrot.slane %v3596, 5
      %v3599 = vshll.u32 %v3255, 16
      %v3601 = vrot.slane %v3599, 6
      %v3602 = vor.u32 %v3598, %v3601
      %v3603 = vsel %vm1290, %v3594, %v3602
      %v3605 = vshrl.u32 %v3256, 16
      %v3607 = vrot.slane %v3605, 5
      %v3608 = vshll.u32 %v3256, 16
      %v3610 = vrot.slane %v3608, 6
      %v3611 = vor.u32 %v3607, %v3610
      %v3612 = vrot.slane %v3611, 4
      %v3614 = vshrl.u32 %v3257, 16
      %v3616 = vrot.slane %v3614, 5
      %v3617 = vshll.u32 %v3257, 16
      %v3619 = vrot.slane %v3617, 6
      %v3620 = vor.u32 %v3616, %v3619
      %v3621 = vsel %vm1290, %v3612, %v3620
      %v3622 = vrot.slane %v3620, 4
      %v3624 = vshrl.u32 %v3258, 16
      %v3626 = vrot.slane %v3624, 5
      %v3627 = vshll.u32 %v3258, 16
      %v3629 = vrot.slane %v3627, 6
      %v3630 = vor.u32 %v3626, %v3629
      %v3631 = vsel %vm1290, %v3622, %v3630
      %v3633 = vshrl.u32 %v3259, 16
      %v3635 = vrot.slane %v3633, 5
      %v3636 = vshll.u32 %v3259, 16
      %v3638 = vrot.slane %v3636, 6
      %v3639 = vor.u32 %v3635, %v3638
      %v3640 = vrot.slane %v3639, 4
      %v3642 = vshrl.u32 %v3260, 16
      %v3644 = vrot.slane %v3642, 5
      %v3645 = vshll.u32 %v3260, 16
      %v3647 = vrot.slane %v3645, 6
      %v3648 = vor.u32 %v3644, %v3647
      %v3649 = vsel %vm1290, %v3640, %v3648
      %v3650 = vrot.slane %v3648, 4
      %v3652 = vshrl.u32 %v3261, 16
      %v3654 = vrot.slane %v3652, 5
      %v3655 = vshll.u32 %v3261, 16
      %v3657 = vrot.slane %v3655, 6
      %v3658 = vor.u32 %v3654, %v3657
      %v3659 = vsel %vm1290, %v3650, %v3658
      %v3661 = vshrl.u32 %v3262, 16
      %v3663 = vrot.slane %v3661, 5
      %v3664 = vshll.u32 %v3262, 16
      %v3666 = vrot.slane %v3664, 6
      %v3667 = vor.u32 %v3663, %v3666
      %v3668 = vrot.slane %v3667, 4
      %v3670 = vshrl.u32 %v3263, 16
      %v3672 = vrot.slane %v3670, 5
      %v3673 = vshll.u32 %v3263, 16
      %v3675 = vrot.slane %v3673, 6
      %v3676 = vor.u32 %v3672, %v3675
      %v3677 = vsel %vm1290, %v3668, %v3676
      %v3678 = vrot.slane %v3676, 4
      %v3680 = vshrl.u32 %v3264, 16
      %v3682 = vrot.slane %v3680, 5
      %v3683 = vshll.u32 %v3264, 16
      %v3685 = vrot.slane %v3683, 6
      %v3686 = vor.u32 %v3682, %v3685
      %v3687 = vsel %vm1290, %v3678, %v3686
      %v3689 = vshrl.u32 %v3265, 16
      %v3691 = vrot.slane %v3689, 5
      %v3692 = vshll.u32 %v3265, 16
      %v3694 = vrot.slane %v3692, 6
      %v3695 = vor.u32 %v3691, %v3694
      %v3696 = vrot.slane %v3695, 4
      %v3698 = vshrl.u32 %v3266, 16
      %v3700 = vrot.slane %v3698, 5
      %v3701 = vshll.u32 %v3266, 16
      %v3703 = vrot.slane %v3701, 6
      %v3704 = vor.u32 %v3700, %v3703
      %v3705 = vsel %vm1290, %v3696, %v3704
      %v3706 = vrot.slane %v3704, 4
      %v3708 = vshrl.u32 %v3267, 16
      %v3710 = vrot.slane %v3708, 5
      %v3711 = vshll.u32 %v3267, 16
      %v3713 = vrot.slane %v3711, 6
      %v3714 = vor.u32 %v3710, %v3713
      %v3715 = vsel %vm1290, %v3706, %v3714
      %v3716 = vunpack.c.l.b16 %v3285
      %v3717 = vunpack.c.l.b16 %v3295
      %v3718 = vunpack.c.l.b16 %v3313
      %v3719 = vunpack.c.l.b16 %v3323
      %v3720 = vunpack.c.l.b16 %v3341
      %v3721 = vunpack.c.l.b16 %v3351
      %v3722 = vunpack.c.l.b16 %v3369
      %v3723 = vunpack.c.l.b16 %v3379
      %v3724 = vunpack.c.l.b16 %v3397
      %v3725 = vunpack.c.l.b16 %v3407
      %v3726 = vunpack.c.l.b16 %v3425
      %v3727 = vunpack.c.l.b16 %v3435
      %v3728 = vunpack.c.l.b16 %v3453
      %v3729 = vunpack.c.l.b16 %v3463
      %v3730 = vunpack.c.l.b16 %v3481
      %v3731 = vunpack.c.l.b16 %v3491
      %v3732 = vunpack.c.l.b16 %v3509
      %v3733 = vunpack.c.l.b16 %v3519
      %v3734 = vunpack.c.l.b16 %v3537
      %v3735 = vunpack.c.l.b16 %v3547
      %v3736 = vunpack.c.l.b16 %v3565
      %v3737 = vunpack.c.l.b16 %v3575
      %v3738 = vunpack.c.l.b16 %v3593
      %v3739 = vunpack.c.l.b16 %v3603
      %v3740 = vunpack.c.l.b16 %v3621
      %v3741 = vunpack.c.l.b16 %v3631
      %v3742 = vunpack.c.l.b16 %v3649
      %v3743 = vunpack.c.l.b16 %v3659
      %v3744 = vunpack.c.l.b16 %v3677
      %v3745 = vunpack.c.l.b16 %v3687
      %v3746 = vunpack.c.l.b16 %v3705
      %v3747 = vunpack.c.l.b16 %v3715
      %v3748 = vpack.c.b16 %v3717, %v3716
      %v3749 = vpack.c.b16 %v3719, %v3718
      %v3750 = vpack.c.b16 %v3721, %v3720
      %v3751 = vpack.c.b16 %v3723, %v3722
      %v3752 = vpack.c.b16 %v3725, %v3724
      %v3753 = vpack.c.b16 %v3727, %v3726
      %v3754 = vpack.c.b16 %v3729, %v3728
      %v3755 = vpack.c.b16 %v3731, %v3730
      %v3756 = vpack.c.b16 %v3733, %v3732
      %v3757 = vpack.c.b16 %v3735, %v3734
      %v3758 = vpack.c.b16 %v3737, %v3736
      %v3759 = vpack.c.b16 %v3739, %v3738
      %v3760 = vpack.c.b16 %v3741, %v3740
      %v3761 = vpack.c.b16 %v3743, %v3742
      %v3762 = vpack.c.b16 %v3745, %v3744
      %v3763 = vpack.c.b16 %v3747, %v3746
      %3764 = vrot.lane.b32.xlu0 %v3748, 32
      %v3765 = vpop.permute.xlu0 %3764
      %3766 = vrot.lane.b32.xlu0 %v3749, 32
      %v3767 = vpop.permute.xlu0 %3766
      %3768 = vrot.lane.b32.xlu0 %v3750, 32
      %v3769 = vpop.permute.xlu0 %3768
      %3770 = vrot.lane.b32.xlu0 %v3751, 32
      %v3771 = vpop.permute.xlu0 %3770
      %3772 = vrot.lane.b32.xlu0 %v3752, 32
      %v3773 = vpop.permute.xlu0 %3772
      %3774 = vrot.lane.b32.xlu0 %v3753, 32
      %v3775 = vpop.permute.xlu0 %3774
      %3776 = vrot.lane.b32.xlu0 %v3754, 32
      %v3777 = vpop.permute.xlu0 %3776
      %3778 = vrot.lane.b32.xlu0 %v3755, 32
      %v3779 = vpop.permute.xlu0 %3778
      %3780 = vrot.lane.b32.xlu0 %v3756, 32
      %v3781 = vpop.permute.xlu0 %3780
      %3782 = vrot.lane.b32.xlu0 %v3757, 32
      %v3783 = vpop.permute.xlu0 %3782
      %3784 = vrot.lane.b32.xlu0 %v3758, 32
      %v3785 = vpop.permute.xlu0 %3784
      %3786 = vrot.lane.b32.xlu0 %v3759, 32
      %v3787 = vpop.permute.xlu0 %3786
      %3788 = vrot.lane.b32.xlu0 %v3760, 32
      %v3789 = vpop.permute.xlu0 %3788
      %3790 = vrot.lane.b32.xlu0 %v3761, 32
      %v3791 = vpop.permute.xlu0 %3790
      %3792 = vrot.lane.b32.xlu0 %v3762, 32
      %v3793 = vpop.permute.xlu0 %3792
      %3794 = vrot.lane.b32.xlu0 %v3763, 32
      %v3795 = vpop.permute.xlu0 %3794
      %vm3812 = vcmask 294144
      %3813 = vst.msk [vmem:[#allocation2] sm:$0xff] %vm3812, %v3765
      %3814 = vst.msk [vmem:[#allocation2 + $0x8] sm:$0xff] %vm3812, %v3767
      %3815 = vst.msk [vmem:[#allocation2 + $0x10] sm:$0xff] %vm3812, %v3769
      %3816 = vst.msk [vmem:[#allocation2 + $0x18] sm:$0xff] %vm3812, %v3771
      %3817 = vst.msk [vmem:[#allocation2 + $0x20] sm:$0xff] %vm3812, %v3773
      %3818 = vst.msk [vmem:[#allocation2 + $0x28] sm:$0xff] %vm3812, %v3775
      %3819 = vst.msk [vmem:[#allocation2 + $0x30] sm:$0xff] %vm3812, %v3777
      %3820 = vst.msk [vmem:[#allocation2 + $0x38] sm:$0xff] %vm3812, %v3779
      %3821 = vst.msk [vmem:[#allocation2 + $0x40] sm:$0xff] %vm3812, %v3781
      %3822 = vst.msk [vmem:[#allocation2 + $0x48] sm:$0xff] %vm3812, %v3783
      %3823 = vst.msk [vmem:[#allocation2 + $0x50] sm:$0xff] %vm3812, %v3785
      %3824 = vst.msk [vmem:[#allocation2 + $0x58] sm:$0xff] %vm3812, %v3787
      %3825 = vst.msk [vmem:[#allocation2 + $0x60] sm:$0xff] %vm3812, %v3789
      %3826 = vst.msk [vmem:[#allocation2 + $0x68] sm:$0xff] %vm3812, %v3791
      %3827 = vst.msk [vmem:[#allocation2 + $0x70] sm:$0xff] %vm3812, %v3793
      %3828 = vst.msk [vmem:[#allocation2 + $0x78] sm:$0xff] %vm3812, %v3795
      %v3829 = vld [vmem:[%s2176] sm:$0xc]
      %v3830 = vld [vmem:[%s2176 + $0x4] sm:$0xf]
      %v3831 = vld [vmem:[%s2176 + $0x8] sm:$0x3]
      %v3832 = vld [vmem:[%s2176 + $0xc] sm:$0xc]
      %v3833 = vld [vmem:[%s2176 + $0x10] sm:$0xf]
      %v3834 = vld [vmem:[%s2176 + $0x14] sm:$0x3]
      %v3835 = vld [vmem:[%s2176 + $0x18] sm:$0xc]
      %v3836 = vld [vmem:[%s2176 + $0x1c] sm:$0xf]
      %v3837 = vld [vmem:[%s2176 + $0x20] sm:$0x3]
      %v3838 = vld [vmem:[%s2176 + $0x24] sm:$0xc]
      %v3839 = vld [vmem:[%s2176 + $0x28] sm:$0xf]
      %v3840 = vld [vmem:[%s2176 + $0x2c] sm:$0x3]
      %v3841 = vld [vmem:[%s2176 + $0x30] sm:$0xc]
      %v3842 = vld [vmem:[%s2176 + $0x34] sm:$0xf]
      %v3843 = vld [vmem:[%s2176 + $0x38] sm:$0x3]
      %v3844 = vld [vmem:[%s2176 + $0x3c] sm:$0xc]
      %v3845 = vld [vmem:[%s2176 + $0x40] sm:$0xf]
      %v3846 = vld [vmem:[%s2176 + $0x44] sm:$0x3]
      %v3847 = vld [vmem:[%s2176 + $0x48] sm:$0xc]
      %v3848 = vld [vmem:[%s2176 + $0x4c] sm:$0xf]
      %v3849 = vld [vmem:[%s2176 + $0x50] sm:$0x3]
      %v3850 = vld [vmem:[%s2176 + $0x54] sm:$0xc]
      %v3851 = vld [vmem:[%s2176 + $0x58] sm:$0xf]
      %v3852 = vld [vmem:[%s2176 + $0x5c] sm:$0x3]
      %v3853 = vld [vmem:[%s2176 + $0x60] sm:$0xc]
      %v3854 = vld [vmem:[%s2176 + $0x64] sm:$0xf]
      %v3855 = vld [vmem:[%s2176 + $0x68] sm:$0x3]
      %v3856 = vld [vmem:[%s2176 + $0x6c] sm:$0xc]
      %v3857 = vld [vmem:[%s2176 + $0x70] sm:$0xf]
      %v3858 = vld [vmem:[%s2176 + $0x74] sm:$0x3]
      %v3859 = vld [vmem:[%s2176 + $0x78] sm:$0xc]
      %v3860 = vld [vmem:[%s2176 + $0x7c] sm:$0xf]
      %v3861 = vld [vmem:[%s2176 + $0x80] sm:$0x3]
      %v3862 = vld [vmem:[%s2176 + $0x84] sm:$0xc]
      %v3863 = vld [vmem:[%s2176 + $0x88] sm:$0xf]
      %v3864 = vld [vmem:[%s2176 + $0x8c] sm:$0x3]
      %v3865 = vld [vmem:[%s2176 + $0x90] sm:$0xc]
      %v3866 = vld [vmem:[%s2176 + $0x94] sm:$0xf]
      %v3867 = vld [vmem:[%s2176 + $0x98] sm:$0x3]
      %v3868 = vld [vmem:[%s2176 + $0x9c] sm:$0xc]
      %v3869 = vld [vmem:[%s2176 + $0xa0] sm:$0xf]
      %v3870 = vld [vmem:[%s2176 + $0xa4] sm:$0x3]
      %v3871 = vld [vmem:[%s2176 + $0xa8] sm:$0xc]
      %v3872 = vld [vmem:[%s2176 + $0xac] sm:$0xf]
      %v3873 = vld [vmem:[%s2176 + $0xb0] sm:$0x3]
      %v3874 = vld [vmem:[%s2176 + $0xb4] sm:$0xc]
      %v3875 = vld [vmem:[%s2176 + $0xb8] sm:$0xf]
      %v3876 = vld [vmem:[%s2176 + $0xbc] sm:$0x3]
      %v3925 = vrot.slane %v3829, 6
      %v3926 = vrot.slane %v3925, 4
      %v3927 = vrot.slane %v3830, 6
      %v3928 = vsel %vm1950, %v3926, %v3927
      %v3929 = vrot.slane %v3927, 4
      %v3930 = vrot.slane %v3831, 6
      %v3931 = vsel %vm1950, %v3929, %v3930
      %v3932 = vrot.slane %v3832, 6
      %v3933 = vrot.slane %v3932, 4
      %v3934 = vrot.slane %v3833, 6
      %v3935 = vsel %vm1950, %v3933, %v3934
      %v3936 = vrot.slane %v3934, 4
      %v3937 = vrot.slane %v3834, 6
      %v3938 = vsel %vm1950, %v3936, %v3937
      %v3939 = vrot.slane %v3835, 6
      %v3940 = vrot.slane %v3939, 4
      %v3941 = vrot.slane %v3836, 6
      %v3942 = vsel %vm1950, %v3940, %v3941
      %v3943 = vrot.slane %v3941, 4
      %v3944 = vrot.slane %v3837, 6
      %v3945 = vsel %vm1950, %v3943, %v3944
      %v3946 = vrot.slane %v3838, 6
      %v3947 = vrot.slane %v3946, 4
      %v3948 = vrot.slane %v3839, 6
      %v3949 = vsel %vm1950, %v3947, %v3948
      %v3950 = vrot.slane %v3948, 4
      %v3951 = vrot.slane %v3840, 6
      %v3952 = vsel %vm1950, %v3950, %v3951
      %v3953 = vrot.slane %v3841, 6
      %v3954 = vrot.slane %v3953, 4
      %v3955 = vrot.slane %v3842, 6
      %v3956 = vsel %vm1950, %v3954, %v3955
      %v3957 = vrot.slane %v3955, 4
      %v3958 = vrot.slane %v3843, 6
      %v3959 = vsel %vm1950, %v3957, %v3958
      %v3960 = vrot.slane %v3844, 6
      %v3961 = vrot.slane %v3960, 4
      %v3962 = vrot.slane %v3845, 6
      %v3963 = vsel %vm1950, %v3961, %v3962
      %v3964 = vrot.slane %v3962, 4
      %v3965 = vrot.slane %v3846, 6
      %v3966 = vsel %vm1950, %v3964, %v3965
      %v3967 = vrot.slane %v3847, 6
      %v3968 = vrot.slane %v3967, 4
      %v3969 = vrot.slane %v3848, 6
      %v3970 = vsel %vm1950, %v3968, %v3969
      %v3971 = vrot.slane %v3969, 4
      %v3972 = vrot.slane %v3849, 6
      %v3973 = vsel %vm1950, %v3971, %v3972
      %v3974 = vrot.slane %v3850, 6
      %v3975 = vrot.slane %v3974, 4
      %v3976 = vrot.slane %v3851, 6
      %v3977 = vsel %vm1950, %v3975, %v3976
      %v3978 = vrot.slane %v3976, 4
      %v3979 = vrot.slane %v3852, 6
      %v3980 = vsel %vm1950, %v3978, %v3979
      %v3981 = vrot.slane %v3853, 6
      %v3982 = vrot.slane %v3981, 4
      %v3983 = vrot.slane %v3854, 6
      %v3984 = vsel %vm1950, %v3982, %v3983
      %v3985 = vrot.slane %v3983, 4
      %v3986 = vrot.slane %v3855, 6
      %v3987 = vsel %vm1950, %v3985, %v3986
      %v3988 = vrot.slane %v3856, 6
      %v3989 = vrot.slane %v3988, 4
      %v3990 = vrot.slane %v3857, 6
      %v3991 = vsel %vm1950, %v3989, %v3990
      %v3992 = vrot.slane %v3990, 4
      %v3993 = vrot.slane %v3858, 6
      %v3994 = vsel %vm1950, %v3992, %v3993
      %v3995 = vrot.slane %v3859, 6
      %v3996 = vrot.slane %v3995, 4
      %v3997 = vrot.slane %v3860, 6
      %v3998 = vsel %vm1950, %v3996, %v3997
      %v3999 = vrot.slane %v3997, 4
      %v4000 = vrot.slane %v3861, 6
      %v4001 = vsel %vm1950, %v3999, %v4000
      %v4002 = vrot.slane %v3862, 6
      %v4003 = vrot.slane %v4002, 4
      %v4004 = vrot.slane %v3863, 6
      %v4005 = vsel %vm1950, %v4003, %v4004
      %v4006 = vrot.slane %v4004, 4
      %v4007 = vrot.slane %v3864, 6
      %v4008 = vsel %vm1950, %v4006, %v4007
      %v4009 = vrot.slane %v3865, 6
      %v4010 = vrot.slane %v4009, 4
      %v4011 = vrot.slane %v3866, 6
      %v4012 = vsel %vm1950, %v4010, %v4011
      %v4013 = vrot.slane %v4011, 4
      %v4014 = vrot.slane %v3867, 6
      %v4015 = vsel %vm1950, %v4013, %v4014
      %v4016 = vrot.slane %v3868, 6
      %v4017 = vrot.slane %v4016, 4
      %v4018 = vrot.slane %v3869, 6
      %v4019 = vsel %vm1950, %v4017, %v4018
      %v4020 = vrot.slane %v4018, 4
      %v4021 = vrot.slane %v3870, 6
      %v4022 = vsel %vm1950, %v4020, %v4021
      %v4023 = vrot.slane %v3871, 6
      %v4024 = vrot.slane %v4023, 4
      %v4025 = vrot.slane %v3872, 6
      %v4026 = vsel %vm1950, %v4024, %v4025
      %v4027 = vrot.slane %v4025, 4
      %v4028 = vrot.slane %v3873, 6
      %v4029 = vsel %vm1950, %v4027, %v4028
      %v4030 = vrot.slane %v3874, 6
      %v4031 = vrot.slane %v4030, 4
      %v4032 = vrot.slane %v3875, 6
      %v4033 = vsel %vm1950, %v4031, %v4032
      %v4034 = vrot.slane %v4032, 4
      %v4035 = vrot.slane %v3876, 6
      %v4036 = vsel %vm1950, %v4034, %v4035
      %v4037 = vunpack.c.l.b16 %v3928
      %v4038 = vunpack.c.l.b16 %v3931
      %v4039 = vunpack.c.l.b16 %v3935
      %v4040 = vunpack.c.l.b16 %v3938
      %v4041 = vunpack.c.l.b16 %v3942
      %v4042 = vunpack.c.l.b16 %v3945
      %v4043 = vunpack.c.l.b16 %v3949
      %v4044 = vunpack.c.l.b16 %v3952
      %v4045 = vunpack.c.l.b16 %v3956
      %v4046 = vunpack.c.l.b16 %v3959
      %v4047 = vunpack.c.l.b16 %v3963
      %v4048 = vunpack.c.l.b16 %v3966
      %v4049 = vunpack.c.l.b16 %v3970
      %v4050 = vunpack.c.l.b16 %v3973
      %v4051 = vunpack.c.l.b16 %v3977
      %v4052 = vunpack.c.l.b16 %v3980
      %v4053 = vunpack.c.l.b16 %v3984
      %v4054 = vunpack.c.l.b16 %v3987
      %v4055 = vunpack.c.l.b16 %v3991
      %v4056 = vunpack.c.l.b16 %v3994
      %v4057 = vunpack.c.l.b16 %v3998
      %v4058 = vunpack.c.l.b16 %v4001
      %v4059 = vunpack.c.l.b16 %v4005
      %v4060 = vunpack.c.l.b16 %v4008
      %v4061 = vunpack.c.l.b16 %v4012
      %v4062 = vunpack.c.l.b16 %v4015
      %v4063 = vunpack.c.l.b16 %v4019
      %v4064 = vunpack.c.l.b16 %v4022
      %v4065 = vunpack.c.l.b16 %v4026
      %v4066 = vunpack.c.l.b16 %v4029
      %v4067 = vunpack.c.l.b16 %v4033
      %v4068 = vunpack.c.l.b16 %v4036
      %v4069 = vpack.c.b16 %v4038, %v4037
      %v4070 = vpack.c.b16 %v4040, %v4039
      %v4071 = vpack.c.b16 %v4042, %v4041
      %v4072 = vpack.c.b16 %v4044, %v4043
      %v4073 = vpack.c.b16 %v4046, %v4045
      %v4074 = vpack.c.b16 %v4048, %v4047
      %v4075 = vpack.c.b16 %v4050, %v4049
      %v4076 = vpack.c.b16 %v4052, %v4051
      %v4077 = vpack.c.b16 %v4054, %v4053
      %v4078 = vpack.c.b16 %v4056, %v4055
      %v4079 = vpack.c.b16 %v4058, %v4057
      %v4080 = vpack.c.b16 %v4060, %v4059
      %v4081 = vpack.c.b16 %v4062, %v4061
      %v4082 = vpack.c.b16 %v4064, %v4063
      %v4083 = vpack.c.b16 %v4066, %v4065
      %v4084 = vpack.c.b16 %v4068, %v4067
      %4085 = vrot.lane.b32.xlu0 %v4069, 36
      %v4086 = vpop.permute.xlu0 %4085
      %4087 = vrot.lane.b32.xlu0 %v4070, 36
      %v4088 = vpop.permute.xlu0 %4087
      %4089 = vrot.lane.b32.xlu0 %v4071, 36
      %v4090 = vpop.permute.xlu0 %4089
      %4091 = vrot.lane.b32.xlu0 %v4072, 36
      %v4092 = vpop.permute.xlu0 %4091
      %4093 = vrot.lane.b32.xlu0 %v4073, 36
      %v4094 = vpop.permute.xlu0 %4093
      %4095 = vrot.lane.b32.xlu0 %v4074, 36
      %v4096 = vpop.permute.xlu0 %4095
      %4097 = vrot.lane.b32.xlu0 %v4075, 36
      %v4098 = vpop.permute.xlu0 %4097
      %4099 = vrot.lane.b32.xlu0 %v4076, 36
      %v4100 = vpop.permute.xlu0 %4099
      %4101 = vrot.lane.b32.xlu0 %v4077, 36
      %v4102 = vpop.permute.xlu0 %4101
      %4103 = vrot.lane.b32.xlu0 %v4078, 36
      %v4104 = vpop.permute.xlu0 %4103
      %4105 = vrot.lane.b32.xlu0 %v4079, 36
      %v4106 = vpop.permute.xlu0 %4105
      %4107 = vrot.lane.b32.xlu0 %v4080, 36
      %v4108 = vpop.permute.xlu0 %4107
      %4109 = vrot.lane.b32.xlu0 %v4081, 36
      %v4110 = vpop.permute.xlu0 %4109
      %4111 = vrot.lane.b32.xlu0 %v4082, 36
      %v4112 = vpop.permute.xlu0 %4111
      %4113 = vrot.lane.b32.xlu0 %v4083, 36
      %v4114 = vpop.permute.xlu0 %4113
      %4115 = vrot.lane.b32.xlu0 %v4084, 36
      %v4116 = vpop.permute.xlu0 %4115
      %vm4133 = vcmask 326944
      %4134 = vst.msk [vmem:[#allocation2] sm:$0xff] %vm4133, %v4086
      %4135 = vst.msk [vmem:[#allocation2 + $0x8] sm:$0xff] %vm4133, %v4088
      %4136 = vst.msk [vmem:[#allocation2 + $0x10] sm:$0xff] %vm4133, %v4090
      %4137 = vst.msk [vmem:[#allocation2 + $0x18] sm:$0xff] %vm4133, %v4092
      %4138 = vst.msk [vmem:[#allocation2 + $0x20] sm:$0xff] %vm4133, %v4094
      %4139 = vst.msk [vmem:[#allocation2 + $0x28] sm:$0xff] %vm4133, %v4096
      %4140 = vst.msk [vmem:[#allocation2 + $0x30] sm:$0xff] %vm4133, %v4098
      %4141 = vst.msk [vmem:[#allocation2 + $0x38] sm:$0xff] %vm4133, %v4100
      %4142 = vst.msk [vmem:[#allocation2 + $0x40] sm:$0xff] %vm4133, %v4102
      %4143 = vst.msk [vmem:[#allocation2 + $0x48] sm:$0xff] %vm4133, %v4104
      %4144 = vst.msk [vmem:[#allocation2 + $0x50] sm:$0xff] %vm4133, %v4106
      %4145 = vst.msk [vmem:[#allocation2 + $0x58] sm:$0xff] %vm4133, %v4108
      %4146 = vst.msk [vmem:[#allocation2 + $0x60] sm:$0xff] %vm4133, %v4110
      %4147 = vst.msk [vmem:[#allocation2 + $0x68] sm:$0xff] %vm4133, %v4112
      %4148 = vst.msk [vmem:[#allocation2 + $0x70] sm:$0xff] %vm4133, %v4114
      %4149 = vst.msk [vmem:[#allocation2 + $0x78] sm:$0xff] %vm4133, %v4116
      %s4150 = scalar_lea.vmem %s206, 24
      %v4151 = vld [vmem:[%s4150] sm:$0xf]
      %v4152 = vld [vmem:[%s4150 + $0x4] sm:$0xf]
      %v4153 = vld [vmem:[%s4150 + $0xc] sm:$0xf]
      %v4154 = vld [vmem:[%s4150 + $0x10] sm:$0xf]
      %v4155 = vld [vmem:[%s4150 + $0x18] sm:$0xf]
      %v4156 = vld [vmem:[%s4150 + $0x1c] sm:$0xf]
      %v4157 = vld [vmem:[%s4150 + $0x24] sm:$0xf]
      %v4158 = vld [vmem:[%s4150 + $0x28] sm:$0xf]
      %v4159 = vld [vmem:[%s4150 + $0x30] sm:$0xf]
      %v4160 = vld [vmem:[%s4150 + $0x34] sm:$0xf]
      %v4161 = vld [vmem:[%s4150 + $0x3c] sm:$0xf]
      %v4162 = vld [vmem:[%s4150 + $0x40] sm:$0xf]
      %v4163 = vld [vmem:[%s4150 + $0x48] sm:$0xf]
      %v4164 = vld [vmem:[%s4150 + $0x4c] sm:$0xf]
      %v4165 = vld [vmem:[%s4150 + $0x54] sm:$0xf]
      %v4166 = vld [vmem:[%s4150 + $0x58] sm:$0xf]
      %v4167 = vld [vmem:[%s4150 + $0x60] sm:$0xf]
      %v4168 = vld [vmem:[%s4150 + $0x64] sm:$0xf]
      %v4169 = vld [vmem:[%s4150 + $0x6c] sm:$0xf]
      %v4170 = vld [vmem:[%s4150 + $0x70] sm:$0xf]
      %v4171 = vld [vmem:[%s4150 + $0x78] sm:$0xf]
      %v4172 = vld [vmem:[%s4150 + $0x7c] sm:$0xf]
      %v4173 = vld [vmem:[%s4150 + $0x84] sm:$0xf]
      %v4174 = vld [vmem:[%s4150 + $0x88] sm:$0xf]
      %v4175 = vld [vmem:[%s4150 + $0x90] sm:$0xf]
      %v4176 = vld [vmem:[%s4150 + $0x94] sm:$0xf]
      %v4177 = vld [vmem:[%s4150 + $0x9c] sm:$0xf]
      %v4178 = vld [vmem:[%s4150 + $0xa0] sm:$0xf]
      %v4179 = vld [vmem:[%s4150 + $0xa8] sm:$0xf]
      %v4180 = vld [vmem:[%s4150 + $0xac] sm:$0xf]
      %v4181 = vld [vmem:[%s4150 + $0xb4] sm:$0xf]
      %v4182 = vld [vmem:[%s4150 + $0xb8] sm:$0xf]
      %v4215 = vunpack.c.l.b16 %v4151
      %v4216 = vunpack.c.l.b16 %v4152
      %v4217 = vunpack.c.l.b16 %v4153
      %v4218 = vunpack.c.l.b16 %v4154
      %v4219 = vunpack.c.l.b16 %v4155
      %v4220 = vunpack.c.l.b16 %v4156
      %v4221 = vunpack.c.l.b16 %v4157
      %v4222 = vunpack.c.l.b16 %v4158
      %v4223 = vunpack.c.l.b16 %v4159
      %v4224 = vunpack.c.l.b16 %v4160
      %v4225 = vunpack.c.l.b16 %v4161
      %v4226 = vunpack.c.l.b16 %v4162
      %v4227 = vunpack.c.l.b16 %v4163
      %v4228 = vunpack.c.l.b16 %v4164
      %v4229 = vunpack.c.l.b16 %v4165
      %v4230 = vunpack.c.l.b16 %v4166
      %v4231 = vunpack.c.l.b16 %v4167
      %v4232 = vunpack.c.l.b16 %v4168
      %v4233 = vunpack.c.l.b16 %v4169
      %v4234 = vunpack.c.l.b16 %v4170
      %v4235 = vunpack.c.l.b16 %v4171
      %v4236 = vunpack.c.l.b16 %v4172
      %v4237 = vunpack.c.l.b16 %v4173
      %v4238 = vunpack.c.l.b16 %v4174
      %v4239 = vunpack.c.l.b16 %v4175
      %v4240 = vunpack.c.l.b16 %v4176
      %v4241 = vunpack.c.l.b16 %v4177
      %v4242 = vunpack.c.l.b16 %v4178
      %v4243 = vunpack.c.l.b16 %v4179
      %v4244 = vunpack.c.l.b16 %v4180
      %v4245 = vunpack.c.l.b16 %v4181
      %v4246 = vunpack.c.l.b16 %v4182
      %v4247 = vpack.c.b16 %v4216, %v4215
      %v4248 = vpack.c.b16 %v4218, %v4217
      %v4249 = vpack.c.b16 %v4220, %v4219
      %v4250 = vpack.c.b16 %v4222, %v4221
      %v4251 = vpack.c.b16 %v4224, %v4223
      %v4252 = vpack.c.b16 %v4226, %v4225
      %v4253 = vpack.c.b16 %v4228, %v4227
      %v4254 = vpack.c.b16 %v4230, %v4229
      %v4255 = vpack.c.b16 %v4232, %v4231
      %v4256 = vpack.c.b16 %v4234, %v4233
      %v4257 = vpack.c.b16 %v4236, %v4235
      %v4258 = vpack.c.b16 %v4238, %v4237
      %v4259 = vpack.c.b16 %v4240, %v4239
      %v4260 = vpack.c.b16 %v4242, %v4241
      %v4261 = vpack.c.b16 %v4244, %v4243
      %v4262 = vpack.c.b16 %v4246, %v4245
      %4263 = vrot.lane.b32.xlu0 %v4247, 40
      %v4264 = vpop.permute.xlu0 %4263
      %4265 = vrot.lane.b32.xlu0 %v4248, 40
      %v4266 = vpop.permute.xlu0 %4265
      %4267 = vrot.lane.b32.xlu0 %v4249, 40
      %v4268 = vpop.permute.xlu0 %4267
      %4269 = vrot.lane.b32.xlu0 %v4250, 40
      %v4270 = vpop.permute.xlu0 %4269
      %4271 = vrot.lane.b32.xlu0 %v4251, 40
      %v4272 = vpop.permute.xlu0 %4271
      %4273 = vrot.lane.b32.xlu0 %v4252, 40
      %v4274 = vpop.permute.xlu0 %4273
      %4275 = vrot.lane.b32.xlu0 %v4253, 40
      %v4276 = vpop.permute.xlu0 %4275
      %4277 = vrot.lane.b32.xlu0 %v4254, 40
      %v4278 = vpop.permute.xlu0 %4277
      %4279 = vrot.lane.b32.xlu0 %v4255, 40
      %v4280 = vpop.permute.xlu0 %4279
      %4281 = vrot.lane.b32.xlu0 %v4256, 40
      %v4282 = vpop.permute.xlu0 %4281
      %4283 = vrot.lane.b32.xlu0 %v4257, 40
      %v4284 = vpop.permute.xlu0 %4283
      %4285 = vrot.lane.b32.xlu0 %v4258, 40
      %v4286 = vpop.permute.xlu0 %4285
      %4287 = vrot.lane.b32.xlu0 %v4259, 40
      %v4288 = vpop.permute.xlu0 %4287
      %4289 = vrot.lane.b32.xlu0 %v4260, 40
      %v4290 = vpop.permute.xlu0 %4289
      %4291 = vrot.lane.b32.xlu0 %v4261, 40
      %v4292 = vpop.permute.xlu0 %4291
      %4293 = vrot.lane.b32.xlu0 %v4262, 40
      %v4294 = vpop.permute.xlu0 %4293
      %vm4311 = vcmask 359744
      %4312 = vst.msk [vmem:[#allocation2] sm:$0xff] %vm4311, %v4264
      %4313 = vst.msk [vmem:[#allocation2 + $0x8] sm:$0xff] %vm4311, %v4266
      %4314 = vst.msk [vmem:[#allocation2 + $0x10] sm:$0xff] %vm4311, %v4268
      %4315 = vst.msk [vmem:[#allocation2 + $0x18] sm:$0xff] %vm4311, %v4270
      %4316 = vst.msk [vmem:[#allocation2 + $0x20] sm:$0xff] %vm4311, %v4272
      %4317 = vst.msk [vmem:[#allocation2 + $0x28] sm:$0xff] %vm4311, %v4274
      %4318 = vst.msk [vmem:[#allocation2 + $0x30] sm:$0xff] %vm4311, %v4276
      %4319 = vst.msk [vmem:[#allocation2 + $0x38] sm:$0xff] %vm4311, %v4278
      %4320 = vst.msk [vmem:[#allocation2 + $0x40] sm:$0xff] %vm4311, %v4280
      %4321 = vst.msk [vmem:[#allocation2 + $0x48] sm:$0xff] %vm4311, %v4282
      %4322 = vst.msk [vmem:[#allocation2 + $0x50] sm:$0xff] %vm4311, %v4284
      %4323 = vst.msk [vmem:[#allocation2 + $0x58] sm:$0xff] %vm4311, %v4286
      %4324 = vst.msk [vmem:[#allocation2 + $0x60] sm:$0xff] %vm4311, %v4288
      %4325 = vst.msk [vmem:[#allocation2 + $0x68] sm:$0xff] %vm4311, %v4290
      %4326 = vst.msk [vmem:[#allocation2 + $0x70] sm:$0xff] %vm4311, %v4292
      %4327 = vst.msk [vmem:[#allocation2 + $0x78] sm:$0xff] %vm4311, %v4294
      %v4328 = vld [vmem:[%s4150] sm:$0xf]
      %v4329 = vld [vmem:[%s4150 + $0x4] sm:$0xf]
      %v4330 = vld [vmem:[%s4150 + $0x8] sm:$0x1]
      %v4331 = vld [vmem:[%s4150 + $0xc] sm:$0xf]
      %v4332 = vld [vmem:[%s4150 + $0x10] sm:$0xf]
      %v4333 = vld [vmem:[%s4150 + $0x14] sm:$0x1]
      %v4334 = vld [vmem:[%s4150 + $0x18] sm:$0xf]
      %v4335 = vld [vmem:[%s4150 + $0x1c] sm:$0xf]
      %v4336 = vld [vmem:[%s4150 + $0x20] sm:$0x1]
      %v4337 = vld [vmem:[%s4150 + $0x24] sm:$0xf]
      %v4338 = vld [vmem:[%s4150 + $0x28] sm:$0xf]
      %v4339 = vld [vmem:[%s4150 + $0x2c] sm:$0x1]
      %v4340 = vld [vmem:[%s4150 + $0x30] sm:$0xf]
      %v4341 = vld [vmem:[%s4150 + $0x34] sm:$0xf]
      %v4342 = vld [vmem:[%s4150 + $0x38] sm:$0x1]
      %v4343 = vld [vmem:[%s4150 + $0x3c] sm:$0xf]
      %v4344 = vld [vmem:[%s4150 + $0x40] sm:$0xf]
      %v4345 = vld [vmem:[%s4150 + $0x44] sm:$0x1]
      %v4346 = vld [vmem:[%s4150 + $0x48] sm:$0xf]
      %v4347 = vld [vmem:[%s4150 + $0x4c] sm:$0xf]
      %v4348 = vld [vmem:[%s4150 + $0x50] sm:$0x1]
      %v4349 = vld [vmem:[%s4150 + $0x54] sm:$0xf]
      %v4350 = vld [vmem:[%s4150 + $0x58] sm:$0xf]
      %v4351 = vld [vmem:[%s4150 + $0x5c] sm:$0x1]
      %v4352 = vld [vmem:[%s4150 + $0x60] sm:$0xf]
      %v4353 = vld [vmem:[%s4150 + $0x64] sm:$0xf]
      %v4354 = vld [vmem:[%s4150 + $0x68] sm:$0x1]
      %v4355 = vld [vmem:[%s4150 + $0x6c] sm:$0xf]
      %v4356 = vld [vmem:[%s4150 + $0x70] sm:$0xf]
      %v4357 = vld [vmem:[%s4150 + $0x74] sm:$0x1]
      %v4358 = vld [vmem:[%s4150 + $0x78] sm:$0xf]
      %v4359 = vld [vmem:[%s4150 + $0x7c] sm:$0xf]
      %v4360 = vld [vmem:[%s4150 + $0x80] sm:$0x1]
      %v4361 = vld [vmem:[%s4150 + $0x84] sm:$0xf]
      %v4362 = vld [vmem:[%s4150 + $0x88] sm:$0xf]
      %v4363 = vld [vmem:[%s4150 + $0x8c] sm:$0x1]
      %v4364 = vld [vmem:[%s4150 + $0x90] sm:$0xf]
      %v4365 = vld [vmem:[%s4150 + $0x94] sm:$0xf]
      %v4366 = vld [vmem:[%s4150 + $0x98] sm:$0x1]
      %v4367 = vld [vmem:[%s4150 + $0x9c] sm:$0xf]
      %v4368 = vld [vmem:[%s4150 + $0xa0] sm:$0xf]
      %v4369 = vld [vmem:[%s4150 + $0xa4] sm:$0x1]
      %v4370 = vld [vmem:[%s4150 + $0xa8] sm:$0xf]
      %v4371 = vld [vmem:[%s4150 + $0xac] sm:$0xf]
      %v4372 = vld [vmem:[%s4150 + $0xb0] sm:$0x1]
      %v4373 = vld [vmem:[%s4150 + $0xb4] sm:$0xf]
      %v4374 = vld [vmem:[%s4150 + $0xb8] sm:$0xf]
      %v4375 = vld [vmem:[%s4150 + $0xbc] sm:$0x1]
      %v4377 = vshrl.u32 %v4328, 16
      %v4379 = vrot.slane %v4377, 4
      %v4380 = vshll.u32 %v4328, 16
      %v4382 = vrot.slane %v4380, 5
      %v4383 = vor.u32 %v4379, %v4382
      %v4384 = vrot.slane %v4383, 4
      %v4386 = vshll.u32 %v4329, 16
      %v4388 = vrot.slane %v4386, 5
      %v4389 = vsel %vm418, %v4384, %v4388
      %v4390 = vshrl.u32 %v4329, 16
      %v4392 = vrot.slane %v4390, 4
      %v4393 = vor.u32 %v4392, %v4388
      %v4394 = vrot.slane %v4393, 4
      %v4396 = vshll.u32 %v4330, 16
      %v4398 = vrot.slane %v4396, 5
      %v4399 = vsel %vm418, %v4394, %v4398
      %v4401 = vshrl.u32 %v4331, 16
      %v4403 = vrot.slane %v4401, 4
      %v4404 = vshll.u32 %v4331, 16
      %v4406 = vrot.slane %v4404, 5
      %v4407 = vor.u32 %v4403, %v4406
      %v4408 = vrot.slane %v4407, 4
      %v4410 = vshll.u32 %v4332, 16
      %v4412 = vrot.slane %v4410, 5
      %v4413 = vsel %vm418, %v4408, %v4412
      %v4414 = vshrl.u32 %v4332, 16
      %v4416 = vrot.slane %v4414, 4
      %v4417 = vor.u32 %v4416, %v4412
      %v4418 = vrot.slane %v4417, 4
      %v4420 = vshll.u32 %v4333, 16
      %v4422 = vrot.slane %v4420, 5
      %v4423 = vsel %vm418, %v4418, %v4422
      %v4425 = vshrl.u32 %v4334, 16
      %v4427 = vrot.slane %v4425, 4
      %v4428 = vshll.u32 %v4334, 16
      %v4430 = vrot.slane %v4428, 5
      %v4431 = vor.u32 %v4427, %v4430
      %v4432 = vrot.slane %v4431, 4
      %v4434 = vshll.u32 %v4335, 16
      %v4436 = vrot.slane %v4434, 5
      %v4437 = vsel %vm418, %v4432, %v4436
      %v4438 = vshrl.u32 %v4335, 16
      %v4440 = vrot.slane %v4438, 4
      %v4441 = vor.u32 %v4440, %v4436
      %v4442 = vrot.slane %v4441, 4
      %v4444 = vshll.u32 %v4336, 16
      %v4446 = vrot.slane %v4444, 5
      %v4447 = vsel %vm418, %v4442, %v4446
      %v4449 = vshrl.u32 %v4337, 16
      %v4451 = vrot.slane %v4449, 4
      %v4452 = vshll.u32 %v4337, 16
      %v4454 = vrot.slane %v4452, 5
      %v4455 = vor.u32 %v4451, %v4454
      %v4456 = vrot.slane %v4455, 4
      %v4458 = vshll.u32 %v4338, 16
      %v4460 = vrot.slane %v4458, 5
      %v4461 = vsel %vm418, %v4456, %v4460
      %v4462 = vshrl.u32 %v4338, 16
      %v4464 = vrot.slane %v4462, 4
      %v4465 = vor.u32 %v4464, %v4460
      %v4466 = vrot.slane %v4465, 4
      %v4468 = vshll.u32 %v4339, 16
      %v4470 = vrot.slane %v4468, 5
      %v4471 = vsel %vm418, %v4466, %v4470
      %v4473 = vshrl.u32 %v4340, 16
      %v4475 = vrot.slane %v4473, 4
      %v4476 = vshll.u32 %v4340, 16
      %v4478 = vrot.slane %v4476, 5
      %v4479 = vor.u32 %v4475, %v4478
      %v4480 = vrot.slane %v4479, 4
      %v4482 = vshll.u32 %v4341, 16
      %v4484 = vrot.slane %v4482, 5
      %v4485 = vsel %vm418, %v4480, %v4484
      %v4486 = vshrl.u32 %v4341, 16
      %v4488 = vrot.slane %v4486, 4
      %v4489 = vor.u32 %v4488, %v4484
      %v4490 = vrot.slane %v4489, 4
      %v4492 = vshll.u32 %v4342, 16
      %v4494 = vrot.slane %v4492, 5
      %v4495 = vsel %vm418, %v4490, %v4494
      %v4497 = vshrl.u32 %v4343, 16
      %v4499 = vrot.slane %v4497, 4
      %v4500 = vshll.u32 %v4343, 16
      %v4502 = vrot.slane %v4500, 5
      %v4503 = vor.u32 %v4499, %v4502
      %v4504 = vrot.slane %v4503, 4
      %v4506 = vshll.u32 %v4344, 16
      %v4508 = vrot.slane %v4506, 5
      %v4509 = vsel %vm418, %v4504, %v4508
      %v4510 = vshrl.u32 %v4344, 16
      %v4512 = vrot.slane %v4510, 4
      %v4513 = vor.u32 %v4512, %v4508
      %v4514 = vrot.slane %v4513, 4
      %v4516 = vshll.u32 %v4345, 16
      %v4518 = vrot.slane %v4516, 5
      %v4519 = vsel %vm418, %v4514, %v4518
      %v4521 = vshrl.u32 %v4346, 16
      %v4523 = vrot.slane %v4521, 4
      %v4524 = vshll.u32 %v4346, 16
      %v4526 = vrot.slane %v4524, 5
      %v4527 = vor.u32 %v4523, %v4526
      %v4528 = vrot.slane %v4527, 4
      %v4530 = vshll.u32 %v4347, 16
      %v4532 = vrot.slane %v4530, 5
      %v4533 = vsel %vm418, %v4528, %v4532
      %v4534 = vshrl.u32 %v4347, 16
      %v4536 = vrot.slane %v4534, 4
      %v4537 = vor.u32 %v4536, %v4532
      %v4538 = vrot.slane %v4537, 4
      %v4540 = vshll.u32 %v4348, 16
      %v4542 = vrot.slane %v4540, 5
      %v4543 = vsel %vm418, %v4538, %v4542
      %v4545 = vshrl.u32 %v4349, 16
      %v4547 = vrot.slane %v4545, 4
      %v4548 = vshll.u32 %v4349, 16
      %v4550 = vrot.slane %v4548, 5
      %v4551 = vor.u32 %v4547, %v4550
      %v4552 = vrot.slane %v4551, 4
      %v4554 = vshll.u32 %v4350, 16
      %v4556 = vrot.slane %v4554, 5
      %v4557 = vsel %vm418, %v4552, %v4556
      %v4558 = vshrl.u32 %v4350, 16
      %v4560 = vrot.slane %v4558, 4
      %v4561 = vor.u32 %v4560, %v4556
      %v4562 = vrot.slane %v4561, 4
      %v4564 = vshll.u32 %v4351, 16
      %v4566 = vrot.slane %v4564, 5
      %v4567 = vsel %vm418, %v4562, %v4566
      %v4569 = vshrl.u32 %v4352, 16
      %v4571 = vrot.slane %v4569, 4
      %v4572 = vshll.u32 %v4352, 16
      %v4574 = vrot.slane %v4572, 5
      %v4575 = vor.u32 %v4571, %v4574
      %v4576 = vrot.slane %v4575, 4
      %v4578 = vshll.u32 %v4353, 16
      %v4580 = vrot.slane %v4578, 5
      %v4581 = vsel %vm418, %v4576, %v4580
      %v4582 = vshrl.u32 %v4353, 16
      %v4584 = vrot.slane %v4582, 4
      %v4585 = vor.u32 %v4584, %v4580
      %v4586 = vrot.slane %v4585, 4
      %v4588 = vshll.u32 %v4354, 16
      %v4590 = vrot.slane %v4588, 5
      %v4591 = vsel %vm418, %v4586, %v4590
      %v4593 = vshrl.u32 %v4355, 16
      %v4595 = vrot.slane %v4593, 4
      %v4596 = vshll.u32 %v4355, 16
      %v4598 = vrot.slane %v4596, 5
      %v4599 = vor.u32 %v4595, %v4598
      %v4600 = vrot.slane %v4599, 4
      %v4602 = vshll.u32 %v4356, 16
      %v4604 = vrot.slane %v4602, 5
      %v4605 = vsel %vm418, %v4600, %v4604
      %v4606 = vshrl.u32 %v4356, 16
      %v4608 = vrot.slane %v4606, 4
      %v4609 = vor.u32 %v4608, %v4604
      %v4610 = vrot.slane %v4609, 4
      %v4612 = vshll.u32 %v4357, 16
      %v4614 = vrot.slane %v4612, 5
      %v4615 = vsel %vm418, %v4610, %v4614
      %v4617 = vshrl.u32 %v4358, 16
      %v4619 = vrot.slane %v4617, 4
      %v4620 = vshll.u32 %v4358, 16
      %v4622 = vrot.slane %v4620, 5
      %v4623 = vor.u32 %v4619, %v4622
      %v4624 = vrot.slane %v4623, 4
      %v4626 = vshll.u32 %v4359, 16
      %v4628 = vrot.slane %v4626, 5
      %v4629 = vsel %vm418, %v4624, %v4628
      %v4630 = vshrl.u32 %v4359, 16
      %v4632 = vrot.slane %v4630, 4
      %v4633 = vor.u32 %v4632, %v4628
      %v4634 = vrot.slane %v4633, 4
      %v4636 = vshll.u32 %v4360, 16
      %v4638 = vrot.slane %v4636, 5
      %v4639 = vsel %vm418, %v4634, %v4638
      %v4641 = vshrl.u32 %v4361, 16
      %v4643 = vrot.slane %v4641, 4
      %v4644 = vshll.u32 %v4361, 16
      %v4646 = vrot.slane %v4644, 5
      %v4647 = vor.u32 %v4643, %v4646
      %v4648 = vrot.slane %v4647, 4
      %v4650 = vshll.u32 %v4362, 16
      %v4652 = vrot.slane %v4650, 5
      %v4653 = vsel %vm418, %v4648, %v4652
      %v4654 = vshrl.u32 %v4362, 16
      %v4656 = vrot.slane %v4654, 4
      %v4657 = vor.u32 %v4656, %v4652
      %v4658 = vrot.slane %v4657, 4
      %v4660 = vshll.u32 %v4363, 16
      %v4662 = vrot.slane %v4660, 5
      %v4663 = vsel %vm418, %v4658, %v4662
      %v4665 = vshrl.u32 %v4364, 16
      %v4667 = vrot.slane %v4665, 4
      %v4668 = vshll.u32 %v4364, 16
      %v4670 = vrot.slane %v4668, 5
      %v4671 = vor.u32 %v4667, %v4670
      %v4672 = vrot.slane %v4671, 4
      %v4674 = vshll.u32 %v4365, 16
      %v4676 = vrot.slane %v4674, 5
      %v4677 = vsel %vm418, %v4672, %v4676
      %v4678 = vshrl.u32 %v4365, 16
      %v4680 = vrot.slane %v4678, 4
      %v4681 = vor.u32 %v4680, %v4676
      %v4682 = vrot.slane %v4681, 4
      %v4684 = vshll.u32 %v4366, 16
      %v4686 = vrot.slane %v4684, 5
      %v4687 = vsel %vm418, %v4682, %v4686
      %v4689 = vshrl.u32 %v4367, 16
      %v4691 = vrot.slane %v4689, 4
      %v4692 = vshll.u32 %v4367, 16
      %v4694 = vrot.slane %v4692, 5
      %v4695 = vor.u32 %v4691, %v4694
      %v4696 = vrot.slane %v4695, 4
      %v4698 = vshll.u32 %v4368, 16
      %v4700 = vrot.slane %v4698, 5
      %v4701 = vsel %vm418, %v4696, %v4700
      %v4702 = vshrl.u32 %v4368, 16
      %v4704 = vrot.slane %v4702, 4
      %v4705 = vor.u32 %v4704, %v4700
      %v4706 = vrot.slane %v4705, 4
      %v4708 = vshll.u32 %v4369, 16
      %v4710 = vrot.slane %v4708, 5
      %v4711 = vsel %vm418, %v4706, %v4710
      %v4713 = vshrl.u32 %v4370, 16
      %v4715 = vrot.slane %v4713, 4
      %v4716 = vshll.u32 %v4370, 16
      %v4718 = vrot.slane %v4716, 5
      %v4719 = vor.u32 %v4715, %v4718
      %v4720 = vrot.slane %v4719, 4
      %v4722 = vshll.u32 %v4371, 16
      %v4724 = vrot.slane %v4722, 5
      %v4725 = vsel %vm418, %v4720, %v4724
      %v4726 = vshrl.u32 %v4371, 16
      %v4728 = vrot.slane %v4726, 4
      %v4729 = vor.u32 %v4728, %v4724
      %v4730 = vrot.slane %v4729, 4
      %v4732 = vshll.u32 %v4372, 16
      %v4734 = vrot.slane %v4732, 5
      %v4735 = vsel %vm418, %v4730, %v4734
      %v4737 = vshrl.u32 %v4373, 16
      %v4739 = vrot.slane %v4737, 4
      %v4740 = vshll.u32 %v4373, 16
      %v4742 = vrot.slane %v4740, 5
      %v4743 = vor.u32 %v4739, %v4742
      %v4744 = vrot.slane %v4743, 4
      %v4746 = vshll.u32 %v4374, 16
      %v4748 = vrot.slane %v4746, 5
      %v4749 = vsel %vm418, %v4744, %v4748
      %v4750 = vshrl.u32 %v4374, 16
      %v4752 = vrot.slane %v4750, 4
      %v4753 = vor.u32 %v4752, %v4748
      %v4754 = vrot.slane %v4753, 4
      %v4756 = vshll.u32 %v4375, 16
      %v4758 = vrot.slane %v4756, 5
      %v4759 = vsel %vm418, %v4754, %v4758
      %v4760 = vunpack.c.l.b16 %v4389
      %v4761 = vunpack.c.l.b16 %v4399
      %v4762 = vunpack.c.l.b16 %v4413
      %v4763 = vunpack.c.l.b16 %v4423
      %v4764 = vunpack.c.l.b16 %v4437
      %v4765 = vunpack.c.l.b16 %v4447
      %v4766 = vunpack.c.l.b16 %v4461
      %v4767 = vunpack.c.l.b16 %v4471
      %v4768 = vunpack.c.l.b16 %v4485
      %v4769 = vunpack.c.l.b16 %v4495
      %v4770 = vunpack.c.l.b16 %v4509
      %v4771 = vunpack.c.l.b16 %v4519
      %v4772 = vunpack.c.l.b16 %v4533
      %v4773 = vunpack.c.l.b16 %v4543
      %v4774 = vunpack.c.l.b16 %v4557
      %v4775 = vunpack.c.l.b16 %v4567
      %v4776 = vunpack.c.l.b16 %v4581
      %v4777 = vunpack.c.l.b16 %v4591
      %v4778 = vunpack.c.l.b16 %v4605
      %v4779 = vunpack.c.l.b16 %v4615
      %v4780 = vunpack.c.l.b16 %v4629
      %v4781 = vunpack.c.l.b16 %v4639
      %v4782 = vunpack.c.l.b16 %v4653
      %v4783 = vunpack.c.l.b16 %v4663
      %v4784 = vunpack.c.l.b16 %v4677
      %v4785 = vunpack.c.l.b16 %v4687
      %v4786 = vunpack.c.l.b16 %v4701
      %v4787 = vunpack.c.l.b16 %v4711
      %v4788 = vunpack.c.l.b16 %v4725
      %v4789 = vunpack.c.l.b16 %v4735
      %v4790 = vunpack.c.l.b16 %v4749
      %v4791 = vunpack.c.l.b16 %v4759
      %v4792 = vpack.c.b16 %v4761, %v4760
      %v4793 = vpack.c.b16 %v4763, %v4762
      %v4794 = vpack.c.b16 %v4765, %v4764
      %v4795 = vpack.c.b16 %v4767, %v4766
      %v4796 = vpack.c.b16 %v4769, %v4768
      %v4797 = vpack.c.b16 %v4771, %v4770
      %v4798 = vpack.c.b16 %v4773, %v4772
      %v4799 = vpack.c.b16 %v4775, %v4774
      %v4800 = vpack.c.b16 %v4777, %v4776
      %v4801 = vpack.c.b16 %v4779, %v4778
      %v4802 = vpack.c.b16 %v4781, %v4780
      %v4803 = vpack.c.b16 %v4783, %v4782
      %v4804 = vpack.c.b16 %v4785, %v4784
      %v4805 = vpack.c.b16 %v4787, %v4786
      %v4806 = vpack.c.b16 %v4789, %v4788
      %v4807 = vpack.c.b16 %v4791, %v4790
      %4808 = vrot.lane.b32.xlu0 %v4792, 44
      %v4809 = vpop.permute.xlu0 %4808
      %4810 = vrot.lane.b32.xlu0 %v4793, 44
      %v4811 = vpop.permute.xlu0 %4810
      %4812 = vrot.lane.b32.xlu0 %v4794, 44
      %v4813 = vpop.permute.xlu0 %4812
      %4814 = vrot.lane.b32.xlu0 %v4795, 44
      %v4815 = vpop.permute.xlu0 %4814
      %4816 = vrot.lane.b32.xlu0 %v4796, 44
      %v4817 = vpop.permute.xlu0 %4816
      %4818 = vrot.lane.b32.xlu0 %v4797, 44
      %v4819 = vpop.permute.xlu0 %4818
      %4820 = vrot.lane.b32.xlu0 %v4798, 44
      %v4821 = vpop.permute.xlu0 %4820
      %4822 = vrot.lane.b32.xlu0 %v4799, 44
      %v4823 = vpop.permute.xlu0 %4822
      %4824 = vrot.lane.b32.xlu0 %v4800, 44
      %v4825 = vpop.permute.xlu0 %4824
      %4826 = vrot.lane.b32.xlu0 %v4801, 44
      %v4827 = vpop.permute.xlu0 %4826
      %4828 = vrot.lane.b32.xlu0 %v4802, 44
      %v4829 = vpop.permute.xlu0 %4828
      %4830 = vrot.lane.b32.xlu0 %v4803, 44
      %v4831 = vpop.permute.xlu0 %4830
      %4832 = vrot.lane.b32.xlu0 %v4804, 44
      %v4833 = vpop.permute.xlu0 %4832
      %4834 = vrot.lane.b32.xlu0 %v4805, 44
      %v4835 = vpop.permute.xlu0 %4834
      %4836 = vrot.lane.b32.xlu0 %v4806, 44
      %v4837 = vpop.permute.xlu0 %4836
      %4838 = vrot.lane.b32.xlu0 %v4807, 44
      %v4839 = vpop.permute.xlu0 %4838
      %vm4856 = vcmask 392544
      %4857 = vst.msk [vmem:[#allocation2] sm:$0xff] %vm4856, %v4809
      %4858 = vst.msk [vmem:[#allocation2 + $0x8] sm:$0xff] %vm4856, %v4811
      %4859 = vst.msk [vmem:[#allocation2 + $0x10] sm:$0xff] %vm4856, %v4813
      %4860 = vst.msk [vmem:[#allocation2 + $0x18] sm:$0xff] %vm4856, %v4815
      %4861 = vst.msk [vmem:[#allocation2 + $0x20] sm:$0xff] %vm4856, %v4817
      %4862 = vst.msk [vmem:[#allocation2 + $0x28] sm:$0xff] %vm4856, %v4819
      %4863 = vst.msk [vmem:[#allocation2 + $0x30] sm:$0xff] %vm4856, %v4821
      %4864 = vst.msk [vmem:[#allocation2 + $0x38] sm:$0xff] %vm4856, %v4823
      %4865 = vst.msk [vmem:[#allocation2 + $0x40] sm:$0xff] %vm4856, %v4825
      %4866 = vst.msk [vmem:[#allocation2 + $0x48] sm:$0xff] %vm4856, %v4827
      %4867 = vst.msk [vmem:[#allocation2 + $0x50] sm:$0xff] %vm4856, %v4829
      %4868 = vst.msk [vmem:[#allocation2 + $0x58] sm:$0xff] %vm4856, %v4831
      %4869 = vst.msk [vmem:[#allocation2 + $0x60] sm:$0xff] %vm4856, %v4833
      %4870 = vst.msk [vmem:[#allocation2 + $0x68] sm:$0xff] %vm4856, %v4835
      %4871 = vst.msk [vmem:[#allocation2 + $0x70] sm:$0xff] %vm4856, %v4837
      %4872 = vst.msk [vmem:[#allocation2 + $0x78] sm:$0xff] %vm4856, %v4839
      %v4873 = vld [vmem:[%s4150] sm:$0xe]
      %v4874 = vld [vmem:[%s4150 + $0x4] sm:$0xf]
      %v4875 = vld [vmem:[%s4150 + $0x8] sm:$0x1]
      %v4876 = vld [vmem:[%s4150 + $0xc] sm:$0xe]
      %v4877 = vld [vmem:[%s4150 + $0x10] sm:$0xf]
      %v4878 = vld [vmem:[%s4150 + $0x14] sm:$0x1]
      %v4879 = vld [vmem:[%s4150 + $0x18] sm:$0xe]
      %v4880 = vld [vmem:[%s4150 + $0x1c] sm:$0xf]
      %v4881 = vld [vmem:[%s4150 + $0x20] sm:$0x1]
      %v4882 = vld [vmem:[%s4150 + $0x24] sm:$0xe]
      %v4883 = vld [vmem:[%s4150 + $0x28] sm:$0xf]
      %v4884 = vld [vmem:[%s4150 + $0x2c] sm:$0x1]
      %v4885 = vld [vmem:[%s4150 + $0x30] sm:$0xe]
      %v4886 = vld [vmem:[%s4150 + $0x34] sm:$0xf]
      %v4887 = vld [vmem:[%s4150 + $0x38] sm:$0x1]
      %v4888 = vld [vmem:[%s4150 + $0x3c] sm:$0xe]
      %v4889 = vld [vmem:[%s4150 + $0x40] sm:$0xf]
      %v4890 = vld [vmem:[%s4150 + $0x44] sm:$0x1]
      %v4891 = vld [vmem:[%s4150 + $0x48] sm:$0xe]
      %v4892 = vld [vmem:[%s4150 + $0x4c] sm:$0xf]
      %v4893 = vld [vmem:[%s4150 + $0x50] sm:$0x1]
      %v4894 = vld [vmem:[%s4150 + $0x54] sm:$0xe]
      %v4895 = vld [vmem:[%s4150 + $0x58] sm:$0xf]
      %v4896 = vld [vmem:[%s4150 + $0x5c] sm:$0x1]
      %v4897 = vld [vmem:[%s4150 + $0x60] sm:$0xe]
      %v4898 = vld [vmem:[%s4150 + $0x64] sm:$0xf]
      %v4899 = vld [vmem:[%s4150 + $0x68] sm:$0x1]
      %v4900 = vld [vmem:[%s4150 + $0x6c] sm:$0xe]
      %v4901 = vld [vmem:[%s4150 + $0x70] sm:$0xf]
      %v4902 = vld [vmem:[%s4150 + $0x74] sm:$0x1]
      %v4903 = vld [vmem:[%s4150 + $0x78] sm:$0xe]
      %v4904 = vld [vmem:[%s4150 + $0x7c] sm:$0xf]
      %v4905 = vld [vmem:[%s4150 + $0x80] sm:$0x1]
      %v4906 = vld [vmem:[%s4150 + $0x84] sm:$0xe]
      %v4907 = vld [vmem:[%s4150 + $0x88] sm:$0xf]
      %v4908 = vld [vmem:[%s4150 + $0x8c] sm:$0x1]
      %v4909 = vld [vmem:[%s4150 + $0x90] sm:$0xe]
      %v4910 = vld [vmem:[%s4150 + $0x94] sm:$0xf]
      %v4911 = vld [vmem:[%s4150 + $0x98] sm:$0x1]
      %v4912 = vld [vmem:[%s4150 + $0x9c] sm:$0xe]
      %v4913 = vld [vmem:[%s4150 + $0xa0] sm:$0xf]
      %v4914 = vld [vmem:[%s4150 + $0xa4] sm:$0x1]
      %v4915 = vld [vmem:[%s4150 + $0xa8] sm:$0xe]
      %v4916 = vld [vmem:[%s4150 + $0xac] sm:$0xf]
      %v4917 = vld [vmem:[%s4150 + $0xb0] sm:$0x1]
      %v4918 = vld [vmem:[%s4150 + $0xb4] sm:$0xe]
      %v4919 = vld [vmem:[%s4150 + $0xb8] sm:$0xf]
      %v4920 = vld [vmem:[%s4150 + $0xbc] sm:$0x1]
      %v4969 = vrot.slane %v4873, 5
      %v4970 = vrot.slane %v4969, 4
      %v4971 = vrot.slane %v4874, 5
      %v4972 = vsel %vm1014, %v4970, %v4971
      %v4973 = vrot.slane %v4971, 4
      %v4974 = vrot.slane %v4875, 5
      %v4975 = vsel %vm1014, %v4973, %v4974
      %v4976 = vrot.slane %v4876, 5
      %v4977 = vrot.slane %v4976, 4
      %v4978 = vrot.slane %v4877, 5
      %v4979 = vsel %vm1014, %v4977, %v4978
      %v4980 = vrot.slane %v4978, 4
      %v4981 = vrot.slane %v4878, 5
      %v4982 = vsel %vm1014, %v4980, %v4981
      %v4983 = vrot.slane %v4879, 5
      %v4984 = vrot.slane %v4983, 4
      %v4985 = vrot.slane %v4880, 5
      %v4986 = vsel %vm1014, %v4984, %v4985
      %v4987 = vrot.slane %v4985, 4
      %v4988 = vrot.slane %v4881, 5
      %v4989 = vsel %vm1014, %v4987, %v4988
      %v4990 = vrot.slane %v4882, 5
      %v4991 = vrot.slane %v4990, 4
      %v4992 = vrot.slane %v4883, 5
      %v4993 = vsel %vm1014, %v4991, %v4992
      %v4994 = vrot.slane %v4992, 4
      %v4995 = vrot.slane %v4884, 5
      %v4996 = vsel %vm1014, %v4994, %v4995
      %v4997 = vrot.slane %v4885, 5
      %v4998 = vrot.slane %v4997, 4
      %v4999 = vrot.slane %v4886, 5
      %v5000 = vsel %vm1014, %v4998, %v4999
      %v5001 = vrot.slane %v4999, 4
      %v5002 = vrot.slane %v4887, 5
      %v5003 = vsel %vm1014, %v5001, %v5002
      %v5004 = vrot.slane %v4888, 5
      %v5005 = vrot.slane %v5004, 4
      %v5006 = vrot.slane %v4889, 5
      %v5007 = vsel %vm1014, %v5005, %v5006
      %v5008 = vrot.slane %v5006, 4
      %v5009 = vrot.slane %v4890, 5
      %v5010 = vsel %vm1014, %v5008, %v5009
      %v5011 = vrot.slane %v4891, 5
      %v5012 = vrot.slane %v5011, 4
      %v5013 = vrot.slane %v4892, 5
      %v5014 = vsel %vm1014, %v5012, %v5013
      %v5015 = vrot.slane %v5013, 4
      %v5016 = vrot.slane %v4893, 5
      %v5017 = vsel %vm1014, %v5015, %v5016
      %v5018 = vrot.slane %v4894, 5
      %v5019 = vrot.slane %v5018, 4
      %v5020 = vrot.slane %v4895, 5
      %v5021 = vsel %vm1014, %v5019, %v5020
      %v5022 = vrot.slane %v5020, 4
      %v5023 = vrot.slane %v4896, 5
      %v5024 = vsel %vm1014, %v5022, %v5023
      %v5025 = vrot.slane %v4897, 5
      %v5026 = vrot.slane %v5025, 4
      %v5027 = vrot.slane %v4898, 5
      %v5028 = vsel %vm1014, %v5026, %v5027
      %v5029 = vrot.slane %v5027, 4
      %v5030 = vrot.slane %v4899, 5
      %v5031 = vsel %vm1014, %v5029, %v5030
      %v5032 = vrot.slane %v4900, 5
      %v5033 = vrot.slane %v5032, 4
      %v5034 = vrot.slane %v4901, 5
      %v5035 = vsel %vm1014, %v5033, %v5034
      %v5036 = vrot.slane %v5034, 4
      %v5037 = vrot.slane %v4902, 5
      %v5038 = vsel %vm1014, %v5036, %v5037
      %v5039 = vrot.slane %v4903, 5
      %v5040 = vrot.slane %v5039, 4
      %v5041 = vrot.slane %v4904, 5
      %v5042 = vsel %vm1014, %v5040, %v5041
      %v5043 = vrot.slane %v5041, 4
      %v5044 = vrot.slane %v4905, 5
      %v5045 = vsel %vm1014, %v5043, %v5044
      %v5046 = vrot.slane %v4906, 5
      %v5047 = vrot.slane %v5046, 4
      %v5048 = vrot.slane %v4907, 5
      %v5049 = vsel %vm1014, %v5047, %v5048
      %v5050 = vrot.slane %v5048, 4
      %v5051 = vrot.slane %v4908, 5
      %v5052 = vsel %vm1014, %v5050, %v5051
      %v5053 = vrot.slane %v4909, 5
      %v5054 = vrot.slane %v5053, 4
      %v5055 = vrot.slane %v4910, 5
      %v5056 = vsel %vm1014, %v5054, %v5055
      %v5057 = vrot.slane %v5055, 4
      %v5058 = vrot.slane %v4911, 5
      %v5059 = vsel %vm1014, %v5057, %v5058
      %v5060 = vrot.slane %v4912, 5
      %v5061 = vrot.slane %v5060, 4
      %v5062 = vrot.slane %v4913, 5
      %v5063 = vsel %vm1014, %v5061, %v5062
      %v5064 = vrot.slane %v5062, 4
      %v5065 = vrot.slane %v4914, 5
      %v5066 = vsel %vm1014, %v5064, %v5065
      %v5067 = vrot.slane %v4915, 5
      %v5068 = vrot.slane %v5067, 4
      %v5069 = vrot.slane %v4916, 5
      %v5070 = vsel %vm1014, %v5068, %v5069
      %v5071 = vrot.slane %v5069, 4
      %v5072 = vrot.slane %v4917, 5
      %v5073 = vsel %vm1014, %v5071, %v5072
      %v5074 = vrot.slane %v4918, 5
      %v5075 = vrot.slane %v5074, 4
      %v5076 = vrot.slane %v4919, 5
      %v5077 = vsel %vm1014, %v5075, %v5076
      %v5078 = vrot.slane %v5076, 4
      %v5079 = vrot.slane %v4920, 5
      %v5080 = vsel %vm1014, %v5078, %v5079
      %v5081 = vunpack.c.l.b16 %v4972
      %v5082 = vunpack.c.l.b16 %v4975
      %v5083 = vunpack.c.l.b16 %v4979
      %v5084 = vunpack.c.l.b16 %v4982
      %v5085 = vunpack.c.l.b16 %v4986
      %v5086 = vunpack.c.l.b16 %v4989
      %v5087 = vunpack.c.l.b16 %v4993
      %v5088 = vunpack.c.l.b16 %v4996
      %v5089 = vunpack.c.l.b16 %v5000
      %v5090 = vunpack.c.l.b16 %v5003
      %v5091 = vunpack.c.l.b16 %v5007
      %v5092 = vunpack.c.l.b16 %v5010
      %v5093 = vunpack.c.l.b16 %v5014
      %v5094 = vunpack.c.l.b16 %v5017
      %v5095 = vunpack.c.l.b16 %v5021
      %v5096 = vunpack.c.l.b16 %v5024
      %v5097 = vunpack.c.l.b16 %v5028
      %v5098 = vunpack.c.l.b16 %v5031
      %v5099 = vunpack.c.l.b16 %v5035
      %v5100 = vunpack.c.l.b16 %v5038
      %v5101 = vunpack.c.l.b16 %v5042
      %v5102 = vunpack.c.l.b16 %v5045
      %v5103 = vunpack.c.l.b16 %v5049
      %v5104 = vunpack.c.l.b16 %v5052
      %v5105 = vunpack.c.l.b16 %v5056
      %v5106 = vunpack.c.l.b16 %v5059
      %v5107 = vunpack.c.l.b16 %v5063
      %v5108 = vunpack.c.l.b16 %v5066
      %v5109 = vunpack.c.l.b16 %v5070
      %v5110 = vunpack.c.l.b16 %v5073
      %v5111 = vunpack.c.l.b16 %v5077
      %v5112 = vunpack.c.l.b16 %v5080
      %v5113 = vpack.c.b16 %v5082, %v5081
      %v5114 = vpack.c.b16 %v5084, %v5083
      %v5115 = vpack.c.b16 %v5086, %v5085
      %v5116 = vpack.c.b16 %v5088, %v5087
      %v5117 = vpack.c.b16 %v5090, %v5089
      %v5118 = vpack.c.b16 %v5092, %v5091
      %v5119 = vpack.c.b16 %v5094, %v5093
      %v5120 = vpack.c.b16 %v5096, %v5095
      %v5121 = vpack.c.b16 %v5098, %v5097
      %v5122 = vpack.c.b16 %v5100, %v5099
      %v5123 = vpack.c.b16 %v5102, %v5101
      %v5124 = vpack.c.b16 %v5104, %v5103
      %v5125 = vpack.c.b16 %v5106, %v5105
      %v5126 = vpack.c.b16 %v5108, %v5107
      %v5127 = vpack.c.b16 %v5110, %v5109
      %v5128 = vpack.c.b16 %v5112, %v5111
      %5129 = vrot.lane.b32.xlu0 %v5113, 48
      %v5130 = vpop.permute.xlu0 %5129
      %5131 = vrot.lane.b32.xlu0 %v5114, 48
      %v5132 = vpop.permute.xlu0 %5131
      %5133 = vrot.lane.b32.xlu0 %v5115, 48
      %v5134 = vpop.permute.xlu0 %5133
      %5135 = vrot.lane.b32.xlu0 %v5116, 48
      %v5136 = vpop.permute.xlu0 %5135
      %5137 = vrot.lane.b32.xlu0 %v5117, 48
      %v5138 = vpop.permute.xlu0 %5137
      %5139 = vrot.lane.b32.xlu0 %v5118, 48
      %v5140 = vpop.permute.xlu0 %5139
      %5141 = vrot.lane.b32.xlu0 %v5119, 48
      %v5142 = vpop.permute.xlu0 %5141
      %5143 = vrot.lane.b32.xlu0 %v5120, 48
      %v5144 = vpop.permute.xlu0 %5143
      %5145 = vrot.lane.b32.xlu0 %v5121, 48
      %v5146 = vpop.permute.xlu0 %5145
      %5147 = vrot.lane.b32.xlu0 %v5122, 48
      %v5148 = vpop.permute.xlu0 %5147
      %5149 = vrot.lane.b32.xlu0 %v5123, 48
      %v5150 = vpop.permute.xlu0 %5149
      %5151 = vrot.lane.b32.xlu0 %v5124, 48
      %v5152 = vpop.permute.xlu0 %5151
      %5153 = vrot.lane.b32.xlu0 %v5125, 48
      %v5154 = vpop.permute.xlu0 %5153
      %5155 = vrot.lane.b32.xlu0 %v5126, 48
      %v5156 = vpop.permute.xlu0 %5155
      %5157 = vrot.lane.b32.xlu0 %v5127, 48
      %v5158 = vpop.permute.xlu0 %5157
      %5159 = vrot.lane.b32.xlu0 %v5128, 48
      %v5160 = vpop.permute.xlu0 %5159
      %vm5177 = vcmask 425344
      %5178 = vst.msk [vmem:[#allocation2] sm:$0xff] %vm5177, %v5130
      %5179 = vst.msk [vmem:[#allocation2 + $0x8] sm:$0xff] %vm5177, %v5132
      %5180 = vst.msk [vmem:[#allocation2 + $0x10] sm:$0xff] %vm5177, %v5134
      %5181 = vst.msk [vmem:[#allocation2 + $0x18] sm:$0xff] %vm5177, %v5136
      %5182 = vst.msk [vmem:[#allocation2 + $0x20] sm:$0xff] %vm5177, %v5138
      %5183 = vst.msk [vmem:[#allocation2 + $0x28] sm:$0xff] %vm5177, %v5140
      %5184 = vst.msk [vmem:[#allocation2 + $0x30] sm:$0xff] %vm5177, %v5142
      %5185 = vst.msk [vmem:[#allocation2 + $0x38] sm:$0xff] %vm5177, %v5144
      %5186 = vst.msk [vmem:[#allocation2 + $0x40] sm:$0xff] %vm5177, %v5146
      %5187 = vst.msk [vmem:[#allocation2 + $0x48] sm:$0xff] %vm5177, %v5148
      %5188 = vst.msk [vmem:[#allocation2 + $0x50] sm:$0xff] %vm5177, %v5150
      %5189 = vst.msk [vmem:[#allocation2 + $0x58] sm:$0xff] %vm5177, %v5152
      %5190 = vst.msk [vmem:[#allocation2 + $0x60] sm:$0xff] %vm5177, %v5154
      %5191 = vst.msk [vmem:[#allocation2 + $0x68] sm:$0xff] %vm5177, %v5156
      %5192 = vst.msk [vmem:[#allocation2 + $0x70] sm:$0xff] %vm5177, %v5158
      %5193 = vst.msk [vmem:[#allocation2 + $0x78] sm:$0xff] %vm5177, %v5160
      %v5194 = vld [vmem:[%s4150] sm:$0xe]
      %v5195 = vld [vmem:[%s4150 + $0x4] sm:$0xf]
      %v5196 = vld [vmem:[%s4150 + $0x8] sm:$0x3]
      %v5197 = vld [vmem:[%s4150 + $0xc] sm:$0xe]
      %v5198 = vld [vmem:[%s4150 + $0x10] sm:$0xf]
      %v5199 = vld [vmem:[%s4150 + $0x14] sm:$0x3]
      %v5200 = vld [vmem:[%s4150 + $0x18] sm:$0xe]
      %v5201 = vld [vmem:[%s4150 + $0x1c] sm:$0xf]
      %v5202 = vld [vmem:[%s4150 + $0x20] sm:$0x3]
      %v5203 = vld [vmem:[%s4150 + $0x24] sm:$0xe]
      %v5204 = vld [vmem:[%s4150 + $0x28] sm:$0xf]
      %v5205 = vld [vmem:[%s4150 + $0x2c] sm:$0x3]
      %v5206 = vld [vmem:[%s4150 + $0x30] sm:$0xe]
      %v5207 = vld [vmem:[%s4150 + $0x34] sm:$0xf]
      %v5208 = vld [vmem:[%s4150 + $0x38] sm:$0x3]
      %v5209 = vld [vmem:[%s4150 + $0x3c] sm:$0xe]
      %v5210 = vld [vmem:[%s4150 + $0x40] sm:$0xf]
      %v5211 = vld [vmem:[%s4150 + $0x44] sm:$0x3]
      %v5212 = vld [vmem:[%s4150 + $0x48] sm:$0xe]
      %v5213 = vld [vmem:[%s4150 + $0x4c] sm:$0xf]
      %v5214 = vld [vmem:[%s4150 + $0x50] sm:$0x3]
      %v5215 = vld [vmem:[%s4150 + $0x54] sm:$0xe]
      %v5216 = vld [vmem:[%s4150 + $0x58] sm:$0xf]
      %v5217 = vld [vmem:[%s4150 + $0x5c] sm:$0x3]
      %v5218 = vld [vmem:[%s4150 + $0x60] sm:$0xe]
      %v5219 = vld [vmem:[%s4150 + $0x64] sm:$0xf]
      %v5220 = vld [vmem:[%s4150 + $0x68] sm:$0x3]
      %v5221 = vld [vmem:[%s4150 + $0x6c] sm:$0xe]
      %v5222 = vld [vmem:[%s4150 + $0x70] sm:$0xf]
      %v5223 = vld [vmem:[%s4150 + $0x74] sm:$0x3]
      %v5224 = vld [vmem:[%s4150 + $0x78] sm:$0xe]
      %v5225 = vld [vmem:[%s4150 + $0x7c] sm:$0xf]
      %v5226 = vld [vmem:[%s4150 + $0x80] sm:$0x3]
      %v5227 = vld [vmem:[%s4150 + $0x84] sm:$0xe]
      %v5228 = vld [vmem:[%s4150 + $0x88] sm:$0xf]
      %v5229 = vld [vmem:[%s4150 + $0x8c] sm:$0x3]
      %v5230 = vld [vmem:[%s4150 + $0x90] sm:$0xe]
      %v5231 = vld [vmem:[%s4150 + $0x94] sm:$0xf]
      %v5232 = vld [vmem:[%s4150 + $0x98] sm:$0x3]
      %v5233 = vld [vmem:[%s4150 + $0x9c] sm:$0xe]
      %v5234 = vld [vmem:[%s4150 + $0xa0] sm:$0xf]
      %v5235 = vld [vmem:[%s4150 + $0xa4] sm:$0x3]
      %v5236 = vld [vmem:[%s4150 + $0xa8] sm:$0xe]
      %v5237 = vld [vmem:[%s4150 + $0xac] sm:$0xf]
      %v5238 = vld [vmem:[%s4150 + $0xb0] sm:$0x3]
      %v5239 = vld [vmem:[%s4150 + $0xb4] sm:$0xe]
      %v5240 = vld [vmem:[%s4150 + $0xb8] sm:$0xf]
      %v5241 = vld [vmem:[%s4150 + $0xbc] sm:$0x3]
      %v5243 = vshrl.u32 %v5194, 16
      %v5245 = vrot.slane %v5243, 5
      %v5246 = vshll.u32 %v5194, 16
      %v5248 = vrot.slane %v5246, 6
      %v5249 = vor.u32 %v5245, %v5248
      %v5250 = vrot.slane %v5249, 4
      %v5252 = vshrl.u32 %v5195, 16
      %v5254 = vrot.slane %v5252, 5
      %v5255 = vshll.u32 %v5195, 16
      %v5257 = vrot.slane %v5255, 6
      %v5258 = vor.u32 %v5254, %v5257
      %v5259 = vsel %vm1290, %v5250, %v5258
      %v5260 = vrot.slane %v5258, 4
      %v5262 = vshrl.u32 %v5196, 16
      %v5264 = vrot.slane %v5262, 5
      %v5265 = vshll.u32 %v5196, 16
      %v5267 = vrot.slane %v5265, 6
      %v5268 = vor.u32 %v5264, %v5267
      %v5269 = vsel %vm1290, %v5260, %v5268
      %v5271 = vshrl.u32 %v5197, 16
      %v5273 = vrot.slane %v5271, 5
      %v5274 = vshll.u32 %v5197, 16
      %v5276 = vrot.slane %v5274, 6
      %v5277 = vor.u32 %v5273, %v5276
      %v5278 = vrot.slane %v5277, 4
      %v5280 = vshrl.u32 %v5198, 16
      %v5282 = vrot.slane %v5280, 5
      %v5283 = vshll.u32 %v5198, 16
      %v5285 = vrot.slane %v5283, 6
      %v5286 = vor.u32 %v5282, %v5285
      %v5287 = vsel %vm1290, %v5278, %v5286
      %v5288 = vrot.slane %v5286, 4
      %v5290 = vshrl.u32 %v5199, 16
      %v5292 = vrot.slane %v5290, 5
      %v5293 = vshll.u32 %v5199, 16
      %v5295 = vrot.slane %v5293, 6
      %v5296 = vor.u32 %v5292, %v5295
      %v5297 = vsel %vm1290, %v5288, %v5296
      %v5299 = vshrl.u32 %v5200, 16
      %v5301 = vrot.slane %v5299, 5
      %v5302 = vshll.u32 %v5200, 16
      %v5304 = vrot.slane %v5302, 6
      %v5305 = vor.u32 %v5301, %v5304
      %v5306 = vrot.slane %v5305, 4
      %v5308 = vshrl.u32 %v5201, 16
      %v5310 = vrot.slane %v5308, 5
      %v5311 = vshll.u32 %v5201, 16
      %v5313 = vrot.slane %v5311, 6
      %v5314 = vor.u32 %v5310, %v5313
      %v5315 = vsel %vm1290, %v5306, %v5314
      %v5316 = vrot.slane %v5314, 4
      %v5318 = vshrl.u32 %v5202, 16
      %v5320 = vrot.slane %v5318, 5
      %v5321 = vshll.u32 %v5202, 16
      %v5323 = vrot.slane %v5321, 6
      %v5324 = vor.u32 %v5320, %v5323
      %v5325 = vsel %vm1290, %v5316, %v5324
      %v5327 = vshrl.u32 %v5203, 16
      %v5329 = vrot.slane %v5327, 5
      %v5330 = vshll.u32 %v5203, 16
      %v5332 = vrot.slane %v5330, 6
      %v5333 = vor.u32 %v5329, %v5332
      %v5334 = vrot.slane %v5333, 4
      %v5336 = vshrl.u32 %v5204, 16
      %v5338 = vrot.slane %v5336, 5
      %v5339 = vshll.u32 %v5204, 16
      %v5341 = vrot.slane %v5339, 6
      %v5342 = vor.u32 %v5338, %v5341
      %v5343 = vsel %vm1290, %v5334, %v5342
      %v5344 = vrot.slane %v5342, 4
      %v5346 = vshrl.u32 %v5205, 16
      %v5348 = vrot.slane %v5346, 5
      %v5349 = vshll.u32 %v5205, 16
      %v5351 = vrot.slane %v5349, 6
      %v5352 = vor.u32 %v5348, %v5351
      %v5353 = vsel %vm1290, %v5344, %v5352
      %v5355 = vshrl.u32 %v5206, 16
      %v5357 = vrot.slane %v5355, 5
      %v5358 = vshll.u32 %v5206, 16
      %v5360 = vrot.slane %v5358, 6
      %v5361 = vor.u32 %v5357, %v5360
      %v5362 = vrot.slane %v5361, 4
      %v5364 = vshrl.u32 %v5207, 16
      %v5366 = vrot.slane %v5364, 5
      %v5367 = vshll.u32 %v5207, 16
      %v5369 = vrot.slane %v5367, 6
      %v5370 = vor.u32 %v5366, %v5369
      %v5371 = vsel %vm1290, %v5362, %v5370
      %v5372 = vrot.slane %v5370, 4
      %v5374 = vshrl.u32 %v5208, 16
      %v5376 = vrot.slane %v5374, 5
      %v5377 = vshll.u32 %v5208, 16
      %v5379 = vrot.slane %v5377, 6
      %v5380 = vor.u32 %v5376, %v5379
      %v5381 = vsel %vm1290, %v5372, %v5380
      %v5383 = vshrl.u32 %v5209, 16
      %v5385 = vrot.slane %v5383, 5
      %v5386 = vshll.u32 %v5209, 16
      %v5388 = vrot.slane %v5386, 6
      %v5389 = vor.u32 %v5385, %v5388
      %v5390 = vrot.slane %v5389, 4
      %v5392 = vshrl.u32 %v5210, 16
      %v5394 = vrot.slane %v5392, 5
      %v5395 = vshll.u32 %v5210, 16
      %v5397 = vrot.slane %v5395, 6
      %v5398 = vor.u32 %v5394, %v5397
      %v5399 = vsel %vm1290, %v5390, %v5398
      %v5400 = vrot.slane %v5398, 4
      %v5402 = vshrl.u32 %v5211, 16
      %v5404 = vrot.slane %v5402, 5
      %v5405 = vshll.u32 %v5211, 16
      %v5407 = vrot.slane %v5405, 6
      %v5408 = vor.u32 %v5404, %v5407
      %v5409 = vsel %vm1290, %v5400, %v5408
      %v5411 = vshrl.u32 %v5212, 16
      %v5413 = vrot.slane %v5411, 5
      %v5414 = vshll.u32 %v5212, 16
      %v5416 = vrot.slane %v5414, 6
      %v5417 = vor.u32 %v5413, %v5416
      %v5418 = vrot.slane %v5417, 4
      %v5420 = vshrl.u32 %v5213, 16
      %v5422 = vrot.slane %v5420, 5
      %v5423 = vshll.u32 %v5213, 16
      %v5425 = vrot.slane %v5423, 6
      %v5426 = vor.u32 %v5422, %v5425
      %v5427 = vsel %vm1290, %v5418, %v5426
      %v5428 = vrot.slane %v5426, 4
      %v5430 = vshrl.u32 %v5214, 16
      %v5432 = vrot.slane %v5430, 5
      %v5433 = vshll.u32 %v5214, 16
      %v5435 = vrot.slane %v5433, 6
      %v5436 = vor.u32 %v5432, %v5435
      %v5437 = vsel %vm1290, %v5428, %v5436
      %v5439 = vshrl.u32 %v5215, 16
      %v5441 = vrot.slane %v5439, 5
      %v5442 = vshll.u32 %v5215, 16
      %v5444 = vrot.slane %v5442, 6
      %v5445 = vor.u32 %v5441, %v5444
      %v5446 = vrot.slane %v5445, 4
      %v5448 = vshrl.u32 %v5216, 16
      %v5450 = vrot.slane %v5448, 5
      %v5451 = vshll.u32 %v5216, 16
      %v5453 = vrot.slane %v5451, 6
      %v5454 = vor.u32 %v5450, %v5453
      %v5455 = vsel %vm1290, %v5446, %v5454
      %v5456 = vrot.slane %v5454, 4
      %v5458 = vshrl.u32 %v5217, 16
      %v5460 = vrot.slane %v5458, 5
      %v5461 = vshll.u32 %v5217, 16
      %v5463 = vrot.slane %v5461, 6
      %v5464 = vor.u32 %v5460, %v5463
      %v5465 = vsel %vm1290, %v5456, %v5464
      %v5467 = vshrl.u32 %v5218, 16
      %v5469 = vrot.slane %v5467, 5
      %v5470 = vshll.u32 %v5218, 16
      %v5472 = vrot.slane %v5470, 6
      %v5473 = vor.u32 %v5469, %v5472
      %v5474 = vrot.slane %v5473, 4
      %v5476 = vshrl.u32 %v5219, 16
      %v5478 = vrot.slane %v5476, 5
      %v5479 = vshll.u32 %v5219, 16
      %v5481 = vrot.slane %v5479, 6
      %v5482 = vor.u32 %v5478, %v5481
      %v5483 = vsel %vm1290, %v5474, %v5482
      %v5484 = vrot.slane %v5482, 4
      %v5486 = vshrl.u32 %v5220, 16
      %v5488 = vrot.slane %v5486, 5
      %v5489 = vshll.u32 %v5220, 16
      %v5491 = vrot.slane %v5489, 6
      %v5492 = vor.u32 %v5488, %v5491
      %v5493 = vsel %vm1290, %v5484, %v5492
      %v5495 = vshrl.u32 %v5221, 16
      %v5497 = vrot.slane %v5495, 5
      %v5498 = vshll.u32 %v5221, 16
      %v5500 = vrot.slane %v5498, 6
      %v5501 = vor.u32 %v5497, %v5500
      %v5502 = vrot.slane %v5501, 4
      %v5504 = vshrl.u32 %v5222, 16
      %v5506 = vrot.slane %v5504, 5
      %v5507 = vshll.u32 %v5222, 16
      %v5509 = vrot.slane %v5507, 6
      %v5510 = vor.u32 %v5506, %v5509
      %v5511 = vsel %vm1290, %v5502, %v5510
      %v5512 = vrot.slane %v5510, 4
      %v5514 = vshrl.u32 %v5223, 16
      %v5516 = vrot.slane %v5514, 5
      %v5517 = vshll.u32 %v5223, 16
      %v5519 = vrot.slane %v5517, 6
      %v5520 = vor.u32 %v5516, %v5519
      %v5521 = vsel %vm1290, %v5512, %v5520
      %v5523 = vshrl.u32 %v5224, 16
      %v5525 = vrot.slane %v5523, 5
      %v5526 = vshll.u32 %v5224, 16
      %v5528 = vrot.slane %v5526, 6
      %v5529 = vor.u32 %v5525, %v5528
      %v5530 = vrot.slane %v5529, 4
      %v5532 = vshrl.u32 %v5225, 16
      %v5534 = vrot.slane %v5532, 5
      %v5535 = vshll.u32 %v5225, 16
      %v5537 = vrot.slane %v5535, 6
      %v5538 = vor.u32 %v5534, %v5537
      %v5539 = vsel %vm1290, %v5530, %v5538
      %v5540 = vrot.slane %v5538, 4
      %v5542 = vshrl.u32 %v5226, 16
      %v5544 = vrot.slane %v5542, 5
      %v5545 = vshll.u32 %v5226, 16
      %v5547 = vrot.slane %v5545, 6
      %v5548 = vor.u32 %v5544, %v5547
      %v5549 = vsel %vm1290, %v5540, %v5548
      %v5551 = vshrl.u32 %v5227, 16
      %v5553 = vrot.slane %v5551, 5
      %v5554 = vshll.u32 %v5227, 16
      %v5556 = vrot.slane %v5554, 6
      %v5557 = vor.u32 %v5553, %v5556
      %v5558 = vrot.slane %v5557, 4
      %v5560 = vshrl.u32 %v5228, 16
      %v5562 = vrot.slane %v5560, 5
      %v5563 = vshll.u32 %v5228, 16
      %v5565 = vrot.slane %v5563, 6
      %v5566 = vor.u32 %v5562, %v5565
      %v5567 = vsel %vm1290, %v5558, %v5566
      %v5568 = vrot.slane %v5566, 4
      %v5570 = vshrl.u32 %v5229, 16
      %v5572 = vrot.slane %v5570, 5
      %v5573 = vshll.u32 %v5229, 16
      %v5575 = vrot.slane %v5573, 6
      %v5576 = vor.u32 %v5572, %v5575
      %v5577 = vsel %vm1290, %v5568, %v5576
      %v5579 = vshrl.u32 %v5230, 16
      %v5581 = vrot.slane %v5579, 5
      %v5582 = vshll.u32 %v5230, 16
      %v5584 = vrot.slane %v5582, 6
      %v5585 = vor.u32 %v5581, %v5584
      %v5586 = vrot.slane %v5585, 4
      %v5588 = vshrl.u32 %v5231, 16
      %v5590 = vrot.slane %v5588, 5
      %v5591 = vshll.u32 %v5231, 16
      %v5593 = vrot.slane %v5591, 6
      %v5594 = vor.u32 %v5590, %v5593
      %v5595 = vsel %vm1290, %v5586, %v5594
      %v5596 = vrot.slane %v5594, 4
      %v5598 = vshrl.u32 %v5232, 16
      %v5600 = vrot.slane %v5598, 5
      %v5601 = vshll.u32 %v5232, 16
      %v5603 = vrot.slane %v5601, 6
      %v5604 = vor.u32 %v5600, %v5603
      %v5605 = vsel %vm1290, %v5596, %v5604
      %v5607 = vshrl.u32 %v5233, 16
      %v5609 = vrot.slane %v5607, 5
      %v5610 = vshll.u32 %v5233, 16
      %v5612 = vrot.slane %v5610, 6
      %v5613 = vor.u32 %v5609, %v5612
      %v5614 = vrot.slane %v5613, 4
      %v5616 = vshrl.u32 %v5234, 16
      %v5618 = vrot.slane %v5616, 5
      %v5619 = vshll.u32 %v5234, 16
      %v5621 = vrot.slane %v5619, 6
      %v5622 = vor.u32 %v5618, %v5621
      %v5623 = vsel %vm1290, %v5614, %v5622
      %v5624 = vrot.slane %v5622, 4
      %v5626 = vshrl.u32 %v5235, 16
      %v5628 = vrot.slane %v5626, 5
      %v5629 = vshll.u32 %v5235, 16
      %v5631 = vrot.slane %v5629, 6
      %v5632 = vor.u32 %v5628, %v5631
      %v5633 = vsel %vm1290, %v5624, %v5632
      %v5635 = vshrl.u32 %v5236, 16
      %v5637 = vrot.slane %v5635, 5
      %v5638 = vshll.u32 %v5236, 16
      %v5640 = vrot.slane %v5638, 6
      %v5641 = vor.u32 %v5637, %v5640
      %v5642 = vrot.slane %v5641, 4
      %v5644 = vshrl.u32 %v5237, 16
      %v5646 = vrot.slane %v5644, 5
      %v5647 = vshll.u32 %v5237, 16
      %v5649 = vrot.slane %v5647, 6
      %v5650 = vor.u32 %v5646, %v5649
      %v5651 = vsel %vm1290, %v5642, %v5650
      %v5652 = vrot.slane %v5650, 4
      %v5654 = vshrl.u32 %v5238, 16
      %v5656 = vrot.slane %v5654, 5
      %v5657 = vshll.u32 %v5238, 16
      %v5659 = vrot.slane %v5657, 6
      %v5660 = vor.u32 %v5656, %v5659
      %v5661 = vsel %vm1290, %v5652, %v5660
      %v5663 = vshrl.u32 %v5239, 16
      %v5665 = vrot.slane %v5663, 5
      %v5666 = vshll.u32 %v5239, 16
      %v5668 = vrot.slane %v5666, 6
      %v5669 = vor.u32 %v5665, %v5668
      %v5670 = vrot.slane %v5669, 4
      %v5672 = vshrl.u32 %v5240, 16
      %v5674 = vrot.slane %v5672, 5
      %v5675 = vshll.u32 %v5240, 16
      %v5677 = vrot.slane %v5675, 6
      %v5678 = vor.u32 %v5674, %v5677
      %v5679 = vsel %vm1290, %v5670, %v5678
      %v5680 = vrot.slane %v5678, 4
      %v5682 = vshrl.u32 %v5241, 16
      %v5684 = vrot.slane %v5682, 5
      %v5685 = vshll.u32 %v5241, 16
      %v5687 = vrot.slane %v5685, 6
      %v5688 = vor.u32 %v5684, %v5687
      %v5689 = vsel %vm1290, %v5680, %v5688
      %v5690 = vunpack.c.l.b16 %v5259
      %v5691 = vunpack.c.l.b16 %v5269
      %v5692 = vunpack.c.l.b16 %v5287
      %v5693 = vunpack.c.l.b16 %v5297
      %v5694 = vunpack.c.l.b16 %v5315
      %v5695 = vunpack.c.l.b16 %v5325
      %v5696 = vunpack.c.l.b16 %v5343
      %v5697 = vunpack.c.l.b16 %v5353
      %v5698 = vunpack.c.l.b16 %v5371
      %v5699 = vunpack.c.l.b16 %v5381
      %v5700 = vunpack.c.l.b16 %v5399
      %v5701 = vunpack.c.l.b16 %v5409
      %v5702 = vunpack.c.l.b16 %v5427
      %v5703 = vunpack.c.l.b16 %v5437
      %v5704 = vunpack.c.l.b16 %v5455
      %v5705 = vunpack.c.l.b16 %v5465
      %v5706 = vunpack.c.l.b16 %v5483
      %v5707 = vunpack.c.l.b16 %v5493
      %v5708 = vunpack.c.l.b16 %v5511
      %v5709 = vunpack.c.l.b16 %v5521
      %v5710 = vunpack.c.l.b16 %v5539
      %v5711 = vunpack.c.l.b16 %v5549
      %v5712 = vunpack.c.l.b16 %v5567
      %v5713 = vunpack.c.l.b16 %v5577
      %v5714 = vunpack.c.l.b16 %v5595
      %v5715 = vunpack.c.l.b16 %v5605
      %v5716 = vunpack.c.l.b16 %v5623
      %v5717 = vunpack.c.l.b16 %v5633
      %v5718 = vunpack.c.l.b16 %v5651
      %v5719 = vunpack.c.l.b16 %v5661
      %v5720 = vunpack.c.l.b16 %v5679
      %v5721 = vunpack.c.l.b16 %v5689
      %v5722 = vpack.c.b16 %v5691, %v5690
      %v5723 = vpack.c.b16 %v5693, %v5692
      %v5724 = vpack.c.b16 %v5695, %v5694
      %v5725 = vpack.c.b16 %v5697, %v5696
      %v5726 = vpack.c.b16 %v5699, %v5698
      %v5727 = vpack.c.b16 %v5701, %v5700
      %v5728 = vpack.c.b16 %v5703, %v5702
      %v5729 = vpack.c.b16 %v5705, %v5704
      %v5730 = vpack.c.b16 %v5707, %v5706
      %v5731 = vpack.c.b16 %v5709, %v5708
      %v5732 = vpack.c.b16 %v5711, %v5710
      %v5733 = vpack.c.b16 %v5713, %v5712
      %v5734 = vpack.c.b16 %v5715, %v5714
      %v5735 = vpack.c.b16 %v5717, %v5716
      %v5736 = vpack.c.b16 %v5719, %v5718
      %v5737 = vpack.c.b16 %v5721, %v5720
      %5738 = vrot.lane.b32.xlu0 %v5722, 52
      %v5739 = vpop.permute.xlu0 %5738
      %5740 = vrot.lane.b32.xlu0 %v5723, 52
      %v5741 = vpop.permute.xlu0 %5740
      %5742 = vrot.lane.b32.xlu0 %v5724, 52
      %v5743 = vpop.permute.xlu0 %5742
      %5744 = vrot.lane.b32.xlu0 %v5725, 52
      %v5745 = vpop.permute.xlu0 %5744
      %5746 = vrot.lane.b32.xlu0 %v5726, 52
      %v5747 = vpop.permute.xlu0 %5746
      %5748 = vrot.lane.b32.xlu0 %v5727, 52
      %v5749 = vpop.permute.xlu0 %5748
      %5750 = vrot.lane.b32.xlu0 %v5728, 52
      %v5751 = vpop.permute.xlu0 %5750
      %5752 = vrot.lane.b32.xlu0 %v5729, 52
      %v5753 = vpop.permute.xlu0 %5752
      %5754 = vrot.lane.b32.xlu0 %v5730, 52
      %v5755 = vpop.permute.xlu0 %5754
      %5756 = vrot.lane.b32.xlu0 %v5731, 52
      %v5757 = vpop.permute.xlu0 %5756
      %5758 = vrot.lane.b32.xlu0 %v5732, 52
      %v5759 = vpop.permute.xlu0 %5758
      %5760 = vrot.lane.b32.xlu0 %v5733, 52
      %v5761 = vpop.permute.xlu0 %5760
      %5762 = vrot.lane.b32.xlu0 %v5734, 52
      %v5763 = vpop.permute.xlu0 %5762
      %5764 = vrot.lane.b32.xlu0 %v5735, 52
      %v5765 = vpop.permute.xlu0 %5764
      %5766 = vrot.lane.b32.xlu0 %v5736, 52
      %v5767 = vpop.permute.xlu0 %5766
      %5768 = vrot.lane.b32.xlu0 %v5737, 52
      %v5769 = vpop.permute.xlu0 %5768
      %vm5786 = vcmask 458144
      %5787 = vst.msk [vmem:[#allocation2] sm:$0xff] %vm5786, %v5739
      %5788 = vst.msk [vmem:[#allocation2 + $0x8] sm:$0xff] %vm5786, %v5741
      %5789 = vst.msk [vmem:[#allocation2 + $0x10] sm:$0xff] %vm5786, %v5743
      %5790 = vst.msk [vmem:[#allocation2 + $0x18] sm:$0xff] %vm5786, %v5745
      %5791 = vst.msk [vmem:[#allocation2 + $0x20] sm:$0xff] %vm5786, %v5747
      %5792 = vst.msk [vmem:[#allocation2 + $0x28] sm:$0xff] %vm5786, %v5749
      %5793 = vst.msk [vmem:[#allocation2 + $0x30] sm:$0xff] %vm5786, %v5751
      %5794 = vst.msk [vmem:[#allocation2 + $0x38] sm:$0xff] %vm5786, %v5753
      %5795 = vst.msk [vmem:[#allocation2 + $0x40] sm:$0xff] %vm5786, %v5755
      %5796 = vst.msk [vmem:[#allocation2 + $0x48] sm:$0xff] %vm5786, %v5757
      %5797 = vst.msk [vmem:[#allocation2 + $0x50] sm:$0xff] %vm5786, %v5759
      %5798 = vst.msk [vmem:[#allocation2 + $0x58] sm:$0xff] %vm5786, %v5761
      %5799 = vst.msk [vmem:[#allocation2 + $0x60] sm:$0xff] %vm5786, %v5763
      %5800 = vst.msk [vmem:[#allocation2 + $0x68] sm:$0xff] %vm5786, %v5765
      %5801 = vst.msk [vmem:[#allocation2 + $0x70] sm:$0xff] %vm5786, %v5767
      %5802 = vst.msk [vmem:[#allocation2 + $0x78] sm:$0xff] %vm5786, %v5769
      %v5803 = vld [vmem:[%s4150] sm:$0xc]
      %v5804 = vld [vmem:[%s4150 + $0x4] sm:$0xf]
      %v5805 = vld [vmem:[%s4150 + $0x8] sm:$0x3]
      %v5806 = vld [vmem:[%s4150 + $0xc] sm:$0xc]
      %v5807 = vld [vmem:[%s4150 + $0x10] sm:$0xf]
      %v5808 = vld [vmem:[%s4150 + $0x14] sm:$0x3]
      %v5809 = vld [vmem:[%s4150 + $0x18] sm:$0xc]
      %v5810 = vld [vmem:[%s4150 + $0x1c] sm:$0xf]
      %v5811 = vld [vmem:[%s4150 + $0x20] sm:$0x3]
      %v5812 = vld [vmem:[%s4150 + $0x24] sm:$0xc]
      %v5813 = vld [vmem:[%s4150 + $0x28] sm:$0xf]
      %v5814 = vld [vmem:[%s4150 + $0x2c] sm:$0x3]
      %v5815 = vld [vmem:[%s4150 + $0x30] sm:$0xc]
      %v5816 = vld [vmem:[%s4150 + $0x34] sm:$0xf]
      %v5817 = vld [vmem:[%s4150 + $0x38] sm:$0x3]
      %v5818 = vld [vmem:[%s4150 + $0x3c] sm:$0xc]
      %v5819 = vld [vmem:[%s4150 + $0x40] sm:$0xf]
      %v5820 = vld [vmem:[%s4150 + $0x44] sm:$0x3]
      %v5821 = vld [vmem:[%s4150 + $0x48] sm:$0xc]
      %v5822 = vld [vmem:[%s4150 + $0x4c] sm:$0xf]
      %v5823 = vld [vmem:[%s4150 + $0x50] sm:$0x3]
      %v5824 = vld [vmem:[%s4150 + $0x54] sm:$0xc]
      %v5825 = vld [vmem:[%s4150 + $0x58] sm:$0xf]
      %v5826 = vld [vmem:[%s4150 + $0x5c] sm:$0x3]
      %v5827 = vld [vmem:[%s4150 + $0x60] sm:$0xc]
      %v5828 = vld [vmem:[%s4150 + $0x64] sm:$0xf]
      %v5829 = vld [vmem:[%s4150 + $0x68] sm:$0x3]
      %v5830 = vld [vmem:[%s4150 + $0x6c] sm:$0xc]
      %v5831 = vld [vmem:[%s4150 + $0x70] sm:$0xf]
      %v5832 = vld [vmem:[%s4150 + $0x74] sm:$0x3]
      %v5833 = vld [vmem:[%s4150 + $0x78] sm:$0xc]
      %v5834 = vld [vmem:[%s4150 + $0x7c] sm:$0xf]
      %v5835 = vld [vmem:[%s4150 + $0x80] sm:$0x3]
      %v5836 = vld [vmem:[%s4150 + $0x84] sm:$0xc]
      %v5837 = vld [vmem:[%s4150 + $0x88] sm:$0xf]
      %v5838 = vld [vmem:[%s4150 + $0x8c] sm:$0x3]
      %v5839 = vld [vmem:[%s4150 + $0x90] sm:$0xc]
      %v5840 = vld [vmem:[%s4150 + $0x94] sm:$0xf]
      %v5841 = vld [vmem:[%s4150 + $0x98] sm:$0x3]
      %v5842 = vld [vmem:[%s4150 + $0x9c] sm:$0xc]
      %v5843 = vld [vmem:[%s4150 + $0xa0] sm:$0xf]
      %v5844 = vld [vmem:[%s4150 + $0xa4] sm:$0x3]
      %v5845 = vld [vmem:[%s4150 + $0xa8] sm:$0xc]
      %v5846 = vld [vmem:[%s4150 + $0xac] sm:$0xf]
      %v5847 = vld [vmem:[%s4150 + $0xb0] sm:$0x3]
      %v5848 = vld [vmem:[%s4150 + $0xb4] sm:$0xc]
      %v5849 = vld [vmem:[%s4150 + $0xb8] sm:$0xf]
      %v5850 = vld [vmem:[%s4150 + $0xbc] sm:$0x3]
      %v5899 = vrot.slane %v5803, 6
      %v5900 = vrot.slane %v5899, 4
      %v5901 = vrot.slane %v5804, 6
      %v5902 = vsel %vm1950, %v5900, %v5901
      %v5903 = vrot.slane %v5901, 4
      %v5904 = vrot.slane %v5805, 6
      %v5905 = vsel %vm1950, %v5903, %v5904
      %v5906 = vrot.slane %v5806, 6
      %v5907 = vrot.slane %v5906, 4
      %v5908 = vrot.slane %v5807, 6
      %v5909 = vsel %vm1950, %v5907, %v5908
      %v5910 = vrot.slane %v5908, 4
      %v5911 = vrot.slane %v5808, 6
      %v5912 = vsel %vm1950, %v5910, %v5911
      %v5913 = vrot.slane %v5809, 6
      %v5914 = vrot.slane %v5913, 4
      %v5915 = vrot.slane %v5810, 6
      %v5916 = vsel %vm1950, %v5914, %v5915
      %v5917 = vrot.slane %v5915, 4
      %v5918 = vrot.slane %v5811, 6
      %v5919 = vsel %vm1950, %v5917, %v5918
      %v5920 = vrot.slane %v5812, 6
      %v5921 = vrot.slane %v5920, 4
      %v5922 = vrot.slane %v5813, 6
      %v5923 = vsel %vm1950, %v5921, %v5922
      %v5924 = vrot.slane %v5922, 4
      %v5925 = vrot.slane %v5814, 6
      %v5926 = vsel %vm1950, %v5924, %v5925
      %v5927 = vrot.slane %v5815, 6
      %v5928 = vrot.slane %v5927, 4
      %v5929 = vrot.slane %v5816, 6
      %v5930 = vsel %vm1950, %v5928, %v5929
      %v5931 = vrot.slane %v5929, 4
      %v5932 = vrot.slane %v5817, 6
      %v5933 = vsel %vm1950, %v5931, %v5932
      %v5934 = vrot.slane %v5818, 6
      %v5935 = vrot.slane %v5934, 4
      %v5936 = vrot.slane %v5819, 6
      %v5937 = vsel %vm1950, %v5935, %v5936
      %v5938 = vrot.slane %v5936, 4
      %v5939 = vrot.slane %v5820, 6
      %v5940 = vsel %vm1950, %v5938, %v5939
      %v5941 = vrot.slane %v5821, 6
      %v5942 = vrot.slane %v5941, 4
      %v5943 = vrot.slane %v5822, 6
      %v5944 = vsel %vm1950, %v5942, %v5943
      %v5945 = vrot.slane %v5943, 4
      %v5946 = vrot.slane %v5823, 6
      %v5947 = vsel %vm1950, %v5945, %v5946
      %v5948 = vrot.slane %v5824, 6
      %v5949 = vrot.slane %v5948, 4
      %v5950 = vrot.slane %v5825, 6
      %v5951 = vsel %vm1950, %v5949, %v5950
      %v5952 = vrot.slane %v5950, 4
      %v5953 = vrot.slane %v5826, 6
      %v5954 = vsel %vm1950, %v5952, %v5953
      %v5955 = vrot.slane %v5827, 6
      %v5956 = vrot.slane %v5955, 4
      %v5957 = vrot.slane %v5828, 6
      %v5958 = vsel %vm1950, %v5956, %v5957
      %v5959 = vrot.slane %v5957, 4
      %v5960 = vrot.slane %v5829, 6
      %v5961 = vsel %vm1950, %v5959, %v5960
      %v5962 = vrot.slane %v5830, 6
      %v5963 = vrot.slane %v5962, 4
      %v5964 = vrot.slane %v5831, 6
      %v5965 = vsel %vm1950, %v5963, %v5964
      %v5966 = vrot.slane %v5964, 4
      %v5967 = vrot.slane %v5832, 6
      %v5968 = vsel %vm1950, %v5966, %v5967
      %v5969 = vrot.slane %v5833, 6
      %v5970 = vrot.slane %v5969, 4
      %v5971 = vrot.slane %v5834, 6
      %v5972 = vsel %vm1950, %v5970, %v5971
      %v5973 = vrot.slane %v5971, 4
      %v5974 = vrot.slane %v5835, 6
      %v5975 = vsel %vm1950, %v5973, %v5974
      %v5976 = vrot.slane %v5836, 6
      %v5977 = vrot.slane %v5976, 4
      %v5978 = vrot.slane %v5837, 6
      %v5979 = vsel %vm1950, %v5977, %v5978
      %v5980 = vrot.slane %v5978, 4
      %v5981 = vrot.slane %v5838, 6
      %v5982 = vsel %vm1950, %v5980, %v5981
      %v5983 = vrot.slane %v5839, 6
      %v5984 = vrot.slane %v5983, 4
      %v5985 = vrot.slane %v5840, 6
      %v5986 = vsel %vm1950, %v5984, %v5985
      %v5987 = vrot.slane %v5985, 4
      %v5988 = vrot.slane %v5841, 6
      %v5989 = vsel %vm1950, %v5987, %v5988
      %v5990 = vrot.slane %v5842, 6
      %v5991 = vrot.slane %v5990, 4
      %v5992 = vrot.slane %v5843, 6
      %v5993 = vsel %vm1950, %v5991, %v5992
      %v5994 = vrot.slane %v5992, 4
      %v5995 = vrot.slane %v5844, 6
      %v5996 = vsel %vm1950, %v5994, %v5995
      %v5997 = vrot.slane %v5845, 6
      %v5998 = vrot.slane %v5997, 4
      %v5999 = vrot.slane %v5846, 6
      %v6000 = vsel %vm1950, %v5998, %v5999
      %v6001 = vrot.slane %v5999, 4
      %v6002 = vrot.slane %v5847, 6
      %v6003 = vsel %vm1950, %v6001, %v6002
      %v6004 = vrot.slane %v5848, 6
      %v6005 = vrot.slane %v6004, 4
      %v6006 = vrot.slane %v5849, 6
      %v6007 = vsel %vm1950, %v6005, %v6006
      %v6008 = vrot.slane %v6006, 4
      %v6009 = vrot.slane %v5850, 6
      %v6010 = vsel %vm1950, %v6008, %v6009
      %v6011 = vunpack.c.l.b16 %v5902
      %v6012 = vunpack.c.l.b16 %v5905
      %v6013 = vunpack.c.l.b16 %v5909
      %v6014 = vunpack.c.l.b16 %v5912
      %v6015 = vunpack.c.l.b16 %v5916
      %v6016 = vunpack.c.l.b16 %v5919
      %v6017 = vunpack.c.l.b16 %v5923
      %v6018 = vunpack.c.l.b16 %v5926
      %v6019 = vunpack.c.l.b16 %v5930
      %v6020 = vunpack.c.l.b16 %v5933
      %v6021 = vunpack.c.l.b16 %v5937
      %v6022 = vunpack.c.l.b16 %v5940
      %v6023 = vunpack.c.l.b16 %v5944
      %v6024 = vunpack.c.l.b16 %v5947
      %v6025 = vunpack.c.l.b16 %v5951
      %v6026 = vunpack.c.l.b16 %v5954
      %v6027 = vunpack.c.l.b16 %v5958
      %v6028 = vunpack.c.l.b16 %v5961
      %v6029 = vunpack.c.l.b16 %v5965
      %v6030 = vunpack.c.l.b16 %v5968
      %v6031 = vunpack.c.l.b16 %v5972
      %v6032 = vunpack.c.l.b16 %v5975
      %v6033 = vunpack.c.l.b16 %v5979
      %v6034 = vunpack.c.l.b16 %v5982
      %v6035 = vunpack.c.l.b16 %v5986
      %v6036 = vunpack.c.l.b16 %v5989
      %v6037 = vunpack.c.l.b16 %v5993
      %v6038 = vunpack.c.l.b16 %v5996
      %v6039 = vunpack.c.l.b16 %v6000
      %v6040 = vunpack.c.l.b16 %v6003
      %v6041 = vunpack.c.l.b16 %v6007
      %v6042 = vunpack.c.l.b16 %v6010
      %v6043 = vpack.c.b16 %v6012, %v6011
      %v6044 = vpack.c.b16 %v6014, %v6013
      %v6045 = vpack.c.b16 %v6016, %v6015
      %v6046 = vpack.c.b16 %v6018, %v6017
      %v6047 = vpack.c.b16 %v6020, %v6019
      %v6048 = vpack.c.b16 %v6022, %v6021
      %v6049 = vpack.c.b16 %v6024, %v6023
      %v6050 = vpack.c.b16 %v6026, %v6025
      %v6051 = vpack.c.b16 %v6028, %v6027
      %v6052 = vpack.c.b16 %v6030, %v6029
      %v6053 = vpack.c.b16 %v6032, %v6031
      %v6054 = vpack.c.b16 %v6034, %v6033
      %v6055 = vpack.c.b16 %v6036, %v6035
      %v6056 = vpack.c.b16 %v6038, %v6037
      %v6057 = vpack.c.b16 %v6040, %v6039
      %v6058 = vpack.c.b16 %v6042, %v6041
      %6059 = vrot.lane.b32.xlu0 %v6043, 56
      %v6060 = vpop.permute.xlu0 %6059
      %6061 = vrot.lane.b32.xlu0 %v6044, 56
      %v6062 = vpop.permute.xlu0 %6061
      %6063 = vrot.lane.b32.xlu0 %v6045, 56
      %v6064 = vpop.permute.xlu0 %6063
      %6065 = vrot.lane.b32.xlu0 %v6046, 56
      %v6066 = vpop.permute.xlu0 %6065
      %6067 = vrot.lane.b32.xlu0 %v6047, 56
      %v6068 = vpop.permute.xlu0 %6067
      %6069 = vrot.lane.b32.xlu0 %v6048, 56
      %v6070 = vpop.permute.xlu0 %6069
      %6071 = vrot.lane.b32.xlu0 %v6049, 56
      %v6072 = vpop.permute.xlu0 %6071
      %6073 = vrot.lane.b32.xlu0 %v6050, 56
      %v6074 = vpop.permute.xlu0 %6073
      %6075 = vrot.lane.b32.xlu0 %v6051, 56
      %v6076 = vpop.permute.xlu0 %6075
      %6077 = vrot.lane.b32.xlu0 %v6052, 56
      %v6078 = vpop.permute.xlu0 %6077
      %6079 = vrot.lane.b32.xlu0 %v6053, 56
      %v6080 = vpop.permute.xlu0 %6079
      %6081 = vrot.lane.b32.xlu0 %v6054, 56
      %v6082 = vpop.permute.xlu0 %6081
      %6083 = vrot.lane.b32.xlu0 %v6055, 56
      %v6084 = vpop.permute.xlu0 %6083
      %6085 = vrot.lane.b32.xlu0 %v6056, 56
      %v6086 = vpop.permute.xlu0 %6085
      %6087 = vrot.lane.b32.xlu0 %v6057, 56
      %v6088 = vpop.permute.xlu0 %6087
      %6089 = vrot.lane.b32.xlu0 %v6058, 56
      %v6090 = vpop.permute.xlu0 %6089
      %vm6107 = vcmask 490944
      %6108 = vst.msk [vmem:[#allocation2] sm:$0xff] %vm6107, %v6060
      %6109 = vst.msk [vmem:[#allocation2 + $0x8] sm:$0xff] %vm6107, %v6062
      %6110 = vst.msk [vmem:[#allocation2 + $0x10] sm:$0xff] %vm6107, %v6064
      %6111 = vst.msk [vmem:[#allocation2 + $0x18] sm:$0xff] %vm6107, %v6066
      %6112 = vst.msk [vmem:[#allocation2 + $0x20] sm:$0xff] %vm6107, %v6068
      %6113 = vst.msk [vmem:[#allocation2 + $0x28] sm:$0xff] %vm6107, %v6070
      %6114 = vst.msk [vmem:[#allocation2 + $0x30] sm:$0xff] %vm6107, %v6072
      %6115 = vst.msk [vmem:[#allocation2 + $0x38] sm:$0xff] %vm6107, %v6074
      %6116 = vst.msk [vmem:[#allocation2 + $0x40] sm:$0xff] %vm6107, %v6076
      %6117 = vst.msk [vmem:[#allocation2 + $0x48] sm:$0xff] %vm6107, %v6078
      %6118 = vst.msk [vmem:[#allocation2 + $0x50] sm:$0xff] %vm6107, %v6080
      %6119 = vst.msk [vmem:[#allocation2 + $0x58] sm:$0xff] %vm6107, %v6082
      %6120 = vst.msk [vmem:[#allocation2 + $0x60] sm:$0xff] %vm6107, %v6084
      %6121 = vst.msk [vmem:[#allocation2 + $0x68] sm:$0xff] %vm6107, %v6086
      %6122 = vst.msk [vmem:[#allocation2 + $0x70] sm:$0xff] %vm6107, %v6088
      %6123 = vst.msk [vmem:[#allocation2 + $0x78] sm:$0xff] %vm6107, %v6090
      %s6124 = scalar_lea.vmem %s206, 36
      %v6125 = vld [vmem:[%s6124] sm:$0xf]
      %v6126 = vld [vmem:[%s6124 + $0x4] sm:$0xf]
      %v6127 = vld [vmem:[%s6124 + $0xc] sm:$0xf]
      %v6128 = vld [vmem:[%s6124 + $0x10] sm:$0xf]
      %v6129 = vld [vmem:[%s6124 + $0x18] sm:$0xf]
      %v6130 = vld [vmem:[%s6124 + $0x1c] sm:$0xf]
      %v6131 = vld [vmem:[%s6124 + $0x24] sm:$0xf]
      %v6132 = vld [vmem:[%s6124 + $0x28] sm:$0xf]
      %v6133 = vld [vmem:[%s6124 + $0x30] sm:$0xf]
      %v6134 = vld [vmem:[%s6124 + $0x34] sm:$0xf]
      %v6135 = vld [vmem:[%s6124 + $0x3c] sm:$0xf]
      %v6136 = vld [vmem:[%s6124 + $0x40] sm:$0xf]
      %v6137 = vld [vmem:[%s6124 + $0x48] sm:$0xf]
      %v6138 = vld [vmem:[%s6124 + $0x4c] sm:$0xf]
      %v6139 = vld [vmem:[%s6124 + $0x54] sm:$0xf]
      %v6140 = vld [vmem:[%s6124 + $0x58] sm:$0xf]
      %v6141 = vld [vmem:[%s6124 + $0x60] sm:$0xf]
      %v6142 = vld [vmem:[%s6124 + $0x64] sm:$0xf]
      %v6143 = vld [vmem:[%s6124 + $0x6c] sm:$0xf]
      %v6144 = vld [vmem:[%s6124 + $0x70] sm:$0xf]
      %v6145 = vld [vmem:[%s6124 + $0x78] sm:$0xf]
      %v6146 = vld [vmem:[%s6124 + $0x7c] sm:$0xf]
      %v6147 = vld [vmem:[%s6124 + $0x84] sm:$0xf]
      %v6148 = vld [vmem:[%s6124 + $0x88] sm:$0xf]
      %v6149 = vld [vmem:[%s6124 + $0x90] sm:$0xf]
      %v6150 = vld [vmem:[%s6124 + $0x94] sm:$0xf]
      %v6151 = vld [vmem:[%s6124 + $0x9c] sm:$0xf]
      %v6152 = vld [vmem:[%s6124 + $0xa0] sm:$0xf]
      %v6153 = vld [vmem:[%s6124 + $0xa8] sm:$0xf]
      %v6154 = vld [vmem:[%s6124 + $0xac] sm:$0xf]
      %v6155 = vld [vmem:[%s6124 + $0xb4] sm:$0xf]
      %v6156 = vld [vmem:[%s6124 + $0xb8] sm:$0xf]
      %v6189 = vunpack.c.l.b16 %v6125
      %v6190 = vunpack.c.l.b16 %v6126
      %v6191 = vunpack.c.l.b16 %v6127
      %v6192 = vunpack.c.l.b16 %v6128
      %v6193 = vunpack.c.l.b16 %v6129
      %v6194 = vunpack.c.l.b16 %v6130
      %v6195 = vunpack.c.l.b16 %v6131
      %v6196 = vunpack.c.l.b16 %v6132
      %v6197 = vunpack.c.l.b16 %v6133
      %v6198 = vunpack.c.l.b16 %v6134
      %v6199 = vunpack.c.l.b16 %v6135
      %v6200 = vunpack.c.l.b16 %v6136
      %v6201 = vunpack.c.l.b16 %v6137
      %v6202 = vunpack.c.l.b16 %v6138
      %v6203 = vunpack.c.l.b16 %v6139
      %v6204 = vunpack.c.l.b16 %v6140
      %v6205 = vunpack.c.l.b16 %v6141
      %v6206 = vunpack.c.l.b16 %v6142
      %v6207 = vunpack.c.l.b16 %v6143
      %v6208 = vunpack.c.l.b16 %v6144
      %v6209 = vunpack.c.l.b16 %v6145
      %v6210 = vunpack.c.l.b16 %v6146
      %v6211 = vunpack.c.l.b16 %v6147
      %v6212 = vunpack.c.l.b16 %v6148
      %v6213 = vunpack.c.l.b16 %v6149
      %v6214 = vunpack.c.l.b16 %v6150
      %v6215 = vunpack.c.l.b16 %v6151
      %v6216 = vunpack.c.l.b16 %v6152
      %v6217 = vunpack.c.l.b16 %v6153
      %v6218 = vunpack.c.l.b16 %v6154
      %v6219 = vunpack.c.l.b16 %v6155
      %v6220 = vunpack.c.l.b16 %v6156
      %v6221 = vpack.c.b16 %v6190, %v6189
      %v6222 = vpack.c.b16 %v6192, %v6191
      %v6223 = vpack.c.b16 %v6194, %v6193
      %v6224 = vpack.c.b16 %v6196, %v6195
      %v6225 = vpack.c.b16 %v6198, %v6197
      %v6226 = vpack.c.b16 %v6200, %v6199
      %v6227 = vpack.c.b16 %v6202, %v6201
      %v6228 = vpack.c.b16 %v6204, %v6203
      %v6229 = vpack.c.b16 %v6206, %v6205
      %v6230 = vpack.c.b16 %v6208, %v6207
      %v6231 = vpack.c.b16 %v6210, %v6209
      %v6232 = vpack.c.b16 %v6212, %v6211
      %v6233 = vpack.c.b16 %v6214, %v6213
      %v6234 = vpack.c.b16 %v6216, %v6215
      %v6235 = vpack.c.b16 %v6218, %v6217
      %v6236 = vpack.c.b16 %v6220, %v6219
      %6237 = vrot.lane.b32.xlu0 %v6221, 60
      %v6238 = vpop.permute.xlu0 %6237
      %6239 = vrot.lane.b32.xlu0 %v6222, 60
      %v6240 = vpop.permute.xlu0 %6239
      %6241 = vrot.lane.b32.xlu0 %v6223, 60
      %v6242 = vpop.permute.xlu0 %6241
      %6243 = vrot.lane.b32.xlu0 %v6224, 60
      %v6244 = vpop.permute.xlu0 %6243
      %6245 = vrot.lane.b32.xlu0 %v6225, 60
      %v6246 = vpop.permute.xlu0 %6245
      %6247 = vrot.lane.b32.xlu0 %v6226, 60
      %v6248 = vpop.permute.xlu0 %6247
      %6249 = vrot.lane.b32.xlu0 %v6227, 60
      %v6250 = vpop.permute.xlu0 %6249
      %6251 = vrot.lane.b32.xlu0 %v6228, 60
      %v6252 = vpop.permute.xlu0 %6251
      %6253 = vrot.lane.b32.xlu0 %v6229, 60
      %v6254 = vpop.permute.xlu0 %6253
      %6255 = vrot.lane.b32.xlu0 %v6230, 60
      %v6256 = vpop.permute.xlu0 %6255
      %6257 = vrot.lane.b32.xlu0 %v6231, 60
      %v6258 = vpop.permute.xlu0 %6257
      %6259 = vrot.lane.b32.xlu0 %v6232, 60
      %v6260 = vpop.permute.xlu0 %6259
      %6261 = vrot.lane.b32.xlu0 %v6233, 60
      %v6262 = vpop.permute.xlu0 %6261
      %6263 = vrot.lane.b32.xlu0 %v6234, 60
      %v6264 = vpop.permute.xlu0 %6263
      %6265 = vrot.lane.b32.xlu0 %v6235, 60
      %v6266 = vpop.permute.xlu0 %6265
      %6267 = vrot.lane.b32.xlu0 %v6236, 60
      %v6268 = vpop.permute.xlu0 %6267
      %vm6285 = vcmask 523744
      %6286 = vst.msk [vmem:[#allocation2] sm:$0xff] %vm6285, %v6238
      %6287 = vst.msk [vmem:[#allocation2 + $0x8] sm:$0xff] %vm6285, %v6240
      %6288 = vst.msk [vmem:[#allocation2 + $0x10] sm:$0xff] %vm6285, %v6242
      %6289 = vst.msk [vmem:[#allocation2 + $0x18] sm:$0xff] %vm6285, %v6244
      %6290 = vst.msk [vmem:[#allocation2 + $0x20] sm:$0xff] %vm6285, %v6246
      %6291 = vst.msk [vmem:[#allocation2 + $0x28] sm:$0xff] %vm6285, %v6248
      %6292 = vst.msk [vmem:[#allocation2 + $0x30] sm:$0xff] %vm6285, %v6250
      %6293 = vst.msk [vmem:[#allocation2 + $0x38] sm:$0xff] %vm6285, %v6252
      %6294 = vst.msk [vmem:[#allocation2 + $0x40] sm:$0xff] %vm6285, %v6254
      %6295 = vst.msk [vmem:[#allocation2 + $0x48] sm:$0xff] %vm6285, %v6256
      %6296 = vst.msk [vmem:[#allocation2 + $0x50] sm:$0xff] %vm6285, %v6258
      %6297 = vst.msk [vmem:[#allocation2 + $0x58] sm:$0xff] %vm6285, %v6260
      %6298 = vst.msk [vmem:[#allocation2 + $0x60] sm:$0xff] %vm6285, %v6262
      %6299 = vst.msk [vmem:[#allocation2 + $0x68] sm:$0xff] %vm6285, %v6264
      %6300 = vst.msk [vmem:[#allocation2 + $0x70] sm:$0xff] %vm6285, %v6266
      %6301 = vst.msk [vmem:[#allocation2 + $0x78] sm:$0xff] %vm6285, %v6268
      %v6302 = vld [vmem:[%s6124] sm:$0xf]
      %v6303 = vld [vmem:[%s6124 + $0x4] sm:$0xf]
      %v6304 = vld [vmem:[%s6124 + $0x8] sm:$0x1]
      %v6305 = vld [vmem:[%s6124 + $0xc] sm:$0xf]
      %v6306 = vld [vmem:[%s6124 + $0x10] sm:$0xf]
      %v6307 = vld [vmem:[%s6124 + $0x14] sm:$0x1]
      %v6308 = vld [vmem:[%s6124 + $0x18] sm:$0xf]
      %v6309 = vld [vmem:[%s6124 + $0x1c] sm:$0xf]
      %v6310 = vld [vmem:[%s6124 + $0x20] sm:$0x1]
      %v6311 = vld [vmem:[%s6124 + $0x24] sm:$0xf]
      %v6312 = vld [vmem:[%s6124 + $0x28] sm:$0xf]
      %v6313 = vld [vmem:[%s6124 + $0x2c] sm:$0x1]
      %v6314 = vld [vmem:[%s6124 + $0x30] sm:$0xf]
      %v6315 = vld [vmem:[%s6124 + $0x34] sm:$0xf]
      %v6316 = vld [vmem:[%s6124 + $0x38] sm:$0x1]
      %v6317 = vld [vmem:[%s6124 + $0x3c] sm:$0xf]
      %v6318 = vld [vmem:[%s6124 + $0x40] sm:$0xf]
      %v6319 = vld [vmem:[%s6124 + $0x44] sm:$0x1]
      %v6320 = vld [vmem:[%s6124 + $0x48] sm:$0xf]
      %v6321 = vld [vmem:[%s6124 + $0x4c] sm:$0xf]
      %v6322 = vld [vmem:[%s6124 + $0x50] sm:$0x1]
      %v6323 = vld [vmem:[%s6124 + $0x54] sm:$0xf]
      %v6324 = vld [vmem:[%s6124 + $0x58] sm:$0xf]
      %v6325 = vld [vmem:[%s6124 + $0x5c] sm:$0x1]
      %v6326 = vld [vmem:[%s6124 + $0x60] sm:$0xf]
      %v6327 = vld [vmem:[%s6124 + $0x64] sm:$0xf]
      %v6328 = vld [vmem:[%s6124 + $0x68] sm:$0x1]
      %v6329 = vld [vmem:[%s6124 + $0x6c] sm:$0xf]
      %v6330 = vld [vmem:[%s6124 + $0x70] sm:$0xf]
      %v6331 = vld [vmem:[%s6124 + $0x74] sm:$0x1]
      %v6332 = vld [vmem:[%s6124 + $0x78] sm:$0xf]
      %v6333 = vld [vmem:[%s6124 + $0x7c] sm:$0xf]
      %v6334 = vld [vmem:[%s6124 + $0x80] sm:$0x1]
      %v6335 = vld [vmem:[%s6124 + $0x84] sm:$0xf]
      %v6336 = vld [vmem:[%s6124 + $0x88] sm:$0xf]
      %v6337 = vld [vmem:[%s6124 + $0x8c] sm:$0x1]
      %v6338 = vld [vmem:[%s6124 + $0x90] sm:$0xf]
      %v6339 = vld [vmem:[%s6124 + $0x94] sm:$0xf]
      %v6340 = vld [vmem:[%s6124 + $0x98] sm:$0x1]
      %v6341 = vld [vmem:[%s6124 + $0x9c] sm:$0xf]
      %v6342 = vld [vmem:[%s6124 + $0xa0] sm:$0xf]
      %v6343 = vld [vmem:[%s6124 + $0xa4] sm:$0x1]
      %v6344 = vld [vmem:[%s6124 + $0xa8] sm:$0xf]
      %v6345 = vld [vmem:[%s6124 + $0xac] sm:$0xf]
      %v6346 = vld [vmem:[%s6124 + $0xb0] sm:$0x1]
      %v6347 = vld [vmem:[%s6124 + $0xb4] sm:$0xf]
      %v6348 = vld [vmem:[%s6124 + $0xb8] sm:$0xf]
      %v6349 = vld [vmem:[%s6124 + $0xbc] sm:$0x1]
      %v6351 = vshrl.u32 %v6302, 16
      %v6353 = vrot.slane %v6351, 4
      %v6354 = vshll.u32 %v6302, 16
      %v6356 = vrot.slane %v6354, 5
      %v6357 = vor.u32 %v6353, %v6356
      %v6358 = vrot.slane %v6357, 4
      %v6360 = vshll.u32 %v6303, 16
      %v6362 = vrot.slane %v6360, 5
      %v6363 = vsel %vm418, %v6358, %v6362
      %v6364 = vshrl.u32 %v6303, 16
      %v6366 = vrot.slane %v6364, 4
      %v6367 = vor.u32 %v6366, %v6362
      %v6368 = vrot.slane %v6367, 4
      %v6370 = vshll.u32 %v6304, 16
      %v6372 = vrot.slane %v6370, 5
      %v6373 = vsel %vm418, %v6368, %v6372
      %v6375 = vshrl.u32 %v6305, 16
      %v6377 = vrot.slane %v6375, 4
      %v6378 = vshll.u32 %v6305, 16
      %v6380 = vrot.slane %v6378, 5
      %v6381 = vor.u32 %v6377, %v6380
      %v6382 = vrot.slane %v6381, 4
      %v6384 = vshll.u32 %v6306, 16
      %v6386 = vrot.slane %v6384, 5
      %v6387 = vsel %vm418, %v6382, %v6386
      %v6388 = vshrl.u32 %v6306, 16
      %v6390 = vrot.slane %v6388, 4
      %v6391 = vor.u32 %v6390, %v6386
      %v6392 = vrot.slane %v6391, 4
      %v6394 = vshll.u32 %v6307, 16
      %v6396 = vrot.slane %v6394, 5
      %v6397 = vsel %vm418, %v6392, %v6396
      %v6399 = vshrl.u32 %v6308, 16
      %v6401 = vrot.slane %v6399, 4
      %v6402 = vshll.u32 %v6308, 16
      %v6404 = vrot.slane %v6402, 5
      %v6405 = vor.u32 %v6401, %v6404
      %v6406 = vrot.slane %v6405, 4
      %v6408 = vshll.u32 %v6309, 16
      %v6410 = vrot.slane %v6408, 5
      %v6411 = vsel %vm418, %v6406, %v6410
      %v6412 = vshrl.u32 %v6309, 16
      %v6414 = vrot.slane %v6412, 4
      %v6415 = vor.u32 %v6414, %v6410
      %v6416 = vrot.slane %v6415, 4
      %v6418 = vshll.u32 %v6310, 16
      %v6420 = vrot.slane %v6418, 5
      %v6421 = vsel %vm418, %v6416, %v6420
      %v6423 = vshrl.u32 %v6311, 16
      %v6425 = vrot.slane %v6423, 4
      %v6426 = vshll.u32 %v6311, 16
      %v6428 = vrot.slane %v6426, 5
      %v6429 = vor.u32 %v6425, %v6428
      %v6430 = vrot.slane %v6429, 4
      %v6432 = vshll.u32 %v6312, 16
      %v6434 = vrot.slane %v6432, 5
      %v6435 = vsel %vm418, %v6430, %v6434
      %v6436 = vshrl.u32 %v6312, 16
      %v6438 = vrot.slane %v6436, 4
      %v6439 = vor.u32 %v6438, %v6434
      %v6440 = vrot.slane %v6439, 4
      %v6442 = vshll.u32 %v6313, 16
      %v6444 = vrot.slane %v6442, 5
      %v6445 = vsel %vm418, %v6440, %v6444
      %v6447 = vshrl.u32 %v6314, 16
      %v6449 = vrot.slane %v6447, 4
      %v6450 = vshll.u32 %v6314, 16
      %v6452 = vrot.slane %v6450, 5
      %v6453 = vor.u32 %v6449, %v6452
      %v6454 = vrot.slane %v6453, 4
      %v6456 = vshll.u32 %v6315, 16
      %v6458 = vrot.slane %v6456, 5
      %v6459 = vsel %vm418, %v6454, %v6458
      %v6460 = vshrl.u32 %v6315, 16
      %v6462 = vrot.slane %v6460, 4
      %v6463 = vor.u32 %v6462, %v6458
      %v6464 = vrot.slane %v6463, 4
      %v6466 = vshll.u32 %v6316, 16
      %v6468 = vrot.slane %v6466, 5
      %v6469 = vsel %vm418, %v6464, %v6468
      %v6471 = vshrl.u32 %v6317, 16
      %v6473 = vrot.slane %v6471, 4
      %v6474 = vshll.u32 %v6317, 16
      %v6476 = vrot.slane %v6474, 5
      %v6477 = vor.u32 %v6473, %v6476
      %v6478 = vrot.slane %v6477, 4
      %v6480 = vshll.u32 %v6318, 16
      %v6482 = vrot.slane %v6480, 5
      %v6483 = vsel %vm418, %v6478, %v6482
      %v6484 = vshrl.u32 %v6318, 16
      %v6486 = vrot.slane %v6484, 4
      %v6487 = vor.u32 %v6486, %v6482
      %v6488 = vrot.slane %v6487, 4
      %v6490 = vshll.u32 %v6319, 16
      %v6492 = vrot.slane %v6490, 5
      %v6493 = vsel %vm418, %v6488, %v6492
      %v6495 = vshrl.u32 %v6320, 16
      %v6497 = vrot.slane %v6495, 4
      %v6498 = vshll.u32 %v6320, 16
      %v6500 = vrot.slane %v6498, 5
      %v6501 = vor.u32 %v6497, %v6500
      %v6502 = vrot.slane %v6501, 4
      %v6504 = vshll.u32 %v6321, 16
      %v6506 = vrot.slane %v6504, 5
      %v6507 = vsel %vm418, %v6502, %v6506
      %v6508 = vshrl.u32 %v6321, 16
      %v6510 = vrot.slane %v6508, 4
      %v6511 = vor.u32 %v6510, %v6506
      %v6512 = vrot.slane %v6511, 4
      %v6514 = vshll.u32 %v6322, 16
      %v6516 = vrot.slane %v6514, 5
      %v6517 = vsel %vm418, %v6512, %v6516
      %v6519 = vshrl.u32 %v6323, 16
      %v6521 = vrot.slane %v6519, 4
      %v6522 = vshll.u32 %v6323, 16
      %v6524 = vrot.slane %v6522, 5
      %v6525 = vor.u32 %v6521, %v6524
      %v6526 = vrot.slane %v6525, 4
      %v6528 = vshll.u32 %v6324, 16
      %v6530 = vrot.slane %v6528, 5
      %v6531 = vsel %vm418, %v6526, %v6530
      %v6532 = vshrl.u32 %v6324, 16
      %v6534 = vrot.slane %v6532, 4
      %v6535 = vor.u32 %v6534, %v6530
      %v6536 = vrot.slane %v6535, 4
      %v6538 = vshll.u32 %v6325, 16
      %v6540 = vrot.slane %v6538, 5
      %v6541 = vsel %vm418, %v6536, %v6540
      %v6543 = vshrl.u32 %v6326, 16
      %v6545 = vrot.slane %v6543, 4
      %v6546 = vshll.u32 %v6326, 16
      %v6548 = vrot.slane %v6546, 5
      %v6549 = vor.u32 %v6545, %v6548
      %v6550 = vrot.slane %v6549, 4
      %v6552 = vshll.u32 %v6327, 16
      %v6554 = vrot.slane %v6552, 5
      %v6555 = vsel %vm418, %v6550, %v6554
      %v6556 = vshrl.u32 %v6327, 16
      %v6558 = vrot.slane %v6556, 4
      %v6559 = vor.u32 %v6558, %v6554
      %v6560 = vrot.slane %v6559, 4
      %v6562 = vshll.u32 %v6328, 16
      %v6564 = vrot.slane %v6562, 5
      %v6565 = vsel %vm418, %v6560, %v6564
      %v6567 = vshrl.u32 %v6329, 16
      %v6569 = vrot.slane %v6567, 4
      %v6570 = vshll.u32 %v6329, 16
      %v6572 = vrot.slane %v6570, 5
      %v6573 = vor.u32 %v6569, %v6572
      %v6574 = vrot.slane %v6573, 4
      %v6576 = vshll.u32 %v6330, 16
      %v6578 = vrot.slane %v6576, 5
      %v6579 = vsel %vm418, %v6574, %v6578
      %v6580 = vshrl.u32 %v6330, 16
      %v6582 = vrot.slane %v6580, 4
      %v6583 = vor.u32 %v6582, %v6578
      %v6584 = vrot.slane %v6583, 4
      %v6586 = vshll.u32 %v6331, 16
      %v6588 = vrot.slane %v6586, 5
      %v6589 = vsel %vm418, %v6584, %v6588
      %v6591 = vshrl.u32 %v6332, 16
      %v6593 = vrot.slane %v6591, 4
      %v6594 = vshll.u32 %v6332, 16
      %v6596 = vrot.slane %v6594, 5
      %v6597 = vor.u32 %v6593, %v6596
      %v6598 = vrot.slane %v6597, 4
      %v6600 = vshll.u32 %v6333, 16
      %v6602 = vrot.slane %v6600, 5
      %v6603 = vsel %vm418, %v6598, %v6602
      %v6604 = vshrl.u32 %v6333, 16
      %v6606 = vrot.slane %v6604, 4
      %v6607 = vor.u32 %v6606, %v6602
      %v6608 = vrot.slane %v6607, 4
      %v6610 = vshll.u32 %v6334, 16
      %v6612 = vrot.slane %v6610, 5
      %v6613 = vsel %vm418, %v6608, %v6612
      %v6615 = vshrl.u32 %v6335, 16
      %v6617 = vrot.slane %v6615, 4
      %v6618 = vshll.u32 %v6335, 16
      %v6620 = vrot.slane %v6618, 5
      %v6621 = vor.u32 %v6617, %v6620
      %v6622 = vrot.slane %v6621, 4
      %v6624 = vshll.u32 %v6336, 16
      %v6626 = vrot.slane %v6624, 5
      %v6627 = vsel %vm418, %v6622, %v6626
      %v6628 = vshrl.u32 %v6336, 16
      %v6630 = vrot.slane %v6628, 4
      %v6631 = vor.u32 %v6630, %v6626
      %v6632 = vrot.slane %v6631, 4
      %v6634 = vshll.u32 %v6337, 16
      %v6636 = vrot.slane %v6634, 5
      %v6637 = vsel %vm418, %v6632, %v6636
      %v6639 = vshrl.u32 %v6338, 16
      %v6641 = vrot.slane %v6639, 4
      %v6642 = vshll.u32 %v6338, 16
      %v6644 = vrot.slane %v6642, 5
      %v6645 = vor.u32 %v6641, %v6644
      %v6646 = vrot.slane %v6645, 4
      %v6648 = vshll.u32 %v6339, 16
      %v6650 = vrot.slane %v6648, 5
      %v6651 = vsel %vm418, %v6646, %v6650
      %v6652 = vshrl.u32 %v6339, 16
      %v6654 = vrot.slane %v6652, 4
      %v6655 = vor.u32 %v6654, %v6650
      %v6656 = vrot.slane %v6655, 4
      %v6658 = vshll.u32 %v6340, 16
      %v6660 = vrot.slane %v6658, 5
      %v6661 = vsel %vm418, %v6656, %v6660
      %v6663 = vshrl.u32 %v6341, 16
      %v6665 = vrot.slane %v6663, 4
      %v6666 = vshll.u32 %v6341, 16
      %v6668 = vrot.slane %v6666, 5
      %v6669 = vor.u32 %v6665, %v6668
      %v6670 = vrot.slane %v6669, 4
      %v6672 = vshll.u32 %v6342, 16
      %v6674 = vrot.slane %v6672, 5
      %v6675 = vsel %vm418, %v6670, %v6674
      %v6676 = vshrl.u32 %v6342, 16
      %v6678 = vrot.slane %v6676, 4
      %v6679 = vor.u32 %v6678, %v6674
      %v6680 = vrot.slane %v6679, 4
      %v6682 = vshll.u32 %v6343, 16
      %v6684 = vrot.slane %v6682, 5
      %v6685 = vsel %vm418, %v6680, %v6684
      %v6687 = vshrl.u32 %v6344, 16
      %v6689 = vrot.slane %v6687, 4
      %v6690 = vshll.u32 %v6344, 16
      %v6692 = vrot.slane %v6690, 5
      %v6693 = vor.u32 %v6689, %v6692
      %v6694 = vrot.slane %v6693, 4
      %v6696 = vshll.u32 %v6345, 16
      %v6698 = vrot.slane %v6696, 5
      %v6699 = vsel %vm418, %v6694, %v6698
      %v6700 = vshrl.u32 %v6345, 16
      %v6702 = vrot.slane %v6700, 4
      %v6703 = vor.u32 %v6702, %v6698
      %v6704 = vrot.slane %v6703, 4
      %v6706 = vshll.u32 %v6346, 16
      %v6708 = vrot.slane %v6706, 5
      %v6709 = vsel %vm418, %v6704, %v6708
      %v6711 = vshrl.u32 %v6347, 16
      %v6713 = vrot.slane %v6711, 4
      %v6714 = vshll.u32 %v6347, 16
      %v6716 = vrot.slane %v6714, 5
      %v6717 = vor.u32 %v6713, %v6716
      %v6718 = vrot.slane %v6717, 4
      %v6720 = vshll.u32 %v6348, 16
      %v6722 = vrot.slane %v6720, 5
      %v6723 = vsel %vm418, %v6718, %v6722
      %v6724 = vshrl.u32 %v6348, 16
      %v6726 = vrot.slane %v6724, 4
      %v6727 = vor.u32 %v6726, %v6722
      %v6728 = vrot.slane %v6727, 4
      %v6730 = vshll.u32 %v6349, 16
      %v6732 = vrot.slane %v6730, 5
      %v6733 = vsel %vm418, %v6728, %v6732
      %v6734 = vunpack.c.l.b16 %v6363
      %v6735 = vunpack.c.l.b16 %v6373
      %v6736 = vunpack.c.l.b16 %v6387
      %v6737 = vunpack.c.l.b16 %v6397
      %v6738 = vunpack.c.l.b16 %v6411
      %v6739 = vunpack.c.l.b16 %v6421
      %v6740 = vunpack.c.l.b16 %v6435
      %v6741 = vunpack.c.l.b16 %v6445
      %v6742 = vunpack.c.l.b16 %v6459
      %v6743 = vunpack.c.l.b16 %v6469
      %v6744 = vunpack.c.l.b16 %v6483
      %v6745 = vunpack.c.l.b16 %v6493
      %v6746 = vunpack.c.l.b16 %v6507
      %v6747 = vunpack.c.l.b16 %v6517
      %v6748 = vunpack.c.l.b16 %v6531
      %v6749 = vunpack.c.l.b16 %v6541
      %v6750 = vunpack.c.l.b16 %v6555
      %v6751 = vunpack.c.l.b16 %v6565
      %v6752 = vunpack.c.l.b16 %v6579
      %v6753 = vunpack.c.l.b16 %v6589
      %v6754 = vunpack.c.l.b16 %v6603
      %v6755 = vunpack.c.l.b16 %v6613
      %v6756 = vunpack.c.l.b16 %v6627
      %v6757 = vunpack.c.l.b16 %v6637
      %v6758 = vunpack.c.l.b16 %v6651
      %v6759 = vunpack.c.l.b16 %v6661
      %v6760 = vunpack.c.l.b16 %v6675
      %v6761 = vunpack.c.l.b16 %v6685
      %v6762 = vunpack.c.l.b16 %v6699
      %v6763 = vunpack.c.l.b16 %v6709
      %v6764 = vunpack.c.l.b16 %v6723
      %v6765 = vunpack.c.l.b16 %v6733
      %v6766 = vpack.c.b16 %v6735, %v6734
      %v6767 = vpack.c.b16 %v6737, %v6736
      %v6768 = vpack.c.b16 %v6739, %v6738
      %v6769 = vpack.c.b16 %v6741, %v6740
      %v6770 = vpack.c.b16 %v6743, %v6742
      %v6771 = vpack.c.b16 %v6745, %v6744
      %v6772 = vpack.c.b16 %v6747, %v6746
      %v6773 = vpack.c.b16 %v6749, %v6748
      %v6774 = vpack.c.b16 %v6751, %v6750
      %v6775 = vpack.c.b16 %v6753, %v6752
      %v6776 = vpack.c.b16 %v6755, %v6754
      %v6777 = vpack.c.b16 %v6757, %v6756
      %v6778 = vpack.c.b16 %v6759, %v6758
      %v6779 = vpack.c.b16 %v6761, %v6760
      %v6780 = vpack.c.b16 %v6763, %v6762
      %v6781 = vpack.c.b16 %v6765, %v6764
      %6782 = vrot.lane.b32.xlu0 %v6766, 64
      %v6783 = vpop.permute.xlu0 %6782
      %6784 = vrot.lane.b32.xlu0 %v6767, 64
      %v6785 = vpop.permute.xlu0 %6784
      %6786 = vrot.lane.b32.xlu0 %v6768, 64
      %v6787 = vpop.permute.xlu0 %6786
      %6788 = vrot.lane.b32.xlu0 %v6769, 64
      %v6789 = vpop.permute.xlu0 %6788
      %6790 = vrot.lane.b32.xlu0 %v6770, 64
      %v6791 = vpop.permute.xlu0 %6790
      %6792 = vrot.lane.b32.xlu0 %v6771, 64
      %v6793 = vpop.permute.xlu0 %6792
      %6794 = vrot.lane.b32.xlu0 %v6772, 64
      %v6795 = vpop.permute.xlu0 %6794
      %6796 = vrot.lane.b32.xlu0 %v6773, 64
      %v6797 = vpop.permute.xlu0 %6796
      %6798 = vrot.lane.b32.xlu0 %v6774, 64
      %v6799 = vpop.permute.xlu0 %6798
      %6800 = vrot.lane.b32.xlu0 %v6775, 64
      %v6801 = vpop.permute.xlu0 %6800
      %6802 = vrot.lane.b32.xlu0 %v6776, 64
      %v6803 = vpop.permute.xlu0 %6802
      %6804 = vrot.lane.b32.xlu0 %v6777, 64
      %v6805 = vpop.permute.xlu0 %6804
      %6806 = vrot.lane.b32.xlu0 %v6778, 64
      %v6807 = vpop.permute.xlu0 %6806
      %6808 = vrot.lane.b32.xlu0 %v6779, 64
      %v6809 = vpop.permute.xlu0 %6808
      %6810 = vrot.lane.b32.xlu0 %v6780, 64
      %v6811 = vpop.permute.xlu0 %6810
      %6812 = vrot.lane.b32.xlu0 %v6781, 64
      %v6813 = vpop.permute.xlu0 %6812
      %vm6830 = vcmask 556544
      %6831 = vst.msk [vmem:[#allocation2] sm:$0xff] %vm6830, %v6783
      %6832 = vst.msk [vmem:[#allocation2 + $0x8] sm:$0xff] %vm6830, %v6785
      %6833 = vst.msk [vmem:[#allocation2 + $0x10] sm:$0xff] %vm6830, %v6787
      %6834 = vst.msk [vmem:[#allocation2 + $0x18] sm:$0xff] %vm6830, %v6789
      %6835 = vst.msk [vmem:[#allocation2 + $0x20] sm:$0xff] %vm6830, %v6791
      %6836 = vst.msk [vmem:[#allocation2 + $0x28] sm:$0xff] %vm6830, %v6793
      %6837 = vst.msk [vmem:[#allocation2 + $0x30] sm:$0xff] %vm6830, %v6795
      %6838 = vst.msk [vmem:[#allocation2 + $0x38] sm:$0xff] %vm6830, %v6797
      %6839 = vst.msk [vmem:[#allocation2 + $0x40] sm:$0xff] %vm6830, %v6799
      %6840 = vst.msk [vmem:[#allocation2 + $0x48] sm:$0xff] %vm6830, %v6801
      %6841 = vst.msk [vmem:[#allocation2 + $0x50] sm:$0xff] %vm6830, %v6803
      %6842 = vst.msk [vmem:[#allocation2 + $0x58] sm:$0xff] %vm6830, %v6805
      %6843 = vst.msk [vmem:[#allocation2 + $0x60] sm:$0xff] %vm6830, %v6807
      %6844 = vst.msk [vmem:[#allocation2 + $0x68] sm:$0xff] %vm6830, %v6809
      %6845 = vst.msk [vmem:[#allocation2 + $0x70] sm:$0xff] %vm6830, %v6811
      %6846 = vst.msk [vmem:[#allocation2 + $0x78] sm:$0xff] %vm6830, %v6813
      %v6847 = vld [vmem:[%s6124] sm:$0xe]
      %v6848 = vld [vmem:[%s6124 + $0x4] sm:$0xf]
      %v6849 = vld [vmem:[%s6124 + $0x8] sm:$0x1]
      %v6850 = vld [vmem:[%s6124 + $0xc] sm:$0xe]
      %v6851 = vld [vmem:[%s6124 + $0x10] sm:$0xf]
      %v6852 = vld [vmem:[%s6124 + $0x14] sm:$0x1]
      %v6853 = vld [vmem:[%s6124 + $0x18] sm:$0xe]
      %v6854 = vld [vmem:[%s6124 + $0x1c] sm:$0xf]
      %v6855 = vld [vmem:[%s6124 + $0x20] sm:$0x1]
      %v6856 = vld [vmem:[%s6124 + $0x24] sm:$0xe]
      %v6857 = vld [vmem:[%s6124 + $0x28] sm:$0xf]
      %v6858 = vld [vmem:[%s6124 + $0x2c] sm:$0x1]
      %v6859 = vld [vmem:[%s6124 + $0x30] sm:$0xe]
      %v6860 = vld [vmem:[%s6124 + $0x34] sm:$0xf]
      %v6861 = vld [vmem:[%s6124 + $0x38] sm:$0x1]
      %v6862 = vld [vmem:[%s6124 + $0x3c] sm:$0xe]
      %v6863 = vld [vmem:[%s6124 + $0x40] sm:$0xf]
      %v6864 = vld [vmem:[%s6124 + $0x44] sm:$0x1]
      %v6865 = vld [vmem:[%s6124 + $0x48] sm:$0xe]
      %v6866 = vld [vmem:[%s6124 + $0x4c] sm:$0xf]
      %v6867 = vld [vmem:[%s6124 + $0x50] sm:$0x1]
      %v6868 = vld [vmem:[%s6124 + $0x54] sm:$0xe]
      %v6869 = vld [vmem:[%s6124 + $0x58] sm:$0xf]
      %v6870 = vld [vmem:[%s6124 + $0x5c] sm:$0x1]
      %v6871 = vld [vmem:[%s6124 + $0x60] sm:$0xe]
      %v6872 = vld [vmem:[%s6124 + $0x64] sm:$0xf]
      %v6873 = vld [vmem:[%s6124 + $0x68] sm:$0x1]
      %v6874 = vld [vmem:[%s6124 + $0x6c] sm:$0xe]
      %v6875 = vld [vmem:[%s6124 + $0x70] sm:$0xf]
      %v6876 = vld [vmem:[%s6124 + $0x74] sm:$0x1]
      %v6877 = vld [vmem:[%s6124 + $0x78] sm:$0xe]
      %v6878 = vld [vmem:[%s6124 + $0x7c] sm:$0xf]
      %v6879 = vld [vmem:[%s6124 + $0x80] sm:$0x1]
      %v6880 = vld [vmem:[%s6124 + $0x84] sm:$0xe]
      %v6881 = vld [vmem:[%s6124 + $0x88] sm:$0xf]
      %v6882 = vld [vmem:[%s6124 + $0x8c] sm:$0x1]
      %v6883 = vld [vmem:[%s6124 + $0x90] sm:$0xe]
      %v6884 = vld [vmem:[%s6124 + $0x94] sm:$0xf]
      %v6885 = vld [vmem:[%s6124 + $0x98] sm:$0x1]
      %v6886 = vld [vmem:[%s6124 + $0x9c] sm:$0xe]
      %v6887 = vld [vmem:[%s6124 + $0xa0] sm:$0xf]
      %v6888 = vld [vmem:[%s6124 + $0xa4] sm:$0x1]
      %v6889 = vld [vmem:[%s6124 + $0xa8] sm:$0xe]
      %v6890 = vld [vmem:[%s6124 + $0xac] sm:$0xf]
      %v6891 = vld [vmem:[%s6124 + $0xb0] sm:$0x1]
      %v6892 = vld [vmem:[%s6124 + $0xb4] sm:$0xe]
      %v6893 = vld [vmem:[%s6124 + $0xb8] sm:$0xf]
      %v6894 = vld [vmem:[%s6124 + $0xbc] sm:$0x1]
      %v6943 = vrot.slane %v6847, 5
      %v6944 = vrot.slane %v6943, 4
      %v6945 = vrot.slane %v6848, 5
      %v6946 = vsel %vm1014, %v6944, %v6945
      %v6947 = vrot.slane %v6945, 4
      %v6948 = vrot.slane %v6849, 5
      %v6949 = vsel %vm1014, %v6947, %v6948
      %v6950 = vrot.slane %v6850, 5
      %v6951 = vrot.slane %v6950, 4
      %v6952 = vrot.slane %v6851, 5
      %v6953 = vsel %vm1014, %v6951, %v6952
      %v6954 = vrot.slane %v6952, 4
      %v6955 = vrot.slane %v6852, 5
      %v6956 = vsel %vm1014, %v6954, %v6955
      %v6957 = vrot.slane %v6853, 5
      %v6958 = vrot.slane %v6957, 4
      %v6959 = vrot.slane %v6854, 5
      %v6960 = vsel %vm1014, %v6958, %v6959
      %v6961 = vrot.slane %v6959, 4
      %v6962 = vrot.slane %v6855, 5
      %v6963 = vsel %vm1014, %v6961, %v6962
      %v6964 = vrot.slane %v6856, 5
      %v6965 = vrot.slane %v6964, 4
      %v6966 = vrot.slane %v6857, 5
      %v6967 = vsel %vm1014, %v6965, %v6966
      %v6968 = vrot.slane %v6966, 4
      %v6969 = vrot.slane %v6858, 5
      %v6970 = vsel %vm1014, %v6968, %v6969
      %v6971 = vrot.slane %v6859, 5
      %v6972 = vrot.slane %v6971, 4
      %v6973 = vrot.slane %v6860, 5
      %v6974 = vsel %vm1014, %v6972, %v6973
      %v6975 = vrot.slane %v6973, 4
      %v6976 = vrot.slane %v6861, 5
      %v6977 = vsel %vm1014, %v6975, %v6976
      %v6978 = vrot.slane %v6862, 5
      %v6979 = vrot.slane %v6978, 4
      %v6980 = vrot.slane %v6863, 5
      %v6981 = vsel %vm1014, %v6979, %v6980
      %v6982 = vrot.slane %v6980, 4
      %v6983 = vrot.slane %v6864, 5
      %v6984 = vsel %vm1014, %v6982, %v6983
      %v6985 = vrot.slane %v6865, 5
      %v6986 = vrot.slane %v6985, 4
      %v6987 = vrot.slane %v6866, 5
      %v6988 = vsel %vm1014, %v6986, %v6987
      %v6989 = vrot.slane %v6987, 4
      %v6990 = vrot.slane %v6867, 5
      %v6991 = vsel %vm1014, %v6989, %v6990
      %v6992 = vrot.slane %v6868, 5
      %v6993 = vrot.slane %v6992, 4
      %v6994 = vrot.slane %v6869, 5
      %v6995 = vsel %vm1014, %v6993, %v6994
      %v6996 = vrot.slane %v6994, 4
      %v6997 = vrot.slane %v6870, 5
      %v6998 = vsel %vm1014, %v6996, %v6997
      %v6999 = vrot.slane %v6871, 5
      %v7000 = vrot.slane %v6999, 4
      %v7001 = vrot.slane %v6872, 5
      %v7002 = vsel %vm1014, %v7000, %v7001
      %v7003 = vrot.slane %v7001, 4
      %v7004 = vrot.slane %v6873, 5
      %v7005 = vsel %vm1014, %v7003, %v7004
      %v7006 = vrot.slane %v6874, 5
      %v7007 = vrot.slane %v7006, 4
      %v7008 = vrot.slane %v6875, 5
      %v7009 = vsel %vm1014, %v7007, %v7008
      %v7010 = vrot.slane %v7008, 4
      %v7011 = vrot.slane %v6876, 5
      %v7012 = vsel %vm1014, %v7010, %v7011
      %v7013 = vrot.slane %v6877, 5
      %v7014 = vrot.slane %v7013, 4
      %v7015 = vrot.slane %v6878, 5
      %v7016 = vsel %vm1014, %v7014, %v7015
      %v7017 = vrot.slane %v7015, 4
      %v7018 = vrot.slane %v6879, 5
      %v7019 = vsel %vm1014, %v7017, %v7018
      %v7020 = vrot.slane %v6880, 5
      %v7021 = vrot.slane %v7020, 4
      %v7022 = vrot.slane %v6881, 5
      %v7023 = vsel %vm1014, %v7021, %v7022
      %v7024 = vrot.slane %v7022, 4
      %v7025 = vrot.slane %v6882, 5
      %v7026 = vsel %vm1014, %v7024, %v7025
      %v7027 = vrot.slane %v6883, 5
      %v7028 = vrot.slane %v7027, 4
      %v7029 = vrot.slane %v6884, 5
      %v7030 = vsel %vm1014, %v7028, %v7029
      %v7031 = vrot.slane %v7029, 4
      %v7032 = vrot.slane %v6885, 5
      %v7033 = vsel %vm1014, %v7031, %v7032
      %v7034 = vrot.slane %v6886, 5
      %v7035 = vrot.slane %v7034, 4
      %v7036 = vrot.slane %v6887, 5
      %v7037 = vsel %vm1014, %v7035, %v7036
      %v7038 = vrot.slane %v7036, 4
      %v7039 = vrot.slane %v6888, 5
      %v7040 = vsel %vm1014, %v7038, %v7039
      %v7041 = vrot.slane %v6889, 5
      %v7042 = vrot.slane %v7041, 4
      %v7043 = vrot.slane %v6890, 5
      %v7044 = vsel %vm1014, %v7042, %v7043
      %v7045 = vrot.slane %v7043, 4
      %v7046 = vrot.slane %v6891, 5
      %v7047 = vsel %vm1014, %v7045, %v7046
      %v7048 = vrot.slane %v6892, 5
      %v7049 = vrot.slane %v7048, 4
      %v7050 = vrot.slane %v6893, 5
      %v7051 = vsel %vm1014, %v7049, %v7050
      %v7052 = vrot.slane %v7050, 4
      %v7053 = vrot.slane %v6894, 5
      %v7054 = vsel %vm1014, %v7052, %v7053
      %v7055 = vunpack.c.l.b16 %v6946
      %v7056 = vunpack.c.l.b16 %v6949
      %v7057 = vunpack.c.l.b16 %v6953
      %v7058 = vunpack.c.l.b16 %v6956
      %v7059 = vunpack.c.l.b16 %v6960
      %v7060 = vunpack.c.l.b16 %v6963
      %v7061 = vunpack.c.l.b16 %v6967
      %v7062 = vunpack.c.l.b16 %v6970
      %v7063 = vunpack.c.l.b16 %v6974
      %v7064 = vunpack.c.l.b16 %v6977
      %v7065 = vunpack.c.l.b16 %v6981
      %v7066 = vunpack.c.l.b16 %v6984
      %v7067 = vunpack.c.l.b16 %v6988
      %v7068 = vunpack.c.l.b16 %v6991
      %v7069 = vunpack.c.l.b16 %v6995
      %v7070 = vunpack.c.l.b16 %v6998
      %v7071 = vunpack.c.l.b16 %v7002
      %v7072 = vunpack.c.l.b16 %v7005
      %v7073 = vunpack.c.l.b16 %v7009
      %v7074 = vunpack.c.l.b16 %v7012
      %v7075 = vunpack.c.l.b16 %v7016
      %v7076 = vunpack.c.l.b16 %v7019
      %v7077 = vunpack.c.l.b16 %v7023
      %v7078 = vunpack.c.l.b16 %v7026
      %v7079 = vunpack.c.l.b16 %v7030
      %v7080 = vunpack.c.l.b16 %v7033
      %v7081 = vunpack.c.l.b16 %v7037
      %v7082 = vunpack.c.l.b16 %v7040
      %v7083 = vunpack.c.l.b16 %v7044
      %v7084 = vunpack.c.l.b16 %v7047
      %v7085 = vunpack.c.l.b16 %v7051
      %v7086 = vunpack.c.l.b16 %v7054
      %v7087 = vpack.c.b16 %v7056, %v7055
      %v7088 = vpack.c.b16 %v7058, %v7057
      %v7089 = vpack.c.b16 %v7060, %v7059
      %v7090 = vpack.c.b16 %v7062, %v7061
      %v7091 = vpack.c.b16 %v7064, %v7063
      %v7092 = vpack.c.b16 %v7066, %v7065
      %v7093 = vpack.c.b16 %v7068, %v7067
      %v7094 = vpack.c.b16 %v7070, %v7069
      %v7095 = vpack.c.b16 %v7072, %v7071
      %v7096 = vpack.c.b16 %v7074, %v7073
      %v7097 = vpack.c.b16 %v7076, %v7075
      %v7098 = vpack.c.b16 %v7078, %v7077
      %v7099 = vpack.c.b16 %v7080, %v7079
      %v7100 = vpack.c.b16 %v7082, %v7081
      %v7101 = vpack.c.b16 %v7084, %v7083
      %v7102 = vpack.c.b16 %v7086, %v7085
      %7103 = vrot.lane.b32.xlu0 %v7087, 68
      %v7104 = vpop.permute.xlu0 %7103
      %7105 = vrot.lane.b32.xlu0 %v7088, 68
      %v7106 = vpop.permute.xlu0 %7105
      %7107 = vrot.lane.b32.xlu0 %v7089, 68
      %v7108 = vpop.permute.xlu0 %7107
      %7109 = vrot.lane.b32.xlu0 %v7090, 68
      %v7110 = vpop.permute.xlu0 %7109
      %7111 = vrot.lane.b32.xlu0 %v7091, 68
      %v7112 = vpop.permute.xlu0 %7111
      %7113 = vrot.lane.b32.xlu0 %v7092, 68
      %v7114 = vpop.permute.xlu0 %7113
      %7115 = vrot.lane.b32.xlu0 %v7093, 68
      %v7116 = vpop.permute.xlu0 %7115
      %7117 = vrot.lane.b32.xlu0 %v7094, 68
      %v7118 = vpop.permute.xlu0 %7117
      %7119 = vrot.lane.b32.xlu0 %v7095, 68
      %v7120 = vpop.permute.xlu0 %7119
      %7121 = vrot.lane.b32.xlu0 %v7096, 68
      %v7122 = vpop.permute.xlu0 %7121
      %7123 = vrot.lane.b32.xlu0 %v7097, 68
      %v7124 = vpop.permute.xlu0 %7123
      %7125 = vrot.lane.b32.xlu0 %v7098, 68
      %v7126 = vpop.permute.xlu0 %7125
      %7127 = vrot.lane.b32.xlu0 %v7099, 68
      %v7128 = vpop.permute.xlu0 %7127
      %7129 = vrot.lane.b32.xlu0 %v7100, 68
      %v7130 = vpop.permute.xlu0 %7129
      %7131 = vrot.lane.b32.xlu0 %v7101, 68
      %v7132 = vpop.permute.xlu0 %7131
      %7133 = vrot.lane.b32.xlu0 %v7102, 68
      %v7134 = vpop.permute.xlu0 %7133
      %vm7151 = vcmask 589344
      %7152 = vst.msk [vmem:[#allocation2] sm:$0xff] %vm7151, %v7104
      %7153 = vst.msk [vmem:[#allocation2 + $0x8] sm:$0xff] %vm7151, %v7106
      %7154 = vst.msk [vmem:[#allocation2 + $0x10] sm:$0xff] %vm7151, %v7108
      %7155 = vst.msk [vmem:[#allocation2 + $0x18] sm:$0xff] %vm7151, %v7110
      %7156 = vst.msk [vmem:[#allocation2 + $0x20] sm:$0xff] %vm7151, %v7112
      %7157 = vst.msk [vmem:[#allocation2 + $0x28] sm:$0xff] %vm7151, %v7114
      %7158 = vst.msk [vmem:[#allocation2 + $0x30] sm:$0xff] %vm7151, %v7116
      %7159 = vst.msk [vmem:[#allocation2 + $0x38] sm:$0xff] %vm7151, %v7118
      %7160 = vst.msk [vmem:[#allocation2 + $0x40] sm:$0xff] %vm7151, %v7120
      %7161 = vst.msk [vmem:[#allocation2 + $0x48] sm:$0xff] %vm7151, %v7122
      %7162 = vst.msk [vmem:[#allocation2 + $0x50] sm:$0xff] %vm7151, %v7124
      %7163 = vst.msk [vmem:[#allocation2 + $0x58] sm:$0xff] %vm7151, %v7126
      %7164 = vst.msk [vmem:[#allocation2 + $0x60] sm:$0xff] %vm7151, %v7128
      %7165 = vst.msk [vmem:[#allocation2 + $0x68] sm:$0xff] %vm7151, %v7130
      %7166 = vst.msk [vmem:[#allocation2 + $0x70] sm:$0xff] %vm7151, %v7132
      %7167 = vst.msk [vmem:[#allocation2 + $0x78] sm:$0xff] %vm7151, %v7134
      %v7168 = vld [vmem:[%s6124] sm:$0xe]
      %v7169 = vld [vmem:[%s6124 + $0x4] sm:$0xf]
      %v7170 = vld [vmem:[%s6124 + $0x8] sm:$0x3]
      %v7171 = vld [vmem:[%s6124 + $0xc] sm:$0xe]
      %v7172 = vld [vmem:[%s6124 + $0x10] sm:$0xf]
      %v7173 = vld [vmem:[%s6124 + $0x14] sm:$0x3]
      %v7174 = vld [vmem:[%s6124 + $0x18] sm:$0xe]
      %v7175 = vld [vmem:[%s6124 + $0x1c] sm:$0xf]
      %v7176 = vld [vmem:[%s6124 + $0x20] sm:$0x3]
      %v7177 = vld [vmem:[%s6124 + $0x24] sm:$0xe]
      %v7178 = vld [vmem:[%s6124 + $0x28] sm:$0xf]
      %v7179 = vld [vmem:[%s6124 + $0x2c] sm:$0x3]
      %v7180 = vld [vmem:[%s6124 + $0x30] sm:$0xe]
      %v7181 = vld [vmem:[%s6124 + $0x34] sm:$0xf]
      %v7182 = vld [vmem:[%s6124 + $0x38] sm:$0x3]
      %v7183 = vld [vmem:[%s6124 + $0x3c] sm:$0xe]
      %v7184 = vld [vmem:[%s6124 + $0x40] sm:$0xf]
      %v7185 = vld [vmem:[%s6124 + $0x44] sm:$0x3]
      %v7186 = vld [vmem:[%s6124 + $0x48] sm:$0xe]
      %v7187 = vld [vmem:[%s6124 + $0x4c] sm:$0xf]
      %v7188 = vld [vmem:[%s6124 + $0x50] sm:$0x3]
      %v7189 = vld [vmem:[%s6124 + $0x54] sm:$0xe]
      %v7190 = vld [vmem:[%s6124 + $0x58] sm:$0xf]
      %v7191 = vld [vmem:[%s6124 + $0x5c] sm:$0x3]
      %v7192 = vld [vmem:[%s6124 + $0x60] sm:$0xe]
      %v7193 = vld [vmem:[%s6124 + $0x64] sm:$0xf]
      %v7194 = vld [vmem:[%s6124 + $0x68] sm:$0x3]
      %v7195 = vld [vmem:[%s6124 + $0x6c] sm:$0xe]
      %v7196 = vld [vmem:[%s6124 + $0x70] sm:$0xf]
      %v7197 = vld [vmem:[%s6124 + $0x74] sm:$0x3]
      %v7198 = vld [vmem:[%s6124 + $0x78] sm:$0xe]
      %v7199 = vld [vmem:[%s6124 + $0x7c] sm:$0xf]
      %v7200 = vld [vmem:[%s6124 + $0x80] sm:$0x3]
      %v7201 = vld [vmem:[%s6124 + $0x84] sm:$0xe]
      %v7202 = vld [vmem:[%s6124 + $0x88] sm:$0xf]
      %v7203 = vld [vmem:[%s6124 + $0x8c] sm:$0x3]
      %v7204 = vld [vmem:[%s6124 + $0x90] sm:$0xe]
      %v7205 = vld [vmem:[%s6124 + $0x94] sm:$0xf]
      %v7206 = vld [vmem:[%s6124 + $0x98] sm:$0x3]
      %v7207 = vld [vmem:[%s6124 + $0x9c] sm:$0xe]
      %v7208 = vld [vmem:[%s6124 + $0xa0] sm:$0xf]
      %v7209 = vld [vmem:[%s6124 + $0xa4] sm:$0x3]
      %v7210 = vld [vmem:[%s6124 + $0xa8] sm:$0xe]
      %v7211 = vld [vmem:[%s6124 + $0xac] sm:$0xf]
      %v7212 = vld [vmem:[%s6124 + $0xb0] sm:$0x3]
      %v7213 = vld [vmem:[%s6124 + $0xb4] sm:$0xe]
      %v7214 = vld [vmem:[%s6124 + $0xb8] sm:$0xf]
      %v7215 = vld [vmem:[%s6124 + $0xbc] sm:$0x3]
      %v7217 = vshrl.u32 %v7168, 16
      %v7219 = vrot.slane %v7217, 5
      %v7220 = vshll.u32 %v7168, 16
      %v7222 = vrot.slane %v7220, 6
      %v7223 = vor.u32 %v7219, %v7222
      %v7224 = vrot.slane %v7223, 4
      %v7226 = vshrl.u32 %v7169, 16
      %v7228 = vrot.slane %v7226, 5
      %v7229 = vshll.u32 %v7169, 16
      %v7231 = vrot.slane %v7229, 6
      %v7232 = vor.u32 %v7228, %v7231
      %v7233 = vsel %vm1290, %v7224, %v7232
      %v7234 = vrot.slane %v7232, 4
      %v7236 = vshrl.u32 %v7170, 16
      %v7238 = vrot.slane %v7236, 5
      %v7239 = vshll.u32 %v7170, 16
      %v7241 = vrot.slane %v7239, 6
      %v7242 = vor.u32 %v7238, %v7241
      %v7243 = vsel %vm1290, %v7234, %v7242
      %v7245 = vshrl.u32 %v7171, 16
      %v7247 = vrot.slane %v7245, 5
      %v7248 = vshll.u32 %v7171, 16
      %v7250 = vrot.slane %v7248, 6
      %v7251 = vor.u32 %v7247, %v7250
      %v7252 = vrot.slane %v7251, 4
      %v7254 = vshrl.u32 %v7172, 16
      %v7256 = vrot.slane %v7254, 5
      %v7257 = vshll.u32 %v7172, 16
      %v7259 = vrot.slane %v7257, 6
      %v7260 = vor.u32 %v7256, %v7259
      %v7261 = vsel %vm1290, %v7252, %v7260
      %v7262 = vrot.slane %v7260, 4
      %v7264 = vshrl.u32 %v7173, 16
      %v7266 = vrot.slane %v7264, 5
      %v7267 = vshll.u32 %v7173, 16
      %v7269 = vrot.slane %v7267, 6
      %v7270 = vor.u32 %v7266, %v7269
      %v7271 = vsel %vm1290, %v7262, %v7270
      %v7273 = vshrl.u32 %v7174, 16
      %v7275 = vrot.slane %v7273, 5
      %v7276 = vshll.u32 %v7174, 16
      %v7278 = vrot.slane %v7276, 6
      %v7279 = vor.u32 %v7275, %v7278
      %v7280 = vrot.slane %v7279, 4
      %v7282 = vshrl.u32 %v7175, 16
      %v7284 = vrot.slane %v7282, 5
      %v7285 = vshll.u32 %v7175, 16
      %v7287 = vrot.slane %v7285, 6
      %v7288 = vor.u32 %v7284, %v7287
      %v7289 = vsel %vm1290, %v7280, %v7288
      %v7290 = vrot.slane %v7288, 4
      %v7292 = vshrl.u32 %v7176, 16
      %v7294 = vrot.slane %v7292, 5
      %v7295 = vshll.u32 %v7176, 16
      %v7297 = vrot.slane %v7295, 6
      %v7298 = vor.u32 %v7294, %v7297
      %v7299 = vsel %vm1290, %v7290, %v7298
      %v7301 = vshrl.u32 %v7177, 16
      %v7303 = vrot.slane %v7301, 5
      %v7304 = vshll.u32 %v7177, 16
      %v7306 = vrot.slane %v7304, 6
      %v7307 = vor.u32 %v7303, %v7306
      %v7308 = vrot.slane %v7307, 4
      %v7310 = vshrl.u32 %v7178, 16
      %v7312 = vrot.slane %v7310, 5
      %v7313 = vshll.u32 %v7178, 16
      %v7315 = vrot.slane %v7313, 6
      %v7316 = vor.u32 %v7312, %v7315
      %v7317 = vsel %vm1290, %v7308, %v7316
      %v7318 = vrot.slane %v7316, 4
      %v7320 = vshrl.u32 %v7179, 16
      %v7322 = vrot.slane %v7320, 5
      %v7323 = vshll.u32 %v7179, 16
      %v7325 = vrot.slane %v7323, 6
      %v7326 = vor.u32 %v7322, %v7325
      %v7327 = vsel %vm1290, %v7318, %v7326
      %v7329 = vshrl.u32 %v7180, 16
      %v7331 = vrot.slane %v7329, 5
      %v7332 = vshll.u32 %v7180, 16
      %v7334 = vrot.slane %v7332, 6
      %v7335 = vor.u32 %v7331, %v7334
      %v7336 = vrot.slane %v7335, 4
      %v7338 = vshrl.u32 %v7181, 16
      %v7340 = vrot.slane %v7338, 5
      %v7341 = vshll.u32 %v7181, 16
      %v7343 = vrot.slane %v7341, 6
      %v7344 = vor.u32 %v7340, %v7343
      %v7345 = vsel %vm1290, %v7336, %v7344
      %v7346 = vrot.slane %v7344, 4
      %v7348 = vshrl.u32 %v7182, 16
      %v7350 = vrot.slane %v7348, 5
      %v7351 = vshll.u32 %v7182, 16
      %v7353 = vrot.slane %v7351, 6
      %v7354 = vor.u32 %v7350, %v7353
      %v7355 = vsel %vm1290, %v7346, %v7354
      %v7357 = vshrl.u32 %v7183, 16
      %v7359 = vrot.slane %v7357, 5
      %v7360 = vshll.u32 %v7183, 16
      %v7362 = vrot.slane %v7360, 6
      %v7363 = vor.u32 %v7359, %v7362
      %v7364 = vrot.slane %v7363, 4
      %v7366 = vshrl.u32 %v7184, 16
      %v7368 = vrot.slane %v7366, 5
      %v7369 = vshll.u32 %v7184, 16
      %v7371 = vrot.slane %v7369, 6
      %v7372 = vor.u32 %v7368, %v7371
      %v7373 = vsel %vm1290, %v7364, %v7372
      %v7374 = vrot.slane %v7372, 4
      %v7376 = vshrl.u32 %v7185, 16
      %v7378 = vrot.slane %v7376, 5
      %v7379 = vshll.u32 %v7185, 16
      %v7381 = vrot.slane %v7379, 6
      %v7382 = vor.u32 %v7378, %v7381
      %v7383 = vsel %vm1290, %v7374, %v7382
      %v7385 = vshrl.u32 %v7186, 16
      %v7387 = vrot.slane %v7385, 5
      %v7388 = vshll.u32 %v7186, 16
      %v7390 = vrot.slane %v7388, 6
      %v7391 = vor.u32 %v7387, %v7390
      %v7392 = vrot.slane %v7391, 4
      %v7394 = vshrl.u32 %v7187, 16
      %v7396 = vrot.slane %v7394, 5
      %v7397 = vshll.u32 %v7187, 16
      %v7399 = vrot.slane %v7397, 6
      %v7400 = vor.u32 %v7396, %v7399
      %v7401 = vsel %vm1290, %v7392, %v7400
      %v7402 = vrot.slane %v7400, 4
      %v7404 = vshrl.u32 %v7188, 16
      %v7406 = vrot.slane %v7404, 5
      %v7407 = vshll.u32 %v7188, 16
      %v7409 = vrot.slane %v7407, 6
      %v7410 = vor.u32 %v7406, %v7409
      %v7411 = vsel %vm1290, %v7402, %v7410
      %v7413 = vshrl.u32 %v7189, 16
      %v7415 = vrot.slane %v7413, 5
      %v7416 = vshll.u32 %v7189, 16
      %v7418 = vrot.slane %v7416, 6
      %v7419 = vor.u32 %v7415, %v7418
      %v7420 = vrot.slane %v7419, 4
      %v7422 = vshrl.u32 %v7190, 16
      %v7424 = vrot.slane %v7422, 5
      %v7425 = vshll.u32 %v7190, 16
      %v7427 = vrot.slane %v7425, 6
      %v7428 = vor.u32 %v7424, %v7427
      %v7429 = vsel %vm1290, %v7420, %v7428
      %v7430 = vrot.slane %v7428, 4
      %v7432 = vshrl.u32 %v7191, 16
      %v7434 = vrot.slane %v7432, 5
      %v7435 = vshll.u32 %v7191, 16
      %v7437 = vrot.slane %v7435, 6
      %v7438 = vor.u32 %v7434, %v7437
      %v7439 = vsel %vm1290, %v7430, %v7438
      %v7441 = vshrl.u32 %v7192, 16
      %v7443 = vrot.slane %v7441, 5
      %v7444 = vshll.u32 %v7192, 16
      %v7446 = vrot.slane %v7444, 6
      %v7447 = vor.u32 %v7443, %v7446
      %v7448 = vrot.slane %v7447, 4
      %v7450 = vshrl.u32 %v7193, 16
      %v7452 = vrot.slane %v7450, 5
      %v7453 = vshll.u32 %v7193, 16
      %v7455 = vrot.slane %v7453, 6
      %v7456 = vor.u32 %v7452, %v7455
      %v7457 = vsel %vm1290, %v7448, %v7456
      %v7458 = vrot.slane %v7456, 4
      %v7460 = vshrl.u32 %v7194, 16
      %v7462 = vrot.slane %v7460, 5
      %v7463 = vshll.u32 %v7194, 16
      %v7465 = vrot.slane %v7463, 6
      %v7466 = vor.u32 %v7462, %v7465
      %v7467 = vsel %vm1290, %v7458, %v7466
      %v7469 = vshrl.u32 %v7195, 16
      %v7471 = vrot.slane %v7469, 5
      %v7472 = vshll.u32 %v7195, 16
      %v7474 = vrot.slane %v7472, 6
      %v7475 = vor.u32 %v7471, %v7474
      %v7476 = vrot.slane %v7475, 4
      %v7478 = vshrl.u32 %v7196, 16
      %v7480 = vrot.slane %v7478, 5
      %v7481 = vshll.u32 %v7196, 16
      %v7483 = vrot.slane %v7481, 6
      %v7484 = vor.u32 %v7480, %v7483
      %v7485 = vsel %vm1290, %v7476, %v7484
      %v7486 = vrot.slane %v7484, 4
      %v7488 = vshrl.u32 %v7197, 16
      %v7490 = vrot.slane %v7488, 5
      %v7491 = vshll.u32 %v7197, 16
      %v7493 = vrot.slane %v7491, 6
      %v7494 = vor.u32 %v7490, %v7493
      %v7495 = vsel %vm1290, %v7486, %v7494
      %v7497 = vshrl.u32 %v7198, 16
      %v7499 = vrot.slane %v7497, 5
      %v7500 = vshll.u32 %v7198, 16
      %v7502 = vrot.slane %v7500, 6
      %v7503 = vor.u32 %v7499, %v7502
      %v7504 = vrot.slane %v7503, 4
      %v7506 = vshrl.u32 %v7199, 16
      %v7508 = vrot.slane %v7506, 5
      %v7509 = vshll.u32 %v7199, 16
      %v7511 = vrot.slane %v7509, 6
      %v7512 = vor.u32 %v7508, %v7511
      %v7513 = vsel %vm1290, %v7504, %v7512
      %v7514 = vrot.slane %v7512, 4
      %v7516 = vshrl.u32 %v7200, 16
      %v7518 = vrot.slane %v7516, 5
      %v7519 = vshll.u32 %v7200, 16
      %v7521 = vrot.slane %v7519, 6
      %v7522 = vor.u32 %v7518, %v7521
      %v7523 = vsel %vm1290, %v7514, %v7522
      %v7525 = vshrl.u32 %v7201, 16
      %v7527 = vrot.slane %v7525, 5
      %v7528 = vshll.u32 %v7201, 16
      %v7530 = vrot.slane %v7528, 6
      %v7531 = vor.u32 %v7527, %v7530
      %v7532 = vrot.slane %v7531, 4
      %v7534 = vshrl.u32 %v7202, 16
      %v7536 = vrot.slane %v7534, 5
      %v7537 = vshll.u32 %v7202, 16
      %v7539 = vrot.slane %v7537, 6
      %v7540 = vor.u32 %v7536, %v7539
      %v7541 = vsel %vm1290, %v7532, %v7540
      %v7542 = vrot.slane %v7540, 4
      %v7544 = vshrl.u32 %v7203, 16
      %v7546 = vrot.slane %v7544, 5
      %v7547 = vshll.u32 %v7203, 16
      %v7549 = vrot.slane %v7547, 6
      %v7550 = vor.u32 %v7546, %v7549
      %v7551 = vsel %vm1290, %v7542, %v7550
      %v7553 = vshrl.u32 %v7204, 16
      %v7555 = vrot.slane %v7553, 5
      %v7556 = vshll.u32 %v7204, 16
      %v7558 = vrot.slane %v7556, 6
      %v7559 = vor.u32 %v7555, %v7558
      %v7560 = vrot.slane %v7559, 4
      %v7562 = vshrl.u32 %v7205, 16
      %v7564 = vrot.slane %v7562, 5
      %v7565 = vshll.u32 %v7205, 16
      %v7567 = vrot.slane %v7565, 6
      %v7568 = vor.u32 %v7564, %v7567
      %v7569 = vsel %vm1290, %v7560, %v7568
      %v7570 = vrot.slane %v7568, 4
      %v7572 = vshrl.u32 %v7206, 16
      %v7574 = vrot.slane %v7572, 5
      %v7575 = vshll.u32 %v7206, 16
      %v7577 = vrot.slane %v7575, 6
      %v7578 = vor.u32 %v7574, %v7577
      %v7579 = vsel %vm1290, %v7570, %v7578
      %v7581 = vshrl.u32 %v7207, 16
      %v7583 = vrot.slane %v7581, 5
      %v7584 = vshll.u32 %v7207, 16
      %v7586 = vrot.slane %v7584, 6
      %v7587 = vor.u32 %v7583, %v7586
      %v7588 = vrot.slane %v7587, 4
      %v7590 = vshrl.u32 %v7208, 16
      %v7592 = vrot.slane %v7590, 5
      %v7593 = vshll.u32 %v7208, 16
      %v7595 = vrot.slane %v7593, 6
      %v7596 = vor.u32 %v7592, %v7595
      %v7597 = vsel %vm1290, %v7588, %v7596
      %v7598 = vrot.slane %v7596, 4
      %v7600 = vshrl.u32 %v7209, 16
      %v7602 = vrot.slane %v7600, 5
      %v7603 = vshll.u32 %v7209, 16
      %v7605 = vrot.slane %v7603, 6
      %v7606 = vor.u32 %v7602, %v7605
      %v7607 = vsel %vm1290, %v7598, %v7606
      %v7609 = vshrl.u32 %v7210, 16
      %v7611 = vrot.slane %v7609, 5
      %v7612 = vshll.u32 %v7210, 16
      %v7614 = vrot.slane %v7612, 6
      %v7615 = vor.u32 %v7611, %v7614
      %v7616 = vrot.slane %v7615, 4
      %v7618 = vshrl.u32 %v7211, 16
      %v7620 = vrot.slane %v7618, 5
      %v7621 = vshll.u32 %v7211, 16
      %v7623 = vrot.slane %v7621, 6
      %v7624 = vor.u32 %v7620, %v7623
      %v7625 = vsel %vm1290, %v7616, %v7624
      %v7626 = vrot.slane %v7624, 4
      %v7628 = vshrl.u32 %v7212, 16
      %v7630 = vrot.slane %v7628, 5
      %v7631 = vshll.u32 %v7212, 16
      %v7633 = vrot.slane %v7631, 6
      %v7634 = vor.u32 %v7630, %v7633
      %v7635 = vsel %vm1290, %v7626, %v7634
      %v7637 = vshrl.u32 %v7213, 16
      %v7639 = vrot.slane %v7637, 5
      %v7640 = vshll.u32 %v7213, 16
      %v7642 = vrot.slane %v7640, 6
      %v7643 = vor.u32 %v7639, %v7642
      %v7644 = vrot.slane %v7643, 4
      %v7646 = vshrl.u32 %v7214, 16
      %v7648 = vrot.slane %v7646, 5
      %v7649 = vshll.u32 %v7214, 16
      %v7651 = vrot.slane %v7649, 6
      %v7652 = vor.u32 %v7648, %v7651
      %v7653 = vsel %vm1290, %v7644, %v7652
      %v7654 = vrot.slane %v7652, 4
      %v7656 = vshrl.u32 %v7215, 16
      %v7658 = vrot.slane %v7656, 5
      %v7659 = vshll.u32 %v7215, 16
      %v7661 = vrot.slane %v7659, 6
      %v7662 = vor.u32 %v7658, %v7661
      %v7663 = vsel %vm1290, %v7654, %v7662
      %v7664 = vunpack.c.l.b16 %v7233
      %v7665 = vunpack.c.l.b16 %v7243
      %v7666 = vunpack.c.l.b16 %v7261
      %v7667 = vunpack.c.l.b16 %v7271
      %v7668 = vunpack.c.l.b16 %v7289
      %v7669 = vunpack.c.l.b16 %v7299
      %v7670 = vunpack.c.l.b16 %v7317
      %v7671 = vunpack.c.l.b16 %v7327
      %v7672 = vunpack.c.l.b16 %v7345
      %v7673 = vunpack.c.l.b16 %v7355
      %v7674 = vunpack.c.l.b16 %v7373
      %v7675 = vunpack.c.l.b16 %v7383
      %v7676 = vunpack.c.l.b16 %v7401
      %v7677 = vunpack.c.l.b16 %v7411
      %v7678 = vunpack.c.l.b16 %v7429
      %v7679 = vunpack.c.l.b16 %v7439
      %v7680 = vunpack.c.l.b16 %v7457
      %v7681 = vunpack.c.l.b16 %v7467
      %v7682 = vunpack.c.l.b16 %v7485
      %v7683 = vunpack.c.l.b16 %v7495
      %v7684 = vunpack.c.l.b16 %v7513
      %v7685 = vunpack.c.l.b16 %v7523
      %v7686 = vunpack.c.l.b16 %v7541
      %v7687 = vunpack.c.l.b16 %v7551
      %v7688 = vunpack.c.l.b16 %v7569
      %v7689 = vunpack.c.l.b16 %v7579
      %v7690 = vunpack.c.l.b16 %v7597
      %v7691 = vunpack.c.l.b16 %v7607
      %v7692 = vunpack.c.l.b16 %v7625
      %v7693 = vunpack.c.l.b16 %v7635
      %v7694 = vunpack.c.l.b16 %v7653
      %v7695 = vunpack.c.l.b16 %v7663
      %v7696 = vpack.c.b16 %v7665, %v7664
      %v7697 = vpack.c.b16 %v7667, %v7666
      %v7698 = vpack.c.b16 %v7669, %v7668
      %v7699 = vpack.c.b16 %v7671, %v7670
      %v7700 = vpack.c.b16 %v7673, %v7672
      %v7701 = vpack.c.b16 %v7675, %v7674
      %v7702 = vpack.c.b16 %v7677, %v7676
      %v7703 = vpack.c.b16 %v7679, %v7678
      %v7704 = vpack.c.b16 %v7681, %v7680
      %v7705 = vpack.c.b16 %v7683, %v7682
      %v7706 = vpack.c.b16 %v7685, %v7684
      %v7707 = vpack.c.b16 %v7687, %v7686
      %v7708 = vpack.c.b16 %v7689, %v7688
      %v7709 = vpack.c.b16 %v7691, %v7690
      %v7710 = vpack.c.b16 %v7693, %v7692
      %v7711 = vpack.c.b16 %v7695, %v7694
      %7712 = vrot.lane.b32.xlu0 %v7696, 72
      %v7713 = vpop.permute.xlu0 %7712
      %7714 = vrot.lane.b32.xlu0 %v7697, 72
      %v7715 = vpop.permute.xlu0 %7714
      %7716 = vrot.lane.b32.xlu0 %v7698, 72
      %v7717 = vpop.permute.xlu0 %7716
      %7718 = vrot.lane.b32.xlu0 %v7699, 72
      %v7719 = vpop.permute.xlu0 %7718
      %7720 = vrot.lane.b32.xlu0 %v7700, 72
      %v7721 = vpop.permute.xlu0 %7720
      %7722 = vrot.lane.b32.xlu0 %v7701, 72
      %v7723 = vpop.permute.xlu0 %7722
      %7724 = vrot.lane.b32.xlu0 %v7702, 72
      %v7725 = vpop.permute.xlu0 %7724
      %7726 = vrot.lane.b32.xlu0 %v7703, 72
      %v7727 = vpop.permute.xlu0 %7726
      %7728 = vrot.lane.b32.xlu0 %v7704, 72
      %v7729 = vpop.permute.xlu0 %7728
      %7730 = vrot.lane.b32.xlu0 %v7705, 72
      %v7731 = vpop.permute.xlu0 %7730
      %7732 = vrot.lane.b32.xlu0 %v7706, 72
      %v7733 = vpop.permute.xlu0 %7732
      %7734 = vrot.lane.b32.xlu0 %v7707, 72
      %v7735 = vpop.permute.xlu0 %7734
      %7736 = vrot.lane.b32.xlu0 %v7708, 72
      %v7737 = vpop.permute.xlu0 %7736
      %7738 = vrot.lane.b32.xlu0 %v7709, 72
      %v7739 = vpop.permute.xlu0 %7738
      %7740 = vrot.lane.b32.xlu0 %v7710, 72
      %v7741 = vpop.permute.xlu0 %7740
      %7742 = vrot.lane.b32.xlu0 %v7711, 72
      %v7743 = vpop.permute.xlu0 %7742
      %vm7760 = vcmask 622144
      %7761 = vst.msk [vmem:[#allocation2] sm:$0xff] %vm7760, %v7713
      %7762 = vst.msk [vmem:[#allocation2 + $0x8] sm:$0xff] %vm7760, %v7715
      %7763 = vst.msk [vmem:[#allocation2 + $0x10] sm:$0xff] %vm7760, %v7717
      %7764 = vst.msk [vmem:[#allocation2 + $0x18] sm:$0xff] %vm7760, %v7719
      %7765 = vst.msk [vmem:[#allocation2 + $0x20] sm:$0xff] %vm7760, %v7721
      %7766 = vst.msk [vmem:[#allocation2 + $0x28] sm:$0xff] %vm7760, %v7723
      %7767 = vst.msk [vmem:[#allocation2 + $0x30] sm:$0xff] %vm7760, %v7725
      %7768 = vst.msk [vmem:[#allocation2 + $0x38] sm:$0xff] %vm7760, %v7727
      %7769 = vst.msk [vmem:[#allocation2 + $0x40] sm:$0xff] %vm7760, %v7729
      %7770 = vst.msk [vmem:[#allocation2 + $0x48] sm:$0xff] %vm7760, %v7731
      %7771 = vst.msk [vmem:[#allocation2 + $0x50] sm:$0xff] %vm7760, %v7733
      %7772 = vst.msk [vmem:[#allocation2 + $0x58] sm:$0xff] %vm7760, %v7735
      %7773 = vst.msk [vmem:[#allocation2 + $0x60] sm:$0xff] %vm7760, %v7737
      %7774 = vst.msk [vmem:[#allocation2 + $0x68] sm:$0xff] %vm7760, %v7739
      %7775 = vst.msk [vmem:[#allocation2 + $0x70] sm:$0xff] %vm7760, %v7741
      %7776 = vst.msk [vmem:[#allocation2 + $0x78] sm:$0xff] %vm7760, %v7743
      %v7777 = vld [vmem:[%s6124] sm:$0xc]
      %v7778 = vld [vmem:[%s6124 + $0x4] sm:$0xf]
      %v7779 = vld [vmem:[%s6124 + $0x8] sm:$0x3]
      %v7780 = vld [vmem:[%s6124 + $0xc] sm:$0xc]
      %v7781 = vld [vmem:[%s6124 + $0x10] sm:$0xf]
      %v7782 = vld [vmem:[%s6124 + $0x14] sm:$0x3]
      %v7783 = vld [vmem:[%s6124 + $0x18] sm:$0xc]
      %v7784 = vld [vmem:[%s6124 + $0x1c] sm:$0xf]
      %v7785 = vld [vmem:[%s6124 + $0x20] sm:$0x3]
      %v7786 = vld [vmem:[%s6124 + $0x24] sm:$0xc]
      %v7787 = vld [vmem:[%s6124 + $0x28] sm:$0xf]
      %v7788 = vld [vmem:[%s6124 + $0x2c] sm:$0x3]
      %v7789 = vld [vmem:[%s6124 + $0x30] sm:$0xc]
      %v7790 = vld [vmem:[%s6124 + $0x34] sm:$0xf]
      %v7791 = vld [vmem:[%s6124 + $0x38] sm:$0x3]
      %v7792 = vld [vmem:[%s6124 + $0x3c] sm:$0xc]
      %v7793 = vld [vmem:[%s6124 + $0x40] sm:$0xf]
      %v7794 = vld [vmem:[%s6124 + $0x44] sm:$0x3]
      %v7795 = vld [vmem:[%s6124 + $0x48] sm:$0xc]
      %v7796 = vld [vmem:[%s6124 + $0x4c] sm:$0xf]
      %v7797 = vld [vmem:[%s6124 + $0x50] sm:$0x3]
      %v7798 = vld [vmem:[%s6124 + $0x54] sm:$0xc]
      %v7799 = vld [vmem:[%s6124 + $0x58] sm:$0xf]
      %v7800 = vld [vmem:[%s6124 + $0x5c] sm:$0x3]
      %v7801 = vld [vmem:[%s6124 + $0x60] sm:$0xc]
      %v7802 = vld [vmem:[%s6124 + $0x64] sm:$0xf]
      %v7803 = vld [vmem:[%s6124 + $0x68] sm:$0x3]
      %v7804 = vld [vmem:[%s6124 + $0x6c] sm:$0xc]
      %v7805 = vld [vmem:[%s6124 + $0x70] sm:$0xf]
      %v7806 = vld [vmem:[%s6124 + $0x74] sm:$0x3]
      %v7807 = vld [vmem:[%s6124 + $0x78] sm:$0xc]
      %v7808 = vld [vmem:[%s6124 + $0x7c] sm:$0xf]
      %v7809 = vld [vmem:[%s6124 + $0x80] sm:$0x3]
      %v7810 = vld [vmem:[%s6124 + $0x84] sm:$0xc]
      %v7811 = vld [vmem:[%s6124 + $0x88] sm:$0xf]
      %v7812 = vld [vmem:[%s6124 + $0x8c] sm:$0x3]
      %v7813 = vld [vmem:[%s6124 + $0x90] sm:$0xc]
      %v7814 = vld [vmem:[%s6124 + $0x94] sm:$0xf]
      %v7815 = vld [vmem:[%s6124 + $0x98] sm:$0x3]
      %v7816 = vld [vmem:[%s6124 + $0x9c] sm:$0xc]
      %v7817 = vld [vmem:[%s6124 + $0xa0] sm:$0xf]
      %v7818 = vld [vmem:[%s6124 + $0xa4] sm:$0x3]
      %v7819 = vld [vmem:[%s6124 + $0xa8] sm:$0xc]
      %v7820 = vld [vmem:[%s6124 + $0xac] sm:$0xf]
      %v7821 = vld [vmem:[%s6124 + $0xb0] sm:$0x3]
      %v7822 = vld [vmem:[%s6124 + $0xb4] sm:$0xc]
      %v7823 = vld [vmem:[%s6124 + $0xb8] sm:$0xf]
      %v7824 = vld [vmem:[%s6124 + $0xbc] sm:$0x3]
      %v7873 = vrot.slane %v7777, 6
      %v7874 = vrot.slane %v7873, 4
      %v7875 = vrot.slane %v7778, 6
      %v7876 = vsel %vm1950, %v7874, %v7875
      %v7877 = vrot.slane %v7875, 4
      %v7878 = vrot.slane %v7779, 6
      %v7879 = vsel %vm1950, %v7877, %v7878
      %v7880 = vrot.slane %v7780, 6
      %v7881 = vrot.slane %v7880, 4
      %v7882 = vrot.slane %v7781, 6
      %v7883 = vsel %vm1950, %v7881, %v7882
      %v7884 = vrot.slane %v7882, 4
      %v7885 = vrot.slane %v7782, 6
      %v7886 = vsel %vm1950, %v7884, %v7885
      %v7887 = vrot.slane %v7783, 6
      %v7888 = vrot.slane %v7887, 4
      %v7889 = vrot.slane %v7784, 6
      %v7890 = vsel %vm1950, %v7888, %v7889
      %v7891 = vrot.slane %v7889, 4
      %v7892 = vrot.slane %v7785, 6
      %v7893 = vsel %vm1950, %v7891, %v7892
      %v7894 = vrot.slane %v7786, 6
      %v7895 = vrot.slane %v7894, 4
      %v7896 = vrot.slane %v7787, 6
      %v7897 = vsel %vm1950, %v7895, %v7896
      %v7898 = vrot.slane %v7896, 4
      %v7899 = vrot.slane %v7788, 6
      %v7900 = vsel %vm1950, %v7898, %v7899
      %v7901 = vrot.slane %v7789, 6
      %v7902 = vrot.slane %v7901, 4
      %v7903 = vrot.slane %v7790, 6
      %v7904 = vsel %vm1950, %v7902, %v7903
      %v7905 = vrot.slane %v7903, 4
      %v7906 = vrot.slane %v7791, 6
      %v7907 = vsel %vm1950, %v7905, %v7906
      %v7908 = vrot.slane %v7792, 6
      %v7909 = vrot.slane %v7908, 4
      %v7910 = vrot.slane %v7793, 6
      %v7911 = vsel %vm1950, %v7909, %v7910
      %v7912 = vrot.slane %v7910, 4
      %v7913 = vrot.slane %v7794, 6
      %v7914 = vsel %vm1950, %v7912, %v7913
      %v7915 = vrot.slane %v7795, 6
      %v7916 = vrot.slane %v7915, 4
      %v7917 = vrot.slane %v7796, 6
      %v7918 = vsel %vm1950, %v7916, %v7917
      %v7919 = vrot.slane %v7917, 4
      %v7920 = vrot.slane %v7797, 6
      %v7921 = vsel %vm1950, %v7919, %v7920
      %v7922 = vrot.slane %v7798, 6
      %v7923 = vrot.slane %v7922, 4
      %v7924 = vrot.slane %v7799, 6
      %v7925 = vsel %vm1950, %v7923, %v7924
      %v7926 = vrot.slane %v7924, 4
      %v7927 = vrot.slane %v7800, 6
      %v7928 = vsel %vm1950, %v7926, %v7927
      %v7929 = vrot.slane %v7801, 6
      %v7930 = vrot.slane %v7929, 4
      %v7931 = vrot.slane %v7802, 6
      %v7932 = vsel %vm1950, %v7930, %v7931
      %v7933 = vrot.slane %v7931, 4
      %v7934 = vrot.slane %v7803, 6
      %v7935 = vsel %vm1950, %v7933, %v7934
      %v7936 = vrot.slane %v7804, 6
      %v7937 = vrot.slane %v7936, 4
      %v7938 = vrot.slane %v7805, 6
      %v7939 = vsel %vm1950, %v7937, %v7938
      %v7940 = vrot.slane %v7938, 4
      %v7941 = vrot.slane %v7806, 6
      %v7942 = vsel %vm1950, %v7940, %v7941
      %v7943 = vrot.slane %v7807, 6
      %v7944 = vrot.slane %v7943, 4
      %v7945 = vrot.slane %v7808, 6
      %v7946 = vsel %vm1950, %v7944, %v7945
      %v7947 = vrot.slane %v7945, 4
      %v7948 = vrot.slane %v7809, 6
      %v7949 = vsel %vm1950, %v7947, %v7948
      %v7950 = vrot.slane %v7810, 6
      %v7951 = vrot.slane %v7950, 4
      %v7952 = vrot.slane %v7811, 6
      %v7953 = vsel %vm1950, %v7951, %v7952
      %v7954 = vrot.slane %v7952, 4
      %v7955 = vrot.slane %v7812, 6
      %v7956 = vsel %vm1950, %v7954, %v7955
      %v7957 = vrot.slane %v7813, 6
      %v7958 = vrot.slane %v7957, 4
      %v7959 = vrot.slane %v7814, 6
      %v7960 = vsel %vm1950, %v7958, %v7959
      %v7961 = vrot.slane %v7959, 4
      %v7962 = vrot.slane %v7815, 6
      %v7963 = vsel %vm1950, %v7961, %v7962
      %v7964 = vrot.slane %v7816, 6
      %v7965 = vrot.slane %v7964, 4
      %v7966 = vrot.slane %v7817, 6
      %v7967 = vsel %vm1950, %v7965, %v7966
      %v7968 = vrot.slane %v7966, 4
      %v7969 = vrot.slane %v7818, 6
      %v7970 = vsel %vm1950, %v7968, %v7969
      %v7971 = vrot.slane %v7819, 6
      %v7972 = vrot.slane %v7971, 4
      %v7973 = vrot.slane %v7820, 6
      %v7974 = vsel %vm1950, %v7972, %v7973
      %v7975 = vrot.slane %v7973, 4
      %v7976 = vrot.slane %v7821, 6
      %v7977 = vsel %vm1950, %v7975, %v7976
      %v7978 = vrot.slane %v7822, 6
      %v7979 = vrot.slane %v7978, 4
      %v7980 = vrot.slane %v7823, 6
      %v7981 = vsel %vm1950, %v7979, %v7980
      %v7982 = vrot.slane %v7980, 4
      %v7983 = vrot.slane %v7824, 6
      %v7984 = vsel %vm1950, %v7982, %v7983
      %v7985 = vunpack.c.l.b16 %v7876
      %v7986 = vunpack.c.l.b16 %v7879
      %v7987 = vunpack.c.l.b16 %v7883
      %v7988 = vunpack.c.l.b16 %v7886
      %v7989 = vunpack.c.l.b16 %v7890
      %v7990 = vunpack.c.l.b16 %v7893
      %v7991 = vunpack.c.l.b16 %v7897
      %v7992 = vunpack.c.l.b16 %v7900
      %v7993 = vunpack.c.l.b16 %v7904
      %v7994 = vunpack.c.l.b16 %v7907
      %v7995 = vunpack.c.l.b16 %v7911
      %v7996 = vunpack.c.l.b16 %v7914
      %v7997 = vunpack.c.l.b16 %v7918
      %v7998 = vunpack.c.l.b16 %v7921
      %v7999 = vunpack.c.l.b16 %v7925
      %v8000 = vunpack.c.l.b16 %v7928
      %v8001 = vunpack.c.l.b16 %v7932
      %v8002 = vunpack.c.l.b16 %v7935
      %v8003 = vunpack.c.l.b16 %v7939
      %v8004 = vunpack.c.l.b16 %v7942
      %v8005 = vunpack.c.l.b16 %v7946
      %v8006 = vunpack.c.l.b16 %v7949
      %v8007 = vunpack.c.l.b16 %v7953
      %v8008 = vunpack.c.l.b16 %v7956
      %v8009 = vunpack.c.l.b16 %v7960
      %v8010 = vunpack.c.l.b16 %v7963
      %v8011 = vunpack.c.l.b16 %v7967
      %v8012 = vunpack.c.l.b16 %v7970
      %v8013 = vunpack.c.l.b16 %v7974
      %v8014 = vunpack.c.l.b16 %v7977
      %v8015 = vunpack.c.l.b16 %v7981
      %v8016 = vunpack.c.l.b16 %v7984
      %v8017 = vpack.c.b16 %v7986, %v7985
      %v8018 = vpack.c.b16 %v7988, %v7987
      %v8019 = vpack.c.b16 %v7990, %v7989
      %v8020 = vpack.c.b16 %v7992, %v7991
      %v8021 = vpack.c.b16 %v7994, %v7993
      %v8022 = vpack.c.b16 %v7996, %v7995
      %v8023 = vpack.c.b16 %v7998, %v7997
      %v8024 = vpack.c.b16 %v8000, %v7999
      %v8025 = vpack.c.b16 %v8002, %v8001
      %v8026 = vpack.c.b16 %v8004, %v8003
      %v8027 = vpack.c.b16 %v8006, %v8005
      %v8028 = vpack.c.b16 %v8008, %v8007
      %v8029 = vpack.c.b16 %v8010, %v8009
      %v8030 = vpack.c.b16 %v8012, %v8011
      %v8031 = vpack.c.b16 %v8014, %v8013
      %v8032 = vpack.c.b16 %v8016, %v8015
      %8033 = vrot.lane.b32.xlu0 %v8017, 76
      %v8034 = vpop.permute.xlu0 %8033
      %8035 = vrot.lane.b32.xlu0 %v8018, 76
      %v8036 = vpop.permute.xlu0 %8035
      %8037 = vrot.lane.b32.xlu0 %v8019, 76
      %v8038 = vpop.permute.xlu0 %8037
      %8039 = vrot.lane.b32.xlu0 %v8020, 76
      %v8040 = vpop.permute.xlu0 %8039
      %8041 = vrot.lane.b32.xlu0 %v8021, 76
      %v8042 = vpop.permute.xlu0 %8041
      %8043 = vrot.lane.b32.xlu0 %v8022, 76
      %v8044 = vpop.permute.xlu0 %8043
      %8045 = vrot.lane.b32.xlu0 %v8023, 76
      %v8046 = vpop.permute.xlu0 %8045
      %8047 = vrot.lane.b32.xlu0 %v8024, 76
      %v8048 = vpop.permute.xlu0 %8047
      %8049 = vrot.lane.b32.xlu0 %v8025, 76
      %v8050 = vpop.permute.xlu0 %8049
      %8051 = vrot.lane.b32.xlu0 %v8026, 76
      %v8052 = vpop.permute.xlu0 %8051
      %8053 = vrot.lane.b32.xlu0 %v8027, 76
      %v8054 = vpop.permute.xlu0 %8053
      %8055 = vrot.lane.b32.xlu0 %v8028, 76
      %v8056 = vpop.permute.xlu0 %8055
      %8057 = vrot.lane.b32.xlu0 %v8029, 76
      %v8058 = vpop.permute.xlu0 %8057
      %8059 = vrot.lane.b32.xlu0 %v8030, 76
      %v8060 = vpop.permute.xlu0 %8059
      %8061 = vrot.lane.b32.xlu0 %v8031, 76
      %v8062 = vpop.permute.xlu0 %8061
      %8063 = vrot.lane.b32.xlu0 %v8032, 76
      %v8064 = vpop.permute.xlu0 %8063
      %vm8081 = vcmask 654944
      %8082 = vst.msk [vmem:[#allocation2] sm:$0xff] %vm8081, %v8034
      %8083 = vst.msk [vmem:[#allocation2 + $0x8] sm:$0xff] %vm8081, %v8036
      %8084 = vst.msk [vmem:[#allocation2 + $0x10] sm:$0xff] %vm8081, %v8038
      %8085 = vst.msk [vmem:[#allocation2 + $0x18] sm:$0xff] %vm8081, %v8040
      %8086 = vst.msk [vmem:[#allocation2 + $0x20] sm:$0xff] %vm8081, %v8042
      %8087 = vst.msk [vmem:[#allocation2 + $0x28] sm:$0xff] %vm8081, %v8044
      %8088 = vst.msk [vmem:[#allocation2 + $0x30] sm:$0xff] %vm8081, %v8046
      %8089 = vst.msk [vmem:[#allocation2 + $0x38] sm:$0xff] %vm8081, %v8048
      %8090 = vst.msk [vmem:[#allocation2 + $0x40] sm:$0xff] %vm8081, %v8050
      %8091 = vst.msk [vmem:[#allocation2 + $0x48] sm:$0xff] %vm8081, %v8052
      %8092 = vst.msk [vmem:[#allocation2 + $0x50] sm:$0xff] %vm8081, %v8054
      %8093 = vst.msk [vmem:[#allocation2 + $0x58] sm:$0xff] %vm8081, %v8056
      %8094 = vst.msk [vmem:[#allocation2 + $0x60] sm:$0xff] %vm8081, %v8058
      %8095 = vst.msk [vmem:[#allocation2 + $0x68] sm:$0xff] %vm8081, %v8060
      %8096 = vst.msk [vmem:[#allocation2 + $0x70] sm:$0xff] %vm8081, %v8062
      %8097 = vst.msk [vmem:[#allocation2 + $0x78] sm:$0xff] %vm8081, %v8064
      %s8098 = scalar_lea.vmem %s206, 48
      %v8099 = vld [vmem:[%s8098] sm:$0xf]
      %v8100 = vld [vmem:[%s8098 + $0x4] sm:$0xf]
      %v8101 = vld [vmem:[%s8098 + $0xc] sm:$0xf]
      %v8102 = vld [vmem:[%s8098 + $0x10] sm:$0xf]
      %v8103 = vld [vmem:[%s8098 + $0x18] sm:$0xf]
      %v8104 = vld [vmem:[%s8098 + $0x1c] sm:$0xf]
      %v8105 = vld [vmem:[%s8098 + $0x24] sm:$0xf]
      %v8106 = vld [vmem:[%s8098 + $0x28] sm:$0xf]
      %v8107 = vld [vmem:[%s8098 + $0x30] sm:$0xf]
      %v8108 = vld [vmem:[%s8098 + $0x34] sm:$0xf]
      %v8109 = vld [vmem:[%s8098 + $0x3c] sm:$0xf]
      %v8110 = vld [vmem:[%s8098 + $0x40] sm:$0xf]
      %v8111 = vld [vmem:[%s8098 + $0x48] sm:$0xf]
      %v8112 = vld [vmem:[%s8098 + $0x4c] sm:$0xf]
      %v8113 = vld [vmem:[%s8098 + $0x54] sm:$0xf]
      %v8114 = vld [vmem:[%s8098 + $0x58] sm:$0xf]
      %v8115 = vld [vmem:[%s8098 + $0x60] sm:$0xf]
      %v8116 = vld [vmem:[%s8098 + $0x64] sm:$0xf]
      %v8117 = vld [vmem:[%s8098 + $0x6c] sm:$0xf]
      %v8118 = vld [vmem:[%s8098 + $0x70] sm:$0xf]
      %v8119 = vld [vmem:[%s8098 + $0x78] sm:$0xf]
      %v8120 = vld [vmem:[%s8098 + $0x7c] sm:$0xf]
      %v8121 = vld [vmem:[%s8098 + $0x84] sm:$0xf]
      %v8122 = vld [vmem:[%s8098 + $0x88] sm:$0xf]
      %v8123 = vld [vmem:[%s8098 + $0x90] sm:$0xf]
      %v8124 = vld [vmem:[%s8098 + $0x94] sm:$0xf]
      %v8125 = vld [vmem:[%s8098 + $0x9c] sm:$0xf]
      %v8126 = vld [vmem:[%s8098 + $0xa0] sm:$0xf]
      %v8127 = vld [vmem:[%s8098 + $0xa8] sm:$0xf]
      %v8128 = vld [vmem:[%s8098 + $0xac] sm:$0xf]
      %v8129 = vld [vmem:[%s8098 + $0xb4] sm:$0xf]
      %v8130 = vld [vmem:[%s8098 + $0xb8] sm:$0xf]
      %v8163 = vunpack.c.l.b16 %v8099
      %v8164 = vunpack.c.l.b16 %v8100
      %v8165 = vunpack.c.l.b16 %v8101
      %v8166 = vunpack.c.l.b16 %v8102
      %v8167 = vunpack.c.l.b16 %v8103
      %v8168 = vunpack.c.l.b16 %v8104
      %v8169 = vunpack.c.l.b16 %v8105
      %v8170 = vunpack.c.l.b16 %v8106
      %v8171 = vunpack.c.l.b16 %v8107
      %v8172 = vunpack.c.l.b16 %v8108
      %v8173 = vunpack.c.l.b16 %v8109
      %v8174 = vunpack.c.l.b16 %v8110
      %v8175 = vunpack.c.l.b16 %v8111
      %v8176 = vunpack.c.l.b16 %v8112
      %v8177 = vunpack.c.l.b16 %v8113
      %v8178 = vunpack.c.l.b16 %v8114
      %v8179 = vunpack.c.l.b16 %v8115
      %v8180 = vunpack.c.l.b16 %v8116
      %v8181 = vunpack.c.l.b16 %v8117
      %v8182 = vunpack.c.l.b16 %v8118
      %v8183 = vunpack.c.l.b16 %v8119
      %v8184 = vunpack.c.l.b16 %v8120
      %v8185 = vunpack.c.l.b16 %v8121
      %v8186 = vunpack.c.l.b16 %v8122
      %v8187 = vunpack.c.l.b16 %v8123
      %v8188 = vunpack.c.l.b16 %v8124
      %v8189 = vunpack.c.l.b16 %v8125
      %v8190 = vunpack.c.l.b16 %v8126
      %v8191 = vunpack.c.l.b16 %v8127
      %v8192 = vunpack.c.l.b16 %v8128
      %v8193 = vunpack.c.l.b16 %v8129
      %v8194 = vunpack.c.l.b16 %v8130
      %v8195 = vpack.c.b16 %v8164, %v8163
      %v8196 = vpack.c.b16 %v8166, %v8165
      %v8197 = vpack.c.b16 %v8168, %v8167
      %v8198 = vpack.c.b16 %v8170, %v8169
      %v8199 = vpack.c.b16 %v8172, %v8171
      %v8200 = vpack.c.b16 %v8174, %v8173
      %v8201 = vpack.c.b16 %v8176, %v8175
      %v8202 = vpack.c.b16 %v8178, %v8177
      %v8203 = vpack.c.b16 %v8180, %v8179
      %v8204 = vpack.c.b16 %v8182, %v8181
      %v8205 = vpack.c.b16 %v8184, %v8183
      %v8206 = vpack.c.b16 %v8186, %v8185
      %v8207 = vpack.c.b16 %v8188, %v8187
      %v8208 = vpack.c.b16 %v8190, %v8189
      %v8209 = vpack.c.b16 %v8192, %v8191
      %v8210 = vpack.c.b16 %v8194, %v8193
      %8211 = vrot.lane.b32.xlu0 %v8195, 80
      %v8212 = vpop.permute.xlu0 %8211
      %8213 = vrot.lane.b32.xlu0 %v8196, 80
      %v8214 = vpop.permute.xlu0 %8213
      %8215 = vrot.lane.b32.xlu0 %v8197, 80
      %v8216 = vpop.permute.xlu0 %8215
      %8217 = vrot.lane.b32.xlu0 %v8198, 80
      %v8218 = vpop.permute.xlu0 %8217
      %8219 = vrot.lane.b32.xlu0 %v8199, 80
      %v8220 = vpop.permute.xlu0 %8219
      %8221 = vrot.lane.b32.xlu0 %v8200, 80
      %v8222 = vpop.permute.xlu0 %8221
      %8223 = vrot.lane.b32.xlu0 %v8201, 80
      %v8224 = vpop.permute.xlu0 %8223
      %8225 = vrot.lane.b32.xlu0 %v8202, 80
      %v8226 = vpop.permute.xlu0 %8225
      %8227 = vrot.lane.b32.xlu0 %v8203, 80
      %v8228 = vpop.permute.xlu0 %8227
      %8229 = vrot.lane.b32.xlu0 %v8204, 80
      %v8230 = vpop.permute.xlu0 %8229
      %8231 = vrot.lane.b32.xlu0 %v8205, 80
      %v8232 = vpop.permute.xlu0 %8231
      %8233 = vrot.lane.b32.xlu0 %v8206, 80
      %v8234 = vpop.permute.xlu0 %8233
      %8235 = vrot.lane.b32.xlu0 %v8207, 80
      %v8236 = vpop.permute.xlu0 %8235
      %8237 = vrot.lane.b32.xlu0 %v8208, 80
      %v8238 = vpop.permute.xlu0 %8237
      %8239 = vrot.lane.b32.xlu0 %v8209, 80
      %v8240 = vpop.permute.xlu0 %8239
      %8241 = vrot.lane.b32.xlu0 %v8210, 80
      %v8242 = vpop.permute.xlu0 %8241
      %vm8259 = vcmask 687744
      %8260 = vst.msk [vmem:[#allocation2] sm:$0xff] %vm8259, %v8212
      %8261 = vst.msk [vmem:[#allocation2 + $0x8] sm:$0xff] %vm8259, %v8214
      %8262 = vst.msk [vmem:[#allocation2 + $0x10] sm:$0xff] %vm8259, %v8216
      %8263 = vst.msk [vmem:[#allocation2 + $0x18] sm:$0xff] %vm8259, %v8218
      %8264 = vst.msk [vmem:[#allocation2 + $0x20] sm:$0xff] %vm8259, %v8220
      %8265 = vst.msk [vmem:[#allocation2 + $0x28] sm:$0xff] %vm8259, %v8222
      %8266 = vst.msk [vmem:[#allocation2 + $0x30] sm:$0xff] %vm8259, %v8224
      %8267 = vst.msk [vmem:[#allocation2 + $0x38] sm:$0xff] %vm8259, %v8226
      %8268 = vst.msk [vmem:[#allocation2 + $0x40] sm:$0xff] %vm8259, %v8228
      %8269 = vst.msk [vmem:[#allocation2 + $0x48] sm:$0xff] %vm8259, %v8230
      %8270 = vst.msk [vmem:[#allocation2 + $0x50] sm:$0xff] %vm8259, %v8232
      %8271 = vst.msk [vmem:[#allocation2 + $0x58] sm:$0xff] %vm8259, %v8234
      %8272 = vst.msk [vmem:[#allocation2 + $0x60] sm:$0xff] %vm8259, %v8236
      %8273 = vst.msk [vmem:[#allocation2 + $0x68] sm:$0xff] %vm8259, %v8238
      %8274 = vst.msk [vmem:[#allocation2 + $0x70] sm:$0xff] %vm8259, %v8240
      %8275 = vst.msk [vmem:[#allocation2 + $0x78] sm:$0xff] %vm8259, %v8242
      %v8276 = vld [vmem:[%s8098] sm:$0xf]
      %v8277 = vld [vmem:[%s8098 + $0x4] sm:$0xf]
      %v8278 = vld [vmem:[%s8098 + $0x8] sm:$0x1]
      %v8279 = vld [vmem:[%s8098 + $0xc] sm:$0xf]
      %v8280 = vld [vmem:[%s8098 + $0x10] sm:$0xf]
      %v8281 = vld [vmem:[%s8098 + $0x14] sm:$0x1]
      %v8282 = vld [vmem:[%s8098 + $0x18] sm:$0xf]
      %v8283 = vld [vmem:[%s8098 + $0x1c] sm:$0xf]
      %v8284 = vld [vmem:[%s8098 + $0x20] sm:$0x1]
      %v8285 = vld [vmem:[%s8098 + $0x24] sm:$0xf]
      %v8286 = vld [vmem:[%s8098 + $0x28] sm:$0xf]
      %v8287 = vld [vmem:[%s8098 + $0x2c] sm:$0x1]
      %v8288 = vld [vmem:[%s8098 + $0x30] sm:$0xf]
      %v8289 = vld [vmem:[%s8098 + $0x34] sm:$0xf]
      %v8290 = vld [vmem:[%s8098 + $0x38] sm:$0x1]
      %v8291 = vld [vmem:[%s8098 + $0x3c] sm:$0xf]
      %v8292 = vld [vmem:[%s8098 + $0x40] sm:$0xf]
      %v8293 = vld [vmem:[%s8098 + $0x44] sm:$0x1]
      %v8294 = vld [vmem:[%s8098 + $0x48] sm:$0xf]
      %v8295 = vld [vmem:[%s8098 + $0x4c] sm:$0xf]
      %v8296 = vld [vmem:[%s8098 + $0x50] sm:$0x1]
      %v8297 = vld [vmem:[%s8098 + $0x54] sm:$0xf]
      %v8298 = vld [vmem:[%s8098 + $0x58] sm:$0xf]
      %v8299 = vld [vmem:[%s8098 + $0x5c] sm:$0x1]
      %v8300 = vld [vmem:[%s8098 + $0x60] sm:$0xf]
      %v8301 = vld [vmem:[%s8098 + $0x64] sm:$0xf]
      %v8302 = vld [vmem:[%s8098 + $0x68] sm:$0x1]
      %v8303 = vld [vmem:[%s8098 + $0x6c] sm:$0xf]
      %v8304 = vld [vmem:[%s8098 + $0x70] sm:$0xf]
      %v8305 = vld [vmem:[%s8098 + $0x74] sm:$0x1]
      %v8306 = vld [vmem:[%s8098 + $0x78] sm:$0xf]
      %v8307 = vld [vmem:[%s8098 + $0x7c] sm:$0xf]
      %v8308 = vld [vmem:[%s8098 + $0x80] sm:$0x1]
      %v8309 = vld [vmem:[%s8098 + $0x84] sm:$0xf]
      %v8310 = vld [vmem:[%s8098 + $0x88] sm:$0xf]
      %v8311 = vld [vmem:[%s8098 + $0x8c] sm:$0x1]
      %v8312 = vld [vmem:[%s8098 + $0x90] sm:$0xf]
      %v8313 = vld [vmem:[%s8098 + $0x94] sm:$0xf]
      %v8314 = vld [vmem:[%s8098 + $0x98] sm:$0x1]
      %v8315 = vld [vmem:[%s8098 + $0x9c] sm:$0xf]
      %v8316 = vld [vmem:[%s8098 + $0xa0] sm:$0xf]
      %v8317 = vld [vmem:[%s8098 + $0xa4] sm:$0x1]
      %v8318 = vld [vmem:[%s8098 + $0xa8] sm:$0xf]
      %v8319 = vld [vmem:[%s8098 + $0xac] sm:$0xf]
      %v8320 = vld [vmem:[%s8098 + $0xb0] sm:$0x1]
      %v8321 = vld [vmem:[%s8098 + $0xb4] sm:$0xf]
      %v8322 = vld [vmem:[%s8098 + $0xb8] sm:$0xf]
      %v8323 = vld [vmem:[%s8098 + $0xbc] sm:$0x1]
      %v8325 = vshrl.u32 %v8276, 16
      %v8327 = vrot.slane %v8325, 4
      %v8328 = vshll.u32 %v8276, 16
      %v8330 = vrot.slane %v8328, 5
      %v8331 = vor.u32 %v8327, %v8330
      %v8332 = vrot.slane %v8331, 4
      %v8334 = vshll.u32 %v8277, 16
      %v8336 = vrot.slane %v8334, 5
      %v8337 = vsel %vm418, %v8332, %v8336
      %v8338 = vshrl.u32 %v8277, 16
      %v8340 = vrot.slane %v8338, 4
      %v8341 = vor.u32 %v8340, %v8336
      %v8342 = vrot.slane %v8341, 4
      %v8344 = vshll.u32 %v8278, 16
      %v8346 = vrot.slane %v8344, 5
      %v8347 = vsel %vm418, %v8342, %v8346
      %v8349 = vshrl.u32 %v8279, 16
      %v8351 = vrot.slane %v8349, 4
      %v8352 = vshll.u32 %v8279, 16
      %v8354 = vrot.slane %v8352, 5
      %v8355 = vor.u32 %v8351, %v8354
      %v8356 = vrot.slane %v8355, 4
      %v8358 = vshll.u32 %v8280, 16
      %v8360 = vrot.slane %v8358, 5
      %v8361 = vsel %vm418, %v8356, %v8360
      %v8362 = vshrl.u32 %v8280, 16
      %v8364 = vrot.slane %v8362, 4
      %v8365 = vor.u32 %v8364, %v8360
      %v8366 = vrot.slane %v8365, 4
      %v8368 = vshll.u32 %v8281, 16
      %v8370 = vrot.slane %v8368, 5
      %v8371 = vsel %vm418, %v8366, %v8370
      %v8373 = vshrl.u32 %v8282, 16
      %v8375 = vrot.slane %v8373, 4
      %v8376 = vshll.u32 %v8282, 16
      %v8378 = vrot.slane %v8376, 5
      %v8379 = vor.u32 %v8375, %v8378
      %v8380 = vrot.slane %v8379, 4
      %v8382 = vshll.u32 %v8283, 16
      %v8384 = vrot.slane %v8382, 5
      %v8385 = vsel %vm418, %v8380, %v8384
      %v8386 = vshrl.u32 %v8283, 16
      %v8388 = vrot.slane %v8386, 4
      %v8389 = vor.u32 %v8388, %v8384
      %v8390 = vrot.slane %v8389, 4
      %v8392 = vshll.u32 %v8284, 16
      %v8394 = vrot.slane %v8392, 5
      %v8395 = vsel %vm418, %v8390, %v8394
      %v8397 = vshrl.u32 %v8285, 16
      %v8399 = vrot.slane %v8397, 4
      %v8400 = vshll.u32 %v8285, 16
      %v8402 = vrot.slane %v8400, 5
      %v8403 = vor.u32 %v8399, %v8402
      %v8404 = vrot.slane %v8403, 4
      %v8406 = vshll.u32 %v8286, 16
      %v8408 = vrot.slane %v8406, 5
      %v8409 = vsel %vm418, %v8404, %v8408
      %v8410 = vshrl.u32 %v8286, 16
      %v8412 = vrot.slane %v8410, 4
      %v8413 = vor.u32 %v8412, %v8408
      %v8414 = vrot.slane %v8413, 4
      %v8416 = vshll.u32 %v8287, 16
      %v8418 = vrot.slane %v8416, 5
      %v8419 = vsel %vm418, %v8414, %v8418
      %v8421 = vshrl.u32 %v8288, 16
      %v8423 = vrot.slane %v8421, 4
      %v8424 = vshll.u32 %v8288, 16
      %v8426 = vrot.slane %v8424, 5
      %v8427 = vor.u32 %v8423, %v8426
      %v8428 = vrot.slane %v8427, 4
      %v8430 = vshll.u32 %v8289, 16
      %v8432 = vrot.slane %v8430, 5
      %v8433 = vsel %vm418, %v8428, %v8432
      %v8434 = vshrl.u32 %v8289, 16
      %v8436 = vrot.slane %v8434, 4
      %v8437 = vor.u32 %v8436, %v8432
      %v8438 = vrot.slane %v8437, 4
      %v8440 = vshll.u32 %v8290, 16
      %v8442 = vrot.slane %v8440, 5
      %v8443 = vsel %vm418, %v8438, %v8442
      %v8445 = vshrl.u32 %v8291, 16
      %v8447 = vrot.slane %v8445, 4
      %v8448 = vshll.u32 %v8291, 16
      %v8450 = vrot.slane %v8448, 5
      %v8451 = vor.u32 %v8447, %v8450
      %v8452 = vrot.slane %v8451, 4
      %v8454 = vshll.u32 %v8292, 16
      %v8456 = vrot.slane %v8454, 5
      %v8457 = vsel %vm418, %v8452, %v8456
      %v8458 = vshrl.u32 %v8292, 16
      %v8460 = vrot.slane %v8458, 4
      %v8461 = vor.u32 %v8460, %v8456
      %v8462 = vrot.slane %v8461, 4
      %v8464 = vshll.u32 %v8293, 16
      %v8466 = vrot.slane %v8464, 5
      %v8467 = vsel %vm418, %v8462, %v8466
      %v8469 = vshrl.u32 %v8294, 16
      %v8471 = vrot.slane %v8469, 4
      %v8472 = vshll.u32 %v8294, 16
      %v8474 = vrot.slane %v8472, 5
      %v8475 = vor.u32 %v8471, %v8474
      %v8476 = vrot.slane %v8475, 4
      %v8478 = vshll.u32 %v8295, 16
      %v8480 = vrot.slane %v8478, 5
      %v8481 = vsel %vm418, %v8476, %v8480
      %v8482 = vshrl.u32 %v8295, 16
      %v8484 = vrot.slane %v8482, 4
      %v8485 = vor.u32 %v8484, %v8480
      %v8486 = vrot.slane %v8485, 4
      %v8488 = vshll.u32 %v8296, 16
      %v8490 = vrot.slane %v8488, 5
      %v8491 = vsel %vm418, %v8486, %v8490
      %v8493 = vshrl.u32 %v8297, 16
      %v8495 = vrot.slane %v8493, 4
      %v8496 = vshll.u32 %v8297, 16
      %v8498 = vrot.slane %v8496, 5
      %v8499 = vor.u32 %v8495, %v8498
      %v8500 = vrot.slane %v8499, 4
      %v8502 = vshll.u32 %v8298, 16
      %v8504 = vrot.slane %v8502, 5
      %v8505 = vsel %vm418, %v8500, %v8504
      %v8506 = vshrl.u32 %v8298, 16
      %v8508 = vrot.slane %v8506, 4
      %v8509 = vor.u32 %v8508, %v8504
      %v8510 = vrot.slane %v8509, 4
      %v8512 = vshll.u32 %v8299, 16
      %v8514 = vrot.slane %v8512, 5
      %v8515 = vsel %vm418, %v8510, %v8514
      %v8517 = vshrl.u32 %v8300, 16
      %v8519 = vrot.slane %v8517, 4
      %v8520 = vshll.u32 %v8300, 16
      %v8522 = vrot.slane %v8520, 5
      %v8523 = vor.u32 %v8519, %v8522
      %v8524 = vrot.slane %v8523, 4
      %v8526 = vshll.u32 %v8301, 16
      %v8528 = vrot.slane %v8526, 5
      %v8529 = vsel %vm418, %v8524, %v8528
      %v8530 = vshrl.u32 %v8301, 16
      %v8532 = vrot.slane %v8530, 4
      %v8533 = vor.u32 %v8532, %v8528
      %v8534 = vrot.slane %v8533, 4
      %v8536 = vshll.u32 %v8302, 16
      %v8538 = vrot.slane %v8536, 5
      %v8539 = vsel %vm418, %v8534, %v8538
      %v8541 = vshrl.u32 %v8303, 16
      %v8543 = vrot.slane %v8541, 4
      %v8544 = vshll.u32 %v8303, 16
      %v8546 = vrot.slane %v8544, 5
      %v8547 = vor.u32 %v8543, %v8546
      %v8548 = vrot.slane %v8547, 4
      %v8550 = vshll.u32 %v8304, 16
      %v8552 = vrot.slane %v8550, 5
      %v8553 = vsel %vm418, %v8548, %v8552
      %v8554 = vshrl.u32 %v8304, 16
      %v8556 = vrot.slane %v8554, 4
      %v8557 = vor.u32 %v8556, %v8552
      %v8558 = vrot.slane %v8557, 4
      %v8560 = vshll.u32 %v8305, 16
      %v8562 = vrot.slane %v8560, 5
      %v8563 = vsel %vm418, %v8558, %v8562
      %v8565 = vshrl.u32 %v8306, 16
      %v8567 = vrot.slane %v8565, 4
      %v8568 = vshll.u32 %v8306, 16
      %v8570 = vrot.slane %v8568, 5
      %v8571 = vor.u32 %v8567, %v8570
      %v8572 = vrot.slane %v8571, 4
      %v8574 = vshll.u32 %v8307, 16
      %v8576 = vrot.slane %v8574, 5
      %v8577 = vsel %vm418, %v8572, %v8576
      %v8578 = vshrl.u32 %v8307, 16
      %v8580 = vrot.slane %v8578, 4
      %v8581 = vor.u32 %v8580, %v8576
      %v8582 = vrot.slane %v8581, 4
      %v8584 = vshll.u32 %v8308, 16
      %v8586 = vrot.slane %v8584, 5
      %v8587 = vsel %vm418, %v8582, %v8586
      %v8589 = vshrl.u32 %v8309, 16
      %v8591 = vrot.slane %v8589, 4
      %v8592 = vshll.u32 %v8309, 16
      %v8594 = vrot.slane %v8592, 5
      %v8595 = vor.u32 %v8591, %v8594
      %v8596 = vrot.slane %v8595, 4
      %v8598 = vshll.u32 %v8310, 16
      %v8600 = vrot.slane %v8598, 5
      %v8601 = vsel %vm418, %v8596, %v8600
      %v8602 = vshrl.u32 %v8310, 16
      %v8604 = vrot.slane %v8602, 4
      %v8605 = vor.u32 %v8604, %v8600
      %v8606 = vrot.slane %v8605, 4
      %v8608 = vshll.u32 %v8311, 16
      %v8610 = vrot.slane %v8608, 5
      %v8611 = vsel %vm418, %v8606, %v8610
      %v8613 = vshrl.u32 %v8312, 16
      %v8615 = vrot.slane %v8613, 4
      %v8616 = vshll.u32 %v8312, 16
      %v8618 = vrot.slane %v8616, 5
      %v8619 = vor.u32 %v8615, %v8618
      %v8620 = vrot.slane %v8619, 4
      %v8622 = vshll.u32 %v8313, 16
      %v8624 = vrot.slane %v8622, 5
      %v8625 = vsel %vm418, %v8620, %v8624
      %v8626 = vshrl.u32 %v8313, 16
      %v8628 = vrot.slane %v8626, 4
      %v8629 = vor.u32 %v8628, %v8624
      %v8630 = vrot.slane %v8629, 4
      %v8632 = vshll.u32 %v8314, 16
      %v8634 = vrot.slane %v8632, 5
      %v8635 = vsel %vm418, %v8630, %v8634
      %v8637 = vshrl.u32 %v8315, 16
      %v8639 = vrot.slane %v8637, 4
      %v8640 = vshll.u32 %v8315, 16
      %v8642 = vrot.slane %v8640, 5
      %v8643 = vor.u32 %v8639, %v8642
      %v8644 = vrot.slane %v8643, 4
      %v8646 = vshll.u32 %v8316, 16
      %v8648 = vrot.slane %v8646, 5
      %v8649 = vsel %vm418, %v8644, %v8648
      %v8650 = vshrl.u32 %v8316, 16
      %v8652 = vrot.slane %v8650, 4
      %v8653 = vor.u32 %v8652, %v8648
      %v8654 = vrot.slane %v8653, 4
      %v8656 = vshll.u32 %v8317, 16
      %v8658 = vrot.slane %v8656, 5
      %v8659 = vsel %vm418, %v8654, %v8658
      %v8661 = vshrl.u32 %v8318, 16
      %v8663 = vrot.slane %v8661, 4
      %v8664 = vshll.u32 %v8318, 16
      %v8666 = vrot.slane %v8664, 5
      %v8667 = vor.u32 %v8663, %v8666
      %v8668 = vrot.slane %v8667, 4
      %v8670 = vshll.u32 %v8319, 16
      %v8672 = vrot.slane %v8670, 5
      %v8673 = vsel %vm418, %v8668, %v8672
      %v8674 = vshrl.u32 %v8319, 16
      %v8676 = vrot.slane %v8674, 4
      %v8677 = vor.u32 %v8676, %v8672
      %v8678 = vrot.slane %v8677, 4
      %v8680 = vshll.u32 %v8320, 16
      %v8682 = vrot.slane %v8680, 5
      %v8683 = vsel %vm418, %v8678, %v8682
      %v8685 = vshrl.u32 %v8321, 16
      %v8687 = vrot.slane %v8685, 4
      %v8688 = vshll.u32 %v8321, 16
      %v8690 = vrot.slane %v8688, 5
      %v8691 = vor.u32 %v8687, %v8690
      %v8692 = vrot.slane %v8691, 4
      %v8694 = vshll.u32 %v8322, 16
      %v8696 = vrot.slane %v8694, 5
      %v8697 = vsel %vm418, %v8692, %v8696
      %v8698 = vshrl.u32 %v8322, 16
      %v8700 = vrot.slane %v8698, 4
      %v8701 = vor.u32 %v8700, %v8696
      %v8702 = vrot.slane %v8701, 4
      %v8704 = vshll.u32 %v8323, 16
      %v8706 = vrot.slane %v8704, 5
      %v8707 = vsel %vm418, %v8702, %v8706
      %v8708 = vunpack.c.l.b16 %v8337
      %v8709 = vunpack.c.l.b16 %v8347
      %v8710 = vunpack.c.l.b16 %v8361
      %v8711 = vunpack.c.l.b16 %v8371
      %v8712 = vunpack.c.l.b16 %v8385
      %v8713 = vunpack.c.l.b16 %v8395
      %v8714 = vunpack.c.l.b16 %v8409
      %v8715 = vunpack.c.l.b16 %v8419
      %v8716 = vunpack.c.l.b16 %v8433
      %v8717 = vunpack.c.l.b16 %v8443
      %v8718 = vunpack.c.l.b16 %v8457
      %v8719 = vunpack.c.l.b16 %v8467
      %v8720 = vunpack.c.l.b16 %v8481
      %v8721 = vunpack.c.l.b16 %v8491
      %v8722 = vunpack.c.l.b16 %v8505
      %v8723 = vunpack.c.l.b16 %v8515
      %v8724 = vunpack.c.l.b16 %v8529
      %v8725 = vunpack.c.l.b16 %v8539
      %v8726 = vunpack.c.l.b16 %v8553
      %v8727 = vunpack.c.l.b16 %v8563
      %v8728 = vunpack.c.l.b16 %v8577
      %v8729 = vunpack.c.l.b16 %v8587
      %v8730 = vunpack.c.l.b16 %v8601
      %v8731 = vunpack.c.l.b16 %v8611
      %v8732 = vunpack.c.l.b16 %v8625
      %v8733 = vunpack.c.l.b16 %v8635
      %v8734 = vunpack.c.l.b16 %v8649
      %v8735 = vunpack.c.l.b16 %v8659
      %v8736 = vunpack.c.l.b16 %v8673
      %v8737 = vunpack.c.l.b16 %v8683
      %v8738 = vunpack.c.l.b16 %v8697
      %v8739 = vunpack.c.l.b16 %v8707
      %v8740 = vpack.c.b16 %v8709, %v8708
      %v8741 = vpack.c.b16 %v8711, %v8710
      %v8742 = vpack.c.b16 %v8713, %v8712
      %v8743 = vpack.c.b16 %v8715, %v8714
      %v8744 = vpack.c.b16 %v8717, %v8716
      %v8745 = vpack.c.b16 %v8719, %v8718
      %v8746 = vpack.c.b16 %v8721, %v8720
      %v8747 = vpack.c.b16 %v8723, %v8722
      %v8748 = vpack.c.b16 %v8725, %v8724
      %v8749 = vpack.c.b16 %v8727, %v8726
      %v8750 = vpack.c.b16 %v8729, %v8728
      %v8751 = vpack.c.b16 %v8731, %v8730
      %v8752 = vpack.c.b16 %v8733, %v8732
      %v8753 = vpack.c.b16 %v8735, %v8734
      %v8754 = vpack.c.b16 %v8737, %v8736
      %v8755 = vpack.c.b16 %v8739, %v8738
      %8756 = vrot.lane.b32.xlu0 %v8740, 84
      %v8757 = vpop.permute.xlu0 %8756
      %8758 = vrot.lane.b32.xlu0 %v8741, 84
      %v8759 = vpop.permute.xlu0 %8758
      %8760 = vrot.lane.b32.xlu0 %v8742, 84
      %v8761 = vpop.permute.xlu0 %8760
      %8762 = vrot.lane.b32.xlu0 %v8743, 84
      %v8763 = vpop.permute.xlu0 %8762
      %8764 = vrot.lane.b32.xlu0 %v8744, 84
      %v8765 = vpop.permute.xlu0 %8764
      %8766 = vrot.lane.b32.xlu0 %v8745, 84
      %v8767 = vpop.permute.xlu0 %8766
      %8768 = vrot.lane.b32.xlu0 %v8746, 84
      %v8769 = vpop.permute.xlu0 %8768
      %8770 = vrot.lane.b32.xlu0 %v8747, 84
      %v8771 = vpop.permute.xlu0 %8770
      %8772 = vrot.lane.b32.xlu0 %v8748, 84
      %v8773 = vpop.permute.xlu0 %8772
      %8774 = vrot.lane.b32.xlu0 %v8749, 84
      %v8775 = vpop.permute.xlu0 %8774
      %8776 = vrot.lane.b32.xlu0 %v8750, 84
      %v8777 = vpop.permute.xlu0 %8776
      %8778 = vrot.lane.b32.xlu0 %v8751, 84
      %v8779 = vpop.permute.xlu0 %8778
      %8780 = vrot.lane.b32.xlu0 %v8752, 84
      %v8781 = vpop.permute.xlu0 %8780
      %8782 = vrot.lane.b32.xlu0 %v8753, 84
      %v8783 = vpop.permute.xlu0 %8782
      %8784 = vrot.lane.b32.xlu0 %v8754, 84
      %v8785 = vpop.permute.xlu0 %8784
      %8786 = vrot.lane.b32.xlu0 %v8755, 84
      %v8787 = vpop.permute.xlu0 %8786
      %vm8804 = vcmask 720544
      %8805 = vst.msk [vmem:[#allocation2] sm:$0xff] %vm8804, %v8757
      %8806 = vst.msk [vmem:[#allocation2 + $0x8] sm:$0xff] %vm8804, %v8759
      %8807 = vst.msk [vmem:[#allocation2 + $0x10] sm:$0xff] %vm8804, %v8761
      %8808 = vst.msk [vmem:[#allocation2 + $0x18] sm:$0xff] %vm8804, %v8763
      %8809 = vst.msk [vmem:[#allocation2 + $0x20] sm:$0xff] %vm8804, %v8765
      %8810 = vst.msk [vmem:[#allocation2 + $0x28] sm:$0xff] %vm8804, %v8767
      %8811 = vst.msk [vmem:[#allocation2 + $0x30] sm:$0xff] %vm8804, %v8769
      %8812 = vst.msk [vmem:[#allocation2 + $0x38] sm:$0xff] %vm8804, %v8771
      %8813 = vst.msk [vmem:[#allocation2 + $0x40] sm:$0xff] %vm8804, %v8773
      %8814 = vst.msk [vmem:[#allocation2 + $0x48] sm:$0xff] %vm8804, %v8775
      %8815 = vst.msk [vmem:[#allocation2 + $0x50] sm:$0xff] %vm8804, %v8777
      %8816 = vst.msk [vmem:[#allocation2 + $0x58] sm:$0xff] %vm8804, %v8779
      %8817 = vst.msk [vmem:[#allocation2 + $0x60] sm:$0xff] %vm8804, %v8781
      %8818 = vst.msk [vmem:[#allocation2 + $0x68] sm:$0xff] %vm8804, %v8783
      %8819 = vst.msk [vmem:[#allocation2 + $0x70] sm:$0xff] %vm8804, %v8785
      %8820 = vst.msk [vmem:[#allocation2 + $0x78] sm:$0xff] %vm8804, %v8787
      %v8821 = vld [vmem:[%s8098] sm:$0xe]
      %v8822 = vld [vmem:[%s8098 + $0x4] sm:$0xf]
      %v8823 = vld [vmem:[%s8098 + $0x8] sm:$0x1]
      %v8824 = vld [vmem:[%s8098 + $0xc] sm:$0xe]
      %v8825 = vld [vmem:[%s8098 + $0x10] sm:$0xf]
      %v8826 = vld [vmem:[%s8098 + $0x14] sm:$0x1]
      %v8827 = vld [vmem:[%s8098 + $0x18] sm:$0xe]
      %v8828 = vld [vmem:[%s8098 + $0x1c] sm:$0xf]
      %v8829 = vld [vmem:[%s8098 + $0x20] sm:$0x1]
      %v8830 = vld [vmem:[%s8098 + $0x24] sm:$0xe]
      %v8831 = vld [vmem:[%s8098 + $0x28] sm:$0xf]
      %v8832 = vld [vmem:[%s8098 + $0x2c] sm:$0x1]
      %v8833 = vld [vmem:[%s8098 + $0x30] sm:$0xe]
      %v8834 = vld [vmem:[%s8098 + $0x34] sm:$0xf]
      %v8835 = vld [vmem:[%s8098 + $0x38] sm:$0x1]
      %v8836 = vld [vmem:[%s8098 + $0x3c] sm:$0xe]
      %v8837 = vld [vmem:[%s8098 + $0x40] sm:$0xf]
      %v8838 = vld [vmem:[%s8098 + $0x44] sm:$0x1]
      %v8839 = vld [vmem:[%s8098 + $0x48] sm:$0xe]
      %v8840 = vld [vmem:[%s8098 + $0x4c] sm:$0xf]
      %v8841 = vld [vmem:[%s8098 + $0x50] sm:$0x1]
      %v8842 = vld [vmem:[%s8098 + $0x54] sm:$0xe]
      %v8843 = vld [vmem:[%s8098 + $0x58] sm:$0xf]
      %v8844 = vld [vmem:[%s8098 + $0x5c] sm:$0x1]
      %v8845 = vld [vmem:[%s8098 + $0x60] sm:$0xe]
      %v8846 = vld [vmem:[%s8098 + $0x64] sm:$0xf]
      %v8847 = vld [vmem:[%s8098 + $0x68] sm:$0x1]
      %v8848 = vld [vmem:[%s8098 + $0x6c] sm:$0xe]
      %v8849 = vld [vmem:[%s8098 + $0x70] sm:$0xf]
      %v8850 = vld [vmem:[%s8098 + $0x74] sm:$0x1]
      %v8851 = vld [vmem:[%s8098 + $0x78] sm:$0xe]
      %v8852 = vld [vmem:[%s8098 + $0x7c] sm:$0xf]
      %v8853 = vld [vmem:[%s8098 + $0x80] sm:$0x1]
      %v8854 = vld [vmem:[%s8098 + $0x84] sm:$0xe]
      %v8855 = vld [vmem:[%s8098 + $0x88] sm:$0xf]
      %v8856 = vld [vmem:[%s8098 + $0x8c] sm:$0x1]
      %v8857 = vld [vmem:[%s8098 + $0x90] sm:$0xe]
      %v8858 = vld [vmem:[%s8098 + $0x94] sm:$0xf]
      %v8859 = vld [vmem:[%s8098 + $0x98] sm:$0x1]
      %v8860 = vld [vmem:[%s8098 + $0x9c] sm:$0xe]
      %v8861 = vld [vmem:[%s8098 + $0xa0] sm:$0xf]
      %v8862 = vld [vmem:[%s8098 + $0xa4] sm:$0x1]
      %v8863 = vld [vmem:[%s8098 + $0xa8] sm:$0xe]
      %v8864 = vld [vmem:[%s8098 + $0xac] sm:$0xf]
      %v8865 = vld [vmem:[%s8098 + $0xb0] sm:$0x1]
      %v8866 = vld [vmem:[%s8098 + $0xb4] sm:$0xe]
      %v8867 = vld [vmem:[%s8098 + $0xb8] sm:$0xf]
      %v8868 = vld [vmem:[%s8098 + $0xbc] sm:$0x1]
      %v8917 = vrot.slane %v8821, 5
      %v8918 = vrot.slane %v8917, 4
      %v8919 = vrot.slane %v8822, 5
      %v8920 = vsel %vm1014, %v8918, %v8919
      %v8921 = vrot.slane %v8919, 4
      %v8922 = vrot.slane %v8823, 5
      %v8923 = vsel %vm1014, %v8921, %v8922
      %v8924 = vrot.slane %v8824, 5
      %v8925 = vrot.slane %v8924, 4
      %v8926 = vrot.slane %v8825, 5
      %v8927 = vsel %vm1014, %v8925, %v8926
      %v8928 = vrot.slane %v8926, 4
      %v8929 = vrot.slane %v8826, 5
      %v8930 = vsel %vm1014, %v8928, %v8929
      %v8931 = vrot.slane %v8827, 5
      %v8932 = vrot.slane %v8931, 4
      %v8933 = vrot.slane %v8828, 5
      %v8934 = vsel %vm1014, %v8932, %v8933
      %v8935 = vrot.slane %v8933, 4
      %v8936 = vrot.slane %v8829, 5
      %v8937 = vsel %vm1014, %v8935, %v8936
      %v8938 = vrot.slane %v8830, 5
      %v8939 = vrot.slane %v8938, 4
      %v8940 = vrot.slane %v8831, 5
      %v8941 = vsel %vm1014, %v8939, %v8940
      %v8942 = vrot.slane %v8940, 4
      %v8943 = vrot.slane %v8832, 5
      %v8944 = vsel %vm1014, %v8942, %v8943
      %v8945 = vrot.slane %v8833, 5
      %v8946 = vrot.slane %v8945, 4
      %v8947 = vrot.slane %v8834, 5
      %v8948 = vsel %vm1014, %v8946, %v8947
      %v8949 = vrot.slane %v8947, 4
      %v8950 = vrot.slane %v8835, 5
      %v8951 = vsel %vm1014, %v8949, %v8950
      %v8952 = vrot.slane %v8836, 5
      %v8953 = vrot.slane %v8952, 4
      %v8954 = vrot.slane %v8837, 5
      %v8955 = vsel %vm1014, %v8953, %v8954
      %v8956 = vrot.slane %v8954, 4
      %v8957 = vrot.slane %v8838, 5
      %v8958 = vsel %vm1014, %v8956, %v8957
      %v8959 = vrot.slane %v8839, 5
      %v8960 = vrot.slane %v8959, 4
      %v8961 = vrot.slane %v8840, 5
      %v8962 = vsel %vm1014, %v8960, %v8961
      %v8963 = vrot.slane %v8961, 4
      %v8964 = vrot.slane %v8841, 5
      %v8965 = vsel %vm1014, %v8963, %v8964
      %v8966 = vrot.slane %v8842, 5
      %v8967 = vrot.slane %v8966, 4
      %v8968 = vrot.slane %v8843, 5
      %v8969 = vsel %vm1014, %v8967, %v8968
      %v8970 = vrot.slane %v8968, 4
      %v8971 = vrot.slane %v8844, 5
      %v8972 = vsel %vm1014, %v8970, %v8971
      %v8973 = vrot.slane %v8845, 5
      %v8974 = vrot.slane %v8973, 4
      %v8975 = vrot.slane %v8846, 5
      %v8976 = vsel %vm1014, %v8974, %v8975
      %v8977 = vrot.slane %v8975, 4
      %v8978 = vrot.slane %v8847, 5
      %v8979 = vsel %vm1014, %v8977, %v8978
      %v8980 = vrot.slane %v8848, 5
      %v8981 = vrot.slane %v8980, 4
      %v8982 = vrot.slane %v8849, 5
      %v8983 = vsel %vm1014, %v8981, %v8982
      %v8984 = vrot.slane %v8982, 4
      %v8985 = vrot.slane %v8850, 5
      %v8986 = vsel %vm1014, %v8984, %v8985
      %v8987 = vrot.slane %v8851, 5
      %v8988 = vrot.slane %v8987, 4
      %v8989 = vrot.slane %v8852, 5
      %v8990 = vsel %vm1014, %v8988, %v8989
      %v8991 = vrot.slane %v8989, 4
      %v8992 = vrot.slane %v8853, 5
      %v8993 = vsel %vm1014, %v8991, %v8992
      %v8994 = vrot.slane %v8854, 5
      %v8995 = vrot.slane %v8994, 4
      %v8996 = vrot.slane %v8855, 5
      %v8997 = vsel %vm1014, %v8995, %v8996
      %v8998 = vrot.slane %v8996, 4
      %v8999 = vrot.slane %v8856, 5
      %v9000 = vsel %vm1014, %v8998, %v8999
      %v9001 = vrot.slane %v8857, 5
      %v9002 = vrot.slane %v9001, 4
      %v9003 = vrot.slane %v8858, 5
      %v9004 = vsel %vm1014, %v9002, %v9003
      %v9005 = vrot.slane %v9003, 4
      %v9006 = vrot.slane %v8859, 5
      %v9007 = vsel %vm1014, %v9005, %v9006
      %v9008 = vrot.slane %v8860, 5
      %v9009 = vrot.slane %v9008, 4
      %v9010 = vrot.slane %v8861, 5
      %v9011 = vsel %vm1014, %v9009, %v9010
      %v9012 = vrot.slane %v9010, 4
      %v9013 = vrot.slane %v8862, 5
      %v9014 = vsel %vm1014, %v9012, %v9013
      %v9015 = vrot.slane %v8863, 5
      %v9016 = vrot.slane %v9015, 4
      %v9017 = vrot.slane %v8864, 5
      %v9018 = vsel %vm1014, %v9016, %v9017
      %v9019 = vrot.slane %v9017, 4
      %v9020 = vrot.slane %v8865, 5
      %v9021 = vsel %vm1014, %v9019, %v9020
      %v9022 = vrot.slane %v8866, 5
      %v9023 = vrot.slane %v9022, 4
      %v9024 = vrot.slane %v8867, 5
      %v9025 = vsel %vm1014, %v9023, %v9024
      %v9026 = vrot.slane %v9024, 4
      %v9027 = vrot.slane %v8868, 5
      %v9028 = vsel %vm1014, %v9026, %v9027
      %v9029 = vunpack.c.l.b16 %v8920
      %v9030 = vunpack.c.l.b16 %v8923
      %v9031 = vunpack.c.l.b16 %v8927
      %v9032 = vunpack.c.l.b16 %v8930
      %v9033 = vunpack.c.l.b16 %v8934
      %v9034 = vunpack.c.l.b16 %v8937
      %v9035 = vunpack.c.l.b16 %v8941
      %v9036 = vunpack.c.l.b16 %v8944
      %v9037 = vunpack.c.l.b16 %v8948
      %v9038 = vunpack.c.l.b16 %v8951
      %v9039 = vunpack.c.l.b16 %v8955
      %v9040 = vunpack.c.l.b16 %v8958
      %v9041 = vunpack.c.l.b16 %v8962
      %v9042 = vunpack.c.l.b16 %v8965
      %v9043 = vunpack.c.l.b16 %v8969
      %v9044 = vunpack.c.l.b16 %v8972
      %v9045 = vunpack.c.l.b16 %v8976
      %v9046 = vunpack.c.l.b16 %v8979
      %v9047 = vunpack.c.l.b16 %v8983
      %v9048 = vunpack.c.l.b16 %v8986
      %v9049 = vunpack.c.l.b16 %v8990
      %v9050 = vunpack.c.l.b16 %v8993
      %v9051 = vunpack.c.l.b16 %v8997
      %v9052 = vunpack.c.l.b16 %v9000
      %v9053 = vunpack.c.l.b16 %v9004
      %v9054 = vunpack.c.l.b16 %v9007
      %v9055 = vunpack.c.l.b16 %v9011
      %v9056 = vunpack.c.l.b16 %v9014
      %v9057 = vunpack.c.l.b16 %v9018
      %v9058 = vunpack.c.l.b16 %v9021
      %v9059 = vunpack.c.l.b16 %v9025
      %v9060 = vunpack.c.l.b16 %v9028
      %v9061 = vpack.c.b16 %v9030, %v9029
      %v9062 = vpack.c.b16 %v9032, %v9031
      %v9063 = vpack.c.b16 %v9034, %v9033
      %v9064 = vpack.c.b16 %v9036, %v9035
      %v9065 = vpack.c.b16 %v9038, %v9037
      %v9066 = vpack.c.b16 %v9040, %v9039
      %v9067 = vpack.c.b16 %v9042, %v9041
      %v9068 = vpack.c.b16 %v9044, %v9043
      %v9069 = vpack.c.b16 %v9046, %v9045
      %v9070 = vpack.c.b16 %v9048, %v9047
      %v9071 = vpack.c.b16 %v9050, %v9049
      %v9072 = vpack.c.b16 %v9052, %v9051
      %v9073 = vpack.c.b16 %v9054, %v9053
      %v9074 = vpack.c.b16 %v9056, %v9055
      %v9075 = vpack.c.b16 %v9058, %v9057
      %v9076 = vpack.c.b16 %v9060, %v9059
      %9077 = vrot.lane.b32.xlu0 %v9061, 88
      %v9078 = vpop.permute.xlu0 %9077
      %9079 = vrot.lane.b32.xlu0 %v9062, 88
      %v9080 = vpop.permute.xlu0 %9079
      %9081 = vrot.lane.b32.xlu0 %v9063, 88
      %v9082 = vpop.permute.xlu0 %9081
      %9083 = vrot.lane.b32.xlu0 %v9064, 88
      %v9084 = vpop.permute.xlu0 %9083
      %9085 = vrot.lane.b32.xlu0 %v9065, 88
      %v9086 = vpop.permute.xlu0 %9085
      %9087 = vrot.lane.b32.xlu0 %v9066, 88
      %v9088 = vpop.permute.xlu0 %9087
      %9089 = vrot.lane.b32.xlu0 %v9067, 88
      %v9090 = vpop.permute.xlu0 %9089
      %9091 = vrot.lane.b32.xlu0 %v9068, 88
      %v9092 = vpop.permute.xlu0 %9091
      %9093 = vrot.lane.b32.xlu0 %v9069, 88
      %v9094 = vpop.permute.xlu0 %9093
      %9095 = vrot.lane.b32.xlu0 %v9070, 88
      %v9096 = vpop.permute.xlu0 %9095
      %9097 = vrot.lane.b32.xlu0 %v9071, 88
      %v9098 = vpop.permute.xlu0 %9097
      %9099 = vrot.lane.b32.xlu0 %v9072, 88
      %v9100 = vpop.permute.xlu0 %9099
      %9101 = vrot.lane.b32.xlu0 %v9073, 88
      %v9102 = vpop.permute.xlu0 %9101
      %9103 = vrot.lane.b32.xlu0 %v9074, 88
      %v9104 = vpop.permute.xlu0 %9103
      %9105 = vrot.lane.b32.xlu0 %v9075, 88
      %v9106 = vpop.permute.xlu0 %9105
      %9107 = vrot.lane.b32.xlu0 %v9076, 88
      %v9108 = vpop.permute.xlu0 %9107
      %vm9125 = vcmask 753344
      %9126 = vst.msk [vmem:[#allocation2] sm:$0xff] %vm9125, %v9078
      %9127 = vst.msk [vmem:[#allocation2 + $0x8] sm:$0xff] %vm9125, %v9080
      %9128 = vst.msk [vmem:[#allocation2 + $0x10] sm:$0xff] %vm9125, %v9082
      %9129 = vst.msk [vmem:[#allocation2 + $0x18] sm:$0xff] %vm9125, %v9084
      %9130 = vst.msk [vmem:[#allocation2 + $0x20] sm:$0xff] %vm9125, %v9086
      %9131 = vst.msk [vmem:[#allocation2 + $0x28] sm:$0xff] %vm9125, %v9088
      %9132 = vst.msk [vmem:[#allocation2 + $0x30] sm:$0xff] %vm9125, %v9090
      %9133 = vst.msk [vmem:[#allocation2 + $0x38] sm:$0xff] %vm9125, %v9092
      %9134 = vst.msk [vmem:[#allocation2 + $0x40] sm:$0xff] %vm9125, %v9094
      %9135 = vst.msk [vmem:[#allocation2 + $0x48] sm:$0xff] %vm9125, %v9096
      %9136 = vst.msk [vmem:[#allocation2 + $0x50] sm:$0xff] %vm9125, %v9098
      %9137 = vst.msk [vmem:[#allocation2 + $0x58] sm:$0xff] %vm9125, %v9100
      %9138 = vst.msk [vmem:[#allocation2 + $0x60] sm:$0xff] %vm9125, %v9102
      %9139 = vst.msk [vmem:[#allocation2 + $0x68] sm:$0xff] %vm9125, %v9104
      %9140 = vst.msk [vmem:[#allocation2 + $0x70] sm:$0xff] %vm9125, %v9106
      %9141 = vst.msk [vmem:[#allocation2 + $0x78] sm:$0xff] %vm9125, %v9108
      %v9142 = vld [vmem:[%s8098] sm:$0xe]
      %v9143 = vld [vmem:[%s8098 + $0x4] sm:$0xf]
      %v9144 = vld [vmem:[%s8098 + $0x8] sm:$0x3]
      %v9145 = vld [vmem:[%s8098 + $0xc] sm:$0xe]
      %v9146 = vld [vmem:[%s8098 + $0x10] sm:$0xf]
      %v9147 = vld [vmem:[%s8098 + $0x14] sm:$0x3]
      %v9148 = vld [vmem:[%s8098 + $0x18] sm:$0xe]
      %v9149 = vld [vmem:[%s8098 + $0x1c] sm:$0xf]
      %v9150 = vld [vmem:[%s8098 + $0x20] sm:$0x3]
      %v9151 = vld [vmem:[%s8098 + $0x24] sm:$0xe]
      %v9152 = vld [vmem:[%s8098 + $0x28] sm:$0xf]
      %v9153 = vld [vmem:[%s8098 + $0x2c] sm:$0x3]
      %v9154 = vld [vmem:[%s8098 + $0x30] sm:$0xe]
      %v9155 = vld [vmem:[%s8098 + $0x34] sm:$0xf]
      %v9156 = vld [vmem:[%s8098 + $0x38] sm:$0x3]
      %v9157 = vld [vmem:[%s8098 + $0x3c] sm:$0xe]
      %v9158 = vld [vmem:[%s8098 + $0x40] sm:$0xf]
      %v9159 = vld [vmem:[%s8098 + $0x44] sm:$0x3]
      %v9160 = vld [vmem:[%s8098 + $0x48] sm:$0xe]
      %v9161 = vld [vmem:[%s8098 + $0x4c] sm:$0xf]
      %v9162 = vld [vmem:[%s8098 + $0x50] sm:$0x3]
      %v9163 = vld [vmem:[%s8098 + $0x54] sm:$0xe]
      %v9164 = vld [vmem:[%s8098 + $0x58] sm:$0xf]
      %v9165 = vld [vmem:[%s8098 + $0x5c] sm:$0x3]
      %v9166 = vld [vmem:[%s8098 + $0x60] sm:$0xe]
      %v9167 = vld [vmem:[%s8098 + $0x64] sm:$0xf]
      %v9168 = vld [vmem:[%s8098 + $0x68] sm:$0x3]
      %v9169 = vld [vmem:[%s8098 + $0x6c] sm:$0xe]
      %v9170 = vld [vmem:[%s8098 + $0x70] sm:$0xf]
      %v9171 = vld [vmem:[%s8098 + $0x74] sm:$0x3]
      %v9172 = vld [vmem:[%s8098 + $0x78] sm:$0xe]
      %v9173 = vld [vmem:[%s8098 + $0x7c] sm:$0xf]
      %v9174 = vld [vmem:[%s8098 + $0x80] sm:$0x3]
      %v9175 = vld [vmem:[%s8098 + $0x84] sm:$0xe]
      %v9176 = vld [vmem:[%s8098 + $0x88] sm:$0xf]
      %v9177 = vld [vmem:[%s8098 + $0x8c] sm:$0x3]
      %v9178 = vld [vmem:[%s8098 + $0x90] sm:$0xe]
      %v9179 = vld [vmem:[%s8098 + $0x94] sm:$0xf]
      %v9180 = vld [vmem:[%s8098 + $0x98] sm:$0x3]
      %v9181 = vld [vmem:[%s8098 + $0x9c] sm:$0xe]
      %v9182 = vld [vmem:[%s8098 + $0xa0] sm:$0xf]
      %v9183 = vld [vmem:[%s8098 + $0xa4] sm:$0x3]
      %v9184 = vld [vmem:[%s8098 + $0xa8] sm:$0xe]
      %v9185 = vld [vmem:[%s8098 + $0xac] sm:$0xf]
      %v9186 = vld [vmem:[%s8098 + $0xb0] sm:$0x3]
      %v9187 = vld [vmem:[%s8098 + $0xb4] sm:$0xe]
      %v9188 = vld [vmem:[%s8098 + $0xb8] sm:$0xf]
      %v9189 = vld [vmem:[%s8098 + $0xbc] sm:$0x3]
      %v9191 = vshrl.u32 %v9142, 16
      %v9193 = vrot.slane %v9191, 5
      %v9194 = vshll.u32 %v9142, 16
      %v9196 = vrot.slane %v9194, 6
      %v9197 = vor.u32 %v9193, %v9196
      %v9198 = vrot.slane %v9197, 4
      %v9200 = vshrl.u32 %v9143, 16
      %v9202 = vrot.slane %v9200, 5
      %v9203 = vshll.u32 %v9143, 16
      %v9205 = vrot.slane %v9203, 6
      %v9206 = vor.u32 %v9202, %v9205
      %v9207 = vsel %vm1290, %v9198, %v9206
      %v9208 = vrot.slane %v9206, 4
      %v9210 = vshrl.u32 %v9144, 16
      %v9212 = vrot.slane %v9210, 5
      %v9213 = vshll.u32 %v9144, 16
      %v9215 = vrot.slane %v9213, 6
      %v9216 = vor.u32 %v9212, %v9215
      %v9217 = vsel %vm1290, %v9208, %v9216
      %v9219 = vshrl.u32 %v9145, 16
      %v9221 = vrot.slane %v9219, 5
      %v9222 = vshll.u32 %v9145, 16
      %v9224 = vrot.slane %v9222, 6
      %v9225 = vor.u32 %v9221, %v9224
      %v9226 = vrot.slane %v9225, 4
      %v9228 = vshrl.u32 %v9146, 16
      %v9230 = vrot.slane %v9228, 5
      %v9231 = vshll.u32 %v9146, 16
      %v9233 = vrot.slane %v9231, 6
      %v9234 = vor.u32 %v9230, %v9233
      %v9235 = vsel %vm1290, %v9226, %v9234
      %v9236 = vrot.slane %v9234, 4
      %v9238 = vshrl.u32 %v9147, 16
      %v9240 = vrot.slane %v9238, 5
      %v9241 = vshll.u32 %v9147, 16
      %v9243 = vrot.slane %v9241, 6
      %v9244 = vor.u32 %v9240, %v9243
      %v9245 = vsel %vm1290, %v9236, %v9244
      %v9247 = vshrl.u32 %v9148, 16
      %v9249 = vrot.slane %v9247, 5
      %v9250 = vshll.u32 %v9148, 16
      %v9252 = vrot.slane %v9250, 6
      %v9253 = vor.u32 %v9249, %v9252
      %v9254 = vrot.slane %v9253, 4
      %v9256 = vshrl.u32 %v9149, 16
      %v9258 = vrot.slane %v9256, 5
      %v9259 = vshll.u32 %v9149, 16
      %v9261 = vrot.slane %v9259, 6
      %v9262 = vor.u32 %v9258, %v9261
      %v9263 = vsel %vm1290, %v9254, %v9262
      %v9264 = vrot.slane %v9262, 4
      %v9266 = vshrl.u32 %v9150, 16
      %v9268 = vrot.slane %v9266, 5
      %v9269 = vshll.u32 %v9150, 16
      %v9271 = vrot.slane %v9269, 6
      %v9272 = vor.u32 %v9268, %v9271
      %v9273 = vsel %vm1290, %v9264, %v9272
      %v9275 = vshrl.u32 %v9151, 16
      %v9277 = vrot.slane %v9275, 5
      %v9278 = vshll.u32 %v9151, 16
      %v9280 = vrot.slane %v9278, 6
      %v9281 = vor.u32 %v9277, %v9280
      %v9282 = vrot.slane %v9281, 4
      %v9284 = vshrl.u32 %v9152, 16
      %v9286 = vrot.slane %v9284, 5
      %v9287 = vshll.u32 %v9152, 16
      %v9289 = vrot.slane %v9287, 6
      %v9290 = vor.u32 %v9286, %v9289
      %v9291 = vsel %vm1290, %v9282, %v9290
      %v9292 = vrot.slane %v9290, 4
      %v9294 = vshrl.u32 %v9153, 16
      %v9296 = vrot.slane %v9294, 5
      %v9297 = vshll.u32 %v9153, 16
      %v9299 = vrot.slane %v9297, 6
      %v9300 = vor.u32 %v9296, %v9299
      %v9301 = vsel %vm1290, %v9292, %v9300
      %v9303 = vshrl.u32 %v9154, 16
      %v9305 = vrot.slane %v9303, 5
      %v9306 = vshll.u32 %v9154, 16
      %v9308 = vrot.slane %v9306, 6
      %v9309 = vor.u32 %v9305, %v9308
      %v9310 = vrot.slane %v9309, 4
      %v9312 = vshrl.u32 %v9155, 16
      %v9314 = vrot.slane %v9312, 5
      %v9315 = vshll.u32 %v9155, 16
      %v9317 = vrot.slane %v9315, 6
      %v9318 = vor.u32 %v9314, %v9317
      %v9319 = vsel %vm1290, %v9310, %v9318
      %v9320 = vrot.slane %v9318, 4
      %v9322 = vshrl.u32 %v9156, 16
      %v9324 = vrot.slane %v9322, 5
      %v9325 = vshll.u32 %v9156, 16
      %v9327 = vrot.slane %v9325, 6
      %v9328 = vor.u32 %v9324, %v9327
      %v9329 = vsel %vm1290, %v9320, %v9328
      %v9331 = vshrl.u32 %v9157, 16
      %v9333 = vrot.slane %v9331, 5
      %v9334 = vshll.u32 %v9157, 16
      %v9336 = vrot.slane %v9334, 6
      %v9337 = vor.u32 %v9333, %v9336
      %v9338 = vrot.slane %v9337, 4
      %v9340 = vshrl.u32 %v9158, 16
      %v9342 = vrot.slane %v9340, 5
      %v9343 = vshll.u32 %v9158, 16
      %v9345 = vrot.slane %v9343, 6
      %v9346 = vor.u32 %v9342, %v9345
      %v9347 = vsel %vm1290, %v9338, %v9346
      %v9348 = vrot.slane %v9346, 4
      %v9350 = vshrl.u32 %v9159, 16
      %v9352 = vrot.slane %v9350, 5
      %v9353 = vshll.u32 %v9159, 16
      %v9355 = vrot.slane %v9353, 6
      %v9356 = vor.u32 %v9352, %v9355
      %v9357 = vsel %vm1290, %v9348, %v9356
      %v9359 = vshrl.u32 %v9160, 16
      %v9361 = vrot.slane %v9359, 5
      %v9362 = vshll.u32 %v9160, 16
      %v9364 = vrot.slane %v9362, 6
      %v9365 = vor.u32 %v9361, %v9364
      %v9366 = vrot.slane %v9365, 4
      %v9368 = vshrl.u32 %v9161, 16
      %v9370 = vrot.slane %v9368, 5
      %v9371 = vshll.u32 %v9161, 16
      %v9373 = vrot.slane %v9371, 6
      %v9374 = vor.u32 %v9370, %v9373
      %v9375 = vsel %vm1290, %v9366, %v9374
      %v9376 = vrot.slane %v9374, 4
      %v9378 = vshrl.u32 %v9162, 16
      %v9380 = vrot.slane %v9378, 5
      %v9381 = vshll.u32 %v9162, 16
      %v9383 = vrot.slane %v9381, 6
      %v9384 = vor.u32 %v9380, %v9383
      %v9385 = vsel %vm1290, %v9376, %v9384
      %v9387 = vshrl.u32 %v9163, 16
      %v9389 = vrot.slane %v9387, 5
      %v9390 = vshll.u32 %v9163, 16
      %v9392 = vrot.slane %v9390, 6
      %v9393 = vor.u32 %v9389, %v9392
      %v9394 = vrot.slane %v9393, 4
      %v9396 = vshrl.u32 %v9164, 16
      %v9398 = vrot.slane %v9396, 5
      %v9399 = vshll.u32 %v9164, 16
      %v9401 = vrot.slane %v9399, 6
      %v9402 = vor.u32 %v9398, %v9401
      %v9403 = vsel %vm1290, %v9394, %v9402
      %v9404 = vrot.slane %v9402, 4
      %v9406 = vshrl.u32 %v9165, 16
      %v9408 = vrot.slane %v9406, 5
      %v9409 = vshll.u32 %v9165, 16
      %v9411 = vrot.slane %v9409, 6
      %v9412 = vor.u32 %v9408, %v9411
      %v9413 = vsel %vm1290, %v9404, %v9412
      %v9415 = vshrl.u32 %v9166, 16
      %v9417 = vrot.slane %v9415, 5
      %v9418 = vshll.u32 %v9166, 16
      %v9420 = vrot.slane %v9418, 6
      %v9421 = vor.u32 %v9417, %v9420
      %v9422 = vrot.slane %v9421, 4
      %v9424 = vshrl.u32 %v9167, 16
      %v9426 = vrot.slane %v9424, 5
      %v9427 = vshll.u32 %v9167, 16
      %v9429 = vrot.slane %v9427, 6
      %v9430 = vor.u32 %v9426, %v9429
      %v9431 = vsel %vm1290, %v9422, %v9430
      %v9432 = vrot.slane %v9430, 4
      %v9434 = vshrl.u32 %v9168, 16
      %v9436 = vrot.slane %v9434, 5
      %v9437 = vshll.u32 %v9168, 16
      %v9439 = vrot.slane %v9437, 6
      %v9440 = vor.u32 %v9436, %v9439
      %v9441 = vsel %vm1290, %v9432, %v9440
      %v9443 = vshrl.u32 %v9169, 16
      %v9445 = vrot.slane %v9443, 5
      %v9446 = vshll.u32 %v9169, 16
      %v9448 = vrot.slane %v9446, 6
      %v9449 = vor.u32 %v9445, %v9448
      %v9450 = vrot.slane %v9449, 4
      %v9452 = vshrl.u32 %v9170, 16
      %v9454 = vrot.slane %v9452, 5
      %v9455 = vshll.u32 %v9170, 16
      %v9457 = vrot.slane %v9455, 6
      %v9458 = vor.u32 %v9454, %v9457
      %v9459 = vsel %vm1290, %v9450, %v9458
      %v9460 = vrot.slane %v9458, 4
      %v9462 = vshrl.u32 %v9171, 16
      %v9464 = vrot.slane %v9462, 5
      %v9465 = vshll.u32 %v9171, 16
      %v9467 = vrot.slane %v9465, 6
      %v9468 = vor.u32 %v9464, %v9467
      %v9469 = vsel %vm1290, %v9460, %v9468
      %v9471 = vshrl.u32 %v9172, 16
      %v9473 = vrot.slane %v9471, 5
      %v9474 = vshll.u32 %v9172, 16
      %v9476 = vrot.slane %v9474, 6
      %v9477 = vor.u32 %v9473, %v9476
      %v9478 = vrot.slane %v9477, 4
      %v9480 = vshrl.u32 %v9173, 16
      %v9482 = vrot.slane %v9480, 5
      %v9483 = vshll.u32 %v9173, 16
      %v9485 = vrot.slane %v9483, 6
      %v9486 = vor.u32 %v9482, %v9485
      %v9487 = vsel %vm1290, %v9478, %v9486
      %v9488 = vrot.slane %v9486, 4
      %v9490 = vshrl.u32 %v9174, 16
      %v9492 = vrot.slane %v9490, 5
      %v9493 = vshll.u32 %v9174, 16
      %v9495 = vrot.slane %v9493, 6
      %v9496 = vor.u32 %v9492, %v9495
      %v9497 = vsel %vm1290, %v9488, %v9496
      %v9499 = vshrl.u32 %v9175, 16
      %v9501 = vrot.slane %v9499, 5
      %v9502 = vshll.u32 %v9175, 16
      %v9504 = vrot.slane %v9502, 6
      %v9505 = vor.u32 %v9501, %v9504
      %v9506 = vrot.slane %v9505, 4
      %v9508 = vshrl.u32 %v9176, 16
      %v9510 = vrot.slane %v9508, 5
      %v9511 = vshll.u32 %v9176, 16
      %v9513 = vrot.slane %v9511, 6
      %v9514 = vor.u32 %v9510, %v9513
      %v9515 = vsel %vm1290, %v9506, %v9514
      %v9516 = vrot.slane %v9514, 4
      %v9518 = vshrl.u32 %v9177, 16
      %v9520 = vrot.slane %v9518, 5
      %v9521 = vshll.u32 %v9177, 16
      %v9523 = vrot.slane %v9521, 6
      %v9524 = vor.u32 %v9520, %v9523
      %v9525 = vsel %vm1290, %v9516, %v9524
      %v9527 = vshrl.u32 %v9178, 16
      %v9529 = vrot.slane %v9527, 5
      %v9530 = vshll.u32 %v9178, 16
      %v9532 = vrot.slane %v9530, 6
      %v9533 = vor.u32 %v9529, %v9532
      %v9534 = vrot.slane %v9533, 4
      %v9536 = vshrl.u32 %v9179, 16
      %v9538 = vrot.slane %v9536, 5
      %v9539 = vshll.u32 %v9179, 16
      %v9541 = vrot.slane %v9539, 6
      %v9542 = vor.u32 %v9538, %v9541
      %v9543 = vsel %vm1290, %v9534, %v9542
      %v9544 = vrot.slane %v9542, 4
      %v9546 = vshrl.u32 %v9180, 16
      %v9548 = vrot.slane %v9546, 5
      %v9549 = vshll.u32 %v9180, 16
      %v9551 = vrot.slane %v9549, 6
      %v9552 = vor.u32 %v9548, %v9551
      %v9553 = vsel %vm1290, %v9544, %v9552
      %v9555 = vshrl.u32 %v9181, 16
      %v9557 = vrot.slane %v9555, 5
      %v9558 = vshll.u32 %v9181, 16
      %v9560 = vrot.slane %v9558, 6
      %v9561 = vor.u32 %v9557, %v9560
      %v9562 = vrot.slane %v9561, 4
      %v9564 = vshrl.u32 %v9182, 16
      %v9566 = vrot.slane %v9564, 5
      %v9567 = vshll.u32 %v9182, 16
      %v9569 = vrot.slane %v9567, 6
      %v9570 = vor.u32 %v9566, %v9569
      %v9571 = vsel %vm1290, %v9562, %v9570
      %v9572 = vrot.slane %v9570, 4
      %v9574 = vshrl.u32 %v9183, 16
      %v9576 = vrot.slane %v9574, 5
      %v9577 = vshll.u32 %v9183, 16
      %v9579 = vrot.slane %v9577, 6
      %v9580 = vor.u32 %v9576, %v9579
      %v9581 = vsel %vm1290, %v9572, %v9580
      %v9583 = vshrl.u32 %v9184, 16
      %v9585 = vrot.slane %v9583, 5
      %v9586 = vshll.u32 %v9184, 16
      %v9588 = vrot.slane %v9586, 6
      %v9589 = vor.u32 %v9585, %v9588
      %v9590 = vrot.slane %v9589, 4
      %v9592 = vshrl.u32 %v9185, 16
      %v9594 = vrot.slane %v9592, 5
      %v9595 = vshll.u32 %v9185, 16
      %v9597 = vrot.slane %v9595, 6
      %v9598 = vor.u32 %v9594, %v9597
      %v9599 = vsel %vm1290, %v9590, %v9598
      %v9600 = vrot.slane %v9598, 4
      %v9602 = vshrl.u32 %v9186, 16
      %v9604 = vrot.slane %v9602, 5
      %v9605 = vshll.u32 %v9186, 16
      %v9607 = vrot.slane %v9605, 6
      %v9608 = vor.u32 %v9604, %v9607
      %v9609 = vsel %vm1290, %v9600, %v9608
      %v9611 = vshrl.u32 %v9187, 16
      %v9613 = vrot.slane %v9611, 5
      %v9614 = vshll.u32 %v9187, 16
      %v9616 = vrot.slane %v9614, 6
      %v9617 = vor.u32 %v9613, %v9616
      %v9618 = vrot.slane %v9617, 4
      %v9620 = vshrl.u32 %v9188, 16
      %v9622 = vrot.slane %v9620, 5
      %v9623 = vshll.u32 %v9188, 16
      %v9625 = vrot.slane %v9623, 6
      %v9626 = vor.u32 %v9622, %v9625
      %v9627 = vsel %vm1290, %v9618, %v9626
      %v9628 = vrot.slane %v9626, 4
      %v9630 = vshrl.u32 %v9189, 16
      %v9632 = vrot.slane %v9630, 5
      %v9633 = vshll.u32 %v9189, 16
      %v9635 = vrot.slane %v9633, 6
      %v9636 = vor.u32 %v9632, %v9635
      %v9637 = vsel %vm1290, %v9628, %v9636
      %v9638 = vunpack.c.l.b16 %v9207
      %v9639 = vunpack.c.l.b16 %v9217
      %v9640 = vunpack.c.l.b16 %v9235
      %v9641 = vunpack.c.l.b16 %v9245
      %v9642 = vunpack.c.l.b16 %v9263
      %v9643 = vunpack.c.l.b16 %v9273
      %v9644 = vunpack.c.l.b16 %v9291
      %v9645 = vunpack.c.l.b16 %v9301
      %v9646 = vunpack.c.l.b16 %v9319
      %v9647 = vunpack.c.l.b16 %v9329
      %v9648 = vunpack.c.l.b16 %v9347
      %v9649 = vunpack.c.l.b16 %v9357
      %v9650 = vunpack.c.l.b16 %v9375
      %v9651 = vunpack.c.l.b16 %v9385
      %v9652 = vunpack.c.l.b16 %v9403
      %v9653 = vunpack.c.l.b16 %v9413
      %v9654 = vunpack.c.l.b16 %v9431
      %v9655 = vunpack.c.l.b16 %v9441
      %v9656 = vunpack.c.l.b16 %v9459
      %v9657 = vunpack.c.l.b16 %v9469
      %v9658 = vunpack.c.l.b16 %v9487
      %v9659 = vunpack.c.l.b16 %v9497
      %v9660 = vunpack.c.l.b16 %v9515
      %v9661 = vunpack.c.l.b16 %v9525
      %v9662 = vunpack.c.l.b16 %v9543
      %v9663 = vunpack.c.l.b16 %v9553
      %v9664 = vunpack.c.l.b16 %v9571
      %v9665 = vunpack.c.l.b16 %v9581
      %v9666 = vunpack.c.l.b16 %v9599
      %v9667 = vunpack.c.l.b16 %v9609
      %v9668 = vunpack.c.l.b16 %v9627
      %v9669 = vunpack.c.l.b16 %v9637
      %v9670 = vpack.c.b16 %v9639, %v9638
      %v9671 = vpack.c.b16 %v9641, %v9640
      %v9672 = vpack.c.b16 %v9643, %v9642
      %v9673 = vpack.c.b16 %v9645, %v9644
      %v9674 = vpack.c.b16 %v9647, %v9646
      %v9675 = vpack.c.b16 %v9649, %v9648
      %v9676 = vpack.c.b16 %v9651, %v9650
      %v9677 = vpack.c.b16 %v9653, %v9652
      %v9678 = vpack.c.b16 %v9655, %v9654
      %v9679 = vpack.c.b16 %v9657, %v9656
      %v9680 = vpack.c.b16 %v9659, %v9658
      %v9681 = vpack.c.b16 %v9661, %v9660
      %v9682 = vpack.c.b16 %v9663, %v9662
      %v9683 = vpack.c.b16 %v9665, %v9664
      %v9684 = vpack.c.b16 %v9667, %v9666
      %v9685 = vpack.c.b16 %v9669, %v9668
      %9686 = vrot.lane.b32.xlu0 %v9670, 92
      %v9687 = vpop.permute.xlu0 %9686
      %9688 = vrot.lane.b32.xlu0 %v9671, 92
      %v9689 = vpop.permute.xlu0 %9688
      %9690 = vrot.lane.b32.xlu0 %v9672, 92
      %v9691 = vpop.permute.xlu0 %9690
      %9692 = vrot.lane.b32.xlu0 %v9673, 92
      %v9693 = vpop.permute.xlu0 %9692
      %9694 = vrot.lane.b32.xlu0 %v9674, 92
      %v9695 = vpop.permute.xlu0 %9694
      %9696 = vrot.lane.b32.xlu0 %v9675, 92
      %v9697 = vpop.permute.xlu0 %9696
      %9698 = vrot.lane.b32.xlu0 %v9676, 92
      %v9699 = vpop.permute.xlu0 %9698
      %9700 = vrot.lane.b32.xlu0 %v9677, 92
      %v9701 = vpop.permute.xlu0 %9700
      %9702 = vrot.lane.b32.xlu0 %v9678, 92
      %v9703 = vpop.permute.xlu0 %9702
      %9704 = vrot.lane.b32.xlu0 %v9679, 92
      %v9705 = vpop.permute.xlu0 %9704
      %9706 = vrot.lane.b32.xlu0 %v9680, 92
      %v9707 = vpop.permute.xlu0 %9706
      %9708 = vrot.lane.b32.xlu0 %v9681, 92
      %v9709 = vpop.permute.xlu0 %9708
      %9710 = vrot.lane.b32.xlu0 %v9682, 92
      %v9711 = vpop.permute.xlu0 %9710
      %9712 = vrot.lane.b32.xlu0 %v9683, 92
      %v9713 = vpop.permute.xlu0 %9712
      %9714 = vrot.lane.b32.xlu0 %v9684, 92
      %v9715 = vpop.permute.xlu0 %9714
      %9716 = vrot.lane.b32.xlu0 %v9685, 92
      %v9717 = vpop.permute.xlu0 %9716
      %vm9734 = vcmask 786144
      %9735 = vst.msk [vmem:[#allocation2] sm:$0xff] %vm9734, %v9687
      %9736 = vst.msk [vmem:[#allocation2 + $0x8] sm:$0xff] %vm9734, %v9689
      %9737 = vst.msk [vmem:[#allocation2 + $0x10] sm:$0xff] %vm9734, %v9691
      %9738 = vst.msk [vmem:[#allocation2 + $0x18] sm:$0xff] %vm9734, %v9693
      %9739 = vst.msk [vmem:[#allocation2 + $0x20] sm:$0xff] %vm9734, %v9695
      %9740 = vst.msk [vmem:[#allocation2 + $0x28] sm:$0xff] %vm9734, %v9697
      %9741 = vst.msk [vmem:[#allocation2 + $0x30] sm:$0xff] %vm9734, %v9699
      %9742 = vst.msk [vmem:[#allocation2 + $0x38] sm:$0xff] %vm9734, %v9701
      %9743 = vst.msk [vmem:[#allocation2 + $0x40] sm:$0xff] %vm9734, %v9703
      %9744 = vst.msk [vmem:[#allocation2 + $0x48] sm:$0xff] %vm9734, %v9705
      %9745 = vst.msk [vmem:[#allocation2 + $0x50] sm:$0xff] %vm9734, %v9707
      %9746 = vst.msk [vmem:[#allocation2 + $0x58] sm:$0xff] %vm9734, %v9709
      %9747 = vst.msk [vmem:[#allocation2 + $0x60] sm:$0xff] %vm9734, %v9711
      %9748 = vst.msk [vmem:[#allocation2 + $0x68] sm:$0xff] %vm9734, %v9713
      %9749 = vst.msk [vmem:[#allocation2 + $0x70] sm:$0xff] %vm9734, %v9715
      %9750 = vst.msk [vmem:[#allocation2 + $0x78] sm:$0xff] %vm9734, %v9717
      %v9751 = vld [vmem:[%s8098] sm:$0xc]
      %v9752 = vld [vmem:[%s8098 + $0x4] sm:$0xf]
      %v9753 = vld [vmem:[%s8098 + $0x8] sm:$0x3]
      %v9754 = vld [vmem:[%s8098 + $0xc] sm:$0xc]
      %v9755 = vld [vmem:[%s8098 + $0x10] sm:$0xf]
      %v9756 = vld [vmem:[%s8098 + $0x14] sm:$0x3]
      %v9757 = vld [vmem:[%s8098 + $0x18] sm:$0xc]
      %v9758 = vld [vmem:[%s8098 + $0x1c] sm:$0xf]
      %v9759 = vld [vmem:[%s8098 + $0x20] sm:$0x3]
      %v9760 = vld [vmem:[%s8098 + $0x24] sm:$0xc]
      %v9761 = vld [vmem:[%s8098 + $0x28] sm:$0xf]
      %v9762 = vld [vmem:[%s8098 + $0x2c] sm:$0x3]
      %v9763 = vld [vmem:[%s8098 + $0x30] sm:$0xc]
      %v9764 = vld [vmem:[%s8098 + $0x34] sm:$0xf]
      %v9765 = vld [vmem:[%s8098 + $0x38] sm:$0x3]
      %v9766 = vld [vmem:[%s8098 + $0x3c] sm:$0xc]
      %v9767 = vld [vmem:[%s8098 + $0x40] sm:$0xf]
      %v9768 = vld [vmem:[%s8098 + $0x44] sm:$0x3]
      %v9769 = vld [vmem:[%s8098 + $0x48] sm:$0xc]
      %v9770 = vld [vmem:[%s8098 + $0x4c] sm:$0xf]
      %v9771 = vld [vmem:[%s8098 + $0x50] sm:$0x3]
      %v9772 = vld [vmem:[%s8098 + $0x54] sm:$0xc]
      %v9773 = vld [vmem:[%s8098 + $0x58] sm:$0xf]
      %v9774 = vld [vmem:[%s8098 + $0x5c] sm:$0x3]
      %v9775 = vld [vmem:[%s8098 + $0x60] sm:$0xc]
      %v9776 = vld [vmem:[%s8098 + $0x64] sm:$0xf]
      %v9777 = vld [vmem:[%s8098 + $0x68] sm:$0x3]
      %v9778 = vld [vmem:[%s8098 + $0x6c] sm:$0xc]
      %v9779 = vld [vmem:[%s8098 + $0x70] sm:$0xf]
      %v9780 = vld [vmem:[%s8098 + $0x74] sm:$0x3]
      %v9781 = vld [vmem:[%s8098 + $0x78] sm:$0xc]
      %v9782 = vld [vmem:[%s8098 + $0x7c] sm:$0xf]
      %v9783 = vld [vmem:[%s8098 + $0x80] sm:$0x3]
      %v9784 = vld [vmem:[%s8098 + $0x84] sm:$0xc]
      %v9785 = vld [vmem:[%s8098 + $0x88] sm:$0xf]
      %v9786 = vld [vmem:[%s8098 + $0x8c] sm:$0x3]
      %v9787 = vld [vmem:[%s8098 + $0x90] sm:$0xc]
      %v9788 = vld [vmem:[%s8098 + $0x94] sm:$0xf]
      %v9789 = vld [vmem:[%s8098 + $0x98] sm:$0x3]
      %v9790 = vld [vmem:[%s8098 + $0x9c] sm:$0xc]
      %v9791 = vld [vmem:[%s8098 + $0xa0] sm:$0xf]
      %v9792 = vld [vmem:[%s8098 + $0xa4] sm:$0x3]
      %v9793 = vld [vmem:[%s8098 + $0xa8] sm:$0xc]
      %v9794 = vld [vmem:[%s8098 + $0xac] sm:$0xf]
      %v9795 = vld [vmem:[%s8098 + $0xb0] sm:$0x3]
      %v9796 = vld [vmem:[%s8098 + $0xb4] sm:$0xc]
      %v9797 = vld [vmem:[%s8098 + $0xb8] sm:$0xf]
      %v9798 = vld [vmem:[%s8098 + $0xbc] sm:$0x3]
      %v9847 = vrot.slane %v9751, 6
      %v9848 = vrot.slane %v9847, 4
      %v9849 = vrot.slane %v9752, 6
      %v9850 = vsel %vm1950, %v9848, %v9849
      %v9851 = vrot.slane %v9849, 4
      %v9852 = vrot.slane %v9753, 6
      %v9853 = vsel %vm1950, %v9851, %v9852
      %v9854 = vrot.slane %v9754, 6
      %v9855 = vrot.slane %v9854, 4
      %v9856 = vrot.slane %v9755, 6
      %v9857 = vsel %vm1950, %v9855, %v9856
      %v9858 = vrot.slane %v9856, 4
      %v9859 = vrot.slane %v9756, 6
      %v9860 = vsel %vm1950, %v9858, %v9859
      %v9861 = vrot.slane %v9757, 6
      %v9862 = vrot.slane %v9861, 4
      %v9863 = vrot.slane %v9758, 6
      %v9864 = vsel %vm1950, %v9862, %v9863
      %v9865 = vrot.slane %v9863, 4
      %v9866 = vrot.slane %v9759, 6
      %v9867 = vsel %vm1950, %v9865, %v9866
      %v9868 = vrot.slane %v9760, 6
      %v9869 = vrot.slane %v9868, 4
      %v9870 = vrot.slane %v9761, 6
      %v9871 = vsel %vm1950, %v9869, %v9870
      %v9872 = vrot.slane %v9870, 4
      %v9873 = vrot.slane %v9762, 6
      %v9874 = vsel %vm1950, %v9872, %v9873
      %v9875 = vrot.slane %v9763, 6
      %v9876 = vrot.slane %v9875, 4
      %v9877 = vrot.slane %v9764, 6
      %v9878 = vsel %vm1950, %v9876, %v9877
      %v9879 = vrot.slane %v9877, 4
      %v9880 = vrot.slane %v9765, 6
      %v9881 = vsel %vm1950, %v9879, %v9880
      %v9882 = vrot.slane %v9766, 6
      %v9883 = vrot.slane %v9882, 4
      %v9884 = vrot.slane %v9767, 6
      %v9885 = vsel %vm1950, %v9883, %v9884
      %v9886 = vrot.slane %v9884, 4
      %v9887 = vrot.slane %v9768, 6
      %v9888 = vsel %vm1950, %v9886, %v9887
      %v9889 = vrot.slane %v9769, 6
      %v9890 = vrot.slane %v9889, 4
      %v9891 = vrot.slane %v9770, 6
      %v9892 = vsel %vm1950, %v9890, %v9891
      %v9893 = vrot.slane %v9891, 4
      %v9894 = vrot.slane %v9771, 6
      %v9895 = vsel %vm1950, %v9893, %v9894
      %v9896 = vrot.slane %v9772, 6
      %v9897 = vrot.slane %v9896, 4
      %v9898 = vrot.slane %v9773, 6
      %v9899 = vsel %vm1950, %v9897, %v9898
      %v9900 = vrot.slane %v9898, 4
      %v9901 = vrot.slane %v9774, 6
      %v9902 = vsel %vm1950, %v9900, %v9901
      %v9903 = vrot.slane %v9775, 6
      %v9904 = vrot.slane %v9903, 4
      %v9905 = vrot.slane %v9776, 6
      %v9906 = vsel %vm1950, %v9904, %v9905
      %v9907 = vrot.slane %v9905, 4
      %v9908 = vrot.slane %v9777, 6
      %v9909 = vsel %vm1950, %v9907, %v9908
      %v9910 = vrot.slane %v9778, 6
      %v9911 = vrot.slane %v9910, 4
      %v9912 = vrot.slane %v9779, 6
      %v9913 = vsel %vm1950, %v9911, %v9912
      %v9914 = vrot.slane %v9912, 4
      %v9915 = vrot.slane %v9780, 6
      %v9916 = vsel %vm1950, %v9914, %v9915
      %v9917 = vrot.slane %v9781, 6
      %v9918 = vrot.slane %v9917, 4
      %v9919 = vrot.slane %v9782, 6
      %v9920 = vsel %vm1950, %v9918, %v9919
      %v9921 = vrot.slane %v9919, 4
      %v9922 = vrot.slane %v9783, 6
      %v9923 = vsel %vm1950, %v9921, %v9922
      %v9924 = vrot.slane %v9784, 6
      %v9925 = vrot.slane %v9924, 4
      %v9926 = vrot.slane %v9785, 6
      %v9927 = vsel %vm1950, %v9925, %v9926
      %v9928 = vrot.slane %v9926, 4
      %v9929 = vrot.slane %v9786, 6
      %v9930 = vsel %vm1950, %v9928, %v9929
      %v9931 = vrot.slane %v9787, 6
      %v9932 = vrot.slane %v9931, 4
      %v9933 = vrot.slane %v9788, 6
      %v9934 = vsel %vm1950, %v9932, %v9933
      %v9935 = vrot.slane %v9933, 4
      %v9936 = vrot.slane %v9789, 6
      %v9937 = vsel %vm1950, %v9935, %v9936
      %v9938 = vrot.slane %v9790, 6
      %v9939 = vrot.slane %v9938, 4
      %v9940 = vrot.slane %v9791, 6
      %v9941 = vsel %vm1950, %v9939, %v9940
      %v9942 = vrot.slane %v9940, 4
      %v9943 = vrot.slane %v9792, 6
      %v9944 = vsel %vm1950, %v9942, %v9943
      %v9945 = vrot.slane %v9793, 6
      %v9946 = vrot.slane %v9945, 4
      %v9947 = vrot.slane %v9794, 6
      %v9948 = vsel %vm1950, %v9946, %v9947
      %v9949 = vrot.slane %v9947, 4
      %v9950 = vrot.slane %v9795, 6
      %v9951 = vsel %vm1950, %v9949, %v9950
      %v9952 = vrot.slane %v9796, 6
      %v9953 = vrot.slane %v9952, 4
      %v9954 = vrot.slane %v9797, 6
      %v9955 = vsel %vm1950, %v9953, %v9954
      %v9956 = vrot.slane %v9954, 4
      %v9957 = vrot.slane %v9798, 6
      %v9958 = vsel %vm1950, %v9956, %v9957
      %v9959 = vunpack.c.l.b16 %v9850
      %v9960 = vunpack.c.l.b16 %v9853
      %v9961 = vunpack.c.l.b16 %v9857
      %v9962 = vunpack.c.l.b16 %v9860
      %v9963 = vunpack.c.l.b16 %v9864
      %v9964 = vunpack.c.l.b16 %v9867
      %v9965 = vunpack.c.l.b16 %v9871
      %v9966 = vunpack.c.l.b16 %v9874
      %v9967 = vunpack.c.l.b16 %v9878
      %v9968 = vunpack.c.l.b16 %v9881
      %v9969 = vunpack.c.l.b16 %v9885
      %v9970 = vunpack.c.l.b16 %v9888
      %v9971 = vunpack.c.l.b16 %v9892
      %v9972 = vunpack.c.l.b16 %v9895
      %v9973 = vunpack.c.l.b16 %v9899
      %v9974 = vunpack.c.l.b16 %v9902
      %v9975 = vunpack.c.l.b16 %v9906
      %v9976 = vunpack.c.l.b16 %v9909
      %v9977 = vunpack.c.l.b16 %v9913
      %v9978 = vunpack.c.l.b16 %v9916
      %v9979 = vunpack.c.l.b16 %v9920
      %v9980 = vunpack.c.l.b16 %v9923
      %v9981 = vunpack.c.l.b16 %v9927
      %v9982 = vunpack.c.l.b16 %v9930
      %v9983 = vunpack.c.l.b16 %v9934
      %v9984 = vunpack.c.l.b16 %v9937
      %v9985 = vunpack.c.l.b16 %v9941
      %v9986 = vunpack.c.l.b16 %v9944
      %v9987 = vunpack.c.l.b16 %v9948
      %v9988 = vunpack.c.l.b16 %v9951
      %v9989 = vunpack.c.l.b16 %v9955
      %v9990 = vunpack.c.l.b16 %v9958
      %v9991 = vpack.c.b16 %v9960, %v9959
      %v9992 = vpack.c.b16 %v9962, %v9961
      %v9993 = vpack.c.b16 %v9964, %v9963
      %v9994 = vpack.c.b16 %v9966, %v9965
      %v9995 = vpack.c.b16 %v9968, %v9967
      %v9996 = vpack.c.b16 %v9970, %v9969
      %v9997 = vpack.c.b16 %v9972, %v9971
      %v9998 = vpack.c.b16 %v9974, %v9973
      %v9999 = vpack.c.b16 %v9976, %v9975
      %v10000 = vpack.c.b16 %v9978, %v9977
      %v10001 = vpack.c.b16 %v9980, %v9979
      %v10002 = vpack.c.b16 %v9982, %v9981
      %v10003 = vpack.c.b16 %v9984, %v9983
      %v10004 = vpack.c.b16 %v9986, %v9985
      %v10005 = vpack.c.b16 %v9988, %v9987
      %v10006 = vpack.c.b16 %v9990, %v9989
      %10007 = vrot.lane.b32.xlu0 %v9991, 96
      %v10008 = vpop.permute.xlu0 %10007
      %10009 = vrot.lane.b32.xlu0 %v9992, 96
      %v10010 = vpop.permute.xlu0 %10009
      %10011 = vrot.lane.b32.xlu0 %v9993, 96
      %v10012 = vpop.permute.xlu0 %10011
      %10013 = vrot.lane.b32.xlu0 %v9994, 96
      %v10014 = vpop.permute.xlu0 %10013
      %10015 = vrot.lane.b32.xlu0 %v9995, 96
      %v10016 = vpop.permute.xlu0 %10015
      %10017 = vrot.lane.b32.xlu0 %v9996, 96
      %v10018 = vpop.permute.xlu0 %10017
      %10019 = vrot.lane.b32.xlu0 %v9997, 96
      %v10020 = vpop.permute.xlu0 %10019
      %10021 = vrot.lane.b32.xlu0 %v9998, 96
      %v10022 = vpop.permute.xlu0 %10021
      %10023 = vrot.lane.b32.xlu0 %v9999, 96
      %v10024 = vpop.permute.xlu0 %10023
      %10025 = vrot.lane.b32.xlu0 %v10000, 96
      %v10026 = vpop.permute.xlu0 %10025
      %10027 = vrot.lane.b32.xlu0 %v10001, 96
      %v10028 = vpop.permute.xlu0 %10027
      %10029 = vrot.lane.b32.xlu0 %v10002, 96
      %v10030 = vpop.permute.xlu0 %10029
      %10031 = vrot.lane.b32.xlu0 %v10003, 96
      %v10032 = vpop.permute.xlu0 %10031
      %10033 = vrot.lane.b32.xlu0 %v10004, 96
      %v10034 = vpop.permute.xlu0 %10033
      %10035 = vrot.lane.b32.xlu0 %v10005, 96
      %v10036 = vpop.permute.xlu0 %10035
      %10037 = vrot.lane.b32.xlu0 %v10006, 96
      %v10038 = vpop.permute.xlu0 %10037
      %vm10055 = vcmask 818944
      %10056 = vst.msk [vmem:[#allocation2] sm:$0xff] %vm10055, %v10008
      %10057 = vst.msk [vmem:[#allocation2 + $0x8] sm:$0xff] %vm10055, %v10010
      %10058 = vst.msk [vmem:[#allocation2 + $0x10] sm:$0xff] %vm10055, %v10012
      %10059 = vst.msk [vmem:[#allocation2 + $0x18] sm:$0xff] %vm10055, %v10014
      %10060 = vst.msk [vmem:[#allocation2 + $0x20] sm:$0xff] %vm10055, %v10016
      %10061 = vst.msk [vmem:[#allocation2 + $0x28] sm:$0xff] %vm10055, %v10018
      %10062 = vst.msk [vmem:[#allocation2 + $0x30] sm:$0xff] %vm10055, %v10020
      %10063 = vst.msk [vmem:[#allocation2 + $0x38] sm:$0xff] %vm10055, %v10022
      %10064 = vst.msk [vmem:[#allocation2 + $0x40] sm:$0xff] %vm10055, %v10024
      %10065 = vst.msk [vmem:[#allocation2 + $0x48] sm:$0xff] %vm10055, %v10026
      %10066 = vst.msk [vmem:[#allocation2 + $0x50] sm:$0xff] %vm10055, %v10028
      %10067 = vst.msk [vmem:[#allocation2 + $0x58] sm:$0xff] %vm10055, %v10030
      %10068 = vst.msk [vmem:[#allocation2 + $0x60] sm:$0xff] %vm10055, %v10032
      %10069 = vst.msk [vmem:[#allocation2 + $0x68] sm:$0xff] %vm10055, %v10034
      %10070 = vst.msk [vmem:[#allocation2 + $0x70] sm:$0xff] %vm10055, %v10036
      %10071 = vst.msk [vmem:[#allocation2 + $0x78] sm:$0xff] %vm10055, %v10038
      %v10072 = vld [vmem:[#allocation2] sm:$0xff]
      %v10073 = vld [vmem:[#allocation2 + $0x8] sm:$0xff]
      %v10074 = vld [vmem:[#allocation2 + $0x10] sm:$0xff]
      %v10075 = vld [vmem:[#allocation2 + $0x18] sm:$0xff]
      %v10076 = vld [vmem:[#allocation2 + $0x20] sm:$0xff]
      %v10077 = vld [vmem:[#allocation2 + $0x28] sm:$0xff]
      %v10078 = vld [vmem:[#allocation2 + $0x30] sm:$0xff]
      %v10079 = vld [vmem:[#allocation2 + $0x38] sm:$0xff]
      %v10080 = vld [vmem:[#allocation2 + $0x40] sm:$0xff]
      %v10081 = vld [vmem:[#allocation2 + $0x48] sm:$0xff]
      %v10082 = vld [vmem:[#allocation2 + $0x50] sm:$0xff]
      %v10083 = vld [vmem:[#allocation2 + $0x58] sm:$0xff]
      %v10084 = vld [vmem:[#allocation2 + $0x60] sm:$0xff]
      %v10085 = vld [vmem:[#allocation2 + $0x68] sm:$0xff]
      %v10086 = vld [vmem:[#allocation2 + $0x70] sm:$0xff]
      %v10087 = vld [vmem:[#allocation2 + $0x78] sm:$0xff]
      %v10088 = vld [vmem:[%s210] sm:$0xf]
      %v10089 = vld [vmem:[%s210 + $0x4] sm:$0xf]
      %v10090 = vld [vmem:[%s210 + $0x8] sm:$0xf]
      %v10091 = vld [vmem:[%s210 + $0xc] sm:$0xf]
      %v10092 = vld [vmem:[%s210 + $0x10] sm:$0xf]
      %v10093 = vld [vmem:[%s210 + $0x14] sm:$0xf]
      %v10094 = vld [vmem:[%s210 + $0x18] sm:$0xf]
      %v10095 = vld [vmem:[%s210 + $0x1c] sm:$0xf]
      %v10096 = vld [vmem:[%s210 + $0x20] sm:$0xf]
      %v10097 = vld [vmem:[%s210 + $0x24] sm:$0xf]
      %v10098 = vld [vmem:[%s210 + $0x28] sm:$0xf]
      %v10099 = vld [vmem:[%s210 + $0x2c] sm:$0xf]
      %v10100 = vld [vmem:[%s210 + $0x30] sm:$0x3]
      %v10114 = vunpack.c.l.b16 %v10088
      %v10115 = vunpack.c.l.b16 %v10089
      %v10116 = vunpack.c.l.b16 %v10090
      %v10117 = vunpack.c.l.b16 %v10091
      %v10118 = vunpack.c.l.b16 %v10092
      %v10119 = vunpack.c.l.b16 %v10093
      %v10120 = vunpack.c.l.b16 %v10094
      %v10121 = vunpack.c.l.b16 %v10095
      %v10122 = vunpack.c.l.b16 %v10096
      %v10123 = vunpack.c.l.b16 %v10097
      %v10124 = vunpack.c.l.b16 %v10098
      %v10125 = vunpack.c.l.b16 %v10099
      %v10126 = vunpack.c.l.b16 %v10100
      %v10127 = vpack.c.b16 %v10115, %v10114
      %v10128 = vpack.c.b16 %v10117, %v10116
      %v10129 = vpack.c.b16 %v10119, %v10118
      %v10130 = vpack.c.b16 %v10121, %v10120
      %v10131 = vpack.c.b16 %v10123, %v10122
      %v10132 = vpack.c.b16 %v10125, %v10124
      %v10133 = vpack.c.b16 %v10126, %v10126
      %vm10140 = vcmask 818176
      %v10142 = vsel %vm10140, %v10072, 0
      %v10145 = vsel %vm10140, %v10073, 0
      %v10148 = vsel %vm10140, %v10074, 0
      %v10151 = vsel %vm10140, %v10075, 0
      %v10154 = vsel %vm10140, %v10076, 0
      %v10157 = vsel %vm10140, %v10077, 0
      %v10160 = vsel %vm10140, %v10078, 0
      %v10163 = vsel %vm10140, %v10079, 0
      %v10166 = vsel %vm10140, %v10080, 0
      %v10169 = vsel %vm10140, %v10081, 0
      %v10172 = vsel %vm10140, %v10082, 0
      %v10175 = vsel %vm10140, %v10083, 0
      %v10178 = vsel %vm10140, %v10084, 0
      %v10181 = vsel %vm10140, %v10085, 0
      %v10184 = vsel %vm10140, %v10086, 0
      %v10187 = vsel %vm10140, %v10087, 0
      %vm10189 = vcmask 1041408
      %v10191 = vsel %vm10189, %v10133, 0
      %10193 = vmatprep.subr.bf16.mxu0 0
      %10194 = vmatpush1.bf16.msra.mxu0 %v10127
      %10195 = vmatprep.subr.bf16.mxu0 0
      %10196 = vmatpush1.bf16.msra.mxu0 %v10128
      %10197 = vmatprep.subr.bf16.mxu0 0
      %10198 = vmatpush1.bf16.msra.mxu0 %v10129
      %10199 = vmatprep.subr.bf16.mxu0 0
      %10200 = vmatpush1.bf16.msra.mxu0 %v10130
      %10201 = vmatprep.subr.bf16.mxu0 0
      %10202 = vmatpush1.bf16.msra.mxu0 %v10131
      %10203 = vmatprep.subr.bf16.mxu0 0
      %10204 = vmatpush1.bf16.msra.mxu0 %v10132
      %10205 = vmatprep.subr.bf16.mxu0 0
      %10206 = vmatpush1.bf16.msra.mxu0 %v10191
      %10207 = vmatprep.subr.bf16.mxu0 0
      %10208 = vmatpush1.bf16.msra.mxu0 0
      %10209 = vmatprep.subr.bf16.mxu0 0
      %10210 = vmatpush1.bf16.msra.mxu0 0
      %10211 = vmatprep.subr.bf16.mxu0 0
      %10212 = vmatpush1.bf16.msra.mxu0 0
      %10213 = vmatprep.subr.bf16.mxu0 0
      %10214 = vmatpush1.bf16.msra.mxu0 0
      %10215 = vmatprep.subr.bf16.mxu0 0
      %10216 = vmatpush1.bf16.msra.mxu0 0
      %10217 = vmatprep.subr.bf16.mxu0 0
      %10218 = vmatpush1.bf16.msra.mxu0 0
      %10219 = vmatprep.subr.bf16.mxu0 0
      %10220 = vmatpush1.bf16.msra.mxu0 0
      %10221 = vmatprep.subr.bf16.mxu0 0
      %10222 = vmatpush1.bf16.msra.mxu0 0
      %10223 = vmatprep.subr.bf16.mxu0 0
      %10224 = vmatpush1.bf16.msra.mxu0 0
      %10225 = vmatprep.mubr.bf16.mxu0 0
      %10226 = vmatmul.mubr.bf16.gmra.mrb[0].mxu0 %v10142
      %v10227 = vpop.f32.mrb[0].mxu0
      %v10228 = vadd.f32 0.0, %v10227
      %v10229 = vpop.f32.mrb[0].mxu0
      %v10230 = vpop.f32.mrb[0].mxu0
      %v10231 = vadd.f32 0.0, %v10230
      %v10232 = vpop.f32.mrb[0].mxu0
      %10233 = vmatprep.mubr.bf16.mxu0 0
      %10234 = vmatmul.mubr.bf16.gmra.mrb[0].mxu0 %v10145
      %v10235 = vpop.f32.mrb[0].mxu0
      %v10236 = vadd.f32 0.0, %v10235
      %v10237 = vpop.f32.mrb[0].mxu0
      %v10238 = vpop.f32.mrb[0].mxu0
      %v10239 = vadd.f32 0.0, %v10238
      %v10240 = vpop.f32.mrb[0].mxu0
      %10241 = vmatprep.mubr.bf16.mxu0 0
      %10242 = vmatmul.mubr.bf16.gmra.mrb[0].mxu0 %v10148
      %v10243 = vpop.f32.mrb[0].mxu0
      %v10244 = vadd.f32 0.0, %v10243
      %v10245 = vpop.f32.mrb[0].mxu0
      %v10246 = vpop.f32.mrb[0].mxu0
      %v10247 = vadd.f32 0.0, %v10246
      %v10248 = vpop.f32.mrb[0].mxu0
      %10249 = vmatprep.mubr.bf16.mxu0 0
      %10250 = vmatmul.mubr.bf16.gmra.mrb[0].mxu0 %v10151
      %v10251 = vpop.f32.mrb[0].mxu0
      %v10252 = vadd.f32 0.0, %v10251
      %v10253 = vpop.f32.mrb[0].mxu0
      %v10254 = vpop.f32.mrb[0].mxu0
      %v10255 = vadd.f32 0.0, %v10254
      %v10256 = vpop.f32.mrb[0].mxu0
      %10257 = vmatprep.mubr.bf16.mxu0 0
      %10258 = vmatmul.mubr.bf16.gmra.mrb[0].mxu0 %v10154
      %v10259 = vpop.f32.mrb[0].mxu0
      %v10260 = vadd.f32 0.0, %v10259
      %v10261 = vpop.f32.mrb[0].mxu0
      %v10262 = vpop.f32.mrb[0].mxu0
      %v10263 = vadd.f32 0.0, %v10262
      %v10264 = vpop.f32.mrb[0].mxu0
      %10265 = vmatprep.mubr.bf16.mxu0 0
      %10266 = vmatmul.mubr.bf16.gmra.mrb[0].mxu0 %v10157
      %v10267 = vpop.f32.mrb[0].mxu0
      %v10268 = vadd.f32 0.0, %v10267
      %v10269 = vpop.f32.mrb[0].mxu0
      %v10270 = vpop.f32.mrb[0].mxu0
      %v10271 = vadd.f32 0.0, %v10270
      %v10272 = vpop.f32.mrb[0].mxu0
      %10273 = vmatprep.mubr.bf16.mxu0 0
      %10274 = vmatmul.mubr.bf16.gmra.mrb[0].mxu0 %v10160
      %v10275 = vpop.f32.mrb[0].mxu0
      %v10276 = vadd.f32 0.0, %v10275
      %v10277 = vpop.f32.mrb[0].mxu0
      %v10278 = vpop.f32.mrb[0].mxu0
      %v10279 = vadd.f32 0.0, %v10278
      %v10280 = vpop.f32.mrb[0].mxu0
      %10281 = vmatprep.mubr.bf16.mxu0 0
      %10282 = vmatmul.mubr.bf16.gmra.mrb[0].mxu0 %v10163
      %v10283 = vpop.f32.mrb[0].mxu0
      %v10284 = vadd.f32 0.0, %v10283
      %v10285 = vpop.f32.mrb[0].mxu0
      %v10286 = vpop.f32.mrb[0].mxu0
      %v10287 = vadd.f32 0.0, %v10286
      %v10288 = vpop.f32.mrb[0].mxu0
      %10289 = vmatprep.mubr.bf16.mxu0 0
      %10290 = vmatmul.mubr.bf16.gmra.mrb[0].mxu0 %v10166
      %v10291 = vpop.f32.mrb[0].mxu0
      %v10292 = vadd.f32 0.0, %v10291
      %v10293 = vpop.f32.mrb[0].mxu0
      %v10294 = vpop.f32.mrb[0].mxu0
      %v10295 = vadd.f32 0.0, %v10294
      %v10296 = vpop.f32.mrb[0].mxu0
      %10297 = vmatprep.mubr.bf16.mxu0 0
      %10298 = vmatmul.mubr.bf16.gmra.mrb[0].mxu0 %v10169
      %v10299 = vpop.f32.mrb[0].mxu0
      %v10300 = vadd.f32 0.0, %v10299
      %v10301 = vpop.f32.mrb[0].mxu0
      %v10302 = vpop.f32.mrb[0].mxu0
      %v10303 = vadd.f32 0.0, %v10302
      %v10304 = vpop.f32.mrb[0].mxu0
      %10305 = vmatprep.mubr.bf16.mxu0 0
      %10306 = vmatmul.mubr.bf16.gmra.mrb[0].mxu0 %v10172
      %v10307 = vpop.f32.mrb[0].mxu0
      %v10308 = vadd.f32 0.0, %v10307
      %v10309 = vpop.f32.mrb[0].mxu0
      %v10310 = vpop.f32.mrb[0].mxu0
      %v10311 = vadd.f32 0.0, %v10310
      %v10312 = vpop.f32.mrb[0].mxu0
      %10313 = vmatprep.mubr.bf16.mxu0 0
      %10314 = vmatmul.mubr.bf16.gmra.mrb[0].mxu0 %v10175
      %v10315 = vpop.f32.mrb[0].mxu0
      %v10316 = vadd.f32 0.0, %v10315
      %v10317 = vpop.f32.mrb[0].mxu0
      %v10318 = vpop.f32.mrb[0].mxu0
      %v10319 = vadd.f32 0.0, %v10318
      %v10320 = vpop.f32.mrb[0].mxu0
      %10321 = vmatprep.mubr.bf16.mxu0 0
      %10322 = vmatmul.mubr.bf16.gmra.mrb[0].mxu0 %v10178
      %v10323 = vpop.f32.mrb[0].mxu0
      %v10324 = vadd.f32 0.0, %v10323
      %v10325 = vpop.f32.mrb[0].mxu0
      %v10326 = vpop.f32.mrb[0].mxu0
      %v10327 = vadd.f32 0.0, %v10326
      %v10328 = vpop.f32.mrb[0].mxu0
      %10329 = vmatprep.mubr.bf16.mxu0 0
      %10330 = vmatmul.mubr.bf16.gmra.mrb[0].mxu0 %v10181
      %v10331 = vpop.f32.mrb[0].mxu0
      %v10332 = vadd.f32 0.0, %v10331
      %v10333 = vpop.f32.mrb[0].mxu0
      %v10334 = vpop.f32.mrb[0].mxu0
      %v10335 = vadd.f32 0.0, %v10334
      %v10336 = vpop.f32.mrb[0].mxu0
      %10337 = vmatprep.mubr.bf16.mxu0 0
      %10338 = vmatmul.mubr.bf16.gmra.mrb[0].mxu0 %v10184
      %v10339 = vpop.f32.mrb[0].mxu0
      %v10340 = vadd.f32 0.0, %v10339
      %v10341 = vpop.f32.mrb[0].mxu0
      %v10342 = vpop.f32.mrb[0].mxu0
      %v10343 = vadd.f32 0.0, %v10342
      %v10344 = vpop.f32.mrb[0].mxu0
      %10345 = vmatprep.mubr.bf16.mxu0 0
      %10346 = vmatmul.mubr.bf16.gmra.mrb[0].mxu0 %v10187
      %v10347 = vpop.f32.mrb[0].mxu0
      %v10348 = vadd.f32 0.0, %v10347
      %v10349 = vpop.f32.mrb[0].mxu0
      %v10350 = vpop.f32.mrb[0].mxu0
      %v10351 = vadd.f32 0.0, %v10350
      %v10352 = vpop.f32.mrb[0].mxu0
      %10353 = vdwg.mxu0
      %10354 = vst [vmem:[#allocation3] sm:$0xff] %v10228
      %10355 = vst [vmem:[#allocation3 + $0x8] sm:$0xff] %v10231
      %10356 = vst [vmem:[#allocation3 + $0x10] sm:$0xff] %v10236
      %10357 = vst [vmem:[#allocation3 + $0x18] sm:$0xff] %v10239
      %10358 = vst [vmem:[#allocation3 + $0x20] sm:$0xff] %v10244
      %10359 = vst [vmem:[#allocation3 + $0x28] sm:$0xff] %v10247
      %10360 = vst [vmem:[#allocation3 + $0x30] sm:$0xff] %v10252
      %10361 = vst [vmem:[#allocation3 + $0x38] sm:$0xff] %v10255
      %10362 = vst [vmem:[#allocation3 + $0x40] sm:$0xff] %v10260
      %10363 = vst [vmem:[#allocation3 + $0x48] sm:$0xff] %v10263
      %10364 = vst [vmem:[#allocation3 + $0x50] sm:$0xff] %v10268
      %10365 = vst [vmem:[#allocation3 + $0x58] sm:$0xff] %v10271
      %10366 = vst [vmem:[#allocation3 + $0x60] sm:$0xff] %v10276
      %10367 = vst [vmem:[#allocation3 + $0x68] sm:$0xff] %v10279
      %10368 = vst [vmem:[#allocation3 + $0x70] sm:$0xff] %v10284
      %10369 = vst [vmem:[#allocation3 + $0x78] sm:$0xff] %v10287
      %10370 = vst [vmem:[#allocation3 + $0x80] sm:$0xff] %v10292
      %10371 = vst [vmem:[#allocation3 + $0x88] sm:$0xff] %v10295
      %10372 = vst [vmem:[#allocation3 + $0x90] sm:$0xff] %v10300
      %10373 = vst [vmem:[#allocation3 + $0x98] sm:$0xff] %v10303
      %10374 = vst [vmem:[#allocation3 + $0xa0] sm:$0xff] %v10308
      %10375 = vst [vmem:[#allocation3 + $0xa8] sm:$0xff] %v10311
      %10376 = vst [vmem:[#allocation3 + $0xb0] sm:$0xff] %v10316
      %10377 = vst [vmem:[#allocation3 + $0xb8] sm:$0xff] %v10319
      %10378 = vst [vmem:[#allocation3 + $0xc0] sm:$0xff] %v10324
      %10379 = vst [vmem:[#allocation3 + $0xc8] sm:$0xff] %v10327
      %10380 = vst [vmem:[#allocation3 + $0xd0] sm:$0xff] %v10332
      %10381 = vst [vmem:[#allocation3 + $0xd8] sm:$0xff] %v10335
      %10382 = vst [vmem:[#allocation3 + $0xe0] sm:$0xff] %v10340
      %10383 = vst [vmem:[#allocation3 + $0xe8] sm:$0xff] %v10343
      %10384 = vst [vmem:[#allocation3 + $0xf0] sm:$0xff] %v10348
      %10385 = vst [vmem:[#allocation3 + $0xf8] sm:$0xff] %v10351
      %v10386 = vld [vmem:[#allocation3] sm:$0xff]
      %v10387 = vld [vmem:[#allocation3 + $0x8] sm:$0xff]
      %v10388 = vld [vmem:[#allocation3 + $0x10] sm:$0xff]
      %v10389 = vld [vmem:[#allocation3 + $0x18] sm:$0xff]
      %v10390 = vld [vmem:[#allocation3 + $0x20] sm:$0xff]
      %v10391 = vld [vmem:[#allocation3 + $0x28] sm:$0xff]
      %v10392 = vld [vmem:[#allocation3 + $0x30] sm:$0xff]
      %v10393 = vld [vmem:[#allocation3 + $0x38] sm:$0xff]
      %v10394 = vld [vmem:[#allocation3 + $0x40] sm:$0xff]
      %v10395 = vld [vmem:[#allocation3 + $0x48] sm:$0xff]
      %v10396 = vld [vmem:[#allocation3 + $0x50] sm:$0xff]
      %v10397 = vld [vmem:[#allocation3 + $0x58] sm:$0xff]
      %v10398 = vld [vmem:[#allocation3 + $0x60] sm:$0xff]
      %v10399 = vld [vmem:[#allocation3 + $0x68] sm:$0xff]
      %v10400 = vld [vmem:[#allocation3 + $0x70] sm:$0xff]
      %v10401 = vld [vmem:[#allocation3 + $0x78] sm:$0xff]
      %v10402 = vld [vmem:[#allocation3 + $0x80] sm:$0xff]
      %v10403 = vld [vmem:[#allocation3 + $0x88] sm:$0xff]
      %v10404 = vld [vmem:[#allocation3 + $0x90] sm:$0xff]
      %v10405 = vld [vmem:[#allocation3 + $0x98] sm:$0xff]
      %v10406 = vld [vmem:[#allocation3 + $0xa0] sm:$0xff]
      %v10407 = vld [vmem:[#allocation3 + $0xa8] sm:$0xff]
      %v10408 = vld [vmem:[#allocation3 + $0xb0] sm:$0xff]
      %v10409 = vld [vmem:[#allocation3 + $0xb8] sm:$0xff]
      %v10410 = vld [vmem:[#allocation3 + $0xc0] sm:$0xff]
      %v10411 = vld [vmem:[#allocation3 + $0xc8] sm:$0xff]
      %v10412 = vld [vmem:[#allocation3 + $0xd0] sm:$0xff]
      %v10413 = vld [vmem:[#allocation3 + $0xd8] sm:$0xff]
      %v10414 = vld [vmem:[#allocation3 + $0xe0] sm:$0xff]
      %v10415 = vld [vmem:[#allocation3 + $0xe8] sm:$0xff]
      %v10416 = vld [vmem:[#allocation3 + $0xf0] sm:$0xff]
      %v10417 = vld [vmem:[#allocation3 + $0xf8] sm:$0xff]
      %v10418 = vld [vmem:[%s213] sm:$0x1]
      %v10420 = vlaneseq
      %v10421 = vshrl.u32 %v10420, 7
      %v10422 = vsub.s32 0, %v10421
      %v10423 = vrot.slane %v10418, %v10422
      %v10425 = vadd.f32 %v10386, %v10423
      %v10426 = vadd.f32 %v10387, %v10423
      %v10427 = vadd.f32 %v10388, %v10423
      %v10428 = vadd.f32 %v10389, %v10423
      %v10429 = vadd.f32 %v10390, %v10423
      %v10430 = vadd.f32 %v10391, %v10423
      %v10431 = vadd.f32 %v10392, %v10423
      %v10432 = vadd.f32 %v10393, %v10423
      %v10433 = vadd.f32 %v10394, %v10423
      %v10434 = vadd.f32 %v10395, %v10423
      %v10435 = vadd.f32 %v10396, %v10423
      %v10436 = vadd.f32 %v10397, %v10423
      %v10437 = vadd.f32 %v10398, %v10423
      %v10438 = vadd.f32 %v10399, %v10423
      %v10439 = vadd.f32 %v10400, %v10423
      %v10440 = vadd.f32 %v10401, %v10423
      %v10441 = vadd.f32 %v10402, %v10423
      %v10442 = vadd.f32 %v10403, %v10423
      %v10443 = vadd.f32 %v10404, %v10423
      %v10444 = vadd.f32 %v10405, %v10423
      %v10445 = vadd.f32 %v10406, %v10423
      %v10446 = vadd.f32 %v10407, %v10423
      %v10447 = vadd.f32 %v10408, %v10423
      %v10448 = vadd.f32 %v10409, %v10423
      %v10449 = vadd.f32 %v10410, %v10423
      %v10450 = vadd.f32 %v10411, %v10423
      %v10451 = vadd.f32 %v10412, %v10423
      %v10452 = vadd.f32 %v10413, %v10423
      %v10453 = vadd.f32 %v10414, %v10423
      %v10454 = vadd.f32 %v10415, %v10423
      %v10455 = vadd.f32 %v10416, %v10423
      %v10456 = vadd.f32 %v10417, %v10423
      %v10457 = vmax.f32 %v10425, 0.0
      %v10458 = vmax.f32 %v10426, 0.0
      %v10459 = vmax.f32 %v10427, 0.0
      %v10460 = vmax.f32 %v10428, 0.0
      %v10461 = vmax.f32 %v10429, 0.0
      %v10462 = vmax.f32 %v10430, 0.0
      %v10463 = vmax.f32 %v10431, 0.0
      %v10464 = vmax.f32 %v10432, 0.0
      %v10465 = vmax.f32 %v10433, 0.0
      %v10466 = vmax.f32 %v10434, 0.0
      %v10467 = vmax.f32 %v10435, 0.0
      %v10468 = vmax.f32 %v10436, 0.0
      %v10469 = vmax.f32 %v10437, 0.0
      %v10470 = vmax.f32 %v10438, 0.0
      %v10471 = vmax.f32 %v10439, 0.0
      %v10472 = vmax.f32 %v10440, 0.0
      %v10473 = vmax.f32 %v10441, 0.0
      %v10474 = vmax.f32 %v10442, 0.0
      %v10475 = vmax.f32 %v10443, 0.0
      %v10476 = vmax.f32 %v10444, 0.0
      %v10477 = vmax.f32 %v10445, 0.0
      %v10478 = vmax.f32 %v10446, 0.0
      %v10479 = vmax.f32 %v10447, 0.0
      %v10480 = vmax.f32 %v10448, 0.0
      %v10481 = vmax.f32 %v10449, 0.0
      %v10482 = vmax.f32 %v10450, 0.0
      %v10483 = vmax.f32 %v10451, 0.0
      %v10484 = vmax.f32 %v10452, 0.0
      %v10485 = vmax.f32 %v10453, 0.0
      %v10486 = vmax.f32 %v10454, 0.0
      %v10487 = vmax.f32 %v10455, 0.0
      %v10488 = vmax.f32 %v10456, 0.0
      %v10489 = vpack.c.bf16 %v10458, %v10457
      %v10490 = vpack.c.bf16 %v10460, %v10459
      %v10491 = vpack.c.bf16 %v10462, %v10461
      %v10492 = vpack.c.bf16 %v10464, %v10463
      %v10493 = vpack.c.bf16 %v10466, %v10465
      %v10494 = vpack.c.bf16 %v10468, %v10467
      %v10495 = vpack.c.bf16 %v10470, %v10469
      %v10496 = vpack.c.bf16 %v10472, %v10471
      %v10497 = vpack.c.bf16 %v10474, %v10473
      %v10498 = vpack.c.bf16 %v10476, %v10475
      %v10499 = vpack.c.bf16 %v10478, %v10477
      %v10500 = vpack.c.bf16 %v10480, %v10479
      %v10501 = vpack.c.bf16 %v10482, %v10481
      %v10502 = vpack.c.bf16 %v10484, %v10483
      %v10503 = vpack.c.bf16 %v10486, %v10485
      %v10504 = vpack.c.bf16 %v10488, %v10487
      %v10521 = vunpack.c.l.b16 %v10489
      %v10522 = vunpack.c.h.b16 %v10489
      %v10523 = vunpack.c.l.b16 %v10490
      %v10524 = vunpack.c.h.b16 %v10490
      %v10525 = vunpack.c.l.b16 %v10491
      %v10526 = vunpack.c.h.b16 %v10491
      %v10527 = vunpack.c.l.b16 %v10492
      %v10528 = vunpack.c.h.b16 %v10492
      %v10529 = vunpack.c.l.b16 %v10493
      %v10530 = vunpack.c.h.b16 %v10493
      %v10531 = vunpack.c.l.b16 %v10494
      %v10532 = vunpack.c.h.b16 %v10494
      %v10533 = vunpack.c.l.b16 %v10495
      %v10534 = vunpack.c.h.b16 %v10495
      %v10535 = vunpack.c.l.b16 %v10496
      %v10536 = vunpack.c.h.b16 %v10496
      %v10537 = vunpack.c.l.b16 %v10497
      %v10538 = vunpack.c.h.b16 %v10497
      %v10539 = vunpack.c.l.b16 %v10498
      %v10540 = vunpack.c.h.b16 %v10498
      %v10541 = vunpack.c.l.b16 %v10499
      %v10542 = vunpack.c.h.b16 %v10499
      %v10543 = vunpack.c.l.b16 %v10500
      %v10544 = vunpack.c.h.b16 %v10500
      %v10545 = vunpack.c.l.b16 %v10501
      %v10546 = vunpack.c.h.b16 %v10501
      %v10547 = vunpack.c.l.b16 %v10502
      %v10548 = vunpack.c.h.b16 %v10502
      %v10549 = vunpack.c.l.b16 %v10503
      %v10550 = vunpack.c.h.b16 %v10503
      %v10551 = vunpack.c.l.b16 %v10504
      %v10552 = vunpack.c.h.b16 %v10504
      %v10553 = vpack.c.b16 %v10521, %v10521
      %v10554 = vpack.c.b16 %v10522, %v10522
      %v10555 = vpack.c.b16 %v10523, %v10523
      %v10556 = vpack.c.b16 %v10524, %v10524
      %v10557 = vpack.c.b16 %v10525, %v10525
      %v10558 = vpack.c.b16 %v10526, %v10526
      %v10559 = vpack.c.b16 %v10527, %v10527
      %v10560 = vpack.c.b16 %v10528, %v10528
      %v10561 = vpack.c.b16 %v10529, %v10529
      %v10562 = vpack.c.b16 %v10530, %v10530
      %v10563 = vpack.c.b16 %v10531, %v10531
      %v10564 = vpack.c.b16 %v10532, %v10532
      %v10565 = vpack.c.b16 %v10533, %v10533
      %v10566 = vpack.c.b16 %v10534, %v10534
      %v10567 = vpack.c.b16 %v10535, %v10535
      %v10568 = vpack.c.b16 %v10536, %v10536
      %v10569 = vpack.c.b16 %v10537, %v10537
      %v10570 = vpack.c.b16 %v10538, %v10538
      %v10571 = vpack.c.b16 %v10539, %v10539
      %v10572 = vpack.c.b16 %v10540, %v10540
      %v10573 = vpack.c.b16 %v10541, %v10541
      %v10574 = vpack.c.b16 %v10542, %v10542
      %v10575 = vpack.c.b16 %v10543, %v10543
      %v10576 = vpack.c.b16 %v10544, %v10544
      %v10577 = vpack.c.b16 %v10545, %v10545
      %v10578 = vpack.c.b16 %v10546, %v10546
      %v10579 = vpack.c.b16 %v10547, %v10547
      %v10580 = vpack.c.b16 %v10548, %v10548
      %v10581 = vpack.c.b16 %v10549, %v10549
      %v10582 = vpack.c.b16 %v10550, %v10550
      %v10583 = vpack.c.b16 %v10551, %v10551
      %v10584 = vpack.c.b16 %v10552, %v10552
      %10617 = vst [vmem:[%s221] sm:$0xf] %v10553
      %10618 = vst [vmem:[%s221 + $0x4] sm:$0xf] %v10554
      %10619 = vst [vmem:[%s221 + $0x8] sm:$0xf] %v10555
      %10620 = vst [vmem:[%s221 + $0xc] sm:$0xf] %v10556
      %10621 = vst [vmem:[%s221 + $0x10] sm:$0xf] %v10557
      %10622 = vst [vmem:[%s221 + $0x14] sm:$0xf] %v10558
      %10623 = vst [vmem:[%s221 + $0x18] sm:$0xf] %v10559
      %10624 = vst [vmem:[%s221 + $0x1c] sm:$0xf] %v10560
      %10625 = vst [vmem:[%s221 + $0x20] sm:$0xf] %v10561
      %10626 = vst [vmem:[%s221 + $0x24] sm:$0xf] %v10562
      %10627 = vst [vmem:[%s221 + $0x28] sm:$0xf] %v10563
      %10628 = vst [vmem:[%s221 + $0x2c] sm:$0xf] %v10564
      %10629 = vst [vmem:[%s221 + $0x30] sm:$0xf] %v10565
      %10630 = vst [vmem:[%s221 + $0x34] sm:$0xf] %v10566
      %10631 = vst [vmem:[%s221 + $0x38] sm:$0xf] %v10567
      %10632 = vst [vmem:[%s221 + $0x3c] sm:$0xf] %v10568
      %10633 = vst [vmem:[%s221 + $0x40] sm:$0xf] %v10569
      %10634 = vst [vmem:[%s221 + $0x44] sm:$0xf] %v10570
      %10635 = vst [vmem:[%s221 + $0x48] sm:$0xf] %v10571
      %10636 = vst [vmem:[%s221 + $0x4c] sm:$0xf] %v10572
      %10637 = vst [vmem:[%s221 + $0x50] sm:$0xf] %v10573
      %10638 = vst [vmem:[%s221 + $0x54] sm:$0xf] %v10574
      %10639 = vst [vmem:[%s221 + $0x58] sm:$0xf] %v10575
      %10640 = vst [vmem:[%s221 + $0x5c] sm:$0xf] %v10576
      %10641 = vst [vmem:[%s221 + $0x60] sm:$0xf] %v10577
      %10642 = vst [vmem:[%s221 + $0x64] sm:$0xf] %v10578
      %10643 = vst [vmem:[%s221 + $0x68] sm:$0xf] %v10579
      %10644 = vst [vmem:[%s221 + $0x6c] sm:$0xf] %v10580
      %10645 = vst [vmem:[%s221 + $0x70] sm:$0xf] %v10581
      %10646 = vst [vmem:[%s221 + $0x74] sm:$0xf] %v10582
      %10647 = vst [vmem:[%s221 + $0x78] sm:$0xf] %v10583
      %10648 = vst [vmem:[%s221 + $0x7c] sm:$0xf] %v10584
      %p10649 = scmp.lt.s32.totalorder %s18, 1
      %s10650 = scalar_select %p10649, %s18, 1
      %p10651 = scmp.lt.s32.totalorder %s19, 0
      %s10652 = scalar_select %p10651, %s19, 0
      %s10653 = smul.addr %s10650, 32
      %s10654 = sadd.s32 %s10652, %s10653
      %s10655 = smul.addr %s10654, 4
      %s10656 = scalar_lea.vmem %s3, %s10655
      // Predicated region
      $region33: #{repvgg_block_5x5.1} parent=31 // pred_check
        %p10657 = pneg %p124
      $region34: #{repvgg_block_5x5.1} parent=31 // pred_check_branch
        %10659 = sbr.rel (%p10657) target = $region36
      $region35: #{repvgg_block_5x5.1} parent=31 // pred_region
        _
      $region36: #{repvgg_block_5x5.1} parent=31 // pred_fallthru
        _
    $region32: #{repvgg_block_5x5.1} parent=5 // pred_fallthru
      _
    %p10660 = scmp.le.s32.totalorder 2, %s9
    // Predicated region
    $region37: #{repvgg_block_5x5.1} parent=5 // pred_check
      %p10661 = pneg %p10660
    $region38: #{repvgg_block_5x5.1} parent=5 // pred_check_branch
      %10663 = sbr.rel (%p10661) target = $region40
    $region39: #{repvgg_block_5x5.1} parent=5 // pred_region
      %s10664 = ssub.s32 %s9, 2
      // Predicated region
      $region41: #{repvgg_block_5x5.1} parent=39 // pred_check
        %p10665 = pneg %p130
      $region42: #{repvgg_block_5x5.1} parent=39 // pred_check_branch
        %10667 = sbr.rel (%p10665) target = $region44
      $region43: #{repvgg_block_5x5.1} parent=39 // pred_region
        %p10668 = scmp.lt.s32.totalorder %s20, 1
        %s10669 = scalar_select %p10668, %s20, 1
        %p10670 = scmp.lt.s32.totalorder %s21, 0
        %s10671 = scalar_select %p10670, %s21, 0
        %s10672 = smul.addr %s10669, 32
        %s10673 = sadd.s32 %s10671, %s10672
        %s10674 = smul.addr %s10673, 4
        %s10675 = scalar_lea.vmem %s3, %s10674
      $region44: #{repvgg_block_5x5.1} parent=39 // pred_fallthru
        _
    $region40: #{repvgg_block_5x5.1} parent=5 // pred_fallthru
      _
  $region6: #{repvgg_block_5x5.1} parent=0 // loop_footer
    %s13 = sadd.s32 1, %s9
  $region7: #{repvgg_block_5x5.1} parent=0 // loop_footer_branch
    %8 = sbr.rel target = $region3
  $region8: #{repvgg_block_5x5.1} parent=0 // loop_exit
    _

</llo_original>
